<compile_context>
chip_gen: v7x
topology: tpu7x:2x2x1
jax: 0.10.0
libtpu: 0.0.40
codegen_flags: <defaults>
</compile_context>

<pallas_src>
import functools

import jax
import jax.numpy as jnp
import numpy as np
from jax import lax
from jax.experimental import pallas as pl
from jax.experimental.pallas import tpu as pltpu

# ----------------------------- static config --------------------------------
IN_CH = 20                      # must be divisible by 2*SA_GROUPS
RC = IN_CH // 2
SA_GROUPS = 5
C_PER_G = IN_CH // SA_GROUPS    # channels per sa group (4)
CP = C_PER_G // 2               # IN_CH // (2 * SA_GROUPS)  (2)
LAM_RES = 1.0                   # reScale[0]
LAM_X = 0.5                     # reScale[1]
GN_EPS = 1e-5
LRELU_SLOPE = 0.05

# channel_shuffle(groups=2): out[o] = pre[(o % 2) * (C//2) + o//2]
PERM = np.array([(o % 2) * (IN_CH // 2) + o // 2 for o in range(IN_CH)], np.int64)

# packed-parameter slot indices -----------------------------------------------
# W_mm : (5, C, C)  serial-chain matmul weights (row = output channel)
W_HC1, W_HC2, W_PW, W_LL2, W_LOL2 = range(5)
# W_br : (BR_ROWS, C)  stacked branch weights (UL / LL1 / LOL1) at 8-aligned rows
BR_OFF1 = ((IN_CH + 7) // 8) * 8          # 24
BR_OFF2 = 2 * BR_OFF1                     # 48
BR_ROWS = BR_OFF2 + IN_CH                 # 68
# DW_all: (4, C, 9)  depthwise 3x3 weights, tap index = kh*3 + kw
DW_MAP, DW_UP, DW_LOW, DW_LOL = range(4)
# B_all : (C, 18)    per-channel bias / affine / mask columns
(B_HC1, B_HC2, B_MDW, B_UL, B_UDW, B_LL1, B_LL2, B_LDW,
 B_LOL1, B_LOL2, B_LODW, SA_CW, SA_CB, SA_SW, SA_SB, SA_GNW, SA_GNB,
 SA_MASK) = range(18)
NUM_BCOL = 18


# --------------------------- in-kernel math helpers --------------------------
def _erf_k(x):
    # Abramowitz-Stegun 7.1.26 polynomial; exp + approx reciprocal run on EUP.
    a1, a2, a3, a4, a5 = 0.254829592, -0.284496736, 1.421413741, -1.453152027, 1.061405429
    p = 0.3275911
    sign = jnp.where(x >= 0.0, 1.0, -1.0)
    ax = jnp.abs(x)
    t = pl.reciprocal(1.0 + p * ax, approx=True)
    poly = ((((a5 * t + a4) * t + a3) * t + a2) * t + a1) * t
    return sign * (1.0 - poly * jnp.exp(-ax * ax))


def _gelu_k(x):
    # nn.GELU() default = exact (erf) variant.
    return 0.5 * x * (1.0 + _erf_k(x * 0.7071067811865476))


def _sigmoid_k(x):
    # 1/(1+e^-x) with the divide pushed onto the EUP.
    return pl.reciprocal(1.0 + jnp.exp(-x), approx=True)


def _dw_conv3x3(x, w9, b, bnd_masks, W, L):
    """Depthwise 3x3 conv, padding=1, on a (C, L = Bt*H*W) tile.

    x: (C, L); w9: (C, 9) tap index kh*3+kw; b: (C, 1);
    bnd_masks: (m_wm1, m_wp1, m_hm1, m_hp1) lane-validity masks of shape (1, L)
    (built with lane % HW so rolls never leak across image boundaries).
    4 circular lane rolls (XLU) + masks, no padded copies.
    """
    m_wm1, m_wp1, m_hm1, m_hp1 = bnd_masks
    x_l = pltpu.roll(x, 1, axis=1) * m_wm1            # value at (h, w-1)
    x_r = pltpu.roll(x, L - 1, axis=1) * m_wp1        # value at (h, w+1)
    cols = (x_l, x, x_r)                              # kw = 0, 1, 2

    def row(kh):
        return (w9[:, 3 * kh + 0:3 * kh + 1] * cols[0]
                + w9[:, 3 * kh + 1:3 * kh + 2] * cols[1]
                + w9[:, 3 * kh + 2:3 * kh + 3] * cols[2])

    acc = b + row(1)
    acc = acc + pltpu.roll(row(0), W, axis=1) * m_hm1        # reads row h-1
    acc = acc + pltpu.roll(row(2), L - W, axis=1) * m_hp1    # reads row h+1
    return acc


# ------------------------------ Pallas kernel --------------------------------
def _yqblock_kernel(x_ref, wmm_ref, wbr_ref, dw_ref, b_ref, m_ref, o_ref,
                    *, W, HW, BT):
    L = BT * HW
    x = x_ref[...]                         # (C, L)
    b_all = b_ref[...]                     # (C, 18)
    masks = m_ref[...]                     # (4 + BT, L), precomputed in wrapper
    bnd = (masks[0:1, :], masks[1:2, :], masks[2:3, :], masks[3:4, :])
    img_masks = [masks[4 + b:5 + b, :] for b in range(BT)]

    def bc(k):
        return b_all[:, k:k + 1]           # (C, 1)

    def mm(k, v, bk=None):
        y = jnp.dot(wmm_ref[k], v, preferred_element_type=jnp.float32)
        return y if bk is None else y + bc(bk)

    def dwconv(v, slot, bk):
        return _dw_conv3x3(v, dw_ref[slot], bc(bk), bnd, W, L)

    chan_mask = bc(SA_MASK)                # (C,1) float {0,1}, pre-shuffled order

    def sa(v):
        # sa_layer(groups=5), vectorized over all groups; channel_shuffle is
        # folded into the packed params, so no permutation matmul here.
        if BT == 1:
            mu = jnp.mean(v, axis=1, keepdims=True)                  # (C, 1)
            diff = v - mu
            var = jnp.mean(diff * diff, axis=1, keepdims=True)       # biased
            rstd = lax.rsqrt(var + GN_EPS)
            xhat = diff * rstd
            mu_x = mu
        else:
            inv_hw = 1.0 / float(HW)
            mu_full = None
            for b in range(BT):            # static unroll; per-image stats
                im = img_masks[b]
                s1 = jnp.sum(v * im, axis=1, keepdims=True) * inv_hw  # (C,1)
                mu_full = s1 * im if mu_full is None else mu_full + s1 * im
            diff = v - mu_full
            d2 = diff * diff
            rstd_full = None
            for b in range(BT):
                im = img_masks[b]
                var_b = jnp.sum(d2 * im, axis=1, keepdims=True) * inv_hw
                rs_b = lax.rsqrt(var_b + GN_EPS) * im
                rstd_full = rs_b if rstd_full is None else rstd_full + rs_b
            xhat = diff * rstd_full
            mu_x = mu_full
        g_c = bc(SA_CW) * mu_x + bc(SA_CB)                           # channel gate
        g_s = bc(SA_SW) * (bc(SA_GNW) * xhat + bc(SA_GNB)) + bc(SA_SB)  # spatial gate
        arg = g_s + chan_mask * (g_c - g_s)
        return v * _sigmoid_k(arg)

    # head_conv: Linear -> GELU -> Linear (over channels)
    h = _gelu_k(mm(W_HC1, x, B_HC1))
    h = mm(W_HC2, h, B_HC2)

    # mapping: BSConvU = bias-free 1x1 pointwise + biased 3x3 depthwise
    # (rows of W_PW / DW_MAP / B_MDW are pre-shuffled to fold channel_shuffle)
    m = dwconv(mm(W_PW, h), DW_MAP, B_MDW)
    xa = jnp.maximum(m, LRELU_SLOPE * m)                 # LeakyReLU(0.05)
    head_out = LAM_RES * x + LAM_X * sa(xa)

    # one stacked matmul for the three branch linears that consume head_out
    br = jnp.dot(wbr_ref[...], head_out, preferred_element_type=jnp.float32)
    up_in = br[0:IN_CH] + bc(B_UL)
    l0_in = br[BR_OFF1:BR_OFF1 + IN_CH] + bc(B_LL1)
    l1_in = br[BR_OFF2:BR_OFF2 + IN_CH] + bc(B_LOL1)

    # upper branch
    upper_attn = _sigmoid_k(dwconv(up_in, DW_UP, B_UDW))

    # lower branch (W_LL2 / B_LL2 / DW_LOW / B_LDW rows pre-shuffled for sa)
    l0 = mm(W_LL2, _gelu_k(l0_in), B_LL2)
    l0 = sa(dwconv(l0, DW_LOW, B_LDW))

    # lower-of-lower branch
    l1 = mm(W_LOL2, _gelu_k(l1_in), B_LOL2)
    l1 = dwconv(l1, DW_LOL, B_LODW)

    o_ref[...] = (LAM_RES * l1 + LAM_X * l0) * upper_attn


# ------------------------------ wrapper / tiling ------------------------------
def _num_tc_hint():
    # v7x has 2 TensorCores per chip; keep >=2 grid steps there so the batch
    # axis shards across both cores.  v5e/v6e have 1 TC -> fold the batch.
    try:
        kind = jax.devices()[0].device_kind.lower()
    except Exception:
        return 1
    return 2 if ("v7" in kind or "7x" in kind) else 1


def _pick_batch_tile(B, HW, lane_cap=512):
    """Largest batch tile Bt (divisor of B) with Bt*HW <= lane_cap and a legal
    block shape; on 2-TC chips prefer Bt that keeps the grid a multiple of 2."""
    n_tc = _num_tc_hint()
    cap = max(1, lane_cap // max(HW, 1))
    divs = [d for d in range(1, B + 1)
            if B % d == 0 and d <= cap and ((d * HW) % 128 == 0 or B // d == 1)]
    if not divs:
        return B                        # single full-array block (always legal)
    if n_tc > 1 and B >= n_tc:
        pref = [d for d in divs if (B // d) % n_tc == 0]
        if pref:
            return max(pref)
    return max(divs)


def _make_masks(H, W, Bt):
    """(4 + Bt, Bt*H*W) float32: 4 depthwise boundary masks + Bt image masks."""
    HW = H * W
    li = np.arange(Bt * HW)
    pos = li % HW
    col = pos % W
    rows = [col > 0, col < W - 1, pos >= W, pos < (H - 1) * W]
    for b in range(Bt):
        rows.append((li // HW) == b)
    return jnp.asarray(np.stack(rows).astype(np.float32))


def yqblock_forward(x_nchw, packed, *, batch_tile=None, lane_cap=512):
    """x_nchw: (B, IN_CH, H, W) float32 -> (B, IN_CH, H, W) float32."""
    B, C, H, W = x_nchw.shape
    assert C == IN_CH
    HW = H * W
    Bt = batch_tile if batch_tile is not None else _pick_batch_tile(B, HW, lane_cap)
    assert B % Bt == 0
    NB = B // Bt
    L = Bt * HW
    assert (L % 128 == 0) or NB == 1

    # lane-dense layout: channels on sublanes, batch*spatial on lanes
    # (wrapper-side transpose is layout plumbing only; tiny arrays)
    x2 = jnp.transpose(x_nchw.astype(jnp.float32), (1, 0, 2, 3)).reshape(C, B * HW)
    masks = _make_masks(H, W, Bt)

    w_mm = packed['W_mm']
    w_br = packed['W_br']
    dw_all = packed['DW_all']
    b_all = packed['B_all']

    kernel = functools.partial(_yqblock_kernel, W=W, HW=HW, BT=Bt)

    mm_flops = 2 * B * HW * (5 * C * C + BR_ROWS * C)
    dw_flops = 2 * B * HW * 4 * C * 9
    ew_flops = 80 * B * HW * C
    param_bytes = 4 * int(w_mm.size + w_br.size + dw_all.size + b_all.size + masks.size)
    cost = pl.CostEstimate(flops=int(mm_flops + dw_flops + ew_flops),
                           transcendentals=int(8 * B * HW * C),
                           bytes_accessed=int(8 * B * C * HW + param_bytes))

    out = pl.pallas_call(
        kernel,
        out_shape=jax.ShapeDtypeStruct((C, B * HW), jnp.float32),
        grid_spec=pltpu.PrefetchScalarGridSpec(
            num_scalar_prefetch=0,
            grid=(NB,),
            in_specs=[
                pl.BlockSpec((C, L), lambda i: (0, i)),
                pl.BlockSpec(w_mm.shape, lambda i: (0, 0, 0)),
                pl.BlockSpec(w_br.shape, lambda i: (0, 0)),
                pl.BlockSpec(dw_all.shape, lambda i: (0, 0, 0)),
                pl.BlockSpec(b_all.shape, lambda i: (0, 0)),
                pl.BlockSpec(masks.shape, lambda i: (0, 0)),
            ],
            out_specs=pl.BlockSpec((C, L), lambda i: (0, i)),
        ),
        compiler_params=pltpu.CompilerParams(
            dimension_semantics=("parallel",)),        # batch blocks independent
        cost_estimate=cost,
    )(x2, w_mm, w_br, dw_all, b_all, masks)
    return out.reshape(C, B, H, W).transpose(1, 0, 2, 3)


# --------------------------- parameters (torch layout) ------------------------
def init_raw_params(key):
    """Random params in PyTorch layout (sa params randomized for a stronger test)."""
    keys = iter(jax.random.split(key, 40))

    def nrm(shape, scale=0.1):
        return scale * jax.random.normal(next(keys), shape, jnp.float32)

    r = {}
    r['hc1_w'] = nrm((IN_CH, IN_CH)); r['hc1_b'] = nrm((IN_CH,))
    r['hc2_w'] = nrm((IN_CH, IN_CH)); r['hc2_b'] = nrm((IN_CH,))
    r['pw_w'] = nrm((IN_CH, IN_CH, 1, 1))                       # pointwise, no bias
    r['map_dw_w'] = nrm((IN_CH, 1, 3, 3)); r['map_dw_b'] = nrm((IN_CH,))
    r['sa_cweight'] = nrm((1, CP, 1, 1)); r['sa_cbias'] = 1.0 + nrm((1, CP, 1, 1))
    r['sa_sweight'] = nrm((1, CP, 1, 1)); r['sa_sbias'] = 1.0 + nrm((1, CP, 1, 1))
    r['sa_gn_w'] = 1.0 + nrm((CP,)); r['sa_gn_b'] = nrm((CP,))
    r['ul_w'] = nrm((IN_CH, RC)); r['ul_b'] = nrm((IN_CH,))
    r['udw_w'] = nrm((IN_CH, 1, 3, 3)); r['udw_b'] = nrm((IN_CH,))
    r['ll1_w'] = nrm((IN_CH, RC)); r['ll1_b'] = nrm((IN_CH,))
    r['ll2_w'] = nrm((IN_CH, IN_CH)); r['ll2_b'] = nrm((IN_CH,))
    r['ldw_w'] = nrm((IN_CH, 1, 3, 3)); r['ldw_b'] = nrm((IN_CH,))
    r['lol1_w'] = nrm((IN_CH, RC)); r['lol1_b'] = nrm((IN_CH,))
    r['lol2_w'] = nrm((IN_CH, IN_CH)); r['lol2_b'] = nrm((IN_CH,))
    r['lodw_w'] = nrm((IN_CH, 1, 3, 3)); r['lodw_b'] = nrm((IN_CH,))
    return r


def pack_params(raw):
    """Pack torch-layout params into the kernel tensors, folding channel_shuffle."""
    C = IN_CH
    perm = PERM

    def npf(a):
        return np.asarray(a, np.float32)

    def ext_first_half(w_half):    # acts on channels [0, RC)
        return np.concatenate([npf(w_half), np.zeros((C, RC), np.float32)], axis=1)

    def ext_second_half(w_half):   # acts on channels [RC, C)
        return np.concatenate([np.zeros((C, RC), np.float32), npf(w_half)], axis=1)

    # serial-chain matmul weights; PW and LL2 rows pre-shuffled (they feed sa)
    W_mm = jnp.asarray(np.stack([
        npf(raw['hc1_w']),
        npf(raw['hc2_w']),
        npf(raw['pw_w'])[:, :, 0, 0][perm, :],
        npf(raw['ll2_w'])[perm, :],
        npf(raw['lol2_w']),
    ], axis=0))

    # stacked branch weight (UL / LL1 / LOL1), zero-extended, 8-aligned rows
    w_br = np.zeros((BR_ROWS, C), np.float32)
    w_br[0:C] = ext_first_half(raw['ul_w'])
    w_br[BR_OFF1:BR_OFF1 + C] = ext_second_half(raw['ll1_w'])
    w_br[BR_OFF2:BR_OFF2 + C] = ext_second_half(raw['lol1_w'])
    W_br = jnp.asarray(w_br)

    def dwmat(w, permute=False):   # (C,1,3,3) -> (C,9), tap index kh*3+kw
        m = npf(w).reshape(C, 9)
        return m[perm, :] if permute else m

    DW_all = jnp.asarray(np.stack([dwmat(raw['map_dw_w'], True),
                                   dwmat(raw['udw_w']),
                                   dwmat(raw['ldw_w'], True),
                                   dwmat(raw['lodw_w'])], axis=0))

    # expand (CP,) sa params to per-channel columns, then fold channel_shuffle
    cw2 = npf(raw['sa_cweight']).reshape(CP); cb2 = npf(raw['sa_cbias']).reshape(CP)
    sw2 = npf(raw['sa_sweight']).reshape(CP); sb2 = npf(raw['sa_sbias']).reshape(CP)
    gw2 = npf(raw['sa_gn_w']).reshape(CP); gb2 = npf(raw['sa_gn_b']).reshape(CP)
    cw_f = np.zeros(C, np.float32); cb_f = np.zeros(C, np.float32)
    sw_f = np.zeros(C, np.float32); sb_f = np.zeros(C, np.float32)
    gw_f = np.zeros(C, np.float32); gb_f = np.zeros(C, np.float32)
    mask_f = np.zeros(C, np.float32)
    for c in range(C):
        q = c % C_PER_G
        if q < CP:
            cw_f[c] = cw2[q]; cb_f[c] = cb2[q]; mask_f[c] = 1.0
        else:
            r2 = q - CP
            sw_f[c] = sw2[r2]; sb_f[c] = sb2[r2]
            gw_f[c] = gw2[r2]; gb_f[c] = gb2[r2]

    def p_(a):                     # col'[o] = col[perm[o]]
        return npf(a)[perm]

    cols = [
        npf(raw['hc1_b']), npf(raw['hc2_b']), p_(raw['map_dw_b']),
        npf(raw['ul_b']), npf(raw['udw_b']),
        npf(raw['ll1_b']), p_(raw['ll2_b']), p_(raw['ldw_b']),
        npf(raw['lol1_b']), npf(raw['lol2_b']), npf(raw['lodw_b']),
        p_(cw_f), p_(cb_f), p_(sw_f), p_(sb_f), p_(gw_f), p_(gb_f), p_(mask_f),
    ]
    B_all = jnp.asarray(np.stack(cols, axis=1))          # (C, 18)
    return {'W_mm': W_mm, 'W_br': W_br, 'DW_all': DW_all, 'B_all': B_all}


# ------------------- independent plain-JAX reference (NHWC) -------------------
def _ref_gelu(x):
    return jax.nn.gelu(x, approximate=False)


def _ref_linear(x2, w, b):
    return jnp.dot(x2, w.T, preferred_element_type=jnp.float32) + b[None, :]


def _ref_dw3x3(x_hwc, w, b):
    Hh, Ww, C = x_hwc.shape
    xp = jnp.pad(x_hwc, ((1, 1), (1, 1), (0, 0)))
    acc = jnp.zeros_like(x_hwc) + b.reshape(1, 1, C)
    for kh in range(3):
        for kw in range(3):
            acc = acc + xp[kh:kh + Hh, kw:kw + Ww, :] * w[:, 0, kh, kw].reshape(1, 1, C)
    return acc


def _ref_sa(y, raw):
    Hh, Ww, C = y.shape
    cw = raw['sa_cweight'].reshape(CP); cb = raw['sa_cbias'].reshape(CP)
    sw = raw['sa_sweight'].reshape(CP); sb = raw['sa_sbias'].reshape(CP)
    gw = raw['sa_gn_w'].reshape(CP); gb = raw['sa_gn_b'].reshape(CP)
    pieces = []
    for g in range(SA_GROUPS):
        base = g * C_PER_G
        x0 = y[:, :, base:base + CP]
        x1 = y[:, :, base + CP:base + C_PER_G]
        xn = jnp.mean(x0, axis=(0, 1), keepdims=True)
        xn = cw.reshape(1, 1, CP) * xn + cb.reshape(1, 1, CP)
        x0o = x0 * jax.nn.sigmoid(xn)
        mu = jnp.mean(x1, axis=(0, 1), keepdims=True)
        var = jnp.mean((x1 - mu) ** 2, axis=(0, 1), keepdims=True)
        xh = (x1 - mu) * lax.rsqrt(var + GN_EPS)
        xs = gw.reshape(1, 1, CP) * xh + gb.reshape(1, 1, CP)
        xs = sw.reshape(1, 1, CP) * xs + sb.reshape(1, 1, CP)
        x1o = x1 * jax.nn.sigmoid(xs)
        pieces += [x0o, x1o]
    pre = jnp.concatenate(pieces, axis=-1)
    half = C // 2
    inter = []
    for k in range(half):
        inter.append(pre[:, :, k:k + 1])
        inter.append(pre[:, :, half + k:half + k + 1])
    return jnp.concatenate(inter, axis=-1)


def _ref_forward_one(x_hwc, raw):
    Hh, Ww, C = x_hwc.shape
    x2 = x_hwc.reshape(-1, C)
    h = _ref_gelu(_ref_linear(x2, raw['hc1_w'], raw['hc1_b']))
    h = _ref_linear(h, raw['hc2_w'], raw['hc2_b'])
    pw = jnp.dot(h, raw['pw_w'][:, :, 0, 0].T, preferred_element_type=jnp.float32)
    m = _ref_dw3x3(pw.reshape(Hh, Ww, C), raw['map_dw_w'], raw['map_dw_b'])
    xa = jnp.where(m >= 0.0, m, LRELU_SLOPE * m)
    head = LAM_RES * x_hwc + LAM_X * _ref_sa(xa, raw)
    upper = head[:, :, :RC].reshape(-1, RC)
    lower = head[:, :, RC:].reshape(-1, RC)
    up = _ref_linear(upper, raw['ul_w'], raw['ul_b'])
    up = _ref_dw3x3(up.reshape(Hh, Ww, C), raw['udw_w'], raw['udw_b'])
    ua = jax.nn.sigmoid(up)
    l0 = _ref_gelu(_ref_linear(lower, raw['ll1_w'], raw['ll1_b']))
    l0 = _ref_linear(l0, raw['ll2_w'], raw['ll2_b'])
    l0 = _ref_dw3x3(l0.reshape(Hh, Ww, C), raw['ldw_w'], raw['ldw_b'])
    l0 = _ref_sa(l0, raw)
    l1 = _ref_gelu(_ref_linear(lower, raw['lol1_w'], raw['lol1_b']))
    l1 = _ref_linear(l1, raw['lol2_w'], raw['lol2_b'])
    l1 = _ref_dw3x3(l1.reshape(Hh, Ww, C), raw['lodw_w'], raw['lodw_b'])
    return (LAM_RES * l1 + LAM_X * l0) * ua


# ----------------------------------- main ------------------------------------
if __name__ == "__main__":
    key = jax.random.PRNGKey(0)
    kx, kp = jax.random.split(key)
    B, H, W = 2, 16, 16
    x = jax.random.normal(kx, (B, IN_CH, H, W), jnp.float32)   # NCHW, like PyTorch
    raw = init_raw_params(kp)
    packed = pack_params(raw)

    out = yqblock_forward(x, packed)
    out = jax.block_until_ready(out)
    assert out.shape == (B, IN_CH, H, W)

    # independent plain-JAX NHWC reference (per-group sa loop, explicit padding,
    # explicit channel shuffle, exact erf GELU) to validate the folded params,
    # lane batching and approx-reciprocal transcendentals.
    x_nhwc = jnp.transpose(x, (0, 2, 3, 1))
    ref = jax.vmap(lambda xi: _ref_forward_one(xi, raw))(x_nhwc)
    ref = jnp.transpose(ref, (0, 3, 1, 2))
    np.testing.assert_allclose(np.asarray(out), np.asarray(ref), rtol=1e-3, atol=1e-3)

    print("KERNEL_OK")
</pallas_src>

<mosaic_0001>
module attributes {stable_mosaic.version = 11 : i64} {
  func.func @_yqblock_kernel(%arg0: i32, %arg1: memref<20x512xf32, #tpu.memory_space<vmem>>, %arg2: memref<5x20x20xf32, #tpu.memory_space<vmem>>, %arg3: memref<68x20xf32, #tpu.memory_space<vmem>>, %arg4: memref<4x20x9xf32, #tpu.memory_space<vmem>>, %arg5: memref<20x18xf32, #tpu.memory_space<vmem>>, %arg6: memref<6x512xf32, #tpu.memory_space<vmem>>, %arg7: memref<20x512xf32, #tpu.memory_space<vmem>>) attributes {dimension_semantics = [#tpu.dimension_semantics<parallel>], iteration_bounds = array<i64: 1>, scalar_prefetch = 0 : i64, scratch_operands = 0 : i64, tpu.core_type = #tpu.core_type<tc>, window_params = [{transform_indices = @transform_0, window_bounds = array<i64: 20, 512>}, {pipeline_mode = #tpu.pipeline_mode<synchronous>, transform_indices = @transform_1, window_bounds = array<i64: 5, 20, 20>}, {pipeline_mode = #tpu.pipeline_mode<synchronous>, transform_indices = @transform_2, window_bounds = array<i64: 68, 20>}, {pipeline_mode = #tpu.pipeline_mode<synchronous>, transform_indices = @transform_3, window_bounds = array<i64: 4, 20, 9>}, {pipeline_mode = #tpu.pipeline_mode<synchronous>, transform_indices = @transform_4, window_bounds = array<i64: 20, 18>}, {pipeline_mode = #tpu.pipeline_mode<synchronous>, transform_indices = @transform_5, window_bounds = array<i64: 6, 512>}, {transform_indices = @transform_6, window_bounds = array<i64: 20, 512>}]} {
    %c0 = arith.constant 0 : index
    %c0_0 = arith.constant 0 : index
    %0 = vector.load %arg1[%c0, %c0_0] : memref<20x512xf32, #tpu.memory_space<vmem>>, vector<20x512xf32>
    %c0_1 = arith.constant 0 : index
    %c0_2 = arith.constant 0 : index
    %1 = vector.load %arg5[%c0_1, %c0_2] : memref<20x18xf32, #tpu.memory_space<vmem>>, vector<20x18xf32>
    %c0_3 = arith.constant 0 : index
    %c0_4 = arith.constant 0 : index
    %2 = vector.load %arg6[%c0_3, %c0_4] : memref<6x512xf32, #tpu.memory_space<vmem>>, vector<6x512xf32>
    %3 = vector.extract_strided_slice %2 {offsets = [0, 0], sizes = [1, 512], strides = [1, 1]} : vector<6x512xf32> to vector<1x512xf32>
    %4 = vector.extract_strided_slice %2 {offsets = [1, 0], sizes = [1, 512], strides = [1, 1]} : vector<6x512xf32> to vector<1x512xf32>
    %5 = vector.extract_strided_slice %2 {offsets = [2, 0], sizes = [1, 512], strides = [1, 1]} : vector<6x512xf32> to vector<1x512xf32>
    %6 = vector.extract_strided_slice %2 {offsets = [3, 0], sizes = [1, 512], strides = [1, 1]} : vector<6x512xf32> to vector<1x512xf32>
    %7 = vector.extract_strided_slice %2 {offsets = [4, 0], sizes = [1, 512], strides = [1, 1]} : vector<6x512xf32> to vector<1x512xf32>
    %8 = vector.extract_strided_slice %2 {offsets = [5, 0], sizes = [1, 512], strides = [1, 1]} : vector<6x512xf32> to vector<1x512xf32>
    %9 = vector.extract_strided_slice %1 {offsets = [0, 17], sizes = [20, 1], strides = [1, 1]} : vector<20x18xf32> to vector<20x1xf32>
    %c0_5 = arith.constant 0 : index
    %c0_6 = arith.constant 0 : index
    %c0_7 = arith.constant 0 : index
    %10 = vector.load %arg2[%c0_5, %c0_6, %c0_7] : memref<5x20x20xf32, #tpu.memory_space<vmem>>, vector<1x20x20xf32>
    %11 = vector.shape_cast %10 : vector<1x20x20xf32> to vector<20x20xf32>
    %cst = arith.constant dense<0.000000e+00> : vector<20x512xf32>
    %12 = tpu.matmul %11, %0, %cst {dimension_numbers = #tpu.dot_dimension_numbers<[1], [0], [0], [1], [0, 0, 1, 1], [], []>} : vector<20x20xf32>, vector<20x512xf32>, vector<20x512xf32> -> vector<20x512xf32>
    %13 = vector.extract_strided_slice %1 {offsets = [0, 0], sizes = [20, 1], strides = [1, 1]} : vector<20x18xf32> to vector<20x1xf32>
    %14 = vector.broadcast %13 : vector<20x1xf32> to vector<20x512xf32>
    %15 = arith.addf %12, %14 : vector<20x512xf32>
    %cst_8 = arith.constant 5.000000e-01 : f32
    %16 = vector.broadcast %cst_8 : f32 to vector<20x512xf32>
    %17 = arith.mulf %16, %15 : vector<20x512xf32>
    %cst_9 = arith.constant 0.707106769 : f32
    %18 = vector.broadcast %cst_9 : f32 to vector<20x512xf32>
    %19 = arith.mulf %15, %18 : vector<20x512xf32>
    %cst_10 = arith.constant 0.000000e+00 : f32
    %20 = vector.broadcast %cst_10 : f32 to vector<20x512xf32>
    %21 = arith.cmpf oge, %19, %20 : vector<20x512xf32>
    %cst_11 = arith.constant 1.000000e+00 : f32
    %cst_12 = arith.constant -1.000000e+00 : f32
    %22 = vector.broadcast %cst_11 : f32 to vector<20x512xf32>
    %23 = vector.broadcast %cst_12 : f32 to vector<20x512xf32>
    %24 = arith.select %21, %22, %23 : vector<20x512xi1>, vector<20x512xf32>
    %25 = math.absf %19 : vector<20x512xf32>
    %cst_13 = arith.constant 0.327591091 : f32
    %26 = vector.broadcast %cst_13 : f32 to vector<20x512xf32>
    %27 = arith.mulf %26, %25 : vector<20x512xf32>
    %cst_14 = arith.constant 1.000000e+00 : f32
    %28 = vector.broadcast %cst_14 : f32 to vector<20x512xf32>
    %29 = arith.addf %28, %27 : vector<20x512xf32>
    %30 = tpu.reciprocal %29 {approx = true} : vector<20x512xf32> -> vector<20x512xf32>
    %cst_15 = arith.constant 1.06140542 : f32
    %31 = vector.broadcast %cst_15 : f32 to vector<20x512xf32>
    %32 = arith.mulf %31, %30 : vector<20x512xf32>
    %cst_16 = arith.constant -1.45315206 : f32
    %33 = vector.broadcast %cst_16 : f32 to vector<20x512xf32>
    %34 = arith.addf %32, %33 : vector<20x512xf32>
    %35 = arith.mulf %34, %30 : vector<20x512xf32>
    %cst_17 = arith.constant 1.42141378 : f32
    %36 = vector.broadcast %cst_17 : f32 to vector<20x512xf32>
    %37 = arith.addf %35, %36 : vector<20x512xf32>
    %38 = arith.mulf %37, %30 : vector<20x512xf32>
    %cst_18 = arith.constant -0.284496725 : f32
    %39 = vector.broadcast %cst_18 : f32 to vector<20x512xf32>
    %40 = arith.addf %38, %39 : vector<20x512xf32>
    %41 = arith.mulf %40, %30 : vector<20x512xf32>
    %cst_19 = arith.constant 0.254829586 : f32
    %42 = vector.broadcast %cst_19 : f32 to vector<20x512xf32>
    %43 = arith.addf %41, %42 : vector<20x512xf32>
    %44 = arith.mulf %43, %30 : vector<20x512xf32>
    %cst_20 = arith.constant 0.000000e+00 : f32
    %45 = vector.broadcast %cst_20 : f32 to vector<20x512xf32>
    %46 = arith.subf %45, %25 : vector<20x512xf32>
    %47 = arith.mulf %46, %25 : vector<20x512xf32>
    %48 = math.exp %47 : vector<20x512xf32>
    %49 = arith.mulf %44, %48 : vector<20x512xf32>
    %cst_21 = arith.constant 1.000000e+00 : f32
    %50 = vector.broadcast %cst_21 : f32 to vector<20x512xf32>
    %51 = arith.subf %50, %49 : vector<20x512xf32>
    %52 = arith.mulf %24, %51 : vector<20x512xf32>
    %cst_22 = arith.constant 1.000000e+00 : f32
    %53 = vector.broadcast %cst_22 : f32 to vector<20x512xf32>
    %54 = arith.addf %53, %52 : vector<20x512xf32>
    %55 = arith.mulf %17, %54 : vector<20x512xf32>
    %c1 = arith.constant 1 : index
    %c0_23 = arith.constant 0 : index
    %c0_24 = arith.constant 0 : index
    %56 = vector.load %arg2[%c1, %c0_23, %c0_24] : memref<5x20x20xf32, #tpu.memory_space<vmem>>, vector<1x20x20xf32>
    %57 = vector.shape_cast %56 : vector<1x20x20xf32> to vector<20x20xf32>
    %cst_25 = arith.constant dense<0.000000e+00> : vector<20x512xf32>
    %58 = tpu.matmul %57, %55, %cst_25 {dimension_numbers = #tpu.dot_dimension_numbers<[1], [0], [0], [1], [0, 0, 1, 1], [], []>} : vector<20x20xf32>, vector<20x512xf32>, vector<20x512xf32> -> vector<20x512xf32>
    %59 = vector.extract_strided_slice %1 {offsets = [0, 1], sizes = [20, 1], strides = [1, 1]} : vector<20x18xf32> to vector<20x1xf32>
    %60 = vector.broadcast %59 : vector<20x1xf32> to vector<20x512xf32>
    %61 = arith.addf %58, %60 : vector<20x512xf32>
    %c2 = arith.constant 2 : index
    %c0_26 = arith.constant 0 : index
    %c0_27 = arith.constant 0 : index
    %62 = vector.load %arg2[%c2, %c0_26, %c0_27] : memref<5x20x20xf32, #tpu.memory_space<vmem>>, vector<1x20x20xf32>
    %63 = vector.shape_cast %62 : vector<1x20x20xf32> to vector<20x20xf32>
    %cst_28 = arith.constant dense<0.000000e+00> : vector<20x512xf32>
    %64 = tpu.matmul %63, %61, %cst_28 {dimension_numbers = #tpu.dot_dimension_numbers<[1], [0], [0], [1], [0, 0, 1, 1], [], []>} : vector<20x20xf32>, vector<20x512xf32>, vector<20x512xf32> -> vector<20x512xf32>
    %c0_29 = arith.constant 0 : index
    %c0_30 = arith.constant 0 : index
    %c0_31 = arith.constant 0 : index
    %65 = vector.load %arg4[%c0_29, %c0_30, %c0_31] : memref<4x20x9xf32, #tpu.memory_space<vmem>>, vector<1x20x9xf32>
    %66 = vector.shape_cast %65 : vector<1x20x9xf32> to vector<20x9xf32>
    %67 = vector.extract_strided_slice %1 {offsets = [0, 2], sizes = [20, 1], strides = [1, 1]} : vector<20x18xf32> to vector<20x1xf32>
    %c1_i32 = arith.constant 1 : i32
    %68 = tpu.dynamic_rotate %64 by %c1_i32 dim 1 : vector<20x512xf32>, i32 -> vector<20x512xf32>
    %69 = vector.broadcast %3 : vector<1x512xf32> to vector<20x512xf32>
    %70 = arith.mulf %68, %69 : vector<20x512xf32>
    %c511_i32 = arith.constant 511 : i32
    %71 = tpu.dynamic_rotate %64 by %c511_i32 dim 1 : vector<20x512xf32>, i32 -> vector<20x512xf32>
    %72 = vector.broadcast %4 : vector<1x512xf32> to vector<20x512xf32>
    %73 = arith.mulf %71, %72 : vector<20x512xf32>
    %74 = vector.extract_strided_slice %66 {offsets = [0, 3], sizes = [20, 1], strides = [1, 1]} : vector<20x9xf32> to vector<20x1xf32>
    %75 = vector.broadcast %74 : vector<20x1xf32> to vector<20x512xf32>
    %76 = arith.mulf %75, %70 : vector<20x512xf32>
    %77 = vector.extract_strided_slice %66 {offsets = [0, 4], sizes = [20, 1], strides = [1, 1]} : vector<20x9xf32> to vector<20x1xf32>
    %78 = vector.broadcast %77 : vector<20x1xf32> to vector<20x512xf32>
    %79 = arith.mulf %78, %64 : vector<20x512xf32>
    %80 = arith.addf %76, %79 : vector<20x512xf32>
    %81 = vector.extract_strided_slice %66 {offsets = [0, 5], sizes = [20, 1], strides = [1, 1]} : vector<20x9xf32> to vector<20x1xf32>
    %82 = vector.broadcast %81 : vector<20x1xf32> to vector<20x512xf32>
    %83 = arith.mulf %82, %73 : vector<20x512xf32>
    %84 = arith.addf %80, %83 : vector<20x512xf32>
    %85 = vector.broadcast %67 : vector<20x1xf32> to vector<20x512xf32>
    %86 = arith.addf %85, %84 : vector<20x512xf32>
    %87 = vector.extract_strided_slice %66 {offsets = [0, 0], sizes = [20, 1], strides = [1, 1]} : vector<20x9xf32> to vector<20x1xf32>
    %88 = vector.broadcast %87 : vector<20x1xf32> to vector<20x512xf32>
    %89 = arith.mulf %88, %70 : vector<20x512xf32>
    %90 = vector.extract_strided_slice %66 {offsets = [0, 1], sizes = [20, 1], strides = [1, 1]} : vector<20x9xf32> to vector<20x1xf32>
    %91 = vector.broadcast %90 : vector<20x1xf32> to vector<20x512xf32>
    %92 = arith.mulf %91, %64 : vector<20x512xf32>
    %93 = arith.addf %89, %92 : vector<20x512xf32>
    %94 = vector.extract_strided_slice %66 {offsets = [0, 2], sizes = [20, 1], strides = [1, 1]} : vector<20x9xf32> to vector<20x1xf32>
    %95 = vector.broadcast %94 : vector<20x1xf32> to vector<20x512xf32>
    %96 = arith.mulf %95, %73 : vector<20x512xf32>
    %97 = arith.addf %93, %96 : vector<20x512xf32>
    %c16_i32 = arith.constant 16 : i32
    %98 = tpu.dynamic_rotate %97 by %c16_i32 dim 1 : vector<20x512xf32>, i32 -> vector<20x512xf32>
    %99 = vector.broadcast %5 : vector<1x512xf32> to vector<20x512xf32>
    %100 = arith.mulf %98, %99 : vector<20x512xf32>
    %101 = arith.addf %86, %100 : vector<20x512xf32>
    %102 = vector.extract_strided_slice %66 {offsets = [0, 6], sizes = [20, 1], strides = [1, 1]} : vector<20x9xf32> to vector<20x1xf32>
    %103 = vector.broadcast %102 : vector<20x1xf32> to vector<20x512xf32>
    %104 = arith.mulf %103, %70 : vector<20x512xf32>
    %105 = vector.extract_strided_slice %66 {offsets = [0, 7], sizes = [20, 1], strides = [1, 1]} : vector<20x9xf32> to vector<20x1xf32>
    %106 = vector.broadcast %105 : vector<20x1xf32> to vector<20x512xf32>
    %107 = arith.mulf %106, %64 : vector<20x512xf32>
    %108 = arith.addf %104, %107 : vector<20x512xf32>
    %109 = vector.extract_strided_slice %66 {offsets = [0, 8], sizes = [20, 1], strides = [1, 1]} : vector<20x9xf32> to vector<20x1xf32>
    %110 = vector.broadcast %109 : vector<20x1xf32> to vector<20x512xf32>
    %111 = arith.mulf %110, %73 : vector<20x512xf32>
    %112 = arith.addf %108, %111 : vector<20x512xf32>
    %c496_i32 = arith.constant 496 : i32
    %113 = tpu.dynamic_rotate %112 by %c496_i32 dim 1 : vector<20x512xf32>, i32 -> vector<20x512xf32>
    %114 = vector.broadcast %6 : vector<1x512xf32> to vector<20x512xf32>
    %115 = arith.mulf %113, %114 : vector<20x512xf32>
    %116 = arith.addf %101, %115 : vector<20x512xf32>
    %cst_32 = arith.constant 5.000000e-02 : f32
    %117 = vector.broadcast %cst_32 : f32 to vector<20x512xf32>
    %118 = arith.mulf %117, %116 : vector<20x512xf32>
    %119 = arith.maximumf %116, %118 : vector<20x512xf32>
    %cst_33 = arith.constant 1.000000e+00 : f32
    %120 = vector.broadcast %cst_33 : f32 to vector<20x512xf32>
    %121 = arith.mulf %120, %0 : vector<20x512xf32>
    %122 = vector.broadcast %7 : vector<1x512xf32> to vector<20x512xf32>
    %123 = arith.mulf %119, %122 : vector<20x512xf32>
    %cst_34 = arith.constant dense<0.000000e+00> : vector<20xf32>
    %124 = vector.multi_reduction <add>, %123, %cst_34 [1] : vector<20x512xf32> to vector<20xf32>
    %125 = vector.shape_cast %124 : vector<20xf32> to vector<20x1xf32>
    %cst_35 = arith.constant 3.906250e-03 : f32
    %126 = vector.broadcast %cst_35 : f32 to vector<20x1xf32>
    %127 = arith.mulf %125, %126 : vector<20x1xf32>
    %128 = vector.broadcast %127 : vector<20x1xf32> to vector<20x512xf32>
    %129 = vector.broadcast %7 : vector<1x512xf32> to vector<20x512xf32>
    %130 = arith.mulf %128, %129 : vector<20x512xf32>
    %131 = vector.broadcast %8 : vector<1x512xf32> to vector<20x512xf32>
    %132 = arith.mulf %119, %131 : vector<20x512xf32>
    %cst_36 = arith.constant dense<0.000000e+00> : vector<20xf32>
    %133 = vector.multi_reduction <add>, %132, %cst_36 [1] : vector<20x512xf32> to vector<20xf32>
    %134 = vector.shape_cast %133 : vector<20xf32> to vector<20x1xf32>
    %cst_37 = arith.constant 3.906250e-03 : f32
    %135 = vector.broadcast %cst_37 : f32 to vector<20x1xf32>
    %136 = arith.mulf %134, %135 : vector<20x1xf32>
    %137 = vector.broadcast %136 : vector<20x1xf32> to vector<20x512xf32>
    %138 = vector.broadcast %8 : vector<1x512xf32> to vector<20x512xf32>
    %139 = arith.mulf %137, %138 : vector<20x512xf32>
    %140 = arith.addf %130, %139 : vector<20x512xf32>
    %141 = arith.subf %119, %140 : vector<20x512xf32>
    %142 = arith.mulf %141, %141 : vector<20x512xf32>
    %143 = vector.broadcast %7 : vector<1x512xf32> to vector<20x512xf32>
    %144 = arith.mulf %142, %143 : vector<20x512xf32>
    %cst_38 = arith.constant dense<0.000000e+00> : vector<20xf32>
    %145 = vector.multi_reduction <add>, %144, %cst_38 [1] : vector<20x512xf32> to vector<20xf32>
    %146 = vector.shape_cast %145 : vector<20xf32> to vector<20x1xf32>
    %cst_39 = arith.constant 3.906250e-03 : f32
    %147 = vector.broadcast %cst_39 : f32 to vector<20x1xf32>
    %148 = arith.mulf %146, %147 : vector<20x1xf32>
    %cst_40 = arith.constant 9.99999974E-6 : f32
    %149 = vector.broadcast %cst_40 : f32 to vector<20x1xf32>
    %150 = arith.addf %148, %149 : vector<20x1xf32>
    %151 = math.rsqrt %150 : vector<20x1xf32>
    %152 = vector.broadcast %151 : vector<20x1xf32> to vector<20x512xf32>
    %153 = vector.broadcast %7 : vector<1x512xf32> to vector<20x512xf32>
    %154 = arith.mulf %152, %153 : vector<20x512xf32>
    %155 = vector.broadcast %8 : vector<1x512xf32> to vector<20x512xf32>
    %156 = arith.mulf %142, %155 : vector<20x512xf32>
    %cst_41 = arith.constant dense<0.000000e+00> : vector<20xf32>
    %157 = vector.multi_reduction <add>, %156, %cst_41 [1] : vector<20x512xf32> to vector<20xf32>
    %158 = vector.shape_cast %157 : vector<20xf32> to vector<20x1xf32>
    %cst_42 = arith.constant 3.906250e-03 : f32
    %159 = vector.broadcast %cst_42 : f32 to vector<20x1xf32>
    %160 = arith.mulf %158, %159 : vector<20x1xf32>
    %cst_43 = arith.constant 9.99999974E-6 : f32
    %161 = vector.broadcast %cst_43 : f32 to vector<20x1xf32>
    %162 = arith.addf %160, %161 : vector<20x1xf32>
    %163 = math.rsqrt %162 : vector<20x1xf32>
    %164 = vector.broadcast %163 : vector<20x1xf32> to vector<20x512xf32>
    %165 = vector.broadcast %8 : vector<1x512xf32> to vector<20x512xf32>
    %166 = arith.mulf %164, %165 : vector<20x512xf32>
    %167 = arith.addf %154, %166 : vector<20x512xf32>
    %168 = arith.mulf %141, %167 : vector<20x512xf32>
    %169 = vector.extract_strided_slice %1 {offsets = [0, 11], sizes = [20, 1], strides = [1, 1]} : vector<20x18xf32> to vector<20x1xf32>
    %170 = vector.broadcast %169 : vector<20x1xf32> to vector<20x512xf32>
    %171 = arith.mulf %170, %140 : vector<20x512xf32>
    %172 = vector.extract_strided_slice %1 {offsets = [0, 12], sizes = [20, 1], strides = [1, 1]} : vector<20x18xf32> to vector<20x1xf32>
    %173 = vector.broadcast %172 : vector<20x1xf32> to vector<20x512xf32>
    %174 = arith.addf %171, %173 : vector<20x512xf32>
    %175 = vector.extract_strided_slice %1 {offsets = [0, 13], sizes = [20, 1], strides = [1, 1]} : vector<20x18xf32> to vector<20x1xf32>
    %176 = vector.extract_strided_slice %1 {offsets = [0, 15], sizes = [20, 1], strides = [1, 1]} : vector<20x18xf32> to vector<20x1xf32>
    %177 = vector.broadcast %176 : vector<20x1xf32> to vector<20x512xf32>
    %178 = arith.mulf %177, %168 : vector<20x512xf32>
    %179 = vector.extract_strided_slice %1 {offsets = [0, 16], sizes = [20, 1], strides = [1, 1]} : vector<20x18xf32> to vector<20x1xf32>
    %180 = vector.broadcast %179 : vector<20x1xf32> to vector<20x512xf32>
    %181 = arith.addf %178, %180 : vector<20x512xf32>
    %182 = vector.broadcast %175 : vector<20x1xf32> to vector<20x512xf32>
    %183 = arith.mulf %182, %181 : vector<20x512xf32>
    %184 = vector.extract_strided_slice %1 {offsets = [0, 14], sizes = [20, 1], strides = [1, 1]} : vector<20x18xf32> to vector<20x1xf32>
    %185 = vector.broadcast %184 : vector<20x1xf32> to vector<20x512xf32>
    %186 = arith.addf %183, %185 : vector<20x512xf32>
    %187 = arith.subf %174, %186 : vector<20x512xf32>
    %188 = vector.broadcast %9 : vector<20x1xf32> to vector<20x512xf32>
    %189 = arith.mulf %188, %187 : vector<20x512xf32>
    %190 = arith.addf %186, %189 : vector<20x512xf32>
    %cst_44 = arith.constant 0.000000e+00 : f32
    %191 = vector.broadcast %cst_44 : f32 to vector<20x512xf32>
    %192 = arith.subf %191, %190 : vector<20x512xf32>
    %193 = math.exp %192 : vector<20x512xf32>
    %cst_45 = arith.constant 1.000000e+00 : f32
    %194 = vector.broadcast %cst_45 : f32 to vector<20x512xf32>
    %195 = arith.addf %194, %193 : vector<20x512xf32>
    %196 = tpu.reciprocal %195 {approx = true} : vector<20x512xf32> -> vector<20x512xf32>
    %197 = arith.mulf %119, %196 : vector<20x512xf32>
    %cst_46 = arith.constant 5.000000e-01 : f32
    %198 = vector.broadcast %cst_46 : f32 to vector<20x512xf32>
    %199 = arith.mulf %198, %197 : vector<20x512xf32>
    %200 = arith.addf %121, %199 : vector<20x512xf32>
    %c0_47 = arith.constant 0 : index
    %c0_48 = arith.constant 0 : index
    %201 = vector.load %arg3[%c0_47, %c0_48] : memref<68x20xf32, #tpu.memory_space<vmem>>, vector<68x20xf32>
    %cst_49 = arith.constant dense<0.000000e+00> : vector<68x512xf32>
    %202 = tpu.matmul %201, %200, %cst_49 {dimension_numbers = #tpu.dot_dimension_numbers<[1], [0], [0], [1], [0, 0, 1, 1], [], []>} : vector<68x20xf32>, vector<20x512xf32>, vector<68x512xf32> -> vector<68x512xf32>
    %203 = vector.extract_strided_slice %202 {offsets = [0, 0], sizes = [20, 512], strides = [1, 1]} : vector<68x512xf32> to vector<20x512xf32>
    %204 = vector.extract_strided_slice %1 {offsets = [0, 3], sizes = [20, 1], strides = [1, 1]} : vector<20x18xf32> to vector<20x1xf32>
    %205 = vector.broadcast %204 : vector<20x1xf32> to vector<20x512xf32>
    %206 = arith.addf %203, %205 : vector<20x512xf32>
    %207 = vector.extract_strided_slice %202 {offsets = [24, 0], sizes = [20, 512], strides = [1, 1]} : vector<68x512xf32> to vector<20x512xf32>
    %208 = vector.extract_strided_slice %1 {offsets = [0, 5], sizes = [20, 1], strides = [1, 1]} : vector<20x18xf32> to vector<20x1xf32>
    %209 = vector.broadcast %208 : vector<20x1xf32> to vector<20x512xf32>
    %210 = arith.addf %207, %209 : vector<20x512xf32>
    %211 = vector.extract_strided_slice %202 {offsets = [48, 0], sizes = [20, 512], strides = [1, 1]} : vector<68x512xf32> to vector<20x512xf32>
    %212 = vector.extract_strided_slice %1 {offsets = [0, 8], sizes = [20, 1], strides = [1, 1]} : vector<20x18xf32> to vector<20x1xf32>
    %213 = vector.broadcast %212 : vector<20x1xf32> to vector<20x512xf32>
    %214 = arith.addf %211, %213 : vector<20x512xf32>
    %c1_50 = arith.constant 1 : index
    %c0_51 = arith.constant 0 : index
    %c0_52 = arith.constant 0 : index
    %215 = vector.load %arg4[%c1_50, %c0_51, %c0_52] : memref<4x20x9xf32, #tpu.memory_space<vmem>>, vector<1x20x9xf32>
    %216 = vector.shape_cast %215 : vector<1x20x9xf32> to vector<20x9xf32>
    %217 = vector.extract_strided_slice %1 {offsets = [0, 4], sizes = [20, 1], strides = [1, 1]} : vector<20x18xf32> to vector<20x1xf32>
    %c1_i32_53 = arith.constant 1 : i32
    %218 = tpu.dynamic_rotate %206 by %c1_i32_53 dim 1 : vector<20x512xf32>, i32 -> vector<20x512xf32>
    %219 = vector.broadcast %3 : vector<1x512xf32> to vector<20x512xf32>
    %220 = arith.mulf %218, %219 : vector<20x512xf32>
    %c511_i32_54 = arith.constant 511 : i32
    %221 = tpu.dynamic_rotate %206 by %c511_i32_54 dim 1 : vector<20x512xf32>, i32 -> vector<20x512xf32>
    %222 = vector.broadcast %4 : vector<1x512xf32> to vector<20x512xf32>
    %223 = arith.mulf %221, %222 : vector<20x512xf32>
    %224 = vector.extract_strided_slice %216 {offsets = [0, 3], sizes = [20, 1], strides = [1, 1]} : vector<20x9xf32> to vector<20x1xf32>
    %225 = vector.broadcast %224 : vector<20x1xf32> to vector<20x512xf32>
    %226 = arith.mulf %225, %220 : vector<20x512xf32>
    %227 = vector.extract_strided_slice %216 {offsets = [0, 4], sizes = [20, 1], strides = [1, 1]} : vector<20x9xf32> to vector<20x1xf32>
    %228 = vector.broadcast %227 : vector<20x1xf32> to vector<20x512xf32>
    %229 = arith.mulf %228, %206 : vector<20x512xf32>
    %230 = arith.addf %226, %229 : vector<20x512xf32>
    %231 = vector.extract_strided_slice %216 {offsets = [0, 5], sizes = [20, 1], strides = [1, 1]} : vector<20x9xf32> to vector<20x1xf32>
    %232 = vector.broadcast %231 : vector<20x1xf32> to vector<20x512xf32>
    %233 = arith.mulf %232, %223 : vector<20x512xf32>
    %234 = arith.addf %230, %233 : vector<20x512xf32>
    %235 = vector.broadcast %217 : vector<20x1xf32> to vector<20x512xf32>
    %236 = arith.addf %235, %234 : vector<20x512xf32>
    %237 = vector.extract_strided_slice %216 {offsets = [0, 0], sizes = [20, 1], strides = [1, 1]} : vector<20x9xf32> to vector<20x1xf32>
    %238 = vector.broadcast %237 : vector<20x1xf32> to vector<20x512xf32>
    %239 = arith.mulf %238, %220 : vector<20x512xf32>
    %240 = vector.extract_strided_slice %216 {offsets = [0, 1], sizes = [20, 1], strides = [1, 1]} : vector<20x9xf32> to vector<20x1xf32>
    %241 = vector.broadcast %240 : vector<20x1xf32> to vector<20x512xf32>
    %242 = arith.mulf %241, %206 : vector<20x512xf32>
    %243 = arith.addf %239, %242 : vector<20x512xf32>
    %244 = vector.extract_strided_slice %216 {offsets = [0, 2], sizes = [20, 1], strides = [1, 1]} : vector<20x9xf32> to vector<20x1xf32>
    %245 = vector.broadcast %244 : vector<20x1xf32> to vector<20x512xf32>
    %246 = arith.mulf %245, %223 : vector<20x512xf32>
    %247 = arith.addf %243, %246 : vector<20x512xf32>
    %c16_i32_55 = arith.constant 16 : i32
    %248 = tpu.dynamic_rotate %247 by %c16_i32_55 dim 1 : vector<20x512xf32>, i32 -> vector<20x512xf32>
    %249 = vector.broadcast %5 : vector<1x512xf32> to vector<20x512xf32>
    %250 = arith.mulf %248, %249 : vector<20x512xf32>
    %251 = arith.addf %236, %250 : vector<20x512xf32>
    %252 = vector.extract_strided_slice %216 {offsets = [0, 6], sizes = [20, 1], strides = [1, 1]} : vector<20x9xf32> to vector<20x1xf32>
    %253 = vector.broadcast %252 : vector<20x1xf32> to vector<20x512xf32>
    %254 = arith.mulf %253, %220 : vector<20x512xf32>
    %255 = vector.extract_strided_slice %216 {offsets = [0, 7], sizes = [20, 1], strides = [1, 1]} : vector<20x9xf32> to vector<20x1xf32>
    %256 = vector.broadcast %255 : vector<20x1xf32> to vector<20x512xf32>
    %257 = arith.mulf %256, %206 : vector<20x512xf32>
    %258 = arith.addf %254, %257 : vector<20x512xf32>
    %259 = vector.extract_strided_slice %216 {offsets = [0, 8], sizes = [20, 1], strides = [1, 1]} : vector<20x9xf32> to vector<20x1xf32>
    %260 = vector.broadcast %259 : vector<20x1xf32> to vector<20x512xf32>
    %261 = arith.mulf %260, %223 : vector<20x512xf32>
    %262 = arith.addf %258, %261 : vector<20x512xf32>
    %c496_i32_56 = arith.constant 496 : i32
    %263 = tpu.dynamic_rotate %262 by %c496_i32_56 dim 1 : vector<20x512xf32>, i32 -> vector<20x512xf32>
    %264 = vector.broadcast %6 : vector<1x512xf32> to vector<20x512xf32>
    %265 = arith.mulf %263, %264 : vector<20x512xf32>
    %266 = arith.addf %251, %265 : vector<20x512xf32>
    %cst_57 = arith.constant 0.000000e+00 : f32
    %267 = vector.broadcast %cst_57 : f32 to vector<20x512xf32>
    %268 = arith.subf %267, %266 : vector<20x512xf32>
    %269 = math.exp %268 : vector<20x512xf32>
    %cst_58 = arith.constant 1.000000e+00 : f32
    %270 = vector.broadcast %cst_58 : f32 to vector<20x512xf32>
    %271 = arith.addf %270, %269 : vector<20x512xf32>
    %272 = tpu.reciprocal %271 {approx = true} : vector<20x512xf32> -> vector<20x512xf32>
    %cst_59 = arith.constant 5.000000e-01 : f32
    %273 = vector.broadcast %cst_59 : f32 to vector<20x512xf32>
    %274 = arith.mulf %273, %210 : vector<20x512xf32>
    %cst_60 = arith.constant 0.707106769 : f32
    %275 = vector.broadcast %cst_60 : f32 to vector<20x512xf32>
    %276 = arith.mulf %210, %275 : vector<20x512xf32>
    %cst_61 = arith.constant 0.000000e+00 : f32
    %277 = vector.broadcast %cst_61 : f32 to vector<20x512xf32>
    %278 = arith.cmpf oge, %276, %277 : vector<20x512xf32>
    %cst_62 = arith.constant 1.000000e+00 : f32
    %cst_63 = arith.constant -1.000000e+00 : f32
    %279 = vector.broadcast %cst_62 : f32 to vector<20x512xf32>
    %280 = vector.broadcast %cst_63 : f32 to vector<20x512xf32>
    %281 = arith.select %278, %279, %280 : vector<20x512xi1>, vector<20x512xf32>
    %282 = math.absf %276 : vector<20x512xf32>
    %cst_64 = arith.constant 0.327591091 : f32
    %283 = vector.broadcast %cst_64 : f32 to vector<20x512xf32>
    %284 = arith.mulf %283, %282 : vector<20x512xf32>
    %cst_65 = arith.constant 1.000000e+00 : f32
    %285 = vector.broadcast %cst_65 : f32 to vector<20x512xf32>
    %286 = arith.addf %285, %284 : vector<20x512xf32>
    %287 = tpu.reciprocal %286 {approx = true} : vector<20x512xf32> -> vector<20x512xf32>
    %cst_66 = arith.constant 1.06140542 : f32
    %288 = vector.broadcast %cst_66 : f32 to vector<20x512xf32>
    %289 = arith.mulf %288, %287 : vector<20x512xf32>
    %cst_67 = arith.constant -1.45315206 : f32
    %290 = vector.broadcast %cst_67 : f32 to vector<20x512xf32>
    %291 = arith.addf %289, %290 : vector<20x512xf32>
    %292 = arith.mulf %291, %287 : vector<20x512xf32>
    %cst_68 = arith.constant 1.42141378 : f32
    %293 = vector.broadcast %cst_68 : f32 to vector<20x512xf32>
    %294 = arith.addf %292, %293 : vector<20x512xf32>
    %295 = arith.mulf %294, %287 : vector<20x512xf32>
    %cst_69 = arith.constant -0.284496725 : f32
    %296 = vector.broadcast %cst_69 : f32 to vector<20x512xf32>
    %297 = arith.addf %295, %296 : vector<20x512xf32>
    %298 = arith.mulf %297, %287 : vector<20x512xf32>
    %cst_70 = arith.constant 0.254829586 : f32
    %299 = vector.broadcast %cst_70 : f32 to vector<20x512xf32>
    %300 = arith.addf %298, %299 : vector<20x512xf32>
    %301 = arith.mulf %300, %287 : vector<20x512xf32>
    %cst_71 = arith.constant 0.000000e+00 : f32
    %302 = vector.broadcast %cst_71 : f32 to vector<20x512xf32>
    %303 = arith.subf %302, %282 : vector<20x512xf32>
    %304 = arith.mulf %303, %282 : vector<20x512xf32>
    %305 = math.exp %304 : vector<20x512xf32>
    %306 = arith.mulf %301, %305 : vector<20x512xf32>
    %cst_72 = arith.constant 1.000000e+00 : f32
    %307 = vector.broadcast %cst_72 : f32 to vector<20x512xf32>
    %308 = arith.subf %307, %306 : vector<20x512xf32>
    %309 = arith.mulf %281, %308 : vector<20x512xf32>
    %cst_73 = arith.constant 1.000000e+00 : f32
    %310 = vector.broadcast %cst_73 : f32 to vector<20x512xf32>
    %311 = arith.addf %310, %309 : vector<20x512xf32>
    %312 = arith.mulf %274, %311 : vector<20x512xf32>
    %c3 = arith.constant 3 : index
    %c0_74 = arith.constant 0 : index
    %c0_75 = arith.constant 0 : index
    %313 = vector.load %arg2[%c3, %c0_74, %c0_75] : memref<5x20x20xf32, #tpu.memory_space<vmem>>, vector<1x20x20xf32>
    %314 = vector.shape_cast %313 : vector<1x20x20xf32> to vector<20x20xf32>
    %cst_76 = arith.constant dense<0.000000e+00> : vector<20x512xf32>
    %315 = tpu.matmul %314, %312, %cst_76 {dimension_numbers = #tpu.dot_dimension_numbers<[1], [0], [0], [1], [0, 0, 1, 1], [], []>} : vector<20x20xf32>, vector<20x512xf32>, vector<20x512xf32> -> vector<20x512xf32>
    %316 = vector.extract_strided_slice %1 {offsets = [0, 6], sizes = [20, 1], strides = [1, 1]} : vector<20x18xf32> to vector<20x1xf32>
    %317 = vector.broadcast %316 : vector<20x1xf32> to vector<20x512xf32>
    %318 = arith.addf %315, %317 : vector<20x512xf32>
    %c2_77 = arith.constant 2 : index
    %c0_78 = arith.constant 0 : index
    %c0_79 = arith.constant 0 : index
    %319 = vector.load %arg4[%c2_77, %c0_78, %c0_79] : memref<4x20x9xf32, #tpu.memory_space<vmem>>, vector<1x20x9xf32>
    %320 = vector.shape_cast %319 : vector<1x20x9xf32> to vector<20x9xf32>
    %321 = vector.extract_strided_slice %1 {offsets = [0, 7], sizes = [20, 1], strides = [1, 1]} : vector<20x18xf32> to vector<20x1xf32>
    %c1_i32_80 = arith.constant 1 : i32
    %322 = tpu.dynamic_rotate %318 by %c1_i32_80 dim 1 : vector<20x512xf32>, i32 -> vector<20x512xf32>
    %323 = vector.broadcast %3 : vector<1x512xf32> to vector<20x512xf32>
    %324 = arith.mulf %322, %323 : vector<20x512xf32>
    %c511_i32_81 = arith.constant 511 : i32
    %325 = tpu.dynamic_rotate %318 by %c511_i32_81 dim 1 : vector<20x512xf32>, i32 -> vector<20x512xf32>
    %326 = vector.broadcast %4 : vector<1x512xf32> to vector<20x512xf32>
    %327 = arith.mulf %325, %326 : vector<20x512xf32>
    %328 = vector.extract_strided_slice %320 {offsets = [0, 3], sizes = [20, 1], strides = [1, 1]} : vector<20x9xf32> to vector<20x1xf32>
    %329 = vector.broadcast %328 : vector<20x1xf32> to vector<20x512xf32>
    %330 = arith.mulf %329, %324 : vector<20x512xf32>
    %331 = vector.extract_strided_slice %320 {offsets = [0, 4], sizes = [20, 1], strides = [1, 1]} : vector<20x9xf32> to vector<20x1xf32>
    %332 = vector.broadcast %331 : vector<20x1xf32> to vector<20x512xf32>
    %333 = arith.mulf %332, %318 : vector<20x512xf32>
    %334 = arith.addf %330, %333 : vector<20x512xf32>
    %335 = vector.extract_strided_slice %320 {offsets = [0, 5], sizes = [20, 1], strides = [1, 1]} : vector<20x9xf32> to vector<20x1xf32>
    %336 = vector.broadcast %335 : vector<20x1xf32> to vector<20x512xf32>
    %337 = arith.mulf %336, %327 : vector<20x512xf32>
    %338 = arith.addf %334, %337 : vector<20x512xf32>
    %339 = vector.broadcast %321 : vector<20x1xf32> to vector<20x512xf32>
    %340 = arith.addf %339, %338 : vector<20x512xf32>
    %341 = vector.extract_strided_slice %320 {offsets = [0, 0], sizes = [20, 1], strides = [1, 1]} : vector<20x9xf32> to vector<20x1xf32>
    %342 = vector.broadcast %341 : vector<20x1xf32> to vector<20x512xf32>
    %343 = arith.mulf %342, %324 : vector<20x512xf32>
    %344 = vector.extract_strided_slice %320 {offsets = [0, 1], sizes = [20, 1], strides = [1, 1]} : vector<20x9xf32> to vector<20x1xf32>
    %345 = vector.broadcast %344 : vector<20x1xf32> to vector<20x512xf32>
    %346 = arith.mulf %345, %318 : vector<20x512xf32>
    %347 = arith.addf %343, %346 : vector<20x512xf32>
    %348 = vector.extract_strided_slice %320 {offsets = [0, 2], sizes = [20, 1], strides = [1, 1]} : vector<20x9xf32> to vector<20x1xf32>
    %349 = vector.broadcast %348 : vector<20x1xf32> to vector<20x512xf32>
    %350 = arith.mulf %349, %327 : vector<20x512xf32>
    %351 = arith.addf %347, %350 : vector<20x512xf32>
    %c16_i32_82 = arith.constant 16 : i32
    %352 = tpu.dynamic_rotate %351 by %c16_i32_82 dim 1 : vector<20x512xf32>, i32 -> vector<20x512xf32>
    %353 = vector.broadcast %5 : vector<1x512xf32> to vector<20x512xf32>
    %354 = arith.mulf %352, %353 : vector<20x512xf32>
    %355 = arith.addf %340, %354 : vector<20x512xf32>
    %356 = vector.extract_strided_slice %320 {offsets = [0, 6], sizes = [20, 1], strides = [1, 1]} : vector<20x9xf32> to vector<20x1xf32>
    %357 = vector.broadcast %356 : vector<20x1xf32> to vector<20x512xf32>
    %358 = arith.mulf %357, %324 : vector<20x512xf32>
    %359 = vector.extract_strided_slice %320 {offsets = [0, 7], sizes = [20, 1], strides = [1, 1]} : vector<20x9xf32> to vector<20x1xf32>
    %360 = vector.broadcast %359 : vector<20x1xf32> to vector<20x512xf32>
    %361 = arith.mulf %360, %318 : vector<20x512xf32>
    %362 = arith.addf %358, %361 : vector<20x512xf32>
    %363 = vector.extract_strided_slice %320 {offsets = [0, 8], sizes = [20, 1], strides = [1, 1]} : vector<20x9xf32> to vector<20x1xf32>
    %364 = vector.broadcast %363 : vector<20x1xf32> to vector<20x512xf32>
    %365 = arith.mulf %364, %327 : vector<20x512xf32>
    %366 = arith.addf %362, %365 : vector<20x512xf32>
    %c496_i32_83 = arith.constant 496 : i32
    %367 = tpu.dynamic_rotate %366 by %c496_i32_83 dim 1 : vector<20x512xf32>, i32 -> vector<20x512xf32>
    %368 = vector.broadcast %6 : vector<1x512xf32> to vector<20x512xf32>
    %369 = arith.mulf %367, %368 : vector<20x512xf32>
    %370 = arith.addf %355, %369 : vector<20x512xf32>
    %371 = vector.broadcast %7 : vector<1x512xf32> to vector<20x512xf32>
    %372 = arith.mulf %370, %371 : vector<20x512xf32>
    %cst_84 = arith.constant dense<0.000000e+00> : vector<20xf32>
    %373 = vector.multi_reduction <add>, %372, %cst_84 [1] : vector<20x512xf32> to vector<20xf32>
    %374 = vector.shape_cast %373 : vector<20xf32> to vector<20x1xf32>
    %cst_85 = arith.constant 3.906250e-03 : f32
    %375 = vector.broadcast %cst_85 : f32 to vector<20x1xf32>
    %376 = arith.mulf %374, %375 : vector<20x1xf32>
    %377 = vector.broadcast %376 : vector<20x1xf32> to vector<20x512xf32>
    %378 = vector.broadcast %7 : vector<1x512xf32> to vector<20x512xf32>
    %379 = arith.mulf %377, %378 : vector<20x512xf32>
    %380 = vector.broadcast %8 : vector<1x512xf32> to vector<20x512xf32>
    %381 = arith.mulf %370, %380 : vector<20x512xf32>
    %cst_86 = arith.constant dense<0.000000e+00> : vector<20xf32>
    %382 = vector.multi_reduction <add>, %381, %cst_86 [1] : vector<20x512xf32> to vector<20xf32>
    %383 = vector.shape_cast %382 : vector<20xf32> to vector<20x1xf32>
    %cst_87 = arith.constant 3.906250e-03 : f32
    %384 = vector.broadcast %cst_87 : f32 to vector<20x1xf32>
    %385 = arith.mulf %383, %384 : vector<20x1xf32>
    %386 = vector.broadcast %385 : vector<20x1xf32> to vector<20x512xf32>
    %387 = vector.broadcast %8 : vector<1x512xf32> to vector<20x512xf32>
    %388 = arith.mulf %386, %387 : vector<20x512xf32>
    %389 = arith.addf %379, %388 : vector<20x512xf32>
    %390 = arith.subf %370, %389 : vector<20x512xf32>
    %391 = arith.mulf %390, %390 : vector<20x512xf32>
    %392 = vector.broadcast %7 : vector<1x512xf32> to vector<20x512xf32>
    %393 = arith.mulf %391, %392 : vector<20x512xf32>
    %cst_88 = arith.constant dense<0.000000e+00> : vector<20xf32>
    %394 = vector.multi_reduction <add>, %393, %cst_88 [1] : vector<20x512xf32> to vector<20xf32>
    %395 = vector.shape_cast %394 : vector<20xf32> to vector<20x1xf32>
    %cst_89 = arith.constant 3.906250e-03 : f32
    %396 = vector.broadcast %cst_89 : f32 to vector<20x1xf32>
    %397 = arith.mulf %395, %396 : vector<20x1xf32>
    %cst_90 = arith.constant 9.99999974E-6 : f32
    %398 = vector.broadcast %cst_90 : f32 to vector<20x1xf32>
    %399 = arith.addf %397, %398 : vector<20x1xf32>
    %400 = math.rsqrt %399 : vector<20x1xf32>
    %401 = vector.broadcast %400 : vector<20x1xf32> to vector<20x512xf32>
    %402 = vector.broadcast %7 : vector<1x512xf32> to vector<20x512xf32>
    %403 = arith.mulf %401, %402 : vector<20x512xf32>
    %404 = vector.broadcast %8 : vector<1x512xf32> to vector<20x512xf32>
    %405 = arith.mulf %391, %404 : vector<20x512xf32>
    %cst_91 = arith.constant dense<0.000000e+00> : vector<20xf32>
    %406 = vector.multi_reduction <add>, %405, %cst_91 [1] : vector<20x512xf32> to vector<20xf32>
    %407 = vector.shape_cast %406 : vector<20xf32> to vector<20x1xf32>
    %cst_92 = arith.constant 3.906250e-03 : f32
    %408 = vector.broadcast %cst_92 : f32 to vector<20x1xf32>
    %409 = arith.mulf %407, %408 : vector<20x1xf32>
    %cst_93 = arith.constant 9.99999974E-6 : f32
    %410 = vector.broadcast %cst_93 : f32 to vector<20x1xf32>
    %411 = arith.addf %409, %410 : vector<20x1xf32>
    %412 = math.rsqrt %411 : vector<20x1xf32>
    %413 = vector.broadcast %412 : vector<20x1xf32> to vector<20x512xf32>
    %414 = vector.broadcast %8 : vector<1x512xf32> to vector<20x512xf32>
    %415 = arith.mulf %413, %414 : vector<20x512xf32>
    %416 = arith.addf %403, %415 : vector<20x512xf32>
    %417 = arith.mulf %390, %416 : vector<20x512xf32>
    %418 = vector.extract_strided_slice %1 {offsets = [0, 11], sizes = [20, 1], strides = [1, 1]} : vector<20x18xf32> to vector<20x1xf32>
    %419 = vector.broadcast %418 : vector<20x1xf32> to vector<20x512xf32>
    %420 = arith.mulf %419, %389 : vector<20x512xf32>
    %421 = vector.extract_strided_slice %1 {offsets = [0, 12], sizes = [20, 1], strides = [1, 1]} : vector<20x18xf32> to vector<20x1xf32>
    %422 = vector.broadcast %421 : vector<20x1xf32> to vector<20x512xf32>
    %423 = arith.addf %420, %422 : vector<20x512xf32>
    %424 = vector.extract_strided_slice %1 {offsets = [0, 13], sizes = [20, 1], strides = [1, 1]} : vector<20x18xf32> to vector<20x1xf32>
    %425 = vector.extract_strided_slice %1 {offsets = [0, 15], sizes = [20, 1], strides = [1, 1]} : vector<20x18xf32> to vector<20x1xf32>
    %426 = vector.broadcast %425 : vector<20x1xf32> to vector<20x512xf32>
    %427 = arith.mulf %426, %417 : vector<20x512xf32>
    %428 = vector.extract_strided_slice %1 {offsets = [0, 16], sizes = [20, 1], strides = [1, 1]} : vector<20x18xf32> to vector<20x1xf32>
    %429 = vector.broadcast %428 : vector<20x1xf32> to vector<20x512xf32>
    %430 = arith.addf %427, %429 : vector<20x512xf32>
    %431 = vector.broadcast %424 : vector<20x1xf32> to vector<20x512xf32>
    %432 = arith.mulf %431, %430 : vector<20x512xf32>
    %433 = vector.extract_strided_slice %1 {offsets = [0, 14], sizes = [20, 1], strides = [1, 1]} : vector<20x18xf32> to vector<20x1xf32>
    %434 = vector.broadcast %433 : vector<20x1xf32> to vector<20x512xf32>
    %435 = arith.addf %432, %434 : vector<20x512xf32>
    %436 = arith.subf %423, %435 : vector<20x512xf32>
    %437 = vector.broadcast %9 : vector<20x1xf32> to vector<20x512xf32>
    %438 = arith.mulf %437, %436 : vector<20x512xf32>
    %439 = arith.addf %435, %438 : vector<20x512xf32>
    %cst_94 = arith.constant 0.000000e+00 : f32
    %440 = vector.broadcast %cst_94 : f32 to vector<20x512xf32>
    %441 = arith.subf %440, %439 : vector<20x512xf32>
    %442 = math.exp %441 : vector<20x512xf32>
    %cst_95 = arith.constant 1.000000e+00 : f32
    %443 = vector.broadcast %cst_95 : f32 to vector<20x512xf32>
    %444 = arith.addf %443, %442 : vector<20x512xf32>
    %445 = tpu.reciprocal %444 {approx = true} : vector<20x512xf32> -> vector<20x512xf32>
    %446 = arith.mulf %370, %445 : vector<20x512xf32>
    %cst_96 = arith.constant 5.000000e-01 : f32
    %447 = vector.broadcast %cst_96 : f32 to vector<20x512xf32>
    %448 = arith.mulf %447, %214 : vector<20x512xf32>
    %cst_97 = arith.constant 0.707106769 : f32
    %449 = vector.broadcast %cst_97 : f32 to vector<20x512xf32>
    %450 = arith.mulf %214, %449 : vector<20x512xf32>
    %cst_98 = arith.constant 0.000000e+00 : f32
    %451 = vector.broadcast %cst_98 : f32 to vector<20x512xf32>
    %452 = arith.cmpf oge, %450, %451 : vector<20x512xf32>
    %cst_99 = arith.constant 1.000000e+00 : f32
    %cst_100 = arith.constant -1.000000e+00 : f32
    %453 = vector.broadcast %cst_99 : f32 to vector<20x512xf32>
    %454 = vector.broadcast %cst_100 : f32 to vector<20x512xf32>
    %455 = arith.select %452, %453, %454 : vector<20x512xi1>, vector<20x512xf32>
    %456 = math.absf %450 : vector<20x512xf32>
    %cst_101 = arith.constant 0.327591091 : f32
    %457 = vector.broadcast %cst_101 : f32 to vector<20x512xf32>
    %458 = arith.mulf %457, %456 : vector<20x512xf32>
    %cst_102 = arith.constant 1.000000e+00 : f32
    %459 = vector.broadcast %cst_102 : f32 to vector<20x512xf32>
    %460 = arith.addf %459, %458 : vector<20x512xf32>
    %461 = tpu.reciprocal %460 {approx = true} : vector<20x512xf32> -> vector<20x512xf32>
    %cst_103 = arith.constant 1.06140542 : f32
    %462 = vector.broadcast %cst_103 : f32 to vector<20x512xf32>
    %463 = arith.mulf %462, %461 : vector<20x512xf32>
    %cst_104 = arith.constant -1.45315206 : f32
    %464 = vector.broadcast %cst_104 : f32 to vector<20x512xf32>
    %465 = arith.addf %463, %464 : vector<20x512xf32>
    %466 = arith.mulf %465, %461 : vector<20x512xf32>
    %cst_105 = arith.constant 1.42141378 : f32
    %467 = vector.broadcast %cst_105 : f32 to vector<20x512xf32>
    %468 = arith.addf %466, %467 : vector<20x512xf32>
    %469 = arith.mulf %468, %461 : vector<20x512xf32>
    %cst_106 = arith.constant -0.284496725 : f32
    %470 = vector.broadcast %cst_106 : f32 to vector<20x512xf32>
    %471 = arith.addf %469, %470 : vector<20x512xf32>
    %472 = arith.mulf %471, %461 : vector<20x512xf32>
    %cst_107 = arith.constant 0.254829586 : f32
    %473 = vector.broadcast %cst_107 : f32 to vector<20x512xf32>
    %474 = arith.addf %472, %473 : vector<20x512xf32>
    %475 = arith.mulf %474, %461 : vector<20x512xf32>
    %cst_108 = arith.constant 0.000000e+00 : f32
    %476 = vector.broadcast %cst_108 : f32 to vector<20x512xf32>
    %477 = arith.subf %476, %456 : vector<20x512xf32>
    %478 = arith.mulf %477, %456 : vector<20x512xf32>
    %479 = math.exp %478 : vector<20x512xf32>
    %480 = arith.mulf %475, %479 : vector<20x512xf32>
    %cst_109 = arith.constant 1.000000e+00 : f32
    %481 = vector.broadcast %cst_109 : f32 to vector<20x512xf32>
    %482 = arith.subf %481, %480 : vector<20x512xf32>
    %483 = arith.mulf %455, %482 : vector<20x512xf32>
    %cst_110 = arith.constant 1.000000e+00 : f32
    %484 = vector.broadcast %cst_110 : f32 to vector<20x512xf32>
    %485 = arith.addf %484, %483 : vector<20x512xf32>
    %486 = arith.mulf %448, %485 : vector<20x512xf32>
    %c4 = arith.constant 4 : index
    %c0_111 = arith.constant 0 : index
    %c0_112 = arith.constant 0 : index
    %487 = vector.load %arg2[%c4, %c0_111, %c0_112] : memref<5x20x20xf32, #tpu.memory_space<vmem>>, vector<1x20x20xf32>
    %488 = vector.shape_cast %487 : vector<1x20x20xf32> to vector<20x20xf32>
    %cst_113 = arith.constant dense<0.000000e+00> : vector<20x512xf32>
    %489 = tpu.matmul %488, %486, %cst_113 {dimension_numbers = #tpu.dot_dimension_numbers<[1], [0], [0], [1], [0, 0, 1, 1], [], []>} : vector<20x20xf32>, vector<20x512xf32>, vector<20x512xf32> -> vector<20x512xf32>
    %490 = vector.extract_strided_slice %1 {offsets = [0, 9], sizes = [20, 1], strides = [1, 1]} : vector<20x18xf32> to vector<20x1xf32>
    %491 = vector.broadcast %490 : vector<20x1xf32> to vector<20x512xf32>
    %492 = arith.addf %489, %491 : vector<20x512xf32>
    %c3_114 = arith.constant 3 : index
    %c0_115 = arith.constant 0 : index
    %c0_116 = arith.constant 0 : index
    %493 = vector.load %arg4[%c3_114, %c0_115, %c0_116] : memref<4x20x9xf32, #tpu.memory_space<vmem>>, vector<1x20x9xf32>
    %494 = vector.shape_cast %493 : vector<1x20x9xf32> to vector<20x9xf32>
    %495 = vector.extract_strided_slice %1 {offsets = [0, 10], sizes = [20, 1], strides = [1, 1]} : vector<20x18xf32> to vector<20x1xf32>
    %c1_i32_117 = arith.constant 1 : i32
    %496 = tpu.dynamic_rotate %492 by %c1_i32_117 dim 1 : vector<20x512xf32>, i32 -> vector<20x512xf32>
    %497 = vector.broadcast %3 : vector<1x512xf32> to vector<20x512xf32>
    %498 = arith.mulf %496, %497 : vector<20x512xf32>
    %c511_i32_118 = arith.constant 511 : i32
    %499 = tpu.dynamic_rotate %492 by %c511_i32_118 dim 1 : vector<20x512xf32>, i32 -> vector<20x512xf32>
    %500 = vector.broadcast %4 : vector<1x512xf32> to vector<20x512xf32>
    %501 = arith.mulf %499, %500 : vector<20x512xf32>
    %502 = vector.extract_strided_slice %494 {offsets = [0, 3], sizes = [20, 1], strides = [1, 1]} : vector<20x9xf32> to vector<20x1xf32>
    %503 = vector.broadcast %502 : vector<20x1xf32> to vector<20x512xf32>
    %504 = arith.mulf %503, %498 : vector<20x512xf32>
    %505 = vector.extract_strided_slice %494 {offsets = [0, 4], sizes = [20, 1], strides = [1, 1]} : vector<20x9xf32> to vector<20x1xf32>
    %506 = vector.broadcast %505 : vector<20x1xf32> to vector<20x512xf32>
    %507 = arith.mulf %506, %492 : vector<20x512xf32>
    %508 = arith.addf %504, %507 : vector<20x512xf32>
    %509 = vector.extract_strided_slice %494 {offsets = [0, 5], sizes = [20, 1], strides = [1, 1]} : vector<20x9xf32> to vector<20x1xf32>
    %510 = vector.broadcast %509 : vector<20x1xf32> to vector<20x512xf32>
    %511 = arith.mulf %510, %501 : vector<20x512xf32>
    %512 = arith.addf %508, %511 : vector<20x512xf32>
    %513 = vector.broadcast %495 : vector<20x1xf32> to vector<20x512xf32>
    %514 = arith.addf %513, %512 : vector<20x512xf32>
    %515 = vector.extract_strided_slice %494 {offsets = [0, 0], sizes = [20, 1], strides = [1, 1]} : vector<20x9xf32> to vector<20x1xf32>
    %516 = vector.broadcast %515 : vector<20x1xf32> to vector<20x512xf32>
    %517 = arith.mulf %516, %498 : vector<20x512xf32>
    %518 = vector.extract_strided_slice %494 {offsets = [0, 1], sizes = [20, 1], strides = [1, 1]} : vector<20x9xf32> to vector<20x1xf32>
    %519 = vector.broadcast %518 : vector<20x1xf32> to vector<20x512xf32>
    %520 = arith.mulf %519, %492 : vector<20x512xf32>
    %521 = arith.addf %517, %520 : vector<20x512xf32>
    %522 = vector.extract_strided_slice %494 {offsets = [0, 2], sizes = [20, 1], strides = [1, 1]} : vector<20x9xf32> to vector<20x1xf32>
    %523 = vector.broadcast %522 : vector<20x1xf32> to vector<20x512xf32>
    %524 = arith.mulf %523, %501 : vector<20x512xf32>
    %525 = arith.addf %521, %524 : vector<20x512xf32>
    %c16_i32_119 = arith.constant 16 : i32
    %526 = tpu.dynamic_rotate %525 by %c16_i32_119 dim 1 : vector<20x512xf32>, i32 -> vector<20x512xf32>
    %527 = vector.broadcast %5 : vector<1x512xf32> to vector<20x512xf32>
    %528 = arith.mulf %526, %527 : vector<20x512xf32>
    %529 = arith.addf %514, %528 : vector<20x512xf32>
    %530 = vector.extract_strided_slice %494 {offsets = [0, 6], sizes = [20, 1], strides = [1, 1]} : vector<20x9xf32> to vector<20x1xf32>
    %531 = vector.broadcast %530 : vector<20x1xf32> to vector<20x512xf32>
    %532 = arith.mulf %531, %498 : vector<20x512xf32>
    %533 = vector.extract_strided_slice %494 {offsets = [0, 7], sizes = [20, 1], strides = [1, 1]} : vector<20x9xf32> to vector<20x1xf32>
    %534 = vector.broadcast %533 : vector<20x1xf32> to vector<20x512xf32>
    %535 = arith.mulf %534, %492 : vector<20x512xf32>
    %536 = arith.addf %532, %535 : vector<20x512xf32>
    %537 = vector.extract_strided_slice %494 {offsets = [0, 8], sizes = [20, 1], strides = [1, 1]} : vector<20x9xf32> to vector<20x1xf32>
    %538 = vector.broadcast %537 : vector<20x1xf32> to vector<20x512xf32>
    %539 = arith.mulf %538, %501 : vector<20x512xf32>
    %540 = arith.addf %536, %539 : vector<20x512xf32>
    %c496_i32_120 = arith.constant 496 : i32
    %541 = tpu.dynamic_rotate %540 by %c496_i32_120 dim 1 : vector<20x512xf32>, i32 -> vector<20x512xf32>
    %542 = vector.broadcast %6 : vector<1x512xf32> to vector<20x512xf32>
    %543 = arith.mulf %541, %542 : vector<20x512xf32>
    %544 = arith.addf %529, %543 : vector<20x512xf32>
    %cst_121 = arith.constant 1.000000e+00 : f32
    %545 = vector.broadcast %cst_121 : f32 to vector<20x512xf32>
    %546 = arith.mulf %545, %544 : vector<20x512xf32>
    %cst_122 = arith.constant 5.000000e-01 : f32
    %547 = vector.broadcast %cst_122 : f32 to vector<20x512xf32>
    %548 = arith.mulf %547, %446 : vector<20x512xf32>
    %549 = arith.addf %546, %548 : vector<20x512xf32>
    %550 = arith.mulf %549, %272 : vector<20x512xf32>
    %c0_123 = arith.constant 0 : index
    %c0_124 = arith.constant 0 : index
    %551 = vector.load %arg7[%c0_123, %c0_124] : memref<20x512xf32, #tpu.memory_space<vmem>>, vector<20x512xf32>
    tpu.vector_store %arg7[%c0_123, %c0_124], %550 {strides = array<i32>} : memref<20x512xf32, #tpu.memory_space<vmem>>, vector<20x512xf32>,
    return
  }
  func.func @transform_0(%arg0: i32) -> (i32, i32) {
    %c0_i32 = arith.constant 0 : i32
    %c0_i32_0 = arith.constant 0 : i32
    return %c0_i32, %arg0 : i32, i32
  }
  func.func @transform_1(%arg0: i32) -> (i32, i32, i32) {
    %c0_i32 = arith.constant 0 : i32
    %c0_i32_0 = arith.constant 0 : i32
    %c0_i32_1 = arith.constant 0 : i32
    %c0_i32_2 = arith.constant 0 : i32
    return %c0_i32, %c0_i32_0, %c0_i32_1 : i32, i32, i32
  }
  func.func @transform_2(%arg0: i32) -> (i32, i32) {
    %c0_i32 = arith.constant 0 : i32
    %c0_i32_0 = arith.constant 0 : i32
    %c0_i32_1 = arith.constant 0 : i32
    return %c0_i32, %c0_i32_0 : i32, i32
  }
  func.func @transform_3(%arg0: i32) -> (i32, i32, i32) {
    %c0_i32 = arith.constant 0 : i32
    %c0_i32_0 = arith.constant 0 : i32
    %c0_i32_1 = arith.constant 0 : i32
    %c0_i32_2 = arith.constant 0 : i32
    return %c0_i32, %c0_i32_0, %c0_i32_1 : i32, i32, i32
  }
  func.func @transform_4(%arg0: i32) -> (i32, i32) {
    %c0_i32 = arith.constant 0 : i32
    %c0_i32_0 = arith.constant 0 : i32
    %c0_i32_1 = arith.constant 0 : i32
    return %c0_i32, %c0_i32_0 : i32, i32
  }
  func.func @transform_5(%arg0: i32) -> (i32, i32) {
    %c0_i32 = arith.constant 0 : i32
    %c0_i32_0 = arith.constant 0 : i32
    %c0_i32_1 = arith.constant 0 : i32
    return %c0_i32, %c0_i32_0 : i32, i32
  }
  func.func @transform_6(%arg0: i32) -> (i32, i32) {
    %c0_i32 = arith.constant 0 : i32
    %c0_i32_0 = arith.constant 0 : i32
    return %c0_i32, %arg0 : i32, i32
  }
}

</mosaic_0001>

<llo_original>
// kernel: tpu_custom_call.1
$region0: #{tpu_custom_call.1}
  #allocation0 [shape = 'u32[]', space=smem, size = 0x4, offset = 0x4, fixed_abs, tag = 'smem constant byte address 0x4 - core index']
  #allocation1 [shape = 'u32[144,128]{1,0:T(1,128)}', space=vmem, size = 0x12000, scoped, tag = 'internal scratch']
  %s0 = inlined_call_operand.vmem [shape: f32[20,512], index: 0, kind: input, shape index: {}]
  %s1 = inlined_call_operand.vmem [shape: f32[5,20,20], index: 1, kind: input, shape index: {}]
  %s2 = inlined_call_operand.vmem [shape: f32[68,20], index: 2, kind: input, shape index: {}]
  %s3 = inlined_call_operand.vmem [shape: f32[4,20,9], index: 3, kind: input, shape index: {}]
  %s4 = inlined_call_operand.vmem [shape: f32[20,18], index: 4, kind: input, shape index: {}]
  %s5 = inlined_call_operand.hbm [shape: f32[6,512], index: 5, kind: input, shape index: {}]
  %s6 = inlined_call_operand.hbm [shape: f32[20,512], index: 6, kind: output, shape index: {}]
  %s7 = sld [smem:[#allocation0]]
  $region38: #{tpu_custom_call.1} parent=0
    _
  %s9 = ssub.s32 1, %s7
  %s10 = scalar_select 0, %s9, %s7
  $region1: #{tpu_custom_call.1} parent=0
    #allocation2 [shape = 'u8[16384]{0}', space=vmem, size = 0x4000, scoped, tag = 'input window, operand 5, single buffered']
    #allocation3 [shape = 's32[1]{0}', space=sflag, size = 0x4, scoped, tag = 'scoped memory for tpu_custom_call.1']
    #allocation4 [shape = 's32[1]{0}', space=sflag, size = 0x4, scoped, tag = 'scoped memory for tpu_custom_call.1']
    #allocation5 [shape = 'u8[49152]{0}', space=vmem, size = 0xc000, scoped, tag = 'output window, operand 0, single buffered']
    %11 = vsyncpa [#allocation3], 0
    %12 = vsyncpa [#allocation4], 0
    // Predicated region
    $region2: #{tpu_custom_call.1} parent=1 // pred_check
      _
    $region3: #{tpu_custom_call.1} parent=1 // pred_check_branch
      %14 = sbr.rel (0) target = $region5
    $region4: #{tpu_custom_call.1} parent=1 // pred_region
      _
    $region5: #{tpu_custom_call.1} parent=1 // pred_fallthru
      _
    // Predicated region
    $region6: #{tpu_custom_call.1} parent=1 // pred_check
      _
    $region7: #{tpu_custom_call.1} parent=1 // pred_check_branch
      %16 = sbr.rel (0) target = $region9
    $region8: #{tpu_custom_call.1} parent=1 // pred_region
      _
    $region9: #{tpu_custom_call.1} parent=1 // pred_fallthru
      _
    // Predicated region
    $region10: #{tpu_custom_call.1} parent=1 // pred_check
      _
    $region11: #{tpu_custom_call.1} parent=1 // pred_check_branch
      %18 = sbr.rel (0) target = $region13
    $region12: #{tpu_custom_call.1} parent=1 // pred_region
      _
    $region13: #{tpu_custom_call.1} parent=1 // pred_fallthru
      _
    // Predicated region
    $region14: #{tpu_custom_call.1} parent=1 // pred_check
      _
    $region15: #{tpu_custom_call.1} parent=1 // pred_check_branch
      %20 = sbr.rel (0) target = $region17
    $region16: #{tpu_custom_call.1} parent=1 // pred_region
      _
    $region17: #{tpu_custom_call.1} parent=1 // pred_fallthru
      _
    // Predicated region
    $region18: #{tpu_custom_call.1} parent=1 // pred_check
      _
    $region19: #{tpu_custom_call.1} parent=1 // pred_check_branch
      %22 = sbr.rel (0) target = $region21
    $region20: #{tpu_custom_call.1} parent=1 // pred_region
      _
    $region21: #{tpu_custom_call.1} parent=1 // pred_fallthru
      _
    // Predicated region
    $region22: #{tpu_custom_call.1} parent=1 // pred_check
      _
    $region23: #{tpu_custom_call.1} parent=1 // pred_check_branch
      %24 = sbr.rel (0) target = $region25
    $region24: #{tpu_custom_call.1} parent=1 // pred_region
      %s26 = ssub.s32 512, 512
      %27 = vsyncadd [#allocation3], %s26
      %s29 = sshll.u32 [#allocation2], 4
      %s30 = int_to_ptr.vmem [resolvable:$true] %s29
      %32 = dma.hbm_to_vmem [thread:$0]  %s5, 512, %s30, [#allocation3]
    $region25: #{tpu_custom_call.1} parent=1 // pred_fallthru
      _
    // Predicated region
    $region26: #{tpu_custom_call.1} parent=1 // pred_check
      _
    $region27: #{tpu_custom_call.1} parent=1 // pred_check_branch
      %34 = sbr.rel (0) target = $region29
    $region28: #{tpu_custom_call.1} parent=1 // pred_region
      %35 = dma.done [#allocation3], 512
    $region29: #{tpu_custom_call.1} parent=1 // pred_fallthru
      _
    %v36 = vld [vmem:[%s0] sm:$0xff]
    %v37 = vld [vmem:[%s0 + $0x8] sm:$0xff]
    %v38 = vld [vmem:[%s0 + $0x10] sm:$0xff]
    %v39 = vld [vmem:[%s0 + $0x18] sm:$0xff]
    %v40 = vld [vmem:[%s0 + $0x20] sm:$0xff]
    %v41 = vld [vmem:[%s0 + $0x28] sm:$0xff]
    %v42 = vld [vmem:[%s0 + $0x30] sm:$0xff]
    %v43 = vld [vmem:[%s0 + $0x38] sm:$0xff]
    %v44 = vld [vmem:[%s0 + $0x40] sm:$0xf]
    %v45 = vld [vmem:[%s0 + $0x48] sm:$0xf]
    %v46 = vld [vmem:[%s0 + $0x50] sm:$0xf]
    %v47 = vld [vmem:[%s0 + $0x58] sm:$0xf]
    %v48 = vld [vmem:[%s4] sm:$0xff]
    %v49 = vld [vmem:[%s4 + $0x8] sm:$0xff]
    %v50 = vld [vmem:[%s4 + $0x10] sm:$0xf]
    %v51 = vld [vmem:[#allocation2] sm:$0x3f]
    %v52 = vld [vmem:[#allocation2 + $0x8] sm:$0x3f]
    %v53 = vld [vmem:[#allocation2 + $0x10] sm:$0x3f]
    %v54 = vld [vmem:[#allocation2 + $0x18] sm:$0x3f]
    %v55 = vld [vmem:[%s1] sm:$0xff]
    %v56 = vld [vmem:[%s1 + $0x8] sm:$0xff]
    %v57 = vld [vmem:[%s1 + $0x10] sm:$0xf]
    %59 = vset.pattern.permute.xlu0 0
    %60 = vperm.xlu0 %59, %v48
    %v61 = vpop.permute.xlu0 %60
    %64 = vset.pattern.permute.xlu0 0
    %65 = vperm.xlu0 %64, %v49
    %v66 = vpop.permute.xlu0 %65
    %69 = vset.pattern.permute.xlu0 0
    %70 = vperm.xlu0 %69, %v50
    %v71 = vpop.permute.xlu0 %70
    %vm73 = vcmask 162816
    %v75 = vsel %vm73, %v55, 0
    %v78 = vsel %vm73, %v56, 0
    %v81 = vsel %vm73, %v57, 0
    %vm83 = vcmask 1043456
    %v85 = vsel %vm83, %v44, 0
    %v88 = vsel %vm83, %v45, 0
    %v91 = vsel %vm83, %v46, 0
    %v94 = vsel %vm83, %v47, 0
    %96 = vmatprep.subr.mxu0 %v37
    %97 = vmatpush1.msra.mxu0 %v36
    %98 = vmatprep.subr.mxu0 %v41
    %99 = vmatpush1.msra.mxu0 %v40
    %100 = vmatprep.subr.mxu0 %v88
    %101 = vmatpush1.msra.mxu0 %v85
    %102 = vmatprep.subr.mxu0 0.0
    %103 = vmatpush1.msra.mxu0 0.0
    %104 = vmatprep.subr.mxu0 0.0
    %105 = vmatpush1.msra.mxu0 0.0
    %106 = vmatprep.subr.mxu0 0.0
    %107 = vmatpush1.msra.mxu0 0.0
    %108 = vmatprep.subr.mxu0 0.0
    %109 = vmatpush1.msra.mxu0 0.0
    %110 = vmatprep.subr.mxu0 0.0
    %111 = vmatpush1.msra.mxu0 0.0
    %112 = vmatprep.subr.mxu0 0.0
    %113 = vmatpush1.msra.mxu0 0.0
    %114 = vmatprep.subr.mxu0 0.0
    %115 = vmatpush1.msra.mxu0 0.0
    %116 = vmatprep.subr.mxu0 0.0
    %117 = vmatpush1.msra.mxu0 0.0
    %118 = vmatprep.subr.mxu0 0.0
    %119 = vmatpush1.msra.mxu0 0.0
    %120 = vmatprep.subr.mxu0 0.0
    %121 = vmatpush1.msra.mxu0 0.0
    %122 = vmatprep.subr.mxu0 0.0
    %123 = vmatpush1.msra.mxu0 0.0
    %124 = vmatprep.subr.mxu0 0.0
    %125 = vmatpush1.msra.mxu0 0.0
    %126 = vmatprep.subr.mxu0 0.0
    %127 = vmatpush1.msra.mxu0 0.0
    %128 = vmatprep.subr.mxu0 0.0
    %129 = vmatpush1.msra.mxu0 0.0
    %130 = vmatprep.subr.mxu0 0.0
    %131 = vmatpush1.msra.mxu0 0.0
    %132 = vmatprep.subr.mxu0 0.0
    %133 = vmatpush1.msra.mxu0 0.0
    %134 = vmatprep.subr.mxu0 0.0
    %135 = vmatpush1.msra.mxu0 0.0
    %136 = vmatprep.subr.mxu0 0.0
    %137 = vmatpush1.msra.mxu0 0.0
    %138 = vmatprep.subr.mxu0 0.0
    %139 = vmatpush1.msra.mxu0 0.0
    %140 = vmatprep.subr.mxu0 0.0
    %141 = vmatpush1.msra.mxu0 0.0
    %142 = vmatprep.subr.mxu0 0.0
    %143 = vmatpush1.msra.mxu0 0.0
    %144 = vmatprep.subr.mxu0 0.0
    %145 = vmatpush1.msra.mxu0 0.0
    %146 = vmatprep.subr.mxu0 0.0
    %147 = vmatpush1.msra.mxu0 0.0
    %148 = vmatprep.subr.mxu0 0.0
    %149 = vmatpush1.msra.mxu0 0.0
    %150 = vmatprep.subr.mxu0 0.0
    %151 = vmatpush1.msra.mxu0 0.0
    %152 = vmatprep.subr.mxu0 0.0
    %153 = vmatpush1.msra.mxu0 0.0
    %154 = vmatprep.subr.mxu0 0.0
    %155 = vmatpush1.msra.mxu0 0.0
    %156 = vmatprep.subr.mxu0 0.0
    %157 = vmatpush1.msra.mxu0 0.0
    %158 = vmatprep.subr.mxu0 0.0
    %159 = vmatpush1.msra.mxu0 0.0
    %160 = vmatprep.mubr.f32.mxu0 0.0
    %161 = vmatmul.mubr.f32.gmra.mrb[0].mxu0 %v75
    %v162 = vpop.f32.mrb[0].mxu0
    %v163 = vadd.f32 %v61, %v162
    %v164 = vpop.f32.mrb[0].mxu0
    %v165 = vadd.f32 %v61, %v164
    %166 = vmatprep.mubr.f32.mxu0 0.0
    %167 = vmatmul.mubr.f32.gmra.mrb[0].mxu0 %v78
    %v168 = vpop.f32.mrb[0].mxu0
    %v169 = vadd.f32 %v66, %v168
    %v170 = vpop.f32.mrb[0].mxu0
    %v171 = vadd.f32 %v66, %v170
    %172 = vmatprep.mubr.f32.mxu0 0.0
    %173 = vmatmul.mubr.f32.gmra.mrb[0].mxu0 %v81
    %v174 = vpop.f32.mrb[0].mxu0
    %v175 = vadd.f32 %v71, %v174
    %v176 = vpop.f32.mrb[0].mxu0
    %v177 = vadd.f32 %v71, %v176
    %178 = vdwg.mxu0
    %179 = vmatprep.subr.mxu0 %v39
    %180 = vmatpush1.msra.mxu0 %v38
    %181 = vmatprep.subr.mxu0 %v43
    %182 = vmatpush1.msra.mxu0 %v42
    %183 = vmatprep.subr.mxu0 %v94
    %184 = vmatpush1.msra.mxu0 %v91
    %185 = vmatprep.subr.mxu0 0.0
    %186 = vmatpush1.msra.mxu0 0.0
    %187 = vmatprep.subr.mxu0 0.0
    %188 = vmatpush1.msra.mxu0 0.0
    %189 = vmatprep.subr.mxu0 0.0
    %190 = vmatpush1.msra.mxu0 0.0
    %191 = vmatprep.subr.mxu0 0.0
    %192 = vmatpush1.msra.mxu0 0.0
    %193 = vmatprep.subr.mxu0 0.0
    %194 = vmatpush1.msra.mxu0 0.0
    %195 = vmatprep.subr.mxu0 0.0
    %196 = vmatpush1.msra.mxu0 0.0
    %197 = vmatprep.subr.mxu0 0.0
    %198 = vmatpush1.msra.mxu0 0.0
    %199 = vmatprep.subr.mxu0 0.0
    %200 = vmatpush1.msra.mxu0 0.0
    %201 = vmatprep.subr.mxu0 0.0
    %202 = vmatpush1.msra.mxu0 0.0
    %203 = vmatprep.subr.mxu0 0.0
    %204 = vmatpush1.msra.mxu0 0.0
    %205 = vmatprep.subr.mxu0 0.0
    %206 = vmatpush1.msra.mxu0 0.0
    %207 = vmatprep.subr.mxu0 0.0
    %208 = vmatpush1.msra.mxu0 0.0
    %209 = vmatprep.subr.mxu0 0.0
    %210 = vmatpush1.msra.mxu0 0.0
    %211 = vmatprep.subr.mxu0 0.0
    %212 = vmatpush1.msra.mxu0 0.0
    %213 = vmatprep.subr.mxu0 0.0
    %214 = vmatpush1.msra.mxu0 0.0
    %215 = vmatprep.subr.mxu0 0.0
    %216 = vmatpush1.msra.mxu0 0.0
    %217 = vmatprep.subr.mxu0 0.0
    %218 = vmatpush1.msra.mxu0 0.0
    %219 = vmatprep.subr.mxu0 0.0
    %220 = vmatpush1.msra.mxu0 0.0
    %221 = vmatprep.subr.mxu0 0.0
    %222 = vmatpush1.msra.mxu0 0.0
    %223 = vmatprep.subr.mxu0 0.0
    %224 = vmatpush1.msra.mxu0 0.0
    %225 = vmatprep.subr.mxu0 0.0
    %226 = vmatpush1.msra.mxu0 0.0
    %227 = vmatprep.subr.mxu0 0.0
    %228 = vmatpush1.msra.mxu0 0.0
    %229 = vmatprep.subr.mxu0 0.0
    %230 = vmatpush1.msra.mxu0 0.0
    %231 = vmatprep.subr.mxu0 0.0
    %232 = vmatpush1.msra.mxu0 0.0
    %233 = vmatprep.subr.mxu0 0.0
    %234 = vmatpush1.msra.mxu0 0.0
    %235 = vmatprep.subr.mxu0 0.0
    %236 = vmatpush1.msra.mxu0 0.0
    %237 = vmatprep.subr.mxu0 0.0
    %238 = vmatpush1.msra.mxu0 0.0
    %239 = vmatprep.subr.mxu0 0.0
    %240 = vmatpush1.msra.mxu0 0.0
    %241 = vmatprep.subr.mxu0 0.0
    %242 = vmatpush1.msra.mxu0 0.0
    %243 = vmatprep.mubr.f32.mxu0 0.0
    %244 = vmatmul.mubr.f32.gmra.mrb[0].mxu0 %v75
    %v245 = vpop.f32.mrb[0].mxu0
    %v246 = vadd.f32 %v61, %v245
    %v247 = vpop.f32.mrb[0].mxu0
    %v248 = vadd.f32 %v61, %v247
    %249 = vmatprep.mubr.f32.mxu0 0.0
    %250 = vmatmul.mubr.f32.gmra.mrb[0].mxu0 %v78
    %v251 = vpop.f32.mrb[0].mxu0
    %v252 = vadd.f32 %v66, %v251
    %v253 = vpop.f32.mrb[0].mxu0
    %v254 = vadd.f32 %v66, %v253
    %255 = vmatprep.mubr.f32.mxu0 0.0
    %256 = vmatmul.mubr.f32.gmra.mrb[0].mxu0 %v81
    %v257 = vpop.f32.mrb[0].mxu0
    %v258 = vadd.f32 %v71, %v257
    %v259 = vpop.f32.mrb[0].mxu0
    %v260 = vadd.f32 %v71, %v259
    %261 = vdwg.mxu0
    %v262 = vmul.f32 %v163, 0.5
    %v263 = vmul.f32 %v165, 0.5
    %v264 = vmul.f32 %v246, 0.5
    %v265 = vmul.f32 %v248, 0.5
    %v266 = vmul.f32 %v169, 0.5
    %v267 = vmul.f32 %v171, 0.5
    %v268 = vmul.f32 %v252, 0.5
    %v269 = vmul.f32 %v254, 0.5
    %v270 = vmul.f32 %v175, 0.5
    %v271 = vmul.f32 %v177, 0.5
    %v272 = vmul.f32 %v258, 0.5
    %v273 = vmul.f32 %v260, 0.5
    %v274 = vmul.f32 %v163, 0.70710677
    %v275 = vmul.f32 %v165, 0.70710677
    %v276 = vmul.f32 %v246, 0.70710677
    %v277 = vmul.f32 %v248, 0.70710677
    %v278 = vmul.f32 %v169, 0.70710677
    %v279 = vmul.f32 %v171, 0.70710677
    %v280 = vmul.f32 %v252, 0.70710677
    %v281 = vmul.f32 %v254, 0.70710677
    %v282 = vmul.f32 %v175, 0.70710677
    %v283 = vmul.f32 %v177, 0.70710677
    %v284 = vmul.f32 %v258, 0.70710677
    %v285 = vmul.f32 %v260, 0.70710677
    %vm286 = vcmp.ge.f32.partialorder %v274, 0.0
    %vm287 = vcmp.ge.f32.partialorder %v275, 0.0
    %vm288 = vcmp.ge.f32.partialorder %v276, 0.0
    %vm289 = vcmp.ge.f32.partialorder %v277, 0.0
    %vm290 = vcmp.ge.f32.partialorder %v278, 0.0
    %vm291 = vcmp.ge.f32.partialorder %v279, 0.0
    %vm292 = vcmp.ge.f32.partialorder %v280, 0.0
    %vm293 = vcmp.ge.f32.partialorder %v281, 0.0
    %vm294 = vcmp.ge.f32.partialorder %v282, 0.0
    %vm295 = vcmp.ge.f32.partialorder %v283, 0.0
    %vm296 = vcmp.ge.f32.partialorder %v284, 0.0
    %vm297 = vcmp.ge.f32.partialorder %v285, 0.0
    %v298 = vsel %vm286, 1.0, -1.0
    %v299 = vsel %vm287, 1.0, -1.0
    %v300 = vsel %vm288, 1.0, -1.0
    %v301 = vsel %vm289, 1.0, -1.0
    %v302 = vsel %vm290, 1.0, -1.0
    %v303 = vsel %vm291, 1.0, -1.0
    %v304 = vsel %vm292, 1.0, -1.0
    %v305 = vsel %vm293, 1.0, -1.0
    %v306 = vsel %vm294, 1.0, -1.0
    %v307 = vsel %vm295, 1.0, -1.0
    %v308 = vsel %vm296, 1.0, -1.0
    %v309 = vsel %vm297, 1.0, -1.0
    %v310 = vand.u32 2147483647, %v274
    %v311 = vand.u32 2147483647, %v275
    %v312 = vand.u32 2147483647, %v276
    %v313 = vand.u32 2147483647, %v277
    %v314 = vand.u32 2147483647, %v278
    %v315 = vand.u32 2147483647, %v279
    %v316 = vand.u32 2147483647, %v280
    %v317 = vand.u32 2147483647, %v281
    %v318 = vand.u32 2147483647, %v282
    %v319 = vand.u32 2147483647, %v283
    %v320 = vand.u32 2147483647, %v284
    %v321 = vand.u32 2147483647, %v285
    %v322 = vmul.f32 %v310, 0.3275911
    %v323 = vmul.f32 %v311, 0.3275911
    %v324 = vmul.f32 %v312, 0.3275911
    %v325 = vmul.f32 %v313, 0.3275911
    %v326 = vmul.f32 %v314, 0.3275911
    %v327 = vmul.f32 %v315, 0.3275911
    %v328 = vmul.f32 %v316, 0.3275911
    %v329 = vmul.f32 %v317, 0.3275911
    %v330 = vmul.f32 %v318, 0.3275911
    %v331 = vmul.f32 %v319, 0.3275911
    %v332 = vmul.f32 %v320, 0.3275911
    %v333 = vmul.f32 %v321, 0.3275911
    %v334 = vadd.f32 %v322, 1.0
    %v335 = vadd.f32 %v323, 1.0
    %v336 = vadd.f32 %v324, 1.0
    %v337 = vadd.f32 %v325, 1.0
    %v338 = vadd.f32 %v326, 1.0
    %v339 = vadd.f32 %v327, 1.0
    %v340 = vadd.f32 %v328, 1.0
    %v341 = vadd.f32 %v329, 1.0
    %v342 = vadd.f32 %v330, 1.0
    %v343 = vadd.f32 %v331, 1.0
    %v344 = vadd.f32 %v332, 1.0
    %v345 = vadd.f32 %v333, 1.0
    %v346 = vrcp.pop %v334
    %v347 = vrcp.pop %v335
    %v348 = vrcp.pop %v336
    %v349 = vrcp.pop %v337
    %v350 = vrcp.pop %v338
    %v351 = vrcp.pop %v339
    %v352 = vrcp.pop %v340
    %v353 = vrcp.pop %v341
    %v354 = vrcp.pop %v342
    %v355 = vrcp.pop %v343
    %v356 = vrcp.pop %v344
    %v357 = vrcp.pop %v345
    %v358 = vmul.f32 %v346, 1.0614054
    %v359 = vmul.f32 %v347, 1.0614054
    %v360 = vmul.f32 %v348, 1.0614054
    %v361 = vmul.f32 %v349, 1.0614054
    %v362 = vmul.f32 %v350, 1.0614054
    %v363 = vmul.f32 %v351, 1.0614054
    %v364 = vmul.f32 %v352, 1.0614054
    %v365 = vmul.f32 %v353, 1.0614054
    %v366 = vmul.f32 %v354, 1.0614054
    %v367 = vmul.f32 %v355, 1.0614054
    %v368 = vmul.f32 %v356, 1.0614054
    %v369 = vmul.f32 %v357, 1.0614054
    %v370 = vadd.f32 %v358, -1.4531521
    %v371 = vadd.f32 %v359, -1.4531521
    %v372 = vadd.f32 %v360, -1.4531521
    %v373 = vadd.f32 %v361, -1.4531521
    %v374 = vadd.f32 %v362, -1.4531521
    %v375 = vadd.f32 %v363, -1.4531521
    %v376 = vadd.f32 %v364, -1.4531521
    %v377 = vadd.f32 %v365, -1.4531521
    %v378 = vadd.f32 %v366, -1.4531521
    %v379 = vadd.f32 %v367, -1.4531521
    %v380 = vadd.f32 %v368, -1.4531521
    %v381 = vadd.f32 %v369, -1.4531521
    %v382 = vmul.f32 %v370, %v346
    %v383 = vmul.f32 %v371, %v347
    %v384 = vmul.f32 %v372, %v348
    %v385 = vmul.f32 %v373, %v349
    %v386 = vmul.f32 %v374, %v350
    %v387 = vmul.f32 %v375, %v351
    %v388 = vmul.f32 %v376, %v352
    %v389 = vmul.f32 %v377, %v353
    %v390 = vmul.f32 %v378, %v354
    %v391 = vmul.f32 %v379, %v355
    %v392 = vmul.f32 %v380, %v356
    %v393 = vmul.f32 %v381, %v357
    %v394 = vadd.f32 %v382, 1.4214138
    %v395 = vadd.f32 %v383, 1.4214138
    %v396 = vadd.f32 %v384, 1.4214138
    %v397 = vadd.f32 %v385, 1.4214138
    %v398 = vadd.f32 %v386, 1.4214138
    %v399 = vadd.f32 %v387, 1.4214138
    %v400 = vadd.f32 %v388, 1.4214138
    %v401 = vadd.f32 %v389, 1.4214138
    %v402 = vadd.f32 %v390, 1.4214138
    %v403 = vadd.f32 %v391, 1.4214138
    %v404 = vadd.f32 %v392, 1.4214138
    %v405 = vadd.f32 %v393, 1.4214138
    %v406 = vmul.f32 %v394, %v346
    %v407 = vmul.f32 %v395, %v347
    %v408 = vmul.f32 %v396, %v348
    %v409 = vmul.f32 %v397, %v349
    %v410 = vmul.f32 %v398, %v350
    %v411 = vmul.f32 %v399, %v351
    %v412 = vmul.f32 %v400, %v352
    %v413 = vmul.f32 %v401, %v353
    %v414 = vmul.f32 %v402, %v354
    %v415 = vmul.f32 %v403, %v355
    %v416 = vmul.f32 %v404, %v356
    %v417 = vmul.f32 %v405, %v357
    %v418 = vadd.f32 %v406, -0.28449672
    %v419 = vadd.f32 %v407, -0.28449672
    %v420 = vadd.f32 %v408, -0.28449672
    %v421 = vadd.f32 %v409, -0.28449672
    %v422 = vadd.f32 %v410, -0.28449672
    %v423 = vadd.f32 %v411, -0.28449672
    %v424 = vadd.f32 %v412, -0.28449672
    %v425 = vadd.f32 %v413, -0.28449672
    %v426 = vadd.f32 %v414, -0.28449672
    %v427 = vadd.f32 %v415, -0.28449672
    %v428 = vadd.f32 %v416, -0.28449672
    %v429 = vadd.f32 %v417, -0.28449672
    %v430 = vmul.f32 %v418, %v346
    %v431 = vmul.f32 %v419, %v347
    %v432 = vmul.f32 %v420, %v348
    %v433 = vmul.f32 %v421, %v349
    %v434 = vmul.f32 %v422, %v350
    %v435 = vmul.f32 %v423, %v351
    %v436 = vmul.f32 %v424, %v352
    %v437 = vmul.f32 %v425, %v353
    %v438 = vmul.f32 %v426, %v354
    %v439 = vmul.f32 %v427, %v355
    %v440 = vmul.f32 %v428, %v356
    %v441 = vmul.f32 %v429, %v357
    %v442 = vadd.f32 %v430, 0.2548296
    %v443 = vadd.f32 %v431, 0.2548296
    %v444 = vadd.f32 %v432, 0.2548296
    %v445 = vadd.f32 %v433, 0.2548296
    %v446 = vadd.f32 %v434, 0.2548296
    %v447 = vadd.f32 %v435, 0.2548296
    %v448 = vadd.f32 %v436, 0.2548296
    %v449 = vadd.f32 %v437, 0.2548296
    %v450 = vadd.f32 %v438, 0.2548296
    %v451 = vadd.f32 %v439, 0.2548296
    %v452 = vadd.f32 %v440, 0.2548296
    %v453 = vadd.f32 %v441, 0.2548296
    %v454 = vmul.f32 %v442, %v346
    %v455 = vmul.f32 %v443, %v347
    %v456 = vmul.f32 %v444, %v348
    %v457 = vmul.f32 %v445, %v349
    %v458 = vmul.f32 %v446, %v350
    %v459 = vmul.f32 %v447, %v351
    %v460 = vmul.f32 %v448, %v352
    %v461 = vmul.f32 %v449, %v353
    %v462 = vmul.f32 %v450, %v354
    %v463 = vmul.f32 %v451, %v355
    %v464 = vmul.f32 %v452, %v356
    %v465 = vmul.f32 %v453, %v357
    %v466 = vsub.f32 0.0, %v310
    %v467 = vsub.f32 0.0, %v311
    %v468 = vsub.f32 0.0, %v312
    %v469 = vsub.f32 0.0, %v313
    %v470 = vsub.f32 0.0, %v314
    %v471 = vsub.f32 0.0, %v315
    %v472 = vsub.f32 0.0, %v316
    %v473 = vsub.f32 0.0, %v317
    %v474 = vsub.f32 0.0, %v318
    %v475 = vsub.f32 0.0, %v319
    %v476 = vsub.f32 0.0, %v320
    %v477 = vsub.f32 0.0, %v321
    %v478 = vmul.f32 %v466, %v310
    %v479 = vmul.f32 %v467, %v311
    %v480 = vmul.f32 %v468, %v312
    %v481 = vmul.f32 %v469, %v313
    %v482 = vmul.f32 %v470, %v314
    %v483 = vmul.f32 %v471, %v315
    %v484 = vmul.f32 %v472, %v316
    %v485 = vmul.f32 %v473, %v317
    %v486 = vmul.f32 %v474, %v318
    %v487 = vmul.f32 %v475, %v319
    %v488 = vmul.f32 %v476, %v320
    %v489 = vmul.f32 %v477, %v321
    %v490 = vmul.f32 %v478, 1.442695
    %v491 = vpow.pop %v490
    %v492 = vmul.f32 %v479, 1.442695
    %v493 = vpow.pop %v492
    %v494 = vmul.f32 %v480, 1.442695
    %v495 = vpow.pop %v494
    %v496 = vmul.f32 %v481, 1.442695
    %v497 = vpow.pop %v496
    %v498 = vmul.f32 %v482, 1.442695
    %v499 = vpow.pop %v498
    %v500 = vmul.f32 %v483, 1.442695
    %v501 = vpow.pop %v500
    %v502 = vmul.f32 %v484, 1.442695
    %v503 = vpow.pop %v502
    %v504 = vmul.f32 %v485, 1.442695
    %v505 = vpow.pop %v504
    %v506 = vmul.f32 %v486, 1.442695
    %v507 = vpow.pop %v506
    %v508 = vmul.f32 %v487, 1.442695
    %v509 = vpow.pop %v508
    %v510 = vmul.f32 %v488, 1.442695
    %v511 = vpow.pop %v510
    %v512 = vmul.f32 %v489, 1.442695
    %v513 = vpow.pop %v512
    %v514 = vmul.f32 %v454, %v491
    %v515 = vmul.f32 %v455, %v493
    %v516 = vmul.f32 %v456, %v495
    %v517 = vmul.f32 %v457, %v497
    %v518 = vmul.f32 %v458, %v499
    %v519 = vmul.f32 %v459, %v501
    %v520 = vmul.f32 %v460, %v503
    %v521 = vmul.f32 %v461, %v505
    %v522 = vmul.f32 %v462, %v507
    %v523 = vmul.f32 %v463, %v509
    %v524 = vmul.f32 %v464, %v511
    %v525 = vmul.f32 %v465, %v513
    %v526 = vsub.f32 1.0, %v514
    %v527 = vsub.f32 1.0, %v515
    %v528 = vsub.f32 1.0, %v516
    %v529 = vsub.f32 1.0, %v517
    %v530 = vsub.f32 1.0, %v518
    %v531 = vsub.f32 1.0, %v519
    %v532 = vsub.f32 1.0, %v520
    %v533 = vsub.f32 1.0, %v521
    %v534 = vsub.f32 1.0, %v522
    %v535 = vsub.f32 1.0, %v523
    %v536 = vsub.f32 1.0, %v524
    %v537 = vsub.f32 1.0, %v525
    %v538 = vmul.f32 %v298, %v526
    %v539 = vmul.f32 %v299, %v527
    %v540 = vmul.f32 %v300, %v528
    %v541 = vmul.f32 %v301, %v529
    %v542 = vmul.f32 %v302, %v530
    %v543 = vmul.f32 %v303, %v531
    %v544 = vmul.f32 %v304, %v532
    %v545 = vmul.f32 %v305, %v533
    %v546 = vmul.f32 %v306, %v534
    %v547 = vmul.f32 %v307, %v535
    %v548 = vmul.f32 %v308, %v536
    %v549 = vmul.f32 %v309, %v537
    %v550 = vadd.f32 %v538, 1.0
    %v551 = vadd.f32 %v539, 1.0
    %v552 = vadd.f32 %v540, 1.0
    %v553 = vadd.f32 %v541, 1.0
    %v554 = vadd.f32 %v542, 1.0
    %v555 = vadd.f32 %v543, 1.0
    %v556 = vadd.f32 %v544, 1.0
    %v557 = vadd.f32 %v545, 1.0
    %v558 = vadd.f32 %v546, 1.0
    %v559 = vadd.f32 %v547, 1.0
    %v560 = vadd.f32 %v548, 1.0
    %v561 = vadd.f32 %v549, 1.0
    %v562 = vmul.f32 %v262, %v550
    %v563 = vmul.f32 %v263, %v551
    %v564 = vmul.f32 %v264, %v552
    %v565 = vmul.f32 %v265, %v553
    %v566 = vmul.f32 %v266, %v554
    %v567 = vmul.f32 %v267, %v555
    %v568 = vmul.f32 %v268, %v556
    %v569 = vmul.f32 %v269, %v557
    %v570 = vmul.f32 %v270, %v558
    %v571 = vmul.f32 %v271, %v559
    %v572 = vmul.f32 %v272, %v560
    %v573 = vmul.f32 %v273, %v561
    %s574 = scalar_lea.vmem %s1, 24
    %v575 = vld [vmem:[%s574] sm:$0xff]
    %v576 = vld [vmem:[%s574 + $0x8] sm:$0xff]
    %v577 = vld [vmem:[%s574 + $0x10] sm:$0xf]
    %578 = vset.pattern.permute.xlu0 1
    %579 = vperm.xlu0 %578, %v48
    %v580 = vpop.permute.xlu0 %579
    %582 = vset.pattern.permute.xlu0 1
    %583 = vperm.xlu0 %582, %v49
    %v584 = vpop.permute.xlu0 %583
    %586 = vset.pattern.permute.xlu0 1
    %587 = vperm.xlu0 %586, %v50
    %v588 = vpop.permute.xlu0 %587
    %v591 = vsel %vm73, %v575, 0
    %v594 = vsel %vm73, %v576, 0
    %v597 = vsel %vm73, %v577, 0
    %v600 = vsel %vm83, %v570, 0
    %v603 = vsel %vm83, %v571, 0
    %v606 = vsel %vm83, %v572, 0
    %v609 = vsel %vm83, %v573, 0
    %611 = vmatprep.subr.mxu0 %v563
    %612 = vmatpush1.msra.mxu0 %v562
    %613 = vmatprep.subr.mxu0 %v567
    %614 = vmatpush1.msra.mxu0 %v566
    %615 = vmatprep.subr.mxu0 %v603
    %616 = vmatpush1.msra.mxu0 %v600
    %617 = vmatprep.subr.mxu0 0.0
    %618 = vmatpush1.msra.mxu0 0.0
    %619 = vmatprep.subr.mxu0 0.0
    %620 = vmatpush1.msra.mxu0 0.0
    %621 = vmatprep.subr.mxu0 0.0
    %622 = vmatpush1.msra.mxu0 0.0
    %623 = vmatprep.subr.mxu0 0.0
    %624 = vmatpush1.msra.mxu0 0.0
    %625 = vmatprep.subr.mxu0 0.0
    %626 = vmatpush1.msra.mxu0 0.0
    %627 = vmatprep.subr.mxu0 0.0
    %628 = vmatpush1.msra.mxu0 0.0
    %629 = vmatprep.subr.mxu0 0.0
    %630 = vmatpush1.msra.mxu0 0.0
    %631 = vmatprep.subr.mxu0 0.0
    %632 = vmatpush1.msra.mxu0 0.0
    %633 = vmatprep.subr.mxu0 0.0
    %634 = vmatpush1.msra.mxu0 0.0
    %635 = vmatprep.subr.mxu0 0.0
    %636 = vmatpush1.msra.mxu0 0.0
    %637 = vmatprep.subr.mxu0 0.0
    %638 = vmatpush1.msra.mxu0 0.0
    %639 = vmatprep.subr.mxu0 0.0
    %640 = vmatpush1.msra.mxu0 0.0
    %641 = vmatprep.subr.mxu0 0.0
    %642 = vmatpush1.msra.mxu0 0.0
    %643 = vmatprep.subr.mxu0 0.0
    %644 = vmatpush1.msra.mxu0 0.0
    %645 = vmatprep.subr.mxu0 0.0
    %646 = vmatpush1.msra.mxu0 0.0
    %647 = vmatprep.subr.mxu0 0.0
    %648 = vmatpush1.msra.mxu0 0.0
    %649 = vmatprep.subr.mxu0 0.0
    %650 = vmatpush1.msra.mxu0 0.0
    %651 = vmatprep.subr.mxu0 0.0
    %652 = vmatpush1.msra.mxu0 0.0
    %653 = vmatprep.subr.mxu0 0.0
    %654 = vmatpush1.msra.mxu0 0.0
    %655 = vmatprep.subr.mxu0 0.0
    %656 = vmatpush1.msra.mxu0 0.0
    %657 = vmatprep.subr.mxu0 0.0
    %658 = vmatpush1.msra.mxu0 0.0
    %659 = vmatprep.subr.mxu0 0.0
    %660 = vmatpush1.msra.mxu0 0.0
    %661 = vmatprep.subr.mxu0 0.0
    %662 = vmatpush1.msra.mxu0 0.0
    %663 = vmatprep.subr.mxu0 0.0
    %664 = vmatpush1.msra.mxu0 0.0
    %665 = vmatprep.subr.mxu0 0.0
    %666 = vmatpush1.msra.mxu0 0.0
    %667 = vmatprep.subr.mxu0 0.0
    %668 = vmatpush1.msra.mxu0 0.0
    %669 = vmatprep.subr.mxu0 0.0
    %670 = vmatpush1.msra.mxu0 0.0
    %671 = vmatprep.subr.mxu0 0.0
    %672 = vmatpush1.msra.mxu0 0.0
    %673 = vmatprep.subr.mxu0 0.0
    %674 = vmatpush1.msra.mxu0 0.0
    %675 = vmatprep.mubr.f32.mxu0 0.0
    %676 = vmatmul.mubr.f32.gmra.mrb[0].mxu0 %v591
    %v677 = vpop.f32.mrb[0].mxu0
    %v678 = vadd.f32 %v580, %v677
    %v679 = vpop.f32.mrb[0].mxu0
    %v680 = vadd.f32 %v580, %v679
    %681 = vmatprep.mubr.f32.mxu0 0.0
    %682 = vmatmul.mubr.f32.gmra.mrb[0].mxu0 %v594
    %v683 = vpop.f32.mrb[0].mxu0
    %v684 = vadd.f32 %v584, %v683
    %v685 = vpop.f32.mrb[0].mxu0
    %v686 = vadd.f32 %v584, %v685
    %687 = vmatprep.mubr.f32.mxu0 0.0
    %688 = vmatmul.mubr.f32.gmra.mrb[0].mxu0 %v597
    %v689 = vpop.f32.mrb[0].mxu0
    %v690 = vadd.f32 %v588, %v689
    %v691 = vpop.f32.mrb[0].mxu0
    %v692 = vadd.f32 %v588, %v691
    %693 = vdwg.mxu0
    %694 = vmatprep.subr.mxu0 %v565
    %695 = vmatpush1.msra.mxu0 %v564
    %696 = vmatprep.subr.mxu0 %v569
    %697 = vmatpush1.msra.mxu0 %v568
    %698 = vmatprep.subr.mxu0 %v609
    %699 = vmatpush1.msra.mxu0 %v606
    %700 = vmatprep.subr.mxu0 0.0
    %701 = vmatpush1.msra.mxu0 0.0
    %702 = vmatprep.subr.mxu0 0.0
    %703 = vmatpush1.msra.mxu0 0.0
    %704 = vmatprep.subr.mxu0 0.0
    %705 = vmatpush1.msra.mxu0 0.0
    %706 = vmatprep.subr.mxu0 0.0
    %707 = vmatpush1.msra.mxu0 0.0
    %708 = vmatprep.subr.mxu0 0.0
    %709 = vmatpush1.msra.mxu0 0.0
    %710 = vmatprep.subr.mxu0 0.0
    %711 = vmatpush1.msra.mxu0 0.0
    %712 = vmatprep.subr.mxu0 0.0
    %713 = vmatpush1.msra.mxu0 0.0
    %714 = vmatprep.subr.mxu0 0.0
    %715 = vmatpush1.msra.mxu0 0.0
    %716 = vmatprep.subr.mxu0 0.0
    %717 = vmatpush1.msra.mxu0 0.0
    %718 = vmatprep.subr.mxu0 0.0
    %719 = vmatpush1.msra.mxu0 0.0
    %720 = vmatprep.subr.mxu0 0.0
    %721 = vmatpush1.msra.mxu0 0.0
    %722 = vmatprep.subr.mxu0 0.0
    %723 = vmatpush1.msra.mxu0 0.0
    %724 = vmatprep.subr.mxu0 0.0
    %725 = vmatpush1.msra.mxu0 0.0
    %726 = vmatprep.subr.mxu0 0.0
    %727 = vmatpush1.msra.mxu0 0.0
    %728 = vmatprep.subr.mxu0 0.0
    %729 = vmatpush1.msra.mxu0 0.0
    %730 = vmatprep.subr.mxu0 0.0
    %731 = vmatpush1.msra.mxu0 0.0
    %732 = vmatprep.subr.mxu0 0.0
    %733 = vmatpush1.msra.mxu0 0.0
    %734 = vmatprep.subr.mxu0 0.0
    %735 = vmatpush1.msra.mxu0 0.0
    %736 = vmatprep.subr.mxu0 0.0
    %737 = vmatpush1.msra.mxu0 0.0
    %738 = vmatprep.subr.mxu0 0.0
    %739 = vmatpush1.msra.mxu0 0.0
    %740 = vmatprep.subr.mxu0 0.0
    %741 = vmatpush1.msra.mxu0 0.0
    %742 = vmatprep.subr.mxu0 0.0
    %743 = vmatpush1.msra.mxu0 0.0
    %744 = vmatprep.subr.mxu0 0.0
    %745 = vmatpush1.msra.mxu0 0.0
    %746 = vmatprep.subr.mxu0 0.0
    %747 = vmatpush1.msra.mxu0 0.0
    %748 = vmatprep.subr.mxu0 0.0
    %749 = vmatpush1.msra.mxu0 0.0
    %750 = vmatprep.subr.mxu0 0.0
    %751 = vmatpush1.msra.mxu0 0.0
    %752 = vmatprep.subr.mxu0 0.0
    %753 = vmatpush1.msra.mxu0 0.0
    %754 = vmatprep.subr.mxu0 0.0
    %755 = vmatpush1.msra.mxu0 0.0
    %756 = vmatprep.subr.mxu0 0.0
    %757 = vmatpush1.msra.mxu0 0.0
    %758 = vmatprep.mubr.f32.mxu0 0.0
    %759 = vmatmul.mubr.f32.gmra.mrb[0].mxu0 %v591
    %v760 = vpop.f32.mrb[0].mxu0
    %v761 = vadd.f32 %v580, %v760
    %v762 = vpop.f32.mrb[0].mxu0
    %v763 = vadd.f32 %v580, %v762
    %764 = vmatprep.mubr.f32.mxu0 0.0
    %765 = vmatmul.mubr.f32.gmra.mrb[0].mxu0 %v594
    %v766 = vpop.f32.mrb[0].mxu0
    %v767 = vadd.f32 %v584, %v766
    %v768 = vpop.f32.mrb[0].mxu0
    %v769 = vadd.f32 %v584, %v768
    %770 = vmatprep.mubr.f32.mxu0 0.0
    %771 = vmatmul.mubr.f32.gmra.mrb[0].mxu0 %v597
    %v772 = vpop.f32.mrb[0].mxu0
    %v773 = vadd.f32 %v588, %v772
    %v774 = vpop.f32.mrb[0].mxu0
    %v775 = vadd.f32 %v588, %v774
    %776 = vdwg.mxu0
    %s777 = scalar_lea.vmem %s1, 48
    %v778 = vld [vmem:[%s777] sm:$0xff]
    %v779 = vld [vmem:[%s777 + $0x8] sm:$0xff]
    %v780 = vld [vmem:[%s777 + $0x10] sm:$0xf]
    %v782 = vsel %vm73, %v778, 0
    %v785 = vsel %vm73, %v779, 0
    %v788 = vsel %vm73, %v780, 0
    %v791 = vsel %vm83, %v690, 0
    %v794 = vsel %vm83, %v692, 0
    %v797 = vsel %vm83, %v773, 0
    %v800 = vsel %vm83, %v775, 0
    %802 = vmatprep.subr.mxu0 %v680
    %803 = vmatpush1.msra.mxu0 %v678
    %804 = vmatprep.subr.mxu0 %v686
    %805 = vmatpush1.msra.mxu0 %v684
    %806 = vmatprep.subr.mxu0 %v794
    %807 = vmatpush1.msra.mxu0 %v791
    %808 = vmatprep.subr.mxu0 0.0
    %809 = vmatpush1.msra.mxu0 0.0
    %810 = vmatprep.subr.mxu0 0.0
    %811 = vmatpush1.msra.mxu0 0.0
    %812 = vmatprep.subr.mxu0 0.0
    %813 = vmatpush1.msra.mxu0 0.0
    %814 = vmatprep.subr.mxu0 0.0
    %815 = vmatpush1.msra.mxu0 0.0
    %816 = vmatprep.subr.mxu0 0.0
    %817 = vmatpush1.msra.mxu0 0.0
    %818 = vmatprep.subr.mxu0 0.0
    %819 = vmatpush1.msra.mxu0 0.0
    %820 = vmatprep.subr.mxu0 0.0
    %821 = vmatpush1.msra.mxu0 0.0
    %822 = vmatprep.subr.mxu0 0.0
    %823 = vmatpush1.msra.mxu0 0.0
    %824 = vmatprep.subr.mxu0 0.0
    %825 = vmatpush1.msra.mxu0 0.0
    %826 = vmatprep.subr.mxu0 0.0
    %827 = vmatpush1.msra.mxu0 0.0
    %828 = vmatprep.subr.mxu0 0.0
    %829 = vmatpush1.msra.mxu0 0.0
    %830 = vmatprep.subr.mxu0 0.0
    %831 = vmatpush1.msra.mxu0 0.0
    %832 = vmatprep.subr.mxu0 0.0
    %833 = vmatpush1.msra.mxu0 0.0
    %834 = vmatprep.subr.mxu0 0.0
    %835 = vmatpush1.msra.mxu0 0.0
    %836 = vmatprep.subr.mxu0 0.0
    %837 = vmatpush1.msra.mxu0 0.0
    %838 = vmatprep.subr.mxu0 0.0
    %839 = vmatpush1.msra.mxu0 0.0
    %840 = vmatprep.subr.mxu0 0.0
    %841 = vmatpush1.msra.mxu0 0.0
    %842 = vmatprep.subr.mxu0 0.0
    %843 = vmatpush1.msra.mxu0 0.0
    %844 = vmatprep.subr.mxu0 0.0
    %845 = vmatpush1.msra.mxu0 0.0
    %846 = vmatprep.subr.mxu0 0.0
    %847 = vmatpush1.msra.mxu0 0.0
    %848 = vmatprep.subr.mxu0 0.0
    %849 = vmatpush1.msra.mxu0 0.0
    %850 = vmatprep.subr.mxu0 0.0
    %851 = vmatpush1.msra.mxu0 0.0
    %852 = vmatprep.subr.mxu0 0.0
    %853 = vmatpush1.msra.mxu0 0.0
    %854 = vmatprep.subr.mxu0 0.0
    %855 = vmatpush1.msra.mxu0 0.0
    %856 = vmatprep.subr.mxu0 0.0
    %857 = vmatpush1.msra.mxu0 0.0
    %858 = vmatprep.subr.mxu0 0.0
    %859 = vmatpush1.msra.mxu0 0.0
    %860 = vmatprep.subr.mxu0 0.0
    %861 = vmatpush1.msra.mxu0 0.0
    %862 = vmatprep.subr.mxu0 0.0
    %863 = vmatpush1.msra.mxu0 0.0
    %864 = vmatprep.subr.mxu0 0.0
    %865 = vmatpush1.msra.mxu0 0.0
    %866 = vmatprep.mubr.f32.mxu0 0.0
    %867 = vmatmul.mubr.f32.gmra.mrb[0].mxu0 %v782
    %v868 = vpop.f32.mrb[0].mxu0
    %v869 = vadd.f32 0.0, %v868
    %v870 = vpop.f32.mrb[0].mxu0
    %v871 = vadd.f32 0.0, %v870
    %872 = vmatprep.mubr.f32.mxu0 0.0
    %873 = vmatmul.mubr.f32.gmra.mrb[0].mxu0 %v785
    %v874 = vpop.f32.mrb[0].mxu0
    %v875 = vadd.f32 0.0, %v874
    %v876 = vpop.f32.mrb[0].mxu0
    %v877 = vadd.f32 0.0, %v876
    %878 = vmatprep.mubr.f32.mxu0 0.0
    %879 = vmatmul.mubr.f32.gmra.mrb[0].mxu0 %v788
    %v880 = vpop.f32.mrb[0].mxu0
    %v881 = vadd.f32 0.0, %v880
    %v882 = vpop.f32.mrb[0].mxu0
    %v883 = vadd.f32 0.0, %v882
    %884 = vdwg.mxu0
    %885 = vmatprep.subr.mxu0 %v763
    %886 = vmatpush1.msra.mxu0 %v761
    %887 = vmatprep.subr.mxu0 %v769
    %888 = vmatpush1.msra.mxu0 %v767
    %889 = vmatprep.subr.mxu0 %v800
    %890 = vmatpush1.msra.mxu0 %v797
    %891 = vmatprep.subr.mxu0 0.0
    %892 = vmatpush1.msra.mxu0 0.0
    %893 = vmatprep.subr.mxu0 0.0
    %894 = vmatpush1.msra.mxu0 0.0
    %895 = vmatprep.subr.mxu0 0.0
    %896 = vmatpush1.msra.mxu0 0.0
    %897 = vmatprep.subr.mxu0 0.0
    %898 = vmatpush1.msra.mxu0 0.0
    %899 = vmatprep.subr.mxu0 0.0
    %900 = vmatpush1.msra.mxu0 0.0
    %901 = vmatprep.subr.mxu0 0.0
    %902 = vmatpush1.msra.mxu0 0.0
    %903 = vmatprep.subr.mxu0 0.0
    %904 = vmatpush1.msra.mxu0 0.0
    %905 = vmatprep.subr.mxu0 0.0
    %906 = vmatpush1.msra.mxu0 0.0
    %907 = vmatprep.subr.mxu0 0.0
    %908 = vmatpush1.msra.mxu0 0.0
    %909 = vmatprep.subr.mxu0 0.0
    %910 = vmatpush1.msra.mxu0 0.0
    %911 = vmatprep.subr.mxu0 0.0
    %912 = vmatpush1.msra.mxu0 0.0
    %913 = vmatprep.subr.mxu0 0.0
    %914 = vmatpush1.msra.mxu0 0.0
    %915 = vmatprep.subr.mxu0 0.0
    %916 = vmatpush1.msra.mxu0 0.0
    %917 = vmatprep.subr.mxu0 0.0
    %918 = vmatpush1.msra.mxu0 0.0
    %919 = vmatprep.subr.mxu0 0.0
    %920 = vmatpush1.msra.mxu0 0.0
    %921 = vmatprep.subr.mxu0 0.0
    %922 = vmatpush1.msra.mxu0 0.0
    %923 = vmatprep.subr.mxu0 0.0
    %924 = vmatpush1.msra.mxu0 0.0
    %925 = vmatprep.subr.mxu0 0.0
    %926 = vmatpush1.msra.mxu0 0.0
    %927 = vmatprep.subr.mxu0 0.0
    %928 = vmatpush1.msra.mxu0 0.0
    %929 = vmatprep.subr.mxu0 0.0
    %930 = vmatpush1.msra.mxu0 0.0
    %931 = vmatprep.subr.mxu0 0.0
    %932 = vmatpush1.msra.mxu0 0.0
    %933 = vmatprep.subr.mxu0 0.0
    %934 = vmatpush1.msra.mxu0 0.0
    %935 = vmatprep.subr.mxu0 0.0
    %936 = vmatpush1.msra.mxu0 0.0
    %937 = vmatprep.subr.mxu0 0.0
    %938 = vmatpush1.msra.mxu0 0.0
    %939 = vmatprep.subr.mxu0 0.0
    %940 = vmatpush1.msra.mxu0 0.0
    %941 = vmatprep.subr.mxu0 0.0
    %942 = vmatpush1.msra.mxu0 0.0
    %943 = vmatprep.subr.mxu0 0.0
    %944 = vmatpush1.msra.mxu0 0.0
    %945 = vmatprep.subr.mxu0 0.0
    %946 = vmatpush1.msra.mxu0 0.0
    %947 = vmatprep.subr.mxu0 0.0
    %948 = vmatpush1.msra.mxu0 0.0
    %949 = vmatprep.mubr.f32.mxu0 0.0
    %950 = vmatmul.mubr.f32.gmra.mrb[0].mxu0 %v782
    %v951 = vpop.f32.mrb[0].mxu0
    %v952 = vadd.f32 0.0, %v951
    %v953 = vpop.f32.mrb[0].mxu0
    %v954 = vadd.f32 0.0, %v953
    %955 = vmatprep.mubr.f32.mxu0 0.0
    %956 = vmatmul.mubr.f32.gmra.mrb[0].mxu0 %v785
    %v957 = vpop.f32.mrb[0].mxu0
    %v958 = vadd.f32 0.0, %v957
    %v959 = vpop.f32.mrb[0].mxu0
    %v960 = vadd.f32 0.0, %v959
    %961 = vmatprep.mubr.f32.mxu0 0.0
    %962 = vmatmul.mubr.f32.gmra.mrb[0].mxu0 %v788
    %v963 = vpop.f32.mrb[0].mxu0
    %v964 = vadd.f32 0.0, %v963
    %v965 = vpop.f32.mrb[0].mxu0
    %v966 = vadd.f32 0.0, %v965
    %967 = vdwg.mxu0
    %v968 = vld [vmem:[%s3] sm:$0xff]
    %v969 = vld [vmem:[%s3 + $0x8] sm:$0xff]
    %v970 = vld [vmem:[%s3 + $0x10] sm:$0xf]
    %971 = vrot.lane.b32.xlu0 %v869, 1
    %v972 = vpop.permute.xlu0 %971
    %973 = vrot.lane.b32.xlu0 %v875, 1
    %v974 = vpop.permute.xlu0 %973
    %975 = vrot.lane.b32.xlu0 %v881, 1
    %v976 = vpop.permute.xlu0 %975
    %977 = vrot.lane.b32.xlu0 %v871, 1
    %v978 = vpop.permute.xlu0 %977
    %979 = vrot.lane.b32.xlu0 %v877, 1
    %v980 = vpop.permute.xlu0 %979
    %981 = vrot.lane.b32.xlu0 %v883, 1
    %v982 = vpop.permute.xlu0 %981
    %983 = vrot.lane.b32.xlu0 %v952, 1
    %v984 = vpop.permute.xlu0 %983
    %985 = vrot.lane.b32.xlu0 %v958, 1
    %v986 = vpop.permute.xlu0 %985
    %987 = vrot.lane.b32.xlu0 %v964, 1
    %v988 = vpop.permute.xlu0 %987
    %989 = vrot.lane.b32.xlu0 %v954, 1
    %v990 = vpop.permute.xlu0 %989
    %991 = vrot.lane.b32.xlu0 %v960, 1
    %v992 = vpop.permute.xlu0 %991
    %993 = vrot.lane.b32.xlu0 %v966, 1
    %v994 = vpop.permute.xlu0 %993
    %v995 = vlaneseq
    %v996 = vand.u32 %v995, 127
    %vm997 = vcmp.lt.s32.totalorder %v996, 1
    %v998 = vsel %vm997, %v984, %v990
    %v999 = vsel %vm997, %v986, %v992
    %v1000 = vsel %vm997, %v988, %v994
    %v1001 = vsel %vm997, %v978, %v984
    %v1002 = vsel %vm997, %v980, %v986
    %v1003 = vsel %vm997, %v982, %v988
    %v1004 = vsel %vm997, %v972, %v978
    %v1005 = vsel %vm997, %v974, %v980
    %v1006 = vsel %vm997, %v976, %v982
    %v1007 = vsel %vm997, %v990, %v972
    %v1008 = vsel %vm997, %v992, %v974
    %v1009 = vsel %vm997, %v994, %v976
    %v1010 = vlaneseq
    %v1011 = vshrl.u32 %v1010, 7
    %v1012 = vsub.s32 0, %v1011
    %v1013 = vrot.slane %v51, %v1012
    %v1014 = vlaneseq
    %v1015 = vshrl.u32 %v1014, 7
    %v1016 = vsub.s32 0, %v1015
    %v1017 = vrot.slane %v52, %v1016
    %v1018 = vlaneseq
    %v1019 = vshrl.u32 %v1018, 7
    %v1020 = vsub.s32 0, %v1019
    %v1021 = vrot.slane %v53, %v1020
    %v1022 = vlaneseq
    %v1023 = vshrl.u32 %v1022, 7
    %v1024 = vsub.s32 0, %v1023
    %v1025 = vrot.slane %v54, %v1024
    %v1026 = vmul.f32 %v1007, %v1013
    %v1027 = vmul.f32 %v1004, %v1017
    %v1028 = vmul.f32 %v1001, %v1021
    %v1029 = vmul.f32 %v998, %v1025
    %v1030 = vmul.f32 %v1008, %v1013
    %v1031 = vmul.f32 %v1005, %v1017
    %v1032 = vmul.f32 %v1002, %v1021
    %v1033 = vmul.f32 %v999, %v1025
    %v1034 = vmul.f32 %v1009, %v1013
    %v1035 = vmul.f32 %v1006, %v1017
    %v1036 = vmul.f32 %v1003, %v1021
    %v1037 = vmul.f32 %v1000, %v1025
    %1038 = vrot.lane.b32.xlu0 %v869, 127
    %v1039 = vpop.permute.xlu0 %1038
    %1040 = vrot.lane.b32.xlu0 %v875, 127
    %v1041 = vpop.permute.xlu0 %1040
    %1042 = vrot.lane.b32.xlu0 %v881, 127
    %v1043 = vpop.permute.xlu0 %1042
    %1044 = vrot.lane.b32.xlu0 %v871, 127
    %v1045 = vpop.permute.xlu0 %1044
    %1046 = vrot.lane.b32.xlu0 %v877, 127
    %v1047 = vpop.permute.xlu0 %1046
    %1048 = vrot.lane.b32.xlu0 %v883, 127
    %v1049 = vpop.permute.xlu0 %1048
    %1050 = vrot.lane.b32.xlu0 %v952, 127
    %v1051 = vpop.permute.xlu0 %1050
    %1052 = vrot.lane.b32.xlu0 %v958, 127
    %v1053 = vpop.permute.xlu0 %1052
    %1054 = vrot.lane.b32.xlu0 %v964, 127
    %v1055 = vpop.permute.xlu0 %1054
    %1056 = vrot.lane.b32.xlu0 %v954, 127
    %v1057 = vpop.permute.xlu0 %1056
    %1058 = vrot.lane.b32.xlu0 %v960, 127
    %v1059 = vpop.permute.xlu0 %1058
    %1060 = vrot.lane.b32.xlu0 %v966, 127
    %v1061 = vpop.permute.xlu0 %1060
    %vm1062 = vcmp.lt.s32.totalorder %v996, 127
    %v1063 = vsel %vm1062, %v1051, %v1057
    %v1064 = vsel %vm1062, %v1053, %v1059
    %v1065 = vsel %vm1062, %v1055, %v1061
    %v1066 = vsel %vm1062, %v1045, %v1051
    %v1067 = vsel %vm1062, %v1047, %v1053
    %v1068 = vsel %vm1062, %v1049, %v1055
    %v1069 = vsel %vm1062, %v1039, %v1045
    %v1070 = vsel %vm1062, %v1041, %v1047
    %v1071 = vsel %vm1062, %v1043, %v1049
    %v1072 = vsel %vm1062, %v1057, %v1039
    %v1073 = vsel %vm1062, %v1059, %v1041
    %v1074 = vsel %vm1062, %v1061, %v1043
    %v1075 = vlaneseq
    %v1076 = vshrl.u32 %v1075, 7
    %v1077 = vsub.s32 1, %v1076
    %v1078 = vrot.slane %v51, %v1077
    %v1079 = vlaneseq
    %v1080 = vshrl.u32 %v1079, 7
    %v1081 = vsub.s32 1, %v1080
    %v1082 = vrot.slane %v52, %v1081
    %v1083 = vlaneseq
    %v1084 = vshrl.u32 %v1083, 7
    %v1085 = vsub.s32 1, %v1084
    %v1086 = vrot.slane %v53, %v1085
    %v1087 = vlaneseq
    %v1088 = vshrl.u32 %v1087, 7
    %v1089 = vsub.s32 1, %v1088
    %v1090 = vrot.slane %v54, %v1089
    %v1091 = vmul.f32 %v1069, %v1078
    %v1092 = vmul.f32 %v1066, %v1082
    %v1093 = vmul.f32 %v1063, %v1086
    %v1094 = vmul.f32 %v1072, %v1090
    %v1095 = vmul.f32 %v1070, %v1078
    %v1096 = vmul.f32 %v1067, %v1082
    %v1097 = vmul.f32 %v1064, %v1086
    %v1098 = vmul.f32 %v1073, %v1090
    %v1099 = vmul.f32 %v1071, %v1078
    %v1100 = vmul.f32 %v1068, %v1082
    %v1101 = vmul.f32 %v1065, %v1086
    %v1102 = vmul.f32 %v1074, %v1090
    %1104 = vset.pattern.permute.xlu0 3
    %1105 = vperm.xlu0 %1104, %v968
    %v1106 = vpop.permute.xlu0 %1105
    %1109 = vset.pattern.permute.xlu0 3
    %1110 = vperm.xlu0 %1109, %v969
    %v1111 = vpop.permute.xlu0 %1110
    %1114 = vset.pattern.permute.xlu0 3
    %1115 = vperm.xlu0 %1114, %v970
    %v1116 = vpop.permute.xlu0 %1115
    %v1118 = vmul.f32 %v1106, %v1026
    %v1119 = vmul.f32 %v1106, %v1027
    %v1120 = vmul.f32 %v1106, %v1028
    %v1121 = vmul.f32 %v1106, %v1029
    %v1122 = vmul.f32 %v1111, %v1030
    %v1123 = vmul.f32 %v1111, %v1031
    %v1124 = vmul.f32 %v1111, %v1032
    %v1125 = vmul.f32 %v1111, %v1033
    %v1126 = vmul.f32 %v1116, %v1034
    %v1127 = vmul.f32 %v1116, %v1035
    %v1128 = vmul.f32 %v1116, %v1036
    %v1129 = vmul.f32 %v1116, %v1037
    %1130 = vset.pattern.permute.xlu0 4
    %1131 = vperm.xlu0 %1130, %v968
    %v1132 = vpop.permute.xlu0 %1131
    %1134 = vset.pattern.permute.xlu0 4
    %1135 = vperm.xlu0 %1134, %v969
    %v1136 = vpop.permute.xlu0 %1135
    %1138 = vset.pattern.permute.xlu0 4
    %1139 = vperm.xlu0 %1138, %v970
    %v1140 = vpop.permute.xlu0 %1139
    %v1142 = vmul.f32 %v1132, %v869
    %v1143 = vmul.f32 %v1132, %v871
    %v1144 = vmul.f32 %v1132, %v952
    %v1145 = vmul.f32 %v1132, %v954
    %v1146 = vmul.f32 %v1136, %v875
    %v1147 = vmul.f32 %v1136, %v877
    %v1148 = vmul.f32 %v1136, %v958
    %v1149 = vmul.f32 %v1136, %v960
    %v1150 = vmul.f32 %v1140, %v881
    %v1151 = vmul.f32 %v1140, %v883
    %v1152 = vmul.f32 %v1140, %v964
    %v1153 = vmul.f32 %v1140, %v966
    %v1154 = vadd.f32 %v1118, %v1142
    %v1155 = vadd.f32 %v1119, %v1143
    %v1156 = vadd.f32 %v1120, %v1144
    %v1157 = vadd.f32 %v1121, %v1145
    %v1158 = vadd.f32 %v1122, %v1146
    %v1159 = vadd.f32 %v1123, %v1147
    %v1160 = vadd.f32 %v1124, %v1148
    %v1161 = vadd.f32 %v1125, %v1149
    %v1162 = vadd.f32 %v1126, %v1150
    %v1163 = vadd.f32 %v1127, %v1151
    %v1164 = vadd.f32 %v1128, %v1152
    %v1165 = vadd.f32 %v1129, %v1153
    %1166 = vset.pattern.permute.xlu0 5
    %1167 = vperm.xlu0 %1166, %v968
    %v1168 = vpop.permute.xlu0 %1167
    %1170 = vset.pattern.permute.xlu0 5
    %1171 = vperm.xlu0 %1170, %v969
    %v1172 = vpop.permute.xlu0 %1171
    %1174 = vset.pattern.permute.xlu0 5
    %1175 = vperm.xlu0 %1174, %v970
    %v1176 = vpop.permute.xlu0 %1175
    %v1178 = vmul.f32 %v1168, %v1091
    %v1179 = vmul.f32 %v1168, %v1092
    %v1180 = vmul.f32 %v1168, %v1093
    %v1181 = vmul.f32 %v1168, %v1094
    %v1182 = vmul.f32 %v1172, %v1095
    %v1183 = vmul.f32 %v1172, %v1096
    %v1184 = vmul.f32 %v1172, %v1097
    %v1185 = vmul.f32 %v1172, %v1098
    %v1186 = vmul.f32 %v1176, %v1099
    %v1187 = vmul.f32 %v1176, %v1100
    %v1188 = vmul.f32 %v1176, %v1101
    %v1189 = vmul.f32 %v1176, %v1102
    %v1190 = vadd.f32 %v1154, %v1178
    %v1191 = vadd.f32 %v1155, %v1179
    %v1192 = vadd.f32 %v1156, %v1180
    %v1193 = vadd.f32 %v1157, %v1181
    %v1194 = vadd.f32 %v1158, %v1182
    %v1195 = vadd.f32 %v1159, %v1183
    %v1196 = vadd.f32 %v1160, %v1184
    %v1197 = vadd.f32 %v1161, %v1185
    %v1198 = vadd.f32 %v1162, %v1186
    %v1199 = vadd.f32 %v1163, %v1187
    %v1200 = vadd.f32 %v1164, %v1188
    %v1201 = vadd.f32 %v1165, %v1189
    %1202 = vset.pattern.permute.xlu0 2
    %1203 = vperm.xlu0 %1202, %v48
    %v1204 = vpop.permute.xlu0 %1203
    %1206 = vset.pattern.permute.xlu0 2
    %1207 = vperm.xlu0 %1206, %v49
    %v1208 = vpop.permute.xlu0 %1207
    %1210 = vset.pattern.permute.xlu0 2
    %1211 = vperm.xlu0 %1210, %v50
    %v1212 = vpop.permute.xlu0 %1211
    %v1214 = vadd.f32 %v1204, %v1190
    %v1215 = vadd.f32 %v1204, %v1191
    %v1216 = vadd.f32 %v1204, %v1192
    %v1217 = vadd.f32 %v1204, %v1193
    %v1218 = vadd.f32 %v1208, %v1194
    %v1219 = vadd.f32 %v1208, %v1195
    %v1220 = vadd.f32 %v1208, %v1196
    %v1221 = vadd.f32 %v1208, %v1197
    %v1222 = vadd.f32 %v1212, %v1198
    %v1223 = vadd.f32 %v1212, %v1199
    %v1224 = vadd.f32 %v1212, %v1200
    %v1225 = vadd.f32 %v1212, %v1201
    %1226 = vset.pattern.permute.xlu0 0
    %1227 = vperm.xlu0 %1226, %v968
    %v1228 = vpop.permute.xlu0 %1227
    %1230 = vset.pattern.permute.xlu0 0
    %1231 = vperm.xlu0 %1230, %v969
    %v1232 = vpop.permute.xlu0 %1231
    %1234 = vset.pattern.permute.xlu0 0
    %1235 = vperm.xlu0 %1234, %v970
    %v1236 = vpop.permute.xlu0 %1235
    %v1238 = vmul.f32 %v1228, %v1026
    %v1239 = vmul.f32 %v1228, %v1027
    %v1240 = vmul.f32 %v1228, %v1028
    %v1241 = vmul.f32 %v1228, %v1029
    %v1242 = vmul.f32 %v1232, %v1030
    %v1243 = vmul.f32 %v1232, %v1031
    %v1244 = vmul.f32 %v1232, %v1032
    %v1245 = vmul.f32 %v1232, %v1033
    %v1246 = vmul.f32 %v1236, %v1034
    %v1247 = vmul.f32 %v1236, %v1035
    %v1248 = vmul.f32 %v1236, %v1036
    %v1249 = vmul.f32 %v1236, %v1037
    %1250 = vset.pattern.permute.xlu0 1
    %1251 = vperm.xlu0 %1250, %v968
    %v1252 = vpop.permute.xlu0 %1251
    %1254 = vset.pattern.permute.xlu0 1
    %1255 = vperm.xlu0 %1254, %v969
    %v1256 = vpop.permute.xlu0 %1255
    %1258 = vset.pattern.permute.xlu0 1
    %1259 = vperm.xlu0 %1258, %v970
    %v1260 = vpop.permute.xlu0 %1259
    %v1262 = vmul.f32 %v1252, %v869
    %v1263 = vmul.f32 %v1252, %v871
    %v1264 = vmul.f32 %v1252, %v952
    %v1265 = vmul.f32 %v1252, %v954
    %v1266 = vmul.f32 %v1256, %v875
    %v1267 = vmul.f32 %v1256, %v877
    %v1268 = vmul.f32 %v1256, %v958
    %v1269 = vmul.f32 %v1256, %v960
    %v1270 = vmul.f32 %v1260, %v881
    %v1271 = vmul.f32 %v1260, %v883
    %v1272 = vmul.f32 %v1260, %v964
    %v1273 = vmul.f32 %v1260, %v966
    %v1274 = vadd.f32 %v1238, %v1262
    %v1275 = vadd.f32 %v1239, %v1263
    %v1276 = vadd.f32 %v1240, %v1264
    %v1277 = vadd.f32 %v1241, %v1265
    %v1278 = vadd.f32 %v1242, %v1266
    %v1279 = vadd.f32 %v1243, %v1267
    %v1280 = vadd.f32 %v1244, %v1268
    %v1281 = vadd.f32 %v1245, %v1269
    %v1282 = vadd.f32 %v1246, %v1270
    %v1283 = vadd.f32 %v1247, %v1271
    %v1284 = vadd.f32 %v1248, %v1272
    %v1285 = vadd.f32 %v1249, %v1273
    %1286 = vset.pattern.permute.xlu0 2
    %1287 = vperm.xlu0 %1286, %v968
    %v1288 = vpop.permute.xlu0 %1287
    %1290 = vset.pattern.permute.xlu0 2
    %1291 = vperm.xlu0 %1290, %v969
    %v1292 = vpop.permute.xlu0 %1291
    %1294 = vset.pattern.permute.xlu0 2
    %1295 = vperm.xlu0 %1294, %v970
    %v1296 = vpop.permute.xlu0 %1295
    %v1298 = vmul.f32 %v1288, %v1091
    %v1299 = vmul.f32 %v1288, %v1092
    %v1300 = vmul.f32 %v1288, %v1093
    %v1301 = vmul.f32 %v1288, %v1094
    %v1302 = vmul.f32 %v1292, %v1095
    %v1303 = vmul.f32 %v1292, %v1096
    %v1304 = vmul.f32 %v1292, %v1097
    %v1305 = vmul.f32 %v1292, %v1098
    %v1306 = vmul.f32 %v1296, %v1099
    %v1307 = vmul.f32 %v1296, %v1100
    %v1308 = vmul.f32 %v1296, %v1101
    %v1309 = vmul.f32 %v1296, %v1102
    %v1310 = vadd.f32 %v1274, %v1298
    %v1311 = vadd.f32 %v1275, %v1299
    %v1312 = vadd.f32 %v1276, %v1300
    %v1313 = vadd.f32 %v1277, %v1301
    %v1314 = vadd.f32 %v1278, %v1302
    %v1315 = vadd.f32 %v1279, %v1303
    %v1316 = vadd.f32 %v1280, %v1304
    %v1317 = vadd.f32 %v1281, %v1305
    %v1318 = vadd.f32 %v1282, %v1306
    %v1319 = vadd.f32 %v1283, %v1307
    %v1320 = vadd.f32 %v1284, %v1308
    %v1321 = vadd.f32 %v1285, %v1309
    %1322 = vrot.lane.b32.xlu0 %v1310, 16
    %v1323 = vpop.permute.xlu0 %1322
    %1324 = vrot.lane.b32.xlu0 %v1314, 16
    %v1325 = vpop.permute.xlu0 %1324
    %1326 = vrot.lane.b32.xlu0 %v1318, 16
    %v1327 = vpop.permute.xlu0 %1326
    %1328 = vrot.lane.b32.xlu0 %v1311, 16
    %v1329 = vpop.permute.xlu0 %1328
    %1330 = vrot.lane.b32.xlu0 %v1315, 16
    %v1331 = vpop.permute.xlu0 %1330
    %1332 = vrot.lane.b32.xlu0 %v1319, 16
    %v1333 = vpop.permute.xlu0 %1332
    %1334 = vrot.lane.b32.xlu0 %v1312, 16
    %v1335 = vpop.permute.xlu0 %1334
    %1336 = vrot.lane.b32.xlu0 %v1316, 16
    %v1337 = vpop.permute.xlu0 %1336
    %1338 = vrot.lane.b32.xlu0 %v1320, 16
    %v1339 = vpop.permute.xlu0 %1338
    %1340 = vrot.lane.b32.xlu0 %v1313, 16
    %v1341 = vpop.permute.xlu0 %1340
    %1342 = vrot.lane.b32.xlu0 %v1317, 16
    %v1343 = vpop.permute.xlu0 %1342
    %1344 = vrot.lane.b32.xlu0 %v1321, 16
    %v1345 = vpop.permute.xlu0 %1344
    %vm1346 = vcmp.lt.s32.totalorder %v996, 16
    %v1347 = vsel %vm1346, %v1335, %v1341
    %v1348 = vsel %vm1346, %v1337, %v1343
    %v1349 = vsel %vm1346, %v1339, %v1345
    %v1350 = vsel %vm1346, %v1329, %v1335
    %v1351 = vsel %vm1346, %v1331, %v1337
    %v1352 = vsel %vm1346, %v1333, %v1339
    %v1353 = vsel %vm1346, %v1323, %v1329
    %v1354 = vsel %vm1346, %v1325, %v1331
    %v1355 = vsel %vm1346, %v1327, %v1333
    %v1356 = vsel %vm1346, %v1341, %v1323
    %v1357 = vsel %vm1346, %v1343, %v1325
    %v1358 = vsel %vm1346, %v1345, %v1327
    %v1359 = vlaneseq
    %v1360 = vshrl.u32 %v1359, 7
    %v1361 = vsub.s32 2, %v1360
    %v1362 = vrot.slane %v51, %v1361
    %v1363 = vlaneseq
    %v1364 = vshrl.u32 %v1363, 7
    %v1365 = vsub.s32 2, %v1364
    %v1366 = vrot.slane %v52, %v1365
    %v1367 = vlaneseq
    %v1368 = vshrl.u32 %v1367, 7
    %v1369 = vsub.s32 2, %v1368
    %v1370 = vrot.slane %v53, %v1369
    %v1371 = vlaneseq
    %v1372 = vshrl.u32 %v1371, 7
    %v1373 = vsub.s32 2, %v1372
    %v1374 = vrot.slane %v54, %v1373
    %v1375 = vmul.f32 %v1356, %v1362
    %v1376 = vmul.f32 %v1353, %v1366
    %v1377 = vmul.f32 %v1350, %v1370
    %v1378 = vmul.f32 %v1347, %v1374
    %v1379 = vmul.f32 %v1357, %v1362
    %v1380 = vmul.f32 %v1354, %v1366
    %v1381 = vmul.f32 %v1351, %v1370
    %v1382 = vmul.f32 %v1348, %v1374
    %v1383 = vmul.f32 %v1358, %v1362
    %v1384 = vmul.f32 %v1355, %v1366
    %v1385 = vmul.f32 %v1352, %v1370
    %v1386 = vmul.f32 %v1349, %v1374
    %v1387 = vadd.f32 %v1214, %v1375
    %v1388 = vadd.f32 %v1215, %v1376
    %v1389 = vadd.f32 %v1216, %v1377
    %v1390 = vadd.f32 %v1217, %v1378
    %v1391 = vadd.f32 %v1218, %v1379
    %v1392 = vadd.f32 %v1219, %v1380
    %v1393 = vadd.f32 %v1220, %v1381
    %v1394 = vadd.f32 %v1221, %v1382
    %v1395 = vadd.f32 %v1222, %v1383
    %v1396 = vadd.f32 %v1223, %v1384
    %v1397 = vadd.f32 %v1224, %v1385
    %v1398 = vadd.f32 %v1225, %v1386
    %1399 = vset.pattern.permute.xlu0 6
    %1400 = vperm.xlu0 %1399, %v968
    %v1401 = vpop.permute.xlu0 %1400
    %1403 = vset.pattern.permute.xlu0 6
    %1404 = vperm.xlu0 %1403, %v969
    %v1405 = vpop.permute.xlu0 %1404
    %1407 = vset.pattern.permute.xlu0 6
    %1408 = vperm.xlu0 %1407, %v970
    %v1409 = vpop.permute.xlu0 %1408
    %v1411 = vmul.f32 %v1401, %v1026
    %v1412 = vmul.f32 %v1401, %v1027
    %v1413 = vmul.f32 %v1401, %v1028
    %v1414 = vmul.f32 %v1401, %v1029
    %v1415 = vmul.f32 %v1405, %v1030
    %v1416 = vmul.f32 %v1405, %v1031
    %v1417 = vmul.f32 %v1405, %v1032
    %v1418 = vmul.f32 %v1405, %v1033
    %v1419 = vmul.f32 %v1409, %v1034
    %v1420 = vmul.f32 %v1409, %v1035
    %v1421 = vmul.f32 %v1409, %v1036
    %v1422 = vmul.f32 %v1409, %v1037
    %1423 = vset.pattern.permute.xlu0 7
    %1424 = vperm.xlu0 %1423, %v968
    %v1425 = vpop.permute.xlu0 %1424
    %1427 = vset.pattern.permute.xlu0 7
    %1428 = vperm.xlu0 %1427, %v969
    %v1429 = vpop.permute.xlu0 %1428
    %1431 = vset.pattern.permute.xlu0 7
    %1432 = vperm.xlu0 %1431, %v970
    %v1433 = vpop.permute.xlu0 %1432
    %v1435 = vmul.f32 %v1425, %v869
    %v1436 = vmul.f32 %v1425, %v871
    %v1437 = vmul.f32 %v1425, %v952
    %v1438 = vmul.f32 %v1425, %v954
    %v1439 = vmul.f32 %v1429, %v875
    %v1440 = vmul.f32 %v1429, %v877
    %v1441 = vmul.f32 %v1429, %v958
    %v1442 = vmul.f32 %v1429, %v960
    %v1443 = vmul.f32 %v1433, %v881
    %v1444 = vmul.f32 %v1433, %v883
    %v1445 = vmul.f32 %v1433, %v964
    %v1446 = vmul.f32 %v1433, %v966
    %v1447 = vadd.f32 %v1411, %v1435
    %v1448 = vadd.f32 %v1412, %v1436
    %v1449 = vadd.f32 %v1413, %v1437
    %v1450 = vadd.f32 %v1414, %v1438
    %v1451 = vadd.f32 %v1415, %v1439
    %v1452 = vadd.f32 %v1416, %v1440
    %v1453 = vadd.f32 %v1417, %v1441
    %v1454 = vadd.f32 %v1418, %v1442
    %v1455 = vadd.f32 %v1419, %v1443
    %v1456 = vadd.f32 %v1420, %v1444
    %v1457 = vadd.f32 %v1421, %v1445
    %v1458 = vadd.f32 %v1422, %v1446
    %1459 = vset.pattern.permute.xlu0 8
    %1460 = vperm.xlu0 %1459, %v968
    %v1461 = vpop.permute.xlu0 %1460
    %1463 = vset.pattern.permute.xlu0 8
    %1464 = vperm.xlu0 %1463, %v969
    %v1465 = vpop.permute.xlu0 %1464
    %1467 = vset.pattern.permute.xlu0 8
    %1468 = vperm.xlu0 %1467, %v970
    %v1469 = vpop.permute.xlu0 %1468
    %v1471 = vmul.f32 %v1461, %v1091
    %v1472 = vmul.f32 %v1461, %v1092
    %v1473 = vmul.f32 %v1461, %v1093
    %v1474 = vmul.f32 %v1461, %v1094
    %v1475 = vmul.f32 %v1465, %v1095
    %v1476 = vmul.f32 %v1465, %v1096
    %v1477 = vmul.f32 %v1465, %v1097
    %v1478 = vmul.f32 %v1465, %v1098
    %v1479 = vmul.f32 %v1469, %v1099
    %v1480 = vmul.f32 %v1469, %v1100
    %v1481 = vmul.f32 %v1469, %v1101
    %v1482 = vmul.f32 %v1469, %v1102
    %v1483 = vadd.f32 %v1447, %v1471
    %v1484 = vadd.f32 %v1448, %v1472
    %v1485 = vadd.f32 %v1449, %v1473
    %v1486 = vadd.f32 %v1450, %v1474
    %v1487 = vadd.f32 %v1451, %v1475
    %v1488 = vadd.f32 %v1452, %v1476
    %v1489 = vadd.f32 %v1453, %v1477
    %v1490 = vadd.f32 %v1454, %v1478
    %v1491 = vadd.f32 %v1455, %v1479
    %v1492 = vadd.f32 %v1456, %v1480
    %v1493 = vadd.f32 %v1457, %v1481
    %v1494 = vadd.f32 %v1458, %v1482
    %1495 = vrot.lane.b32.xlu0 %v1483, 112
    %v1496 = vpop.permute.xlu0 %1495
    %1497 = vrot.lane.b32.xlu0 %v1487, 112
    %v1498 = vpop.permute.xlu0 %1497
    %1499 = vrot.lane.b32.xlu0 %v1491, 112
    %v1500 = vpop.permute.xlu0 %1499
    %1501 = vrot.lane.b32.xlu0 %v1484, 112
    %v1502 = vpop.permute.xlu0 %1501
    %1503 = vrot.lane.b32.xlu0 %v1488, 112
    %v1504 = vpop.permute.xlu0 %1503
    %1505 = vrot.lane.b32.xlu0 %v1492, 112
    %v1506 = vpop.permute.xlu0 %1505
    %1507 = vrot.lane.b32.xlu0 %v1485, 112
    %v1508 = vpop.permute.xlu0 %1507
    %1509 = vrot.lane.b32.xlu0 %v1489, 112
    %v1510 = vpop.permute.xlu0 %1509
    %1511 = vrot.lane.b32.xlu0 %v1493, 112
    %v1512 = vpop.permute.xlu0 %1511
    %1513 = vrot.lane.b32.xlu0 %v1486, 112
    %v1514 = vpop.permute.xlu0 %1513
    %1515 = vrot.lane.b32.xlu0 %v1490, 112
    %v1516 = vpop.permute.xlu0 %1515
    %1517 = vrot.lane.b32.xlu0 %v1494, 112
    %v1518 = vpop.permute.xlu0 %1517
    %vm1519 = vcmp.lt.s32.totalorder %v996, 112
    %v1520 = vsel %vm1519, %v1508, %v1514
    %v1521 = vsel %vm1519, %v1510, %v1516
    %v1522 = vsel %vm1519, %v1512, %v1518
    %v1523 = vsel %vm1519, %v1502, %v1508
    %v1524 = vsel %vm1519, %v1504, %v1510
    %v1525 = vsel %vm1519, %v1506, %v1512
    %v1526 = vsel %vm1519, %v1496, %v1502
    %v1527 = vsel %vm1519, %v1498, %v1504
    %v1528 = vsel %vm1519, %v1500, %v1506
    %v1529 = vsel %vm1519, %v1514, %v1496
    %v1530 = vsel %vm1519, %v1516, %v1498
    %v1531 = vsel %vm1519, %v1518, %v1500
    %v1532 = vlaneseq
    %v1533 = vshrl.u32 %v1532, 7
    %v1534 = vsub.s32 3, %v1533
    %v1535 = vrot.slane %v51, %v1534
    %v1536 = vlaneseq
    %v1537 = vshrl.u32 %v1536, 7
    %v1538 = vsub.s32 3, %v1537
    %v1539 = vrot.slane %v52, %v1538
    %v1540 = vlaneseq
    %v1541 = vshrl.u32 %v1540, 7
    %v1542 = vsub.s32 3, %v1541
    %v1543 = vrot.slane %v53, %v1542
    %v1544 = vlaneseq
    %v1545 = vshrl.u32 %v1544, 7
    %v1546 = vsub.s32 3, %v1545
    %v1547 = vrot.slane %v54, %v1546
    %v1548 = vmul.f32 %v1526, %v1535
    %v1549 = vmul.f32 %v1523, %v1539
    %v1550 = vmul.f32 %v1520, %v1543
    %v1551 = vmul.f32 %v1529, %v1547
    %v1552 = vmul.f32 %v1527, %v1535
    %v1553 = vmul.f32 %v1524, %v1539
    %v1554 = vmul.f32 %v1521, %v1543
    %v1555 = vmul.f32 %v1530, %v1547
    %v1556 = vmul.f32 %v1528, %v1535
    %v1557 = vmul.f32 %v1525, %v1539
    %v1558 = vmul.f32 %v1522, %v1543
    %v1559 = vmul.f32 %v1531, %v1547
    %v1560 = vadd.f32 %v1387, %v1548
    %v1561 = vadd.f32 %v1388, %v1549
    %v1562 = vadd.f32 %v1389, %v1550
    %v1563 = vadd.f32 %v1390, %v1551
    %v1564 = vadd.f32 %v1391, %v1552
    %v1565 = vadd.f32 %v1392, %v1553
    %v1566 = vadd.f32 %v1393, %v1554
    %v1567 = vadd.f32 %v1394, %v1555
    %v1568 = vadd.f32 %v1395, %v1556
    %v1569 = vadd.f32 %v1396, %v1557
    %v1570 = vadd.f32 %v1397, %v1558
    %v1571 = vadd.f32 %v1398, %v1559
    %v1572 = vmul.f32 %v1560, 0.05
    %v1573 = vmul.f32 %v1561, 0.05
    %v1574 = vmul.f32 %v1562, 0.05
    %v1575 = vmul.f32 %v1563, 0.05
    %v1576 = vmul.f32 %v1564, 0.05
    %v1577 = vmul.f32 %v1565, 0.05
    %v1578 = vmul.f32 %v1566, 0.05
    %v1579 = vmul.f32 %v1567, 0.05
    %v1580 = vmul.f32 %v1568, 0.05
    %v1581 = vmul.f32 %v1569, 0.05
    %v1582 = vmul.f32 %v1570, 0.05
    %v1583 = vmul.f32 %v1571, 0.05
    %v1584 = vmax.f32 %v1560, %v1572
    %v1585 = vmax.f32 %v1561, %v1573
    %v1586 = vmax.f32 %v1562, %v1574
    %v1587 = vmax.f32 %v1563, %v1575
    %v1588 = vmax.f32 %v1564, %v1576
    %v1589 = vmax.f32 %v1565, %v1577
    %v1590 = vmax.f32 %v1566, %v1578
    %v1591 = vmax.f32 %v1567, %v1579
    %v1592 = vmax.f32 %v1568, %v1580
    %v1593 = vmax.f32 %v1569, %v1581
    %v1594 = vmax.f32 %v1570, %v1582
    %v1595 = vmax.f32 %v1571, %v1583
    %v1596 = vlaneseq
    %v1597 = vshrl.u32 %v1596, 7
    %v1598 = vsub.s32 4, %v1597
    %v1599 = vrot.slane %v51, %v1598
    %v1600 = vlaneseq
    %v1601 = vshrl.u32 %v1600, 7
    %v1602 = vsub.s32 4, %v1601
    %v1603 = vrot.slane %v52, %v1602
    %v1604 = vlaneseq
    %v1605 = vshrl.u32 %v1604, 7
    %v1606 = vsub.s32 4, %v1605
    %v1607 = vrot.slane %v53, %v1606
    %v1608 = vlaneseq
    %v1609 = vshrl.u32 %v1608, 7
    %v1610 = vsub.s32 4, %v1609
    %v1611 = vrot.slane %v54, %v1610
    %v1612 = vmul.f32 %v1584, %v1599
    %v1613 = vmul.f32 %v1585, %v1603
    %v1614 = vmul.f32 %v1586, %v1607
    %v1615 = vmul.f32 %v1587, %v1611
    %v1616 = vmul.f32 %v1588, %v1599
    %v1617 = vmul.f32 %v1589, %v1603
    %v1618 = vmul.f32 %v1590, %v1607
    %v1619 = vmul.f32 %v1591, %v1611
    %v1620 = vmul.f32 %v1592, %v1599
    %v1621 = vmul.f32 %v1593, %v1603
    %v1622 = vmul.f32 %v1594, %v1607
    %v1623 = vmul.f32 %v1595, %v1611
    %v1624 = vadd.f32 %v1612, %v1613
    %v1625 = vadd.f32 %v1624, %v1614
    %v1626 = vadd.f32 %v1625, %v1615
    %1627 = vadd.xlane.f32.xlu0 %v1626
    %v1628 = vpop.xlane.xlu0 %1627
    %v1629 = vadd.f32 %v1616, %v1617
    %v1630 = vadd.f32 %v1629, %v1618
    %v1631 = vadd.f32 %v1630, %v1619
    %1632 = vadd.xlane.f32.xlu0 %v1631
    %v1633 = vpop.xlane.xlu0 %1632
    %v1634 = vsel %vm83, %v1620, 0.0
    %v1635 = vsel %vm83, %v1621, 0.0
    %v1636 = vadd.f32 %v1634, %v1635
    %v1637 = vsel %vm83, %v1622, 0.0
    %v1638 = vadd.f32 %v1636, %v1637
    %v1639 = vsel %vm83, %v1623, 0.0
    %v1640 = vadd.f32 %v1638, %v1639
    %1641 = vadd.xlane.f32.xlu0 %v1640
    %v1642 = vpop.xlane.xlu0 %1641
    %v1643 = vmul.f32 %v1628, 0.00390625
    %v1644 = vmul.f32 %v1633, 0.00390625
    %v1645 = vmul.f32 %v1642, 0.00390625
    %v1646 = vmul.f32 %v1643, %v1599
    %v1647 = vmul.f32 %v1643, %v1603
    %v1648 = vmul.f32 %v1643, %v1607
    %v1649 = vmul.f32 %v1643, %v1611
    %v1650 = vmul.f32 %v1644, %v1599
    %v1651 = vmul.f32 %v1644, %v1603
    %v1652 = vmul.f32 %v1644, %v1607
    %v1653 = vmul.f32 %v1644, %v1611
    %v1654 = vmul.f32 %v1645, %v1599
    %v1655 = vmul.f32 %v1645, %v1603
    %v1656 = vmul.f32 %v1645, %v1607
    %v1657 = vmul.f32 %v1645, %v1611
    %v1658 = vlaneseq
    %v1659 = vshrl.u32 %v1658, 7
    %v1660 = vsub.s32 5, %v1659
    %v1661 = vrot.slane %v51, %v1660
    %v1662 = vlaneseq
    %v1663 = vshrl.u32 %v1662, 7
    %v1664 = vsub.s32 5, %v1663
    %v1665 = vrot.slane %v52, %v1664
    %v1666 = vlaneseq
    %v1667 = vshrl.u32 %v1666, 7
    %v1668 = vsub.s32 5, %v1667
    %v1669 = vrot.slane %v53, %v1668
    %v1670 = vlaneseq
    %v1671 = vshrl.u32 %v1670, 7
    %v1672 = vsub.s32 5, %v1671
    %v1673 = vrot.slane %v54, %v1672
    %v1674 = vmul.f32 %v1584, %v1661
    %v1675 = vmul.f32 %v1585, %v1665
    %v1676 = vmul.f32 %v1586, %v1669
    %v1677 = vmul.f32 %v1587, %v1673
    %v1678 = vmul.f32 %v1588, %v1661
    %v1679 = vmul.f32 %v1589, %v1665
    %v1680 = vmul.f32 %v1590, %v1669
    %v1681 = vmul.f32 %v1591, %v1673
    %v1682 = vmul.f32 %v1592, %v1661
    %v1683 = vmul.f32 %v1593, %v1665
    %v1684 = vmul.f32 %v1594, %v1669
    %v1685 = vmul.f32 %v1595, %v1673
    %v1686 = vadd.f32 %v1674, %v1675
    %v1687 = vadd.f32 %v1686, %v1676
    %v1688 = vadd.f32 %v1687, %v1677
    %1689 = vadd.xlane.f32.xlu0 %v1688
    %v1690 = vpop.xlane.xlu0 %1689
    %v1691 = vadd.f32 %v1678, %v1679
    %v1692 = vadd.f32 %v1691, %v1680
    %v1693 = vadd.f32 %v1692, %v1681
    %1694 = vadd.xlane.f32.xlu0 %v1693
    %v1695 = vpop.xlane.xlu0 %1694
    %v1696 = vsel %vm83, %v1682, 0.0
    %v1697 = vsel %vm83, %v1683, 0.0
    %v1698 = vadd.f32 %v1696, %v1697
    %v1699 = vsel %vm83, %v1684, 0.0
    %v1700 = vadd.f32 %v1698, %v1699
    %v1701 = vsel %vm83, %v1685, 0.0
    %v1702 = vadd.f32 %v1700, %v1701
    %1703 = vadd.xlane.f32.xlu0 %v1702
    %v1704 = vpop.xlane.xlu0 %1703
    %v1705 = vmul.f32 %v1690, 0.00390625
    %v1706 = vmul.f32 %v1695, 0.00390625
    %v1707 = vmul.f32 %v1704, 0.00390625
    %v1708 = vmul.f32 %v1705, %v1661
    %v1709 = vmul.f32 %v1705, %v1665
    %v1710 = vmul.f32 %v1705, %v1669
    %v1711 = vmul.f32 %v1705, %v1673
    %v1712 = vmul.f32 %v1706, %v1661
    %v1713 = vmul.f32 %v1706, %v1665
    %v1714 = vmul.f32 %v1706, %v1669
    %v1715 = vmul.f32 %v1706, %v1673
    %v1716 = vmul.f32 %v1707, %v1661
    %v1717 = vmul.f32 %v1707, %v1665
    %v1718 = vmul.f32 %v1707, %v1669
    %v1719 = vmul.f32 %v1707, %v1673
    %v1720 = vadd.f32 %v1646, %v1708
    %v1721 = vadd.f32 %v1647, %v1709
    %v1722 = vadd.f32 %v1648, %v1710
    %v1723 = vadd.f32 %v1649, %v1711
    %v1724 = vadd.f32 %v1650, %v1712
    %v1725 = vadd.f32 %v1651, %v1713
    %v1726 = vadd.f32 %v1652, %v1714
    %v1727 = vadd.f32 %v1653, %v1715
    %v1728 = vadd.f32 %v1654, %v1716
    %v1729 = vadd.f32 %v1655, %v1717
    %v1730 = vadd.f32 %v1656, %v1718
    %v1731 = vadd.f32 %v1657, %v1719
    %v1732 = vsub.f32 %v1584, %v1720
    %v1733 = vsub.f32 %v1585, %v1721
    %v1734 = vsub.f32 %v1586, %v1722
    %v1735 = vsub.f32 %v1587, %v1723
    %v1736 = vsub.f32 %v1588, %v1724
    %v1737 = vsub.f32 %v1589, %v1725
    %v1738 = vsub.f32 %v1590, %v1726
    %v1739 = vsub.f32 %v1591, %v1727
    %v1740 = vsub.f32 %v1592, %v1728
    %v1741 = vsub.f32 %v1593, %v1729
    %v1742 = vsub.f32 %v1594, %v1730
    %v1743 = vsub.f32 %v1595, %v1731
    %v1744 = vmul.f32 %v1732, %v1732
    %v1745 = vmul.f32 %v1733, %v1733
    %v1746 = vmul.f32 %v1734, %v1734
    %v1747 = vmul.f32 %v1735, %v1735
    %v1748 = vmul.f32 %v1736, %v1736
    %v1749 = vmul.f32 %v1737, %v1737
    %v1750 = vmul.f32 %v1738, %v1738
    %v1751 = vmul.f32 %v1739, %v1739
    %v1752 = vmul.f32 %v1740, %v1740
    %v1753 = vmul.f32 %v1741, %v1741
    %v1754 = vmul.f32 %v1742, %v1742
    %v1755 = vmul.f32 %v1743, %v1743
    %v1756 = vmul.f32 %v1744, %v1599
    %v1757 = vmul.f32 %v1745, %v1603
    %v1758 = vmul.f32 %v1746, %v1607
    %v1759 = vmul.f32 %v1747, %v1611
    %v1760 = vmul.f32 %v1748, %v1599
    %v1761 = vmul.f32 %v1749, %v1603
    %v1762 = vmul.f32 %v1750, %v1607
    %v1763 = vmul.f32 %v1751, %v1611
    %v1764 = vmul.f32 %v1752, %v1599
    %v1765 = vmul.f32 %v1753, %v1603
    %v1766 = vmul.f32 %v1754, %v1607
    %v1767 = vmul.f32 %v1755, %v1611
    %v1768 = vadd.f32 %v1756, %v1757
    %v1769 = vadd.f32 %v1768, %v1758
    %v1770 = vadd.f32 %v1769, %v1759
    %1771 = vadd.xlane.f32.xlu0 %v1770
    %v1772 = vpop.xlane.xlu0 %1771
    %v1773 = vadd.f32 %v1760, %v1761
    %v1774 = vadd.f32 %v1773, %v1762
    %v1775 = vadd.f32 %v1774, %v1763
    %1776 = vadd.xlane.f32.xlu0 %v1775
    %v1777 = vpop.xlane.xlu0 %1776
    %v1778 = vsel %vm83, %v1764, 0.0
    %v1779 = vsel %vm83, %v1765, 0.0
    %v1780 = vadd.f32 %v1778, %v1779
    %v1781 = vsel %vm83, %v1766, 0.0
    %v1782 = vadd.f32 %v1780, %v1781
    %v1783 = vsel %vm83, %v1767, 0.0
    %v1784 = vadd.f32 %v1782, %v1783
    %1785 = vadd.xlane.f32.xlu0 %v1784
    %v1786 = vpop.xlane.xlu0 %1785
    %v1787 = vmul.f32 %v1772, 0.00390625
    %v1788 = vmul.f32 %v1777, 0.00390625
    %v1789 = vmul.f32 %v1786, 0.00390625
    %v1790 = vadd.f32 %v1787, 1e-05
    %v1791 = vadd.f32 %v1788, 1e-05
    %v1792 = vadd.f32 %v1789, 1e-05
    %v1793 = vrsqrt.pop %v1790
    %v1794 = vrsqrt.pop %v1791
    %v1795 = vrsqrt.pop %v1792
    %v1796 = vmul.f32 %v1793, %v1599
    %v1797 = vmul.f32 %v1793, %v1603
    %v1798 = vmul.f32 %v1793, %v1607
    %v1799 = vmul.f32 %v1793, %v1611
    %v1800 = vmul.f32 %v1794, %v1599
    %v1801 = vmul.f32 %v1794, %v1603
    %v1802 = vmul.f32 %v1794, %v1607
    %v1803 = vmul.f32 %v1794, %v1611
    %v1804 = vmul.f32 %v1795, %v1599
    %v1805 = vmul.f32 %v1795, %v1603
    %v1806 = vmul.f32 %v1795, %v1607
    %v1807 = vmul.f32 %v1795, %v1611
    %v1808 = vmul.f32 %v1744, %v1661
    %v1809 = vmul.f32 %v1745, %v1665
    %v1810 = vmul.f32 %v1746, %v1669
    %v1811 = vmul.f32 %v1747, %v1673
    %v1812 = vmul.f32 %v1748, %v1661
    %v1813 = vmul.f32 %v1749, %v1665
    %v1814 = vmul.f32 %v1750, %v1669
    %v1815 = vmul.f32 %v1751, %v1673
    %v1816 = vmul.f32 %v1752, %v1661
    %v1817 = vmul.f32 %v1753, %v1665
    %v1818 = vmul.f32 %v1754, %v1669
    %v1819 = vmul.f32 %v1755, %v1673
    %v1820 = vadd.f32 %v1808, %v1809
    %v1821 = vadd.f32 %v1820, %v1810
    %v1822 = vadd.f32 %v1821, %v1811
    %1823 = vadd.xlane.f32.xlu0 %v1822
    %v1824 = vpop.xlane.xlu0 %1823
    %v1825 = vadd.f32 %v1812, %v1813
    %v1826 = vadd.f32 %v1825, %v1814
    %v1827 = vadd.f32 %v1826, %v1815
    %1828 = vadd.xlane.f32.xlu0 %v1827
    %v1829 = vpop.xlane.xlu0 %1828
    %v1830 = vsel %vm83, %v1816, 0.0
    %v1831 = vsel %vm83, %v1817, 0.0
    %v1832 = vadd.f32 %v1830, %v1831
    %v1833 = vsel %vm83, %v1818, 0.0
    %v1834 = vadd.f32 %v1832, %v1833
    %v1835 = vsel %vm83, %v1819, 0.0
    %v1836 = vadd.f32 %v1834, %v1835
    %1837 = vadd.xlane.f32.xlu0 %v1836
    %v1838 = vpop.xlane.xlu0 %1837
    %v1839 = vmul.f32 %v1824, 0.00390625
    %v1840 = vmul.f32 %v1829, 0.00390625
    %v1841 = vmul.f32 %v1838, 0.00390625
    %v1842 = vadd.f32 %v1839, 1e-05
    %v1843 = vadd.f32 %v1840, 1e-05
    %v1844 = vadd.f32 %v1841, 1e-05
    %v1845 = vrsqrt.pop %v1842
    %v1846 = vrsqrt.pop %v1843
    %v1847 = vrsqrt.pop %v1844
    %v1848 = vmul.f32 %v1845, %v1661
    %v1849 = vmul.f32 %v1845, %v1665
    %v1850 = vmul.f32 %v1845, %v1669
    %v1851 = vmul.f32 %v1845, %v1673
    %v1852 = vmul.f32 %v1846, %v1661
    %v1853 = vmul.f32 %v1846, %v1665
    %v1854 = vmul.f32 %v1846, %v1669
    %v1855 = vmul.f32 %v1846, %v1673
    %v1856 = vmul.f32 %v1847, %v1661
    %v1857 = vmul.f32 %v1847, %v1665
    %v1858 = vmul.f32 %v1847, %v1669
    %v1859 = vmul.f32 %v1847, %v1673
    %v1860 = vadd.f32 %v1796, %v1848
    %v1861 = vadd.f32 %v1797, %v1849
    %v1862 = vadd.f32 %v1798, %v1850
    %v1863 = vadd.f32 %v1799, %v1851
    %v1864 = vadd.f32 %v1800, %v1852
    %v1865 = vadd.f32 %v1801, %v1853
    %v1866 = vadd.f32 %v1802, %v1854
    %v1867 = vadd.f32 %v1803, %v1855
    %v1868 = vadd.f32 %v1804, %v1856
    %v1869 = vadd.f32 %v1805, %v1857
    %v1870 = vadd.f32 %v1806, %v1858
    %v1871 = vadd.f32 %v1807, %v1859
    %v1872 = vmul.f32 %v1732, %v1860
    %v1873 = vmul.f32 %v1733, %v1861
    %v1874 = vmul.f32 %v1734, %v1862
    %v1875 = vmul.f32 %v1735, %v1863
    %v1876 = vmul.f32 %v1736, %v1864
    %v1877 = vmul.f32 %v1737, %v1865
    %v1878 = vmul.f32 %v1738, %v1866
    %v1879 = vmul.f32 %v1739, %v1867
    %v1880 = vmul.f32 %v1740, %v1868
    %v1881 = vmul.f32 %v1741, %v1869
    %v1882 = vmul.f32 %v1742, %v1870
    %v1883 = vmul.f32 %v1743, %v1871
    %1884 = vset.pattern.permute.xlu0 11
    %1885 = vperm.xlu0 %1884, %v48
    %v1886 = vpop.permute.xlu0 %1885
    %1888 = vset.pattern.permute.xlu0 11
    %1889 = vperm.xlu0 %1888, %v49
    %v1890 = vpop.permute.xlu0 %1889
    %1892 = vset.pattern.permute.xlu0 11
    %1893 = vperm.xlu0 %1892, %v50
    %v1894 = vpop.permute.xlu0 %1893
    %v1896 = vmul.f32 %v1886, %v1720
    %v1897 = vmul.f32 %v1886, %v1721
    %v1898 = vmul.f32 %v1886, %v1722
    %v1899 = vmul.f32 %v1886, %v1723
    %v1900 = vmul.f32 %v1890, %v1724
    %v1901 = vmul.f32 %v1890, %v1725
    %v1902 = vmul.f32 %v1890, %v1726
    %v1903 = vmul.f32 %v1890, %v1727
    %v1904 = vmul.f32 %v1894, %v1728
    %v1905 = vmul.f32 %v1894, %v1729
    %v1906 = vmul.f32 %v1894, %v1730
    %v1907 = vmul.f32 %v1894, %v1731
    %1908 = vset.pattern.permute.xlu0 12
    %1909 = vperm.xlu0 %1908, %v48
    %v1910 = vpop.permute.xlu0 %1909
    %1912 = vset.pattern.permute.xlu0 12
    %1913 = vperm.xlu0 %1912, %v49
    %v1914 = vpop.permute.xlu0 %1913
    %1916 = vset.pattern.permute.xlu0 12
    %1917 = vperm.xlu0 %1916, %v50
    %v1918 = vpop.permute.xlu0 %1917
    %v1920 = vadd.f32 %v1896, %v1910
    %v1921 = vadd.f32 %v1897, %v1910
    %v1922 = vadd.f32 %v1898, %v1910
    %v1923 = vadd.f32 %v1899, %v1910
    %v1924 = vadd.f32 %v1900, %v1914
    %v1925 = vadd.f32 %v1901, %v1914
    %v1926 = vadd.f32 %v1902, %v1914
    %v1927 = vadd.f32 %v1903, %v1914
    %v1928 = vadd.f32 %v1904, %v1918
    %v1929 = vadd.f32 %v1905, %v1918
    %v1930 = vadd.f32 %v1906, %v1918
    %v1931 = vadd.f32 %v1907, %v1918
    %1932 = vset.pattern.permute.xlu0 15
    %1933 = vperm.xlu0 %1932, %v48
    %v1934 = vpop.permute.xlu0 %1933
    %1936 = vset.pattern.permute.xlu0 15
    %1937 = vperm.xlu0 %1936, %v49
    %v1938 = vpop.permute.xlu0 %1937
    %1940 = vset.pattern.permute.xlu0 15
    %1941 = vperm.xlu0 %1940, %v50
    %v1942 = vpop.permute.xlu0 %1941
    %v1944 = vmul.f32 %v1934, %v1872
    %v1945 = vmul.f32 %v1934, %v1873
    %v1946 = vmul.f32 %v1934, %v1874
    %v1947 = vmul.f32 %v1934, %v1875
    %v1948 = vmul.f32 %v1938, %v1876
    %v1949 = vmul.f32 %v1938, %v1877
    %v1950 = vmul.f32 %v1938, %v1878
    %v1951 = vmul.f32 %v1938, %v1879
    %v1952 = vmul.f32 %v1942, %v1880
    %v1953 = vmul.f32 %v1942, %v1881
    %v1954 = vmul.f32 %v1942, %v1882
    %v1955 = vmul.f32 %v1942, %v1883
    %1956 = vset.pattern.permute.xlu0 16
    %1957 = vperm.xlu0 %1956, %v48
    %v1958 = vpop.permute.xlu0 %1957
    %1960 = vset.pattern.permute.xlu0 16
    %1961 = vperm.xlu0 %1960, %v49
    %v1962 = vpop.permute.xlu0 %1961
    %1964 = vset.pattern.permute.xlu0 16
    %1965 = vperm.xlu0 %1964, %v50
    %v1966 = vpop.permute.xlu0 %1965
    %v1968 = vadd.f32 %v1944, %v1958
    %v1969 = vadd.f32 %v1945, %v1958
    %v1970 = vadd.f32 %v1946, %v1958
    %v1971 = vadd.f32 %v1947, %v1958
    %v1972 = vadd.f32 %v1948, %v1962
    %v1973 = vadd.f32 %v1949, %v1962
    %v1974 = vadd.f32 %v1950, %v1962
    %v1975 = vadd.f32 %v1951, %v1962
    %v1976 = vadd.f32 %v1952, %v1966
    %v1977 = vadd.f32 %v1953, %v1966
    %v1978 = vadd.f32 %v1954, %v1966
    %v1979 = vadd.f32 %v1955, %v1966
    %1980 = vset.pattern.permute.xlu0 13
    %1981 = vperm.xlu0 %1980, %v48
    %v1982 = vpop.permute.xlu0 %1981
    %1984 = vset.pattern.permute.xlu0 13
    %1985 = vperm.xlu0 %1984, %v49
    %v1986 = vpop.permute.xlu0 %1985
    %1988 = vset.pattern.permute.xlu0 13
    %1989 = vperm.xlu0 %1988, %v50
    %v1990 = vpop.permute.xlu0 %1989
    %v1992 = vmul.f32 %v1982, %v1968
    %v1993 = vmul.f32 %v1982, %v1969
    %v1994 = vmul.f32 %v1982, %v1970
    %v1995 = vmul.f32 %v1982, %v1971
    %v1996 = vmul.f32 %v1986, %v1972
    %v1997 = vmul.f32 %v1986, %v1973
    %v1998 = vmul.f32 %v1986, %v1974
    %v1999 = vmul.f32 %v1986, %v1975
    %v2000 = vmul.f32 %v1990, %v1976
    %v2001 = vmul.f32 %v1990, %v1977
    %v2002 = vmul.f32 %v1990, %v1978
    %v2003 = vmul.f32 %v1990, %v1979
    %2004 = vset.pattern.permute.xlu0 14
    %2005 = vperm.xlu0 %2004, %v48
    %v2006 = vpop.permute.xlu0 %2005
    %2008 = vset.pattern.permute.xlu0 14
    %2009 = vperm.xlu0 %2008, %v49
    %v2010 = vpop.permute.xlu0 %2009
    %2012 = vset.pattern.permute.xlu0 14
    %2013 = vperm.xlu0 %2012, %v50
    %v2014 = vpop.permute.xlu0 %2013
    %v2016 = vadd.f32 %v1992, %v2006
    %v2017 = vadd.f32 %v1993, %v2006
    %v2018 = vadd.f32 %v1994, %v2006
    %v2019 = vadd.f32 %v1995, %v2006
    %v2020 = vadd.f32 %v1996, %v2010
    %v2021 = vadd.f32 %v1997, %v2010
    %v2022 = vadd.f32 %v1998, %v2010
    %v2023 = vadd.f32 %v1999, %v2010
    %v2024 = vadd.f32 %v2000, %v2014
    %v2025 = vadd.f32 %v2001, %v2014
    %v2026 = vadd.f32 %v2002, %v2014
    %v2027 = vadd.f32 %v2003, %v2014
    %v2028 = vsub.f32 %v1920, %v2016
    %v2029 = vsub.f32 %v1921, %v2017
    %v2030 = vsub.f32 %v1922, %v2018
    %v2031 = vsub.f32 %v1923, %v2019
    %v2032 = vsub.f32 %v1924, %v2020
    %v2033 = vsub.f32 %v1925, %v2021
    %v2034 = vsub.f32 %v1926, %v2022
    %v2035 = vsub.f32 %v1927, %v2023
    %v2036 = vsub.f32 %v1928, %v2024
    %v2037 = vsub.f32 %v1929, %v2025
    %v2038 = vsub.f32 %v1930, %v2026
    %v2039 = vsub.f32 %v1931, %v2027
    %2040 = vset.pattern.permute.xlu0 17
    %2041 = vperm.xlu0 %2040, %v48
    %v2042 = vpop.permute.xlu0 %2041
    %2044 = vset.pattern.permute.xlu0 17
    %2045 = vperm.xlu0 %2044, %v49
    %v2046 = vpop.permute.xlu0 %2045
    %2048 = vset.pattern.permute.xlu0 17
    %2049 = vperm.xlu0 %2048, %v50
    %v2050 = vpop.permute.xlu0 %2049
    %v2052 = vmul.f32 %v2042, %v2028
    %v2053 = vmul.f32 %v2042, %v2029
    %v2054 = vmul.f32 %v2042, %v2030
    %v2055 = vmul.f32 %v2042, %v2031
    %v2056 = vmul.f32 %v2046, %v2032
    %v2057 = vmul.f32 %v2046, %v2033
    %v2058 = vmul.f32 %v2046, %v2034
    %v2059 = vmul.f32 %v2046, %v2035
    %v2060 = vmul.f32 %v2050, %v2036
    %v2061 = vmul.f32 %v2050, %v2037
    %v2062 = vmul.f32 %v2050, %v2038
    %v2063 = vmul.f32 %v2050, %v2039
    %v2064 = vadd.f32 %v2016, %v2052
    %v2065 = vadd.f32 %v2017, %v2053
    %v2066 = vadd.f32 %v2018, %v2054
    %v2067 = vadd.f32 %v2019, %v2055
    %v2068 = vadd.f32 %v2020, %v2056
    %v2069 = vadd.f32 %v2021, %v2057
    %v2070 = vadd.f32 %v2022, %v2058
    %v2071 = vadd.f32 %v2023, %v2059
    %v2072 = vadd.f32 %v2024, %v2060
    %v2073 = vadd.f32 %v2025, %v2061
    %v2074 = vadd.f32 %v2026, %v2062
    %v2075 = vadd.f32 %v2027, %v2063
    %v2076 = vsub.f32 0.0, %v2064
    %v2077 = vsub.f32 0.0, %v2065
    %v2078 = vsub.f32 0.0, %v2066
    %v2079 = vsub.f32 0.0, %v2067
    %v2080 = vsub.f32 0.0, %v2068
    %v2081 = vsub.f32 0.0, %v2069
    %v2082 = vsub.f32 0.0, %v2070
    %v2083 = vsub.f32 0.0, %v2071
    %v2084 = vsub.f32 0.0, %v2072
    %v2085 = vsub.f32 0.0, %v2073
    %v2086 = vsub.f32 0.0, %v2074
    %v2087 = vsub.f32 0.0, %v2075
    %v2088 = vmul.f32 %v2076, 1.442695
    %v2089 = vpow.pop %v2088
    %v2090 = vmul.f32 %v2077, 1.442695
    %v2091 = vpow.pop %v2090
    %v2092 = vmul.f32 %v2078, 1.442695
    %v2093 = vpow.pop %v2092
    %v2094 = vmul.f32 %v2079, 1.442695
    %v2095 = vpow.pop %v2094
    %v2096 = vmul.f32 %v2080, 1.442695
    %v2097 = vpow.pop %v2096
    %v2098 = vmul.f32 %v2081, 1.442695
    %v2099 = vpow.pop %v2098
    %v2100 = vmul.f32 %v2082, 1.442695
    %v2101 = vpow.pop %v2100
    %v2102 = vmul.f32 %v2083, 1.442695
    %v2103 = vpow.pop %v2102
    %v2104 = vmul.f32 %v2084, 1.442695
    %v2105 = vpow.pop %v2104
    %v2106 = vmul.f32 %v2085, 1.442695
    %v2107 = vpow.pop %v2106
    %v2108 = vmul.f32 %v2086, 1.442695
    %v2109 = vpow.pop %v2108
    %v2110 = vmul.f32 %v2087, 1.442695
    %v2111 = vpow.pop %v2110
    %v2112 = vadd.f32 %v2089, 1.0
    %v2113 = vadd.f32 %v2091, 1.0
    %v2114 = vadd.f32 %v2093, 1.0
    %v2115 = vadd.f32 %v2095, 1.0
    %v2116 = vadd.f32 %v2097, 1.0
    %v2117 = vadd.f32 %v2099, 1.0
    %v2118 = vadd.f32 %v2101, 1.0
    %v2119 = vadd.f32 %v2103, 1.0
    %v2120 = vadd.f32 %v2105, 1.0
    %v2121 = vadd.f32 %v2107, 1.0
    %v2122 = vadd.f32 %v2109, 1.0
    %v2123 = vadd.f32 %v2111, 1.0
    %v2124 = vrcp.pop %v2112
    %v2125 = vrcp.pop %v2113
    %v2126 = vrcp.pop %v2114
    %v2127 = vrcp.pop %v2115
    %v2128 = vrcp.pop %v2116
    %v2129 = vrcp.pop %v2117
    %v2130 = vrcp.pop %v2118
    %v2131 = vrcp.pop %v2119
    %v2132 = vrcp.pop %v2120
    %v2133 = vrcp.pop %v2121
    %v2134 = vrcp.pop %v2122
    %v2135 = vrcp.pop %v2123
    %v2136 = vmul.f32 %v1584, %v2124
    %v2137 = vmul.f32 %v1585, %v2125
    %v2138 = vmul.f32 %v1586, %v2126
    %v2139 = vmul.f32 %v1587, %v2127
    %v2140 = vmul.f32 %v1588, %v2128
    %v2141 = vmul.f32 %v1589, %v2129
    %v2142 = vmul.f32 %v1590, %v2130
    %v2143 = vmul.f32 %v1591, %v2131
    %v2144 = vmul.f32 %v1592, %v2132
    %v2145 = vmul.f32 %v1593, %v2133
    %v2146 = vmul.f32 %v1594, %v2134
    %v2147 = vmul.f32 %v1595, %v2135
    %v2148 = vmul.f32 %v2136, 0.5
    %v2149 = vmul.f32 %v2137, 0.5
    %v2150 = vmul.f32 %v2138, 0.5
    %v2151 = vmul.f32 %v2139, 0.5
    %v2152 = vmul.f32 %v2140, 0.5
    %v2153 = vmul.f32 %v2141, 0.5
    %v2154 = vmul.f32 %v2142, 0.5
    %v2155 = vmul.f32 %v2143, 0.5
    %v2156 = vmul.f32 %v2144, 0.5
    %v2157 = vmul.f32 %v2145, 0.5
    %v2158 = vmul.f32 %v2146, 0.5
    %v2159 = vmul.f32 %v2147, 0.5
    %v2160 = vadd.f32 %v36, %v2148
    %v2161 = vadd.f32 %v37, %v2149
    %v2162 = vadd.f32 %v38, %v2150
    %v2163 = vadd.f32 %v39, %v2151
    %v2164 = vadd.f32 %v40, %v2152
    %v2165 = vadd.f32 %v41, %v2153
    %v2166 = vadd.f32 %v42, %v2154
    %v2167 = vadd.f32 %v43, %v2155
    %v2168 = vadd.f32 %v44, %v2156
    %v2169 = vadd.f32 %v45, %v2157
    %v2170 = vadd.f32 %v46, %v2158
    %v2171 = vadd.f32 %v47, %v2159
    %v2172 = vld [vmem:[%s2] sm:$0xff]
    %v2173 = vld [vmem:[%s2 + $0x8] sm:$0xff]
    %v2174 = vld [vmem:[%s2 + $0x10] sm:$0xff]
    %v2175 = vld [vmem:[%s2 + $0x18] sm:$0xff]
    %v2176 = vld [vmem:[%s2 + $0x20] sm:$0xff]
    %v2177 = vld [vmem:[%s2 + $0x28] sm:$0xff]
    %v2178 = vld [vmem:[%s2 + $0x30] sm:$0xff]
    %v2179 = vld [vmem:[%s2 + $0x38] sm:$0xff]
    %v2180 = vld [vmem:[%s2 + $0x40] sm:$0xf]
    %v2182 = vsel %vm73, %v2172, 0
    %v2185 = vsel %vm73, %v2173, 0
    %v2188 = vsel %vm73, %v2174, 0
    %v2191 = vsel %vm73, %v2175, 0
    %v2194 = vsel %vm73, %v2176, 0
    %v2197 = vsel %vm73, %v2177, 0
    %v2200 = vsel %vm73, %v2178, 0
    %v2203 = vsel %vm73, %v2179, 0
    %v2206 = vsel %vm73, %v2180, 0
    %v2209 = vsel %vm83, %v2168, 0
    %v2212 = vsel %vm83, %v2169, 0
    %v2215 = vsel %vm83, %v2170, 0
    %v2218 = vsel %vm83, %v2171, 0
    %2220 = vmatprep.subr.mxu0 %v2161
    %2221 = vmatpush1.msra.mxu0 %v2160
    %2222 = vmatprep.subr.mxu0 %v2165
    %2223 = vmatpush1.msra.mxu0 %v2164
    %2224 = vmatprep.subr.mxu0 %v2212
    %2225 = vmatpush1.msra.mxu0 %v2209
    %2226 = vmatprep.subr.mxu0 0.0
    %2227 = vmatpush1.msra.mxu0 0.0
    %2228 = vmatprep.subr.mxu0 0.0
    %2229 = vmatpush1.msra.mxu0 0.0
    %2230 = vmatprep.subr.mxu0 0.0
    %2231 = vmatpush1.msra.mxu0 0.0
    %2232 = vmatprep.subr.mxu0 0.0
    %2233 = vmatpush1.msra.mxu0 0.0
    %2234 = vmatprep.subr.mxu0 0.0
    %2235 = vmatpush1.msra.mxu0 0.0
    %2236 = vmatprep.subr.mxu0 0.0
    %2237 = vmatpush1.msra.mxu0 0.0
    %2238 = vmatprep.subr.mxu0 0.0
    %2239 = vmatpush1.msra.mxu0 0.0
    %2240 = vmatprep.subr.mxu0 0.0
    %2241 = vmatpush1.msra.mxu0 0.0
    %2242 = vmatprep.subr.mxu0 0.0
    %2243 = vmatpush1.msra.mxu0 0.0
    %2244 = vmatprep.subr.mxu0 0.0
    %2245 = vmatpush1.msra.mxu0 0.0
    %2246 = vmatprep.subr.mxu0 0.0
    %2247 = vmatpush1.msra.mxu0 0.0
    %2248 = vmatprep.subr.mxu0 0.0
    %2249 = vmatpush1.msra.mxu0 0.0
    %2250 = vmatprep.subr.mxu0 0.0
    %2251 = vmatpush1.msra.mxu0 0.0
    %2252 = vmatprep.subr.mxu0 0.0
    %2253 = vmatpush1.msra.mxu0 0.0
    %2254 = vmatprep.subr.mxu0 0.0
    %2255 = vmatpush1.msra.mxu0 0.0
    %2256 = vmatprep.subr.mxu0 0.0
    %2257 = vmatpush1.msra.mxu0 0.0
    %2258 = vmatprep.subr.mxu0 0.0
    %2259 = vmatpush1.msra.mxu0 0.0
    %2260 = vmatprep.subr.mxu0 0.0
    %2261 = vmatpush1.msra.mxu0 0.0
    %2262 = vmatprep.subr.mxu0 0.0
    %2263 = vmatpush1.msra.mxu0 0.0
    %2264 = vmatprep.subr.mxu0 0.0
    %2265 = vmatpush1.msra.mxu0 0.0
    %2266 = vmatprep.subr.mxu0 0.0
    %2267 = vmatpush1.msra.mxu0 0.0
    %2268 = vmatprep.subr.mxu0 0.0
    %2269 = vmatpush1.msra.mxu0 0.0
    %2270 = vmatprep.subr.mxu0 0.0
    %2271 = vmatpush1.msra.mxu0 0.0
    %2272 = vmatprep.subr.mxu0 0.0
    %2273 = vmatpush1.msra.mxu0 0.0
    %2274 = vmatprep.subr.mxu0 0.0
    %2275 = vmatpush1.msra.mxu0 0.0
    %2276 = vmatprep.subr.mxu0 0.0
    %2277 = vmatpush1.msra.mxu0 0.0
    %2278 = vmatprep.subr.mxu0 0.0
    %2279 = vmatpush1.msra.mxu0 0.0
    %2280 = vmatprep.subr.mxu0 0.0
    %2281 = vmatpush1.msra.mxu0 0.0
    %2282 = vmatprep.subr.mxu0 0.0
    %2283 = vmatpush1.msra.mxu0 0.0
    %2284 = vmatprep.mubr.f32.mxu0 0.0
    %2285 = vmatmul.mubr.f32.gmra.mrb[0].mxu0 %v2182
    %v2286 = vpop.f32.mrb[0].mxu0
    %v2287 = vadd.f32 0.0, %v2286
    %v2288 = vpop.f32.mrb[0].mxu0
    %v2289 = vadd.f32 0.0, %v2288
    %2290 = vmatprep.mubr.f32.mxu0 0.0
    %2291 = vmatmul.mubr.f32.gmra.mrb[0].mxu0 %v2185
    %v2292 = vpop.f32.mrb[0].mxu0
    %v2293 = vadd.f32 0.0, %v2292
    %v2294 = vpop.f32.mrb[0].mxu0
    %v2295 = vadd.f32 0.0, %v2294
    %2296 = vmatprep.mubr.f32.mxu0 0.0
    %2297 = vmatmul.mubr.f32.gmra.mrb[0].mxu0 %v2188
    %v2298 = vpop.f32.mrb[0].mxu0
    %v2299 = vadd.f32 0.0, %v2298
    %v2300 = vpop.f32.mrb[0].mxu0
    %v2301 = vadd.f32 0.0, %v2300
    %2302 = vmatprep.mubr.f32.mxu0 0.0
    %2303 = vmatmul.mubr.f32.gmra.mrb[0].mxu0 %v2191
    %v2304 = vpop.f32.mrb[0].mxu0
    %v2305 = vadd.f32 0.0, %v2304
    %v2306 = vpop.f32.mrb[0].mxu0
    %v2307 = vadd.f32 0.0, %v2306
    %2308 = vmatprep.mubr.f32.mxu0 0.0
    %2309 = vmatmul.mubr.f32.gmra.mrb[0].mxu0 %v2194
    %v2310 = vpop.f32.mrb[0].mxu0
    %v2311 = vadd.f32 0.0, %v2310
    %v2312 = vpop.f32.mrb[0].mxu0
    %v2313 = vadd.f32 0.0, %v2312
    %2314 = vmatprep.mubr.f32.mxu0 0.0
    %2315 = vmatmul.mubr.f32.gmra.mrb[0].mxu0 %v2197
    %v2316 = vpop.f32.mrb[0].mxu0
    %v2317 = vadd.f32 0.0, %v2316
    %v2318 = vpop.f32.mrb[0].mxu0
    %v2319 = vadd.f32 0.0, %v2318
    %2320 = vmatprep.mubr.f32.mxu0 0.0
    %2321 = vmatmul.mubr.f32.gmra.mrb[0].mxu0 %v2200
    %v2322 = vpop.f32.mrb[0].mxu0
    %v2323 = vadd.f32 0.0, %v2322
    %v2324 = vpop.f32.mrb[0].mxu0
    %v2325 = vadd.f32 0.0, %v2324
    %2326 = vmatprep.mubr.f32.mxu0 0.0
    %2327 = vmatmul.mubr.f32.gmra.mrb[0].mxu0 %v2203
    %v2328 = vpop.f32.mrb[0].mxu0
    %v2329 = vadd.f32 0.0, %v2328
    %v2330 = vpop.f32.mrb[0].mxu0
    %v2331 = vadd.f32 0.0, %v2330
    %2332 = vmatprep.mubr.f32.mxu0 0.0
    %2333 = vmatmul.mubr.f32.gmra.mrb[0].mxu0 %v2206
    %v2334 = vpop.f32.mrb[0].mxu0
    %v2335 = vadd.f32 0.0, %v2334
    %v2336 = vpop.f32.mrb[0].mxu0
    %v2337 = vadd.f32 0.0, %v2336
    %2338 = vdwg.mxu0
    %2339 = vmatprep.subr.mxu0 %v2163
    %2340 = vmatpush1.msra.mxu0 %v2162
    %2341 = vmatprep.subr.mxu0 %v2167
    %2342 = vmatpush1.msra.mxu0 %v2166
    %2343 = vmatprep.subr.mxu0 %v2218
    %2344 = vmatpush1.msra.mxu0 %v2215
    %2345 = vmatprep.subr.mxu0 0.0
    %2346 = vmatpush1.msra.mxu0 0.0
    %2347 = vmatprep.subr.mxu0 0.0
    %2348 = vmatpush1.msra.mxu0 0.0
    %2349 = vmatprep.subr.mxu0 0.0
    %2350 = vmatpush1.msra.mxu0 0.0
    %2351 = vmatprep.subr.mxu0 0.0
    %2352 = vmatpush1.msra.mxu0 0.0
    %2353 = vmatprep.subr.mxu0 0.0
    %2354 = vmatpush1.msra.mxu0 0.0
    %2355 = vmatprep.subr.mxu0 0.0
    %2356 = vmatpush1.msra.mxu0 0.0
    %2357 = vmatprep.subr.mxu0 0.0
    %2358 = vmatpush1.msra.mxu0 0.0
    %2359 = vmatprep.subr.mxu0 0.0
    %2360 = vmatpush1.msra.mxu0 0.0
    %2361 = vmatprep.subr.mxu0 0.0
    %2362 = vmatpush1.msra.mxu0 0.0
    %2363 = vmatprep.subr.mxu0 0.0
    %2364 = vmatpush1.msra.mxu0 0.0
    %2365 = vmatprep.subr.mxu0 0.0
    %2366 = vmatpush1.msra.mxu0 0.0
    %2367 = vmatprep.subr.mxu0 0.0
    %2368 = vmatpush1.msra.mxu0 0.0
    %2369 = vmatprep.subr.mxu0 0.0
    %2370 = vmatpush1.msra.mxu0 0.0
    %2371 = vmatprep.subr.mxu0 0.0
    %2372 = vmatpush1.msra.mxu0 0.0
    %2373 = vmatprep.subr.mxu0 0.0
    %2374 = vmatpush1.msra.mxu0 0.0
    %2375 = vmatprep.subr.mxu0 0.0
    %2376 = vmatpush1.msra.mxu0 0.0
    %2377 = vmatprep.subr.mxu0 0.0
    %2378 = vmatpush1.msra.mxu0 0.0
    %2379 = vmatprep.subr.mxu0 0.0
    %2380 = vmatpush1.msra.mxu0 0.0
    %2381 = vmatprep.subr.mxu0 0.0
    %2382 = vmatpush1.msra.mxu0 0.0
    %2383 = vmatprep.subr.mxu0 0.0
    %2384 = vmatpush1.msra.mxu0 0.0
    %2385 = vmatprep.subr.mxu0 0.0
    %2386 = vmatpush1.msra.mxu0 0.0
    %2387 = vmatprep.subr.mxu0 0.0
    %2388 = vmatpush1.msra.mxu0 0.0
    %2389 = vmatprep.subr.mxu0 0.0
    %2390 = vmatpush1.msra.mxu0 0.0
    %2391 = vmatprep.subr.mxu0 0.0
    %2392 = vmatpush1.msra.mxu0 0.0
    %2393 = vmatprep.subr.mxu0 0.0
    %2394 = vmatpush1.msra.mxu0 0.0
    %2395 = vmatprep.subr.mxu0 0.0
    %2396 = vmatpush1.msra.mxu0 0.0
    %2397 = vmatprep.subr.mxu0 0.0
    %2398 = vmatpush1.msra.mxu0 0.0
    %2399 = vmatprep.subr.mxu0 0.0
    %2400 = vmatpush1.msra.mxu0 0.0
    %2401 = vmatprep.subr.mxu0 0.0
    %2402 = vmatpush1.msra.mxu0 0.0
    %2403 = vmatprep.mubr.f32.mxu0 0.0
    %2404 = vmatmul.mubr.f32.gmra.mrb[0].mxu0 %v2182
    %v2405 = vpop.f32.mrb[0].mxu0
    %v2406 = vadd.f32 0.0, %v2405
    %v2407 = vpop.f32.mrb[0].mxu0
    %v2408 = vadd.f32 0.0, %v2407
    %2409 = vmatprep.mubr.f32.mxu0 0.0
    %2410 = vmatmul.mubr.f32.gmra.mrb[0].mxu0 %v2185
    %v2411 = vpop.f32.mrb[0].mxu0
    %v2412 = vadd.f32 0.0, %v2411
    %v2413 = vpop.f32.mrb[0].mxu0
    %v2414 = vadd.f32 0.0, %v2413
    %2415 = vmatprep.mubr.f32.mxu0 0.0
    %2416 = vmatmul.mubr.f32.gmra.mrb[0].mxu0 %v2188
    %v2417 = vpop.f32.mrb[0].mxu0
    %v2418 = vadd.f32 0.0, %v2417
    %v2419 = vpop.f32.mrb[0].mxu0
    %v2420 = vadd.f32 0.0, %v2419
    %2421 = vmatprep.mubr.f32.mxu0 0.0
    %2422 = vmatmul.mubr.f32.gmra.mrb[0].mxu0 %v2191
    %v2423 = vpop.f32.mrb[0].mxu0
    %v2424 = vadd.f32 0.0, %v2423
    %v2425 = vpop.f32.mrb[0].mxu0
    %v2426 = vadd.f32 0.0, %v2425
    %2427 = vmatprep.mubr.f32.mxu0 0.0
    %2428 = vmatmul.mubr.f32.gmra.mrb[0].mxu0 %v2194
    %v2429 = vpop.f32.mrb[0].mxu0
    %v2430 = vadd.f32 0.0, %v2429
    %v2431 = vpop.f32.mrb[0].mxu0
    %v2432 = vadd.f32 0.0, %v2431
    %2433 = vmatprep.mubr.f32.mxu0 0.0
    %2434 = vmatmul.mubr.f32.gmra.mrb[0].mxu0 %v2197
    %v2435 = vpop.f32.mrb[0].mxu0
    %v2436 = vadd.f32 0.0, %v2435
    %v2437 = vpop.f32.mrb[0].mxu0
    %v2438 = vadd.f32 0.0, %v2437
    %2439 = vmatprep.mubr.f32.mxu0 0.0
    %2440 = vmatmul.mubr.f32.gmra.mrb[0].mxu0 %v2200
    %v2441 = vpop.f32.mrb[0].mxu0
    %v2442 = vadd.f32 0.0, %v2441
    %v2443 = vpop.f32.mrb[0].mxu0
    %v2444 = vadd.f32 0.0, %v2443
    %2445 = vmatprep.mubr.f32.mxu0 0.0
    %2446 = vmatmul.mubr.f32.gmra.mrb[0].mxu0 %v2203
    %v2447 = vpop.f32.mrb[0].mxu0
    %v2448 = vadd.f32 0.0, %v2447
    %v2449 = vpop.f32.mrb[0].mxu0
    %v2450 = vadd.f32 0.0, %v2449
    %2451 = vmatprep.mubr.f32.mxu0 0.0
    %2452 = vmatmul.mubr.f32.gmra.mrb[0].mxu0 %v2206
    %v2453 = vpop.f32.mrb[0].mxu0
    %v2454 = vadd.f32 0.0, %v2453
    %v2455 = vpop.f32.mrb[0].mxu0
    %v2456 = vadd.f32 0.0, %v2455
    %2457 = vdwg.mxu0
    %2458 = vset.pattern.permute.xlu0 3
    %2459 = vperm.xlu0 %2458, %v48
    %v2460 = vpop.permute.xlu0 %2459
    %2462 = vset.pattern.permute.xlu0 3
    %2463 = vperm.xlu0 %2462, %v49
    %v2464 = vpop.permute.xlu0 %2463
    %2466 = vset.pattern.permute.xlu0 3
    %2467 = vperm.xlu0 %2466, %v50
    %v2468 = vpop.permute.xlu0 %2467
    %v2470 = vadd.f32 %v2287, %v2460
    %v2471 = vadd.f32 %v2289, %v2460
    %v2472 = vadd.f32 %v2406, %v2460
    %v2473 = vadd.f32 %v2408, %v2460
    %v2474 = vadd.f32 %v2293, %v2464
    %v2475 = vadd.f32 %v2295, %v2464
    %v2476 = vadd.f32 %v2412, %v2464
    %v2477 = vadd.f32 %v2414, %v2464
    %v2478 = vadd.f32 %v2299, %v2468
    %v2479 = vadd.f32 %v2301, %v2468
    %v2480 = vadd.f32 %v2418, %v2468
    %v2481 = vadd.f32 %v2420, %v2468
    %2482 = vset.pattern.permute.xlu0 5
    %2483 = vperm.xlu0 %2482, %v48
    %v2484 = vpop.permute.xlu0 %2483
    %2486 = vset.pattern.permute.xlu0 5
    %2487 = vperm.xlu0 %2486, %v49
    %v2488 = vpop.permute.xlu0 %2487
    %2490 = vset.pattern.permute.xlu0 5
    %2491 = vperm.xlu0 %2490, %v50
    %v2492 = vpop.permute.xlu0 %2491
    %v2494 = vadd.f32 %v2305, %v2484
    %v2495 = vadd.f32 %v2307, %v2484
    %v2496 = vadd.f32 %v2424, %v2484
    %v2497 = vadd.f32 %v2426, %v2484
    %v2498 = vadd.f32 %v2311, %v2488
    %v2499 = vadd.f32 %v2313, %v2488
    %v2500 = vadd.f32 %v2430, %v2488
    %v2501 = vadd.f32 %v2432, %v2488
    %v2502 = vadd.f32 %v2317, %v2492
    %v2503 = vadd.f32 %v2319, %v2492
    %v2504 = vadd.f32 %v2436, %v2492
    %v2505 = vadd.f32 %v2438, %v2492
    %2506 = vset.pattern.permute.xlu0 8
    %2507 = vperm.xlu0 %2506, %v48
    %v2508 = vpop.permute.xlu0 %2507
    %2510 = vset.pattern.permute.xlu0 8
    %2511 = vperm.xlu0 %2510, %v49
    %v2512 = vpop.permute.xlu0 %2511
    %2514 = vset.pattern.permute.xlu0 8
    %2515 = vperm.xlu0 %2514, %v50
    %v2516 = vpop.permute.xlu0 %2515
    %v2518 = vadd.f32 %v2323, %v2508
    %v2519 = vadd.f32 %v2325, %v2508
    %v2520 = vadd.f32 %v2442, %v2508
    %v2521 = vadd.f32 %v2444, %v2508
    %v2522 = vadd.f32 %v2329, %v2512
    %v2523 = vadd.f32 %v2331, %v2512
    %v2524 = vadd.f32 %v2448, %v2512
    %v2525 = vadd.f32 %v2450, %v2512
    %v2526 = vadd.f32 %v2335, %v2516
    %v2527 = vadd.f32 %v2337, %v2516
    %v2528 = vadd.f32 %v2454, %v2516
    %v2529 = vadd.f32 %v2456, %v2516
    %s2530 = scalar_lea.vmem %s3, 24
    %v2531 = vld [vmem:[%s2530] sm:$0xff]
    %v2532 = vld [vmem:[%s2530 + $0x8] sm:$0xff]
    %v2533 = vld [vmem:[%s2530 + $0x10] sm:$0xf]
    %2534 = vrot.lane.b32.xlu0 %v2470, 1
    %v2535 = vpop.permute.xlu0 %2534
    %2536 = vrot.lane.b32.xlu0 %v2474, 1
    %v2537 = vpop.permute.xlu0 %2536
    %2538 = vrot.lane.b32.xlu0 %v2478, 1
    %v2539 = vpop.permute.xlu0 %2538
    %2540 = vrot.lane.b32.xlu0 %v2471, 1
    %v2541 = vpop.permute.xlu0 %2540
    %2542 = vrot.lane.b32.xlu0 %v2475, 1
    %v2543 = vpop.permute.xlu0 %2542
    %2544 = vrot.lane.b32.xlu0 %v2479, 1
    %v2545 = vpop.permute.xlu0 %2544
    %2546 = vrot.lane.b32.xlu0 %v2472, 1
    %v2547 = vpop.permute.xlu0 %2546
    %2548 = vrot.lane.b32.xlu0 %v2476, 1
    %v2549 = vpop.permute.xlu0 %2548
    %2550 = vrot.lane.b32.xlu0 %v2480, 1
    %v2551 = vpop.permute.xlu0 %2550
    %2552 = vrot.lane.b32.xlu0 %v2473, 1
    %v2553 = vpop.permute.xlu0 %2552
    %2554 = vrot.lane.b32.xlu0 %v2477, 1
    %v2555 = vpop.permute.xlu0 %2554
    %2556 = vrot.lane.b32.xlu0 %v2481, 1
    %v2557 = vpop.permute.xlu0 %2556
    %v2558 = vsel %vm997, %v2547, %v2553
    %v2559 = vsel %vm997, %v2549, %v2555
    %v2560 = vsel %vm997, %v2551, %v2557
    %v2561 = vsel %vm997, %v2541, %v2547
    %v2562 = vsel %vm997, %v2543, %v2549
    %v2563 = vsel %vm997, %v2545, %v2551
    %v2564 = vsel %vm997, %v2535, %v2541
    %v2565 = vsel %vm997, %v2537, %v2543
    %v2566 = vsel %vm997, %v2539, %v2545
    %v2567 = vsel %vm997, %v2553, %v2535
    %v2568 = vsel %vm997, %v2555, %v2537
    %v2569 = vsel %vm997, %v2557, %v2539
    %v2570 = vmul.f32 %v2567, %v1013
    %v2571 = vmul.f32 %v2564, %v1017
    %v2572 = vmul.f32 %v2561, %v1021
    %v2573 = vmul.f32 %v2558, %v1025
    %v2574 = vmul.f32 %v2568, %v1013
    %v2575 = vmul.f32 %v2565, %v1017
    %v2576 = vmul.f32 %v2562, %v1021
    %v2577 = vmul.f32 %v2559, %v1025
    %v2578 = vmul.f32 %v2569, %v1013
    %v2579 = vmul.f32 %v2566, %v1017
    %v2580 = vmul.f32 %v2563, %v1021
    %v2581 = vmul.f32 %v2560, %v1025
    %2582 = vrot.lane.b32.xlu0 %v2470, 127
    %v2583 = vpop.permute.xlu0 %2582
    %2584 = vrot.lane.b32.xlu0 %v2474, 127
    %v2585 = vpop.permute.xlu0 %2584
    %2586 = vrot.lane.b32.xlu0 %v2478, 127
    %v2587 = vpop.permute.xlu0 %2586
    %2588 = vrot.lane.b32.xlu0 %v2471, 127
    %v2589 = vpop.permute.xlu0 %2588
    %2590 = vrot.lane.b32.xlu0 %v2475, 127
    %v2591 = vpop.permute.xlu0 %2590
    %2592 = vrot.lane.b32.xlu0 %v2479, 127
    %v2593 = vpop.permute.xlu0 %2592
    %2594 = vrot.lane.b32.xlu0 %v2472, 127
    %v2595 = vpop.permute.xlu0 %2594
    %2596 = vrot.lane.b32.xlu0 %v2476, 127
    %v2597 = vpop.permute.xlu0 %2596
    %2598 = vrot.lane.b32.xlu0 %v2480, 127
    %v2599 = vpop.permute.xlu0 %2598
    %2600 = vrot.lane.b32.xlu0 %v2473, 127
    %v2601 = vpop.permute.xlu0 %2600
    %2602 = vrot.lane.b32.xlu0 %v2477, 127
    %v2603 = vpop.permute.xlu0 %2602
    %2604 = vrot.lane.b32.xlu0 %v2481, 127
    %v2605 = vpop.permute.xlu0 %2604
    %v2606 = vsel %vm1062, %v2595, %v2601
    %v2607 = vsel %vm1062, %v2597, %v2603
    %v2608 = vsel %vm1062, %v2599, %v2605
    %v2609 = vsel %vm1062, %v2589, %v2595
    %v2610 = vsel %vm1062, %v2591, %v2597
    %v2611 = vsel %vm1062, %v2593, %v2599
    %v2612 = vsel %vm1062, %v2583, %v2589
    %v2613 = vsel %vm1062, %v2585, %v2591
    %v2614 = vsel %vm1062, %v2587, %v2593
    %v2615 = vsel %vm1062, %v2601, %v2583
    %v2616 = vsel %vm1062, %v2603, %v2585
    %v2617 = vsel %vm1062, %v2605, %v2587
    %v2618 = vmul.f32 %v2612, %v1078
    %v2619 = vmul.f32 %v2609, %v1082
    %v2620 = vmul.f32 %v2606, %v1086
    %v2621 = vmul.f32 %v2615, %v1090
    %v2622 = vmul.f32 %v2613, %v1078
    %v2623 = vmul.f32 %v2610, %v1082
    %v2624 = vmul.f32 %v2607, %v1086
    %v2625 = vmul.f32 %v2616, %v1090
    %v2626 = vmul.f32 %v2614, %v1078
    %v2627 = vmul.f32 %v2611, %v1082
    %v2628 = vmul.f32 %v2608, %v1086
    %v2629 = vmul.f32 %v2617, %v1090
    %2631 = vset.pattern.permute.xlu0 3
    %2632 = vperm.xlu0 %2631, %v2531
    %v2633 = vpop.permute.xlu0 %2632
    %2636 = vset.pattern.permute.xlu0 3
    %2637 = vperm.xlu0 %2636, %v2532
    %v2638 = vpop.permute.xlu0 %2637
    %2641 = vset.pattern.permute.xlu0 3
    %2642 = vperm.xlu0 %2641, %v2533
    %v2643 = vpop.permute.xlu0 %2642
    %v2645 = vmul.f32 %v2633, %v2570
    %v2646 = vmul.f32 %v2633, %v2571
    %v2647 = vmul.f32 %v2633, %v2572
    %v2648 = vmul.f32 %v2633, %v2573
    %v2649 = vmul.f32 %v2638, %v2574
    %v2650 = vmul.f32 %v2638, %v2575
    %v2651 = vmul.f32 %v2638, %v2576
    %v2652 = vmul.f32 %v2638, %v2577
    %v2653 = vmul.f32 %v2643, %v2578
    %v2654 = vmul.f32 %v2643, %v2579
    %v2655 = vmul.f32 %v2643, %v2580
    %v2656 = vmul.f32 %v2643, %v2581
    %2657 = vset.pattern.permute.xlu0 4
    %2658 = vperm.xlu0 %2657, %v2531
    %v2659 = vpop.permute.xlu0 %2658
    %2661 = vset.pattern.permute.xlu0 4
    %2662 = vperm.xlu0 %2661, %v2532
    %v2663 = vpop.permute.xlu0 %2662
    %2665 = vset.pattern.permute.xlu0 4
    %2666 = vperm.xlu0 %2665, %v2533
    %v2667 = vpop.permute.xlu0 %2666
    %v2669 = vmul.f32 %v2659, %v2470
    %v2670 = vmul.f32 %v2659, %v2471
    %v2671 = vmul.f32 %v2659, %v2472
    %v2672 = vmul.f32 %v2659, %v2473
    %v2673 = vmul.f32 %v2663, %v2474
    %v2674 = vmul.f32 %v2663, %v2475
    %v2675 = vmul.f32 %v2663, %v2476
    %v2676 = vmul.f32 %v2663, %v2477
    %v2677 = vmul.f32 %v2667, %v2478
    %v2678 = vmul.f32 %v2667, %v2479
    %v2679 = vmul.f32 %v2667, %v2480
    %v2680 = vmul.f32 %v2667, %v2481
    %v2681 = vadd.f32 %v2645, %v2669
    %v2682 = vadd.f32 %v2646, %v2670
    %v2683 = vadd.f32 %v2647, %v2671
    %v2684 = vadd.f32 %v2648, %v2672
    %v2685 = vadd.f32 %v2649, %v2673
    %v2686 = vadd.f32 %v2650, %v2674
    %v2687 = vadd.f32 %v2651, %v2675
    %v2688 = vadd.f32 %v2652, %v2676
    %v2689 = vadd.f32 %v2653, %v2677
    %v2690 = vadd.f32 %v2654, %v2678
    %v2691 = vadd.f32 %v2655, %v2679
    %v2692 = vadd.f32 %v2656, %v2680
    %2693 = vset.pattern.permute.xlu0 5
    %2694 = vperm.xlu0 %2693, %v2531
    %v2695 = vpop.permute.xlu0 %2694
    %2697 = vset.pattern.permute.xlu0 5
    %2698 = vperm.xlu0 %2697, %v2532
    %v2699 = vpop.permute.xlu0 %2698
    %2701 = vset.pattern.permute.xlu0 5
    %2702 = vperm.xlu0 %2701, %v2533
    %v2703 = vpop.permute.xlu0 %2702
    %v2705 = vmul.f32 %v2695, %v2618
    %v2706 = vmul.f32 %v2695, %v2619
    %v2707 = vmul.f32 %v2695, %v2620
    %v2708 = vmul.f32 %v2695, %v2621
    %v2709 = vmul.f32 %v2699, %v2622
    %v2710 = vmul.f32 %v2699, %v2623
    %v2711 = vmul.f32 %v2699, %v2624
    %v2712 = vmul.f32 %v2699, %v2625
    %v2713 = vmul.f32 %v2703, %v2626
    %v2714 = vmul.f32 %v2703, %v2627
    %v2715 = vmul.f32 %v2703, %v2628
    %v2716 = vmul.f32 %v2703, %v2629
    %v2717 = vadd.f32 %v2681, %v2705
    %v2718 = vadd.f32 %v2682, %v2706
    %v2719 = vadd.f32 %v2683, %v2707
    %v2720 = vadd.f32 %v2684, %v2708
    %v2721 = vadd.f32 %v2685, %v2709
    %v2722 = vadd.f32 %v2686, %v2710
    %v2723 = vadd.f32 %v2687, %v2711
    %v2724 = vadd.f32 %v2688, %v2712
    %v2725 = vadd.f32 %v2689, %v2713
    %v2726 = vadd.f32 %v2690, %v2714
    %v2727 = vadd.f32 %v2691, %v2715
    %v2728 = vadd.f32 %v2692, %v2716
    %2729 = vset.pattern.permute.xlu0 4
    %2730 = vperm.xlu0 %2729, %v48
    %v2731 = vpop.permute.xlu0 %2730
    %2733 = vset.pattern.permute.xlu0 4
    %2734 = vperm.xlu0 %2733, %v49
    %v2735 = vpop.permute.xlu0 %2734
    %2737 = vset.pattern.permute.xlu0 4
    %2738 = vperm.xlu0 %2737, %v50
    %v2739 = vpop.permute.xlu0 %2738
    %v2741 = vadd.f32 %v2731, %v2717
    %v2742 = vadd.f32 %v2731, %v2718
    %v2743 = vadd.f32 %v2731, %v2719
    %v2744 = vadd.f32 %v2731, %v2720
    %v2745 = vadd.f32 %v2735, %v2721
    %v2746 = vadd.f32 %v2735, %v2722
    %v2747 = vadd.f32 %v2735, %v2723
    %v2748 = vadd.f32 %v2735, %v2724
    %v2749 = vadd.f32 %v2739, %v2725
    %v2750 = vadd.f32 %v2739, %v2726
    %v2751 = vadd.f32 %v2739, %v2727
    %v2752 = vadd.f32 %v2739, %v2728
    %2753 = vset.pattern.permute.xlu0 0
    %2754 = vperm.xlu0 %2753, %v2531
    %v2755 = vpop.permute.xlu0 %2754
    %2757 = vset.pattern.permute.xlu0 0
    %2758 = vperm.xlu0 %2757, %v2532
    %v2759 = vpop.permute.xlu0 %2758
    %2761 = vset.pattern.permute.xlu0 0
    %2762 = vperm.xlu0 %2761, %v2533
    %v2763 = vpop.permute.xlu0 %2762
    %v2765 = vmul.f32 %v2755, %v2570
    %v2766 = vmul.f32 %v2755, %v2571
    %v2767 = vmul.f32 %v2755, %v2572
    %v2768 = vmul.f32 %v2755, %v2573
    %v2769 = vmul.f32 %v2759, %v2574
    %v2770 = vmul.f32 %v2759, %v2575
    %v2771 = vmul.f32 %v2759, %v2576
    %v2772 = vmul.f32 %v2759, %v2577
    %v2773 = vmul.f32 %v2763, %v2578
    %v2774 = vmul.f32 %v2763, %v2579
    %v2775 = vmul.f32 %v2763, %v2580
    %v2776 = vmul.f32 %v2763, %v2581
    %2777 = vset.pattern.permute.xlu0 1
    %2778 = vperm.xlu0 %2777, %v2531
    %v2779 = vpop.permute.xlu0 %2778
    %2781 = vset.pattern.permute.xlu0 1
    %2782 = vperm.xlu0 %2781, %v2532
    %v2783 = vpop.permute.xlu0 %2782
    %2785 = vset.pattern.permute.xlu0 1
    %2786 = vperm.xlu0 %2785, %v2533
    %v2787 = vpop.permute.xlu0 %2786
    %v2789 = vmul.f32 %v2779, %v2470
    %v2790 = vmul.f32 %v2779, %v2471
    %v2791 = vmul.f32 %v2779, %v2472
    %v2792 = vmul.f32 %v2779, %v2473
    %v2793 = vmul.f32 %v2783, %v2474
    %v2794 = vmul.f32 %v2783, %v2475
    %v2795 = vmul.f32 %v2783, %v2476
    %v2796 = vmul.f32 %v2783, %v2477
    %v2797 = vmul.f32 %v2787, %v2478
    %v2798 = vmul.f32 %v2787, %v2479
    %v2799 = vmul.f32 %v2787, %v2480
    %v2800 = vmul.f32 %v2787, %v2481
    %v2801 = vadd.f32 %v2765, %v2789
    %v2802 = vadd.f32 %v2766, %v2790
    %v2803 = vadd.f32 %v2767, %v2791
    %v2804 = vadd.f32 %v2768, %v2792
    %v2805 = vadd.f32 %v2769, %v2793
    %v2806 = vadd.f32 %v2770, %v2794
    %v2807 = vadd.f32 %v2771, %v2795
    %v2808 = vadd.f32 %v2772, %v2796
    %v2809 = vadd.f32 %v2773, %v2797
    %v2810 = vadd.f32 %v2774, %v2798
    %v2811 = vadd.f32 %v2775, %v2799
    %v2812 = vadd.f32 %v2776, %v2800
    %2813 = vset.pattern.permute.xlu0 2
    %2814 = vperm.xlu0 %2813, %v2531
    %v2815 = vpop.permute.xlu0 %2814
    %2817 = vset.pattern.permute.xlu0 2
    %2818 = vperm.xlu0 %2817, %v2532
    %v2819 = vpop.permute.xlu0 %2818
    %2821 = vset.pattern.permute.xlu0 2
    %2822 = vperm.xlu0 %2821, %v2533
    %v2823 = vpop.permute.xlu0 %2822
    %v2825 = vmul.f32 %v2815, %v2618
    %v2826 = vmul.f32 %v2815, %v2619
    %v2827 = vmul.f32 %v2815, %v2620
    %v2828 = vmul.f32 %v2815, %v2621
    %v2829 = vmul.f32 %v2819, %v2622
    %v2830 = vmul.f32 %v2819, %v2623
    %v2831 = vmul.f32 %v2819, %v2624
    %v2832 = vmul.f32 %v2819, %v2625
    %v2833 = vmul.f32 %v2823, %v2626
    %v2834 = vmul.f32 %v2823, %v2627
    %v2835 = vmul.f32 %v2823, %v2628
    %v2836 = vmul.f32 %v2823, %v2629
    %v2837 = vadd.f32 %v2801, %v2825
    %v2838 = vadd.f32 %v2802, %v2826
    %v2839 = vadd.f32 %v2803, %v2827
    %v2840 = vadd.f32 %v2804, %v2828
    %v2841 = vadd.f32 %v2805, %v2829
    %v2842 = vadd.f32 %v2806, %v2830
    %v2843 = vadd.f32 %v2807, %v2831
    %v2844 = vadd.f32 %v2808, %v2832
    %v2845 = vadd.f32 %v2809, %v2833
    %v2846 = vadd.f32 %v2810, %v2834
    %v2847 = vadd.f32 %v2811, %v2835
    %v2848 = vadd.f32 %v2812, %v2836
    %2849 = vrot.lane.b32.xlu0 %v2837, 16
    %v2850 = vpop.permute.xlu0 %2849
    %2851 = vrot.lane.b32.xlu0 %v2841, 16
    %v2852 = vpop.permute.xlu0 %2851
    %2853 = vrot.lane.b32.xlu0 %v2845, 16
    %v2854 = vpop.permute.xlu0 %2853
    %2855 = vrot.lane.b32.xlu0 %v2838, 16
    %v2856 = vpop.permute.xlu0 %2855
    %2857 = vrot.lane.b32.xlu0 %v2842, 16
    %v2858 = vpop.permute.xlu0 %2857
    %2859 = vrot.lane.b32.xlu0 %v2846, 16
    %v2860 = vpop.permute.xlu0 %2859
    %2861 = vrot.lane.b32.xlu0 %v2839, 16
    %v2862 = vpop.permute.xlu0 %2861
    %2863 = vrot.lane.b32.xlu0 %v2843, 16
    %v2864 = vpop.permute.xlu0 %2863
    %2865 = vrot.lane.b32.xlu0 %v2847, 16
    %v2866 = vpop.permute.xlu0 %2865
    %2867 = vrot.lane.b32.xlu0 %v2840, 16
    %v2868 = vpop.permute.xlu0 %2867
    %2869 = vrot.lane.b32.xlu0 %v2844, 16
    %v2870 = vpop.permute.xlu0 %2869
    %2871 = vrot.lane.b32.xlu0 %v2848, 16
    %v2872 = vpop.permute.xlu0 %2871
    %v2873 = vsel %vm1346, %v2862, %v2868
    %v2874 = vsel %vm1346, %v2864, %v2870
    %v2875 = vsel %vm1346, %v2866, %v2872
    %v2876 = vsel %vm1346, %v2856, %v2862
    %v2877 = vsel %vm1346, %v2858, %v2864
    %v2878 = vsel %vm1346, %v2860, %v2866
    %v2879 = vsel %vm1346, %v2850, %v2856
    %v2880 = vsel %vm1346, %v2852, %v2858
    %v2881 = vsel %vm1346, %v2854, %v2860
    %v2882 = vsel %vm1346, %v2868, %v2850
    %v2883 = vsel %vm1346, %v2870, %v2852
    %v2884 = vsel %vm1346, %v2872, %v2854
    %v2885 = vmul.f32 %v2882, %v1362
    %v2886 = vmul.f32 %v2879, %v1366
    %v2887 = vmul.f32 %v2876, %v1370
    %v2888 = vmul.f32 %v2873, %v1374
    %v2889 = vmul.f32 %v2883, %v1362
    %v2890 = vmul.f32 %v2880, %v1366
    %v2891 = vmul.f32 %v2877, %v1370
    %v2892 = vmul.f32 %v2874, %v1374
    %v2893 = vmul.f32 %v2884, %v1362
    %v2894 = vmul.f32 %v2881, %v1366
    %v2895 = vmul.f32 %v2878, %v1370
    %v2896 = vmul.f32 %v2875, %v1374
    %v2897 = vadd.f32 %v2741, %v2885
    %v2898 = vadd.f32 %v2742, %v2886
    %v2899 = vadd.f32 %v2743, %v2887
    %v2900 = vadd.f32 %v2744, %v2888
    %v2901 = vadd.f32 %v2745, %v2889
    %v2902 = vadd.f32 %v2746, %v2890
    %v2903 = vadd.f32 %v2747, %v2891
    %v2904 = vadd.f32 %v2748, %v2892
    %v2905 = vadd.f32 %v2749, %v2893
    %v2906 = vadd.f32 %v2750, %v2894
    %v2907 = vadd.f32 %v2751, %v2895
    %v2908 = vadd.f32 %v2752, %v2896
    %2909 = vset.pattern.permute.xlu0 6
    %2910 = vperm.xlu0 %2909, %v2531
    %v2911 = vpop.permute.xlu0 %2910
    %2913 = vset.pattern.permute.xlu0 6
    %2914 = vperm.xlu0 %2913, %v2532
    %v2915 = vpop.permute.xlu0 %2914
    %2917 = vset.pattern.permute.xlu0 6
    %2918 = vperm.xlu0 %2917, %v2533
    %v2919 = vpop.permute.xlu0 %2918
    %v2921 = vmul.f32 %v2911, %v2570
    %v2922 = vmul.f32 %v2911, %v2571
    %v2923 = vmul.f32 %v2911, %v2572
    %v2924 = vmul.f32 %v2911, %v2573
    %v2925 = vmul.f32 %v2915, %v2574
    %v2926 = vmul.f32 %v2915, %v2575
    %v2927 = vmul.f32 %v2915, %v2576
    %v2928 = vmul.f32 %v2915, %v2577
    %v2929 = vmul.f32 %v2919, %v2578
    %v2930 = vmul.f32 %v2919, %v2579
    %v2931 = vmul.f32 %v2919, %v2580
    %v2932 = vmul.f32 %v2919, %v2581
    %2933 = vset.pattern.permute.xlu0 7
    %2934 = vperm.xlu0 %2933, %v2531
    %v2935 = vpop.permute.xlu0 %2934
    %2937 = vset.pattern.permute.xlu0 7
    %2938 = vperm.xlu0 %2937, %v2532
    %v2939 = vpop.permute.xlu0 %2938
    %2941 = vset.pattern.permute.xlu0 7
    %2942 = vperm.xlu0 %2941, %v2533
    %v2943 = vpop.permute.xlu0 %2942
    %v2945 = vmul.f32 %v2935, %v2470
    %v2946 = vmul.f32 %v2935, %v2471
    %v2947 = vmul.f32 %v2935, %v2472
    %v2948 = vmul.f32 %v2935, %v2473
    %v2949 = vmul.f32 %v2939, %v2474
    %v2950 = vmul.f32 %v2939, %v2475
    %v2951 = vmul.f32 %v2939, %v2476
    %v2952 = vmul.f32 %v2939, %v2477
    %v2953 = vmul.f32 %v2943, %v2478
    %v2954 = vmul.f32 %v2943, %v2479
    %v2955 = vmul.f32 %v2943, %v2480
    %v2956 = vmul.f32 %v2943, %v2481
    %v2957 = vadd.f32 %v2921, %v2945
    %v2958 = vadd.f32 %v2922, %v2946
    %v2959 = vadd.f32 %v2923, %v2947
    %v2960 = vadd.f32 %v2924, %v2948
    %v2961 = vadd.f32 %v2925, %v2949
    %v2962 = vadd.f32 %v2926, %v2950
    %v2963 = vadd.f32 %v2927, %v2951
    %v2964 = vadd.f32 %v2928, %v2952
    %v2965 = vadd.f32 %v2929, %v2953
    %v2966 = vadd.f32 %v2930, %v2954
    %v2967 = vadd.f32 %v2931, %v2955
    %v2968 = vadd.f32 %v2932, %v2956
    %2969 = vset.pattern.permute.xlu0 8
    %2970 = vperm.xlu0 %2969, %v2531
    %v2971 = vpop.permute.xlu0 %2970
    %2973 = vset.pattern.permute.xlu0 8
    %2974 = vperm.xlu0 %2973, %v2532
    %v2975 = vpop.permute.xlu0 %2974
    %2977 = vset.pattern.permute.xlu0 8
    %2978 = vperm.xlu0 %2977, %v2533
    %v2979 = vpop.permute.xlu0 %2978
    %v2981 = vmul.f32 %v2971, %v2618
    %v2982 = vmul.f32 %v2971, %v2619
    %v2983 = vmul.f32 %v2971, %v2620
    %v2984 = vmul.f32 %v2971, %v2621
    %v2985 = vmul.f32 %v2975, %v2622
    %v2986 = vmul.f32 %v2975, %v2623
    %v2987 = vmul.f32 %v2975, %v2624
    %v2988 = vmul.f32 %v2975, %v2625
    %v2989 = vmul.f32 %v2979, %v2626
    %v2990 = vmul.f32 %v2979, %v2627
    %v2991 = vmul.f32 %v2979, %v2628
    %v2992 = vmul.f32 %v2979, %v2629
    %v2993 = vadd.f32 %v2957, %v2981
    %v2994 = vadd.f32 %v2958, %v2982
    %v2995 = vadd.f32 %v2959, %v2983
    %v2996 = vadd.f32 %v2960, %v2984
    %v2997 = vadd.f32 %v2961, %v2985
    %v2998 = vadd.f32 %v2962, %v2986
    %v2999 = vadd.f32 %v2963, %v2987
    %v3000 = vadd.f32 %v2964, %v2988
    %v3001 = vadd.f32 %v2965, %v2989
    %v3002 = vadd.f32 %v2966, %v2990
    %v3003 = vadd.f32 %v2967, %v2991
    %v3004 = vadd.f32 %v2968, %v2992
    %3005 = vrot.lane.b32.xlu0 %v2993, 112
    %v3006 = vpop.permute.xlu0 %3005
    %3007 = vrot.lane.b32.xlu0 %v2997, 112
    %v3008 = vpop.permute.xlu0 %3007
    %3009 = vrot.lane.b32.xlu0 %v3001, 112
    %v3010 = vpop.permute.xlu0 %3009
    %3011 = vrot.lane.b32.xlu0 %v2994, 112
    %v3012 = vpop.permute.xlu0 %3011
    %3013 = vrot.lane.b32.xlu0 %v2998, 112
    %v3014 = vpop.permute.xlu0 %3013
    %3015 = vrot.lane.b32.xlu0 %v3002, 112
    %v3016 = vpop.permute.xlu0 %3015
    %3017 = vrot.lane.b32.xlu0 %v2995, 112
    %v3018 = vpop.permute.xlu0 %3017
    %3019 = vrot.lane.b32.xlu0 %v2999, 112
    %v3020 = vpop.permute.xlu0 %3019
    %3021 = vrot.lane.b32.xlu0 %v3003, 112
    %v3022 = vpop.permute.xlu0 %3021
    %3023 = vrot.lane.b32.xlu0 %v2996, 112
    %v3024 = vpop.permute.xlu0 %3023
    %3025 = vrot.lane.b32.xlu0 %v3000, 112
    %v3026 = vpop.permute.xlu0 %3025
    %3027 = vrot.lane.b32.xlu0 %v3004, 112
    %v3028 = vpop.permute.xlu0 %3027
    %v3029 = vsel %vm1519, %v3018, %v3024
    %v3030 = vsel %vm1519, %v3020, %v3026
    %v3031 = vsel %vm1519, %v3022, %v3028
    %v3032 = vsel %vm1519, %v3012, %v3018
    %v3033 = vsel %vm1519, %v3014, %v3020
    %v3034 = vsel %vm1519, %v3016, %v3022
    %v3035 = vsel %vm1519, %v3006, %v3012
    %v3036 = vsel %vm1519, %v3008, %v3014
    %v3037 = vsel %vm1519, %v3010, %v3016
    %v3038 = vsel %vm1519, %v3024, %v3006
    %v3039 = vsel %vm1519, %v3026, %v3008
    %v3040 = vsel %vm1519, %v3028, %v3010
    %v3041 = vmul.f32 %v3035, %v1535
    %v3042 = vmul.f32 %v3032, %v1539
    %v3043 = vmul.f32 %v3029, %v1543
    %v3044 = vmul.f32 %v3038, %v1547
    %v3045 = vmul.f32 %v3036, %v1535
    %v3046 = vmul.f32 %v3033, %v1539
    %v3047 = vmul.f32 %v3030, %v1543
    %v3048 = vmul.f32 %v3039, %v1547
    %v3049 = vmul.f32 %v3037, %v1535
    %v3050 = vmul.f32 %v3034, %v1539
    %v3051 = vmul.f32 %v3031, %v1543
    %v3052 = vmul.f32 %v3040, %v1547
    %v3053 = vadd.f32 %v2897, %v3041
    %v3054 = vadd.f32 %v2898, %v3042
    %v3055 = vadd.f32 %v2899, %v3043
    %v3056 = vadd.f32 %v2900, %v3044
    %v3057 = vadd.f32 %v2901, %v3045
    %v3058 = vadd.f32 %v2902, %v3046
    %v3059 = vadd.f32 %v2903, %v3047
    %v3060 = vadd.f32 %v2904, %v3048
    %v3061 = vadd.f32 %v2905, %v3049
    %v3062 = vadd.f32 %v2906, %v3050
    %v3063 = vadd.f32 %v2907, %v3051
    %v3064 = vadd.f32 %v2908, %v3052
    %v3065 = vsub.f32 0.0, %v3053
    %v3066 = vsub.f32 0.0, %v3054
    %v3067 = vsub.f32 0.0, %v3055
    %v3068 = vsub.f32 0.0, %v3056
    %v3069 = vsub.f32 0.0, %v3057
    %v3070 = vsub.f32 0.0, %v3058
    %v3071 = vsub.f32 0.0, %v3059
    %v3072 = vsub.f32 0.0, %v3060
    %v3073 = vsub.f32 0.0, %v3061
    %v3074 = vsub.f32 0.0, %v3062
    %v3075 = vsub.f32 0.0, %v3063
    %v3076 = vsub.f32 0.0, %v3064
    %v3077 = vmul.f32 %v3065, 1.442695
    %v3078 = vpow.pop %v3077
    %v3079 = vmul.f32 %v3066, 1.442695
    %v3080 = vpow.pop %v3079
    %v3081 = vmul.f32 %v3067, 1.442695
    %v3082 = vpow.pop %v3081
    %v3083 = vmul.f32 %v3068, 1.442695
    %v3084 = vpow.pop %v3083
    %v3085 = vmul.f32 %v3069, 1.442695
    %v3086 = vpow.pop %v3085
    %v3087 = vmul.f32 %v3070, 1.442695
    %v3088 = vpow.pop %v3087
    %v3089 = vmul.f32 %v3071, 1.442695
    %v3090 = vpow.pop %v3089
    %v3091 = vmul.f32 %v3072, 1.442695
    %v3092 = vpow.pop %v3091
    %v3093 = vmul.f32 %v3073, 1.442695
    %v3094 = vpow.pop %v3093
    %v3095 = vmul.f32 %v3074, 1.442695
    %v3096 = vpow.pop %v3095
    %v3097 = vmul.f32 %v3075, 1.442695
    %v3098 = vpow.pop %v3097
    %v3099 = vmul.f32 %v3076, 1.442695
    %v3100 = vpow.pop %v3099
    %v3101 = vadd.f32 %v3078, 1.0
    %v3102 = vadd.f32 %v3080, 1.0
    %v3103 = vadd.f32 %v3082, 1.0
    %v3104 = vadd.f32 %v3084, 1.0
    %v3105 = vadd.f32 %v3086, 1.0
    %v3106 = vadd.f32 %v3088, 1.0
    %v3107 = vadd.f32 %v3090, 1.0
    %v3108 = vadd.f32 %v3092, 1.0
    %v3109 = vadd.f32 %v3094, 1.0
    %v3110 = vadd.f32 %v3096, 1.0
    %v3111 = vadd.f32 %v3098, 1.0
    %v3112 = vadd.f32 %v3100, 1.0
    %v3113 = vrcp.pop %v3101
    %v3114 = vrcp.pop %v3102
    %v3115 = vrcp.pop %v3103
    %v3116 = vrcp.pop %v3104
    %v3117 = vrcp.pop %v3105
    %v3118 = vrcp.pop %v3106
    %v3119 = vrcp.pop %v3107
    %v3120 = vrcp.pop %v3108
    %v3121 = vrcp.pop %v3109
    %v3122 = vrcp.pop %v3110
    %v3123 = vrcp.pop %v3111
    %v3124 = vrcp.pop %v3112
    %v3125 = vmul.f32 %v2494, 0.5
    %v3126 = vmul.f32 %v2495, 0.5
    %v3127 = vmul.f32 %v2496, 0.5
    %v3128 = vmul.f32 %v2497, 0.5
    %v3129 = vmul.f32 %v2498, 0.5
    %v3130 = vmul.f32 %v2499, 0.5
    %v3131 = vmul.f32 %v2500, 0.5
    %v3132 = vmul.f32 %v2501, 0.5
    %v3133 = vmul.f32 %v2502, 0.5
    %v3134 = vmul.f32 %v2503, 0.5
    %v3135 = vmul.f32 %v2504, 0.5
    %v3136 = vmul.f32 %v2505, 0.5
    %v3137 = vmul.f32 %v2494, 0.70710677
    %v3138 = vmul.f32 %v2495, 0.70710677
    %v3139 = vmul.f32 %v2496, 0.70710677
    %v3140 = vmul.f32 %v2497, 0.70710677
    %v3141 = vmul.f32 %v2498, 0.70710677
    %v3142 = vmul.f32 %v2499, 0.70710677
    %v3143 = vmul.f32 %v2500, 0.70710677
    %v3144 = vmul.f32 %v2501, 0.70710677
    %v3145 = vmul.f32 %v2502, 0.70710677
    %v3146 = vmul.f32 %v2503, 0.70710677
    %v3147 = vmul.f32 %v2504, 0.70710677
    %v3148 = vmul.f32 %v2505, 0.70710677
    %vm3149 = vcmp.ge.f32.partialorder %v3137, 0.0
    %vm3150 = vcmp.ge.f32.partialorder %v3138, 0.0
    %vm3151 = vcmp.ge.f32.partialorder %v3139, 0.0
    %vm3152 = vcmp.ge.f32.partialorder %v3140, 0.0
    %vm3153 = vcmp.ge.f32.partialorder %v3141, 0.0
    %vm3154 = vcmp.ge.f32.partialorder %v3142, 0.0
    %vm3155 = vcmp.ge.f32.partialorder %v3143, 0.0
    %vm3156 = vcmp.ge.f32.partialorder %v3144, 0.0
    %vm3157 = vcmp.ge.f32.partialorder %v3145, 0.0
    %vm3158 = vcmp.ge.f32.partialorder %v3146, 0.0
    %vm3159 = vcmp.ge.f32.partialorder %v3147, 0.0
    %vm3160 = vcmp.ge.f32.partialorder %v3148, 0.0
    %v3161 = vsel %vm3149, 1.0, -1.0
    %v3162 = vsel %vm3150, 1.0, -1.0
    %v3163 = vsel %vm3151, 1.0, -1.0
    %v3164 = vsel %vm3152, 1.0, -1.0
    %v3165 = vsel %vm3153, 1.0, -1.0
    %v3166 = vsel %vm3154, 1.0, -1.0
    %v3167 = vsel %vm3155, 1.0, -1.0
    %v3168 = vsel %vm3156, 1.0, -1.0
    %v3169 = vsel %vm3157, 1.0, -1.0
    %v3170 = vsel %vm3158, 1.0, -1.0
    %v3171 = vsel %vm3159, 1.0, -1.0
    %v3172 = vsel %vm3160, 1.0, -1.0
    %v3173 = vand.u32 2147483647, %v3137
    %v3174 = vand.u32 2147483647, %v3138
    %v3175 = vand.u32 2147483647, %v3139
    %v3176 = vand.u32 2147483647, %v3140
    %v3177 = vand.u32 2147483647, %v3141
    %v3178 = vand.u32 2147483647, %v3142
    %v3179 = vand.u32 2147483647, %v3143
    %v3180 = vand.u32 2147483647, %v3144
    %v3181 = vand.u32 2147483647, %v3145
    %v3182 = vand.u32 2147483647, %v3146
    %v3183 = vand.u32 2147483647, %v3147
    %v3184 = vand.u32 2147483647, %v3148
    %v3185 = vmul.f32 %v3173, 0.3275911
    %v3186 = vmul.f32 %v3174, 0.3275911
    %v3187 = vmul.f32 %v3175, 0.3275911
    %v3188 = vmul.f32 %v3176, 0.3275911
    %v3189 = vmul.f32 %v3177, 0.3275911
    %v3190 = vmul.f32 %v3178, 0.3275911
    %v3191 = vmul.f32 %v3179, 0.3275911
    %v3192 = vmul.f32 %v3180, 0.3275911
    %v3193 = vmul.f32 %v3181, 0.3275911
    %v3194 = vmul.f32 %v3182, 0.3275911
    %v3195 = vmul.f32 %v3183, 0.3275911
    %v3196 = vmul.f32 %v3184, 0.3275911
    %v3197 = vadd.f32 %v3185, 1.0
    %v3198 = vadd.f32 %v3186, 1.0
    %v3199 = vadd.f32 %v3187, 1.0
    %v3200 = vadd.f32 %v3188, 1.0
    %v3201 = vadd.f32 %v3189, 1.0
    %v3202 = vadd.f32 %v3190, 1.0
    %v3203 = vadd.f32 %v3191, 1.0
    %v3204 = vadd.f32 %v3192, 1.0
    %v3205 = vadd.f32 %v3193, 1.0
    %v3206 = vadd.f32 %v3194, 1.0
    %v3207 = vadd.f32 %v3195, 1.0
    %v3208 = vadd.f32 %v3196, 1.0
    %v3209 = vrcp.pop %v3197
    %v3210 = vrcp.pop %v3198
    %v3211 = vrcp.pop %v3199
    %v3212 = vrcp.pop %v3200
    %v3213 = vrcp.pop %v3201
    %v3214 = vrcp.pop %v3202
    %v3215 = vrcp.pop %v3203
    %v3216 = vrcp.pop %v3204
    %v3217 = vrcp.pop %v3205
    %v3218 = vrcp.pop %v3206
    %v3219 = vrcp.pop %v3207
    %v3220 = vrcp.pop %v3208
    %v3221 = vmul.f32 %v3209, 1.0614054
    %v3222 = vmul.f32 %v3210, 1.0614054
    %v3223 = vmul.f32 %v3211, 1.0614054
    %v3224 = vmul.f32 %v3212, 1.0614054
    %v3225 = vmul.f32 %v3213, 1.0614054
    %v3226 = vmul.f32 %v3214, 1.0614054
    %v3227 = vmul.f32 %v3215, 1.0614054
    %v3228 = vmul.f32 %v3216, 1.0614054
    %v3229 = vmul.f32 %v3217, 1.0614054
    %v3230 = vmul.f32 %v3218, 1.0614054
    %v3231 = vmul.f32 %v3219, 1.0614054
    %v3232 = vmul.f32 %v3220, 1.0614054
    %v3233 = vadd.f32 %v3221, -1.4531521
    %v3234 = vadd.f32 %v3222, -1.4531521
    %v3235 = vadd.f32 %v3223, -1.4531521
    %v3236 = vadd.f32 %v3224, -1.4531521
    %v3237 = vadd.f32 %v3225, -1.4531521
    %v3238 = vadd.f32 %v3226, -1.4531521
    %v3239 = vadd.f32 %v3227, -1.4531521
    %v3240 = vadd.f32 %v3228, -1.4531521
    %v3241 = vadd.f32 %v3229, -1.4531521
    %v3242 = vadd.f32 %v3230, -1.4531521
    %v3243 = vadd.f32 %v3231, -1.4531521
    %v3244 = vadd.f32 %v3232, -1.4531521
    %v3245 = vmul.f32 %v3233, %v3209
    %v3246 = vmul.f32 %v3234, %v3210
    %v3247 = vmul.f32 %v3235, %v3211
    %v3248 = vmul.f32 %v3236, %v3212
    %v3249 = vmul.f32 %v3237, %v3213
    %v3250 = vmul.f32 %v3238, %v3214
    %v3251 = vmul.f32 %v3239, %v3215
    %v3252 = vmul.f32 %v3240, %v3216
    %v3253 = vmul.f32 %v3241, %v3217
    %v3254 = vmul.f32 %v3242, %v3218
    %v3255 = vmul.f32 %v3243, %v3219
    %v3256 = vmul.f32 %v3244, %v3220
    %v3257 = vadd.f32 %v3245, 1.4214138
    %v3258 = vadd.f32 %v3246, 1.4214138
    %v3259 = vadd.f32 %v3247, 1.4214138
    %v3260 = vadd.f32 %v3248, 1.4214138
    %v3261 = vadd.f32 %v3249, 1.4214138
    %v3262 = vadd.f32 %v3250, 1.4214138
    %v3263 = vadd.f32 %v3251, 1.4214138
    %v3264 = vadd.f32 %v3252, 1.4214138
    %v3265 = vadd.f32 %v3253, 1.4214138
    %v3266 = vadd.f32 %v3254, 1.4214138
    %v3267 = vadd.f32 %v3255, 1.4214138
    %v3268 = vadd.f32 %v3256, 1.4214138
    %v3269 = vmul.f32 %v3257, %v3209
    %v3270 = vmul.f32 %v3258, %v3210
    %v3271 = vmul.f32 %v3259, %v3211
    %v3272 = vmul.f32 %v3260, %v3212
    %v3273 = vmul.f32 %v3261, %v3213
    %v3274 = vmul.f32 %v3262, %v3214
    %v3275 = vmul.f32 %v3263, %v3215
    %v3276 = vmul.f32 %v3264, %v3216
    %v3277 = vmul.f32 %v3265, %v3217
    %v3278 = vmul.f32 %v3266, %v3218
    %v3279 = vmul.f32 %v3267, %v3219
    %v3280 = vmul.f32 %v3268, %v3220
    %v3281 = vadd.f32 %v3269, -0.28449672
    %v3282 = vadd.f32 %v3270, -0.28449672
    %v3283 = vadd.f32 %v3271, -0.28449672
    %v3284 = vadd.f32 %v3272, -0.28449672
    %v3285 = vadd.f32 %v3273, -0.28449672
    %v3286 = vadd.f32 %v3274, -0.28449672
    %v3287 = vadd.f32 %v3275, -0.28449672
    %v3288 = vadd.f32 %v3276, -0.28449672
    %v3289 = vadd.f32 %v3277, -0.28449672
    %v3290 = vadd.f32 %v3278, -0.28449672
    %v3291 = vadd.f32 %v3279, -0.28449672
    %v3292 = vadd.f32 %v3280, -0.28449672
    %v3293 = vmul.f32 %v3281, %v3209
    %v3294 = vmul.f32 %v3282, %v3210
    %v3295 = vmul.f32 %v3283, %v3211
    %v3296 = vmul.f32 %v3284, %v3212
    %v3297 = vmul.f32 %v3285, %v3213
    %v3298 = vmul.f32 %v3286, %v3214
    %v3299 = vmul.f32 %v3287, %v3215
    %v3300 = vmul.f32 %v3288, %v3216
    %v3301 = vmul.f32 %v3289, %v3217
    %v3302 = vmul.f32 %v3290, %v3218
    %v3303 = vmul.f32 %v3291, %v3219
    %v3304 = vmul.f32 %v3292, %v3220
    %v3305 = vadd.f32 %v3293, 0.2548296
    %v3306 = vadd.f32 %v3294, 0.2548296
    %v3307 = vadd.f32 %v3295, 0.2548296
    %v3308 = vadd.f32 %v3296, 0.2548296
    %v3309 = vadd.f32 %v3297, 0.2548296
    %v3310 = vadd.f32 %v3298, 0.2548296
    %v3311 = vadd.f32 %v3299, 0.2548296
    %v3312 = vadd.f32 %v3300, 0.2548296
    %v3313 = vadd.f32 %v3301, 0.2548296
    %v3314 = vadd.f32 %v3302, 0.2548296
    %v3315 = vadd.f32 %v3303, 0.2548296
    %v3316 = vadd.f32 %v3304, 0.2548296
    %v3317 = vmul.f32 %v3305, %v3209
    %v3318 = vmul.f32 %v3306, %v3210
    %v3319 = vmul.f32 %v3307, %v3211
    %v3320 = vmul.f32 %v3308, %v3212
    %v3321 = vmul.f32 %v3309, %v3213
    %v3322 = vmul.f32 %v3310, %v3214
    %v3323 = vmul.f32 %v3311, %v3215
    %v3324 = vmul.f32 %v3312, %v3216
    %v3325 = vmul.f32 %v3313, %v3217
    %v3326 = vmul.f32 %v3314, %v3218
    %v3327 = vmul.f32 %v3315, %v3219
    %v3328 = vmul.f32 %v3316, %v3220
    %v3329 = vsub.f32 0.0, %v3173
    %v3330 = vsub.f32 0.0, %v3174
    %v3331 = vsub.f32 0.0, %v3175
    %v3332 = vsub.f32 0.0, %v3176
    %v3333 = vsub.f32 0.0, %v3177
    %v3334 = vsub.f32 0.0, %v3178
    %v3335 = vsub.f32 0.0, %v3179
    %v3336 = vsub.f32 0.0, %v3180
    %v3337 = vsub.f32 0.0, %v3181
    %v3338 = vsub.f32 0.0, %v3182
    %v3339 = vsub.f32 0.0, %v3183
    %v3340 = vsub.f32 0.0, %v3184
    %v3341 = vmul.f32 %v3329, %v3173
    %v3342 = vmul.f32 %v3330, %v3174
    %v3343 = vmul.f32 %v3331, %v3175
    %v3344 = vmul.f32 %v3332, %v3176
    %v3345 = vmul.f32 %v3333, %v3177
    %v3346 = vmul.f32 %v3334, %v3178
    %v3347 = vmul.f32 %v3335, %v3179
    %v3348 = vmul.f32 %v3336, %v3180
    %v3349 = vmul.f32 %v3337, %v3181
    %v3350 = vmul.f32 %v3338, %v3182
    %v3351 = vmul.f32 %v3339, %v3183
    %v3352 = vmul.f32 %v3340, %v3184
    %v3353 = vmul.f32 %v3341, 1.442695
    %v3354 = vpow.pop %v3353
    %v3355 = vmul.f32 %v3342, 1.442695
    %v3356 = vpow.pop %v3355
    %v3357 = vmul.f32 %v3343, 1.442695
    %v3358 = vpow.pop %v3357
    %v3359 = vmul.f32 %v3344, 1.442695
    %v3360 = vpow.pop %v3359
    %v3361 = vmul.f32 %v3345, 1.442695
    %v3362 = vpow.pop %v3361
    %v3363 = vmul.f32 %v3346, 1.442695
    %v3364 = vpow.pop %v3363
    %v3365 = vmul.f32 %v3347, 1.442695
    %v3366 = vpow.pop %v3365
    %v3367 = vmul.f32 %v3348, 1.442695
    %v3368 = vpow.pop %v3367
    %v3369 = vmul.f32 %v3349, 1.442695
    %v3370 = vpow.pop %v3369
    %v3371 = vmul.f32 %v3350, 1.442695
    %v3372 = vpow.pop %v3371
    %v3373 = vmul.f32 %v3351, 1.442695
    %v3374 = vpow.pop %v3373
    %v3375 = vmul.f32 %v3352, 1.442695
    %v3376 = vpow.pop %v3375
    %v3377 = vmul.f32 %v3317, %v3354
    %v3378 = vmul.f32 %v3318, %v3356
    %v3379 = vmul.f32 %v3319, %v3358
    %v3380 = vmul.f32 %v3320, %v3360
    %v3381 = vmul.f32 %v3321, %v3362
    %v3382 = vmul.f32 %v3322, %v3364
    %v3383 = vmul.f32 %v3323, %v3366
    %v3384 = vmul.f32 %v3324, %v3368
    %v3385 = vmul.f32 %v3325, %v3370
    %v3386 = vmul.f32 %v3326, %v3372
    %v3387 = vmul.f32 %v3327, %v3374
    %v3388 = vmul.f32 %v3328, %v3376
    %v3389 = vsub.f32 1.0, %v3377
    %v3390 = vsub.f32 1.0, %v3378
    %v3391 = vsub.f32 1.0, %v3379
    %v3392 = vsub.f32 1.0, %v3380
    %v3393 = vsub.f32 1.0, %v3381
    %v3394 = vsub.f32 1.0, %v3382
    %v3395 = vsub.f32 1.0, %v3383
    %v3396 = vsub.f32 1.0, %v3384
    %v3397 = vsub.f32 1.0, %v3385
    %v3398 = vsub.f32 1.0, %v3386
    %v3399 = vsub.f32 1.0, %v3387
    %v3400 = vsub.f32 1.0, %v3388
    %v3401 = vmul.f32 %v3161, %v3389
    %v3402 = vmul.f32 %v3162, %v3390
    %v3403 = vmul.f32 %v3163, %v3391
    %v3404 = vmul.f32 %v3164, %v3392
    %v3405 = vmul.f32 %v3165, %v3393
    %v3406 = vmul.f32 %v3166, %v3394
    %v3407 = vmul.f32 %v3167, %v3395
    %v3408 = vmul.f32 %v3168, %v3396
    %v3409 = vmul.f32 %v3169, %v3397
    %v3410 = vmul.f32 %v3170, %v3398
    %v3411 = vmul.f32 %v3171, %v3399
    %v3412 = vmul.f32 %v3172, %v3400
    %v3413 = vadd.f32 %v3401, 1.0
    %v3414 = vadd.f32 %v3402, 1.0
    %v3415 = vadd.f32 %v3403, 1.0
    %v3416 = vadd.f32 %v3404, 1.0
    %v3417 = vadd.f32 %v3405, 1.0
    %v3418 = vadd.f32 %v3406, 1.0
    %v3419 = vadd.f32 %v3407, 1.0
    %v3420 = vadd.f32 %v3408, 1.0
    %v3421 = vadd.f32 %v3409, 1.0
    %v3422 = vadd.f32 %v3410, 1.0
    %v3423 = vadd.f32 %v3411, 1.0
    %v3424 = vadd.f32 %v3412, 1.0
    %v3425 = vmul.f32 %v3125, %v3413
    %v3426 = vmul.f32 %v3126, %v3414
    %v3427 = vmul.f32 %v3127, %v3415
    %v3428 = vmul.f32 %v3128, %v3416
    %v3429 = vmul.f32 %v3129, %v3417
    %v3430 = vmul.f32 %v3130, %v3418
    %v3431 = vmul.f32 %v3131, %v3419
    %v3432 = vmul.f32 %v3132, %v3420
    %v3433 = vmul.f32 %v3133, %v3421
    %v3434 = vmul.f32 %v3134, %v3422
    %v3435 = vmul.f32 %v3135, %v3423
    %v3436 = vmul.f32 %v3136, %v3424
    %s3437 = scalar_lea.vmem %s1, 72
    %v3438 = vld [vmem:[%s3437] sm:$0xff]
    %v3439 = vld [vmem:[%s3437 + $0x8] sm:$0xff]
    %v3440 = vld [vmem:[%s3437 + $0x10] sm:$0xf]
    %3441 = vset.pattern.permute.xlu0 6
    %3442 = vperm.xlu0 %3441, %v48
    %v3443 = vpop.permute.xlu0 %3442
    %3445 = vset.pattern.permute.xlu0 6
    %3446 = vperm.xlu0 %3445, %v49
    %v3447 = vpop.permute.xlu0 %3446
    %3449 = vset.pattern.permute.xlu0 6
    %3450 = vperm.xlu0 %3449, %v50
    %v3451 = vpop.permute.xlu0 %3450
    %v3454 = vsel %vm73, %v3438, 0
    %v3457 = vsel %vm73, %v3439, 0
    %v3460 = vsel %vm73, %v3440, 0
    %v3463 = vsel %vm83, %v3433, 0
    %v3466 = vsel %vm83, %v3434, 0
    %v3469 = vsel %vm83, %v3435, 0
    %v3472 = vsel %vm83, %v3436, 0
    %3474 = vmatprep.subr.mxu0 %v3426
    %3475 = vmatpush1.msra.mxu0 %v3425
    %3476 = vmatprep.subr.mxu0 %v3430
    %3477 = vmatpush1.msra.mxu0 %v3429
    %3478 = vmatprep.subr.mxu0 %v3466
    %3479 = vmatpush1.msra.mxu0 %v3463
    %3480 = vmatprep.subr.mxu0 0.0
    %3481 = vmatpush1.msra.mxu0 0.0
    %3482 = vmatprep.subr.mxu0 0.0
    %3483 = vmatpush1.msra.mxu0 0.0
    %3484 = vmatprep.subr.mxu0 0.0
    %3485 = vmatpush1.msra.mxu0 0.0
    %3486 = vmatprep.subr.mxu0 0.0
    %3487 = vmatpush1.msra.mxu0 0.0
    %3488 = vmatprep.subr.mxu0 0.0
    %3489 = vmatpush1.msra.mxu0 0.0
    %3490 = vmatprep.subr.mxu0 0.0
    %3491 = vmatpush1.msra.mxu0 0.0
    %3492 = vmatprep.subr.mxu0 0.0
    %3493 = vmatpush1.msra.mxu0 0.0
    %3494 = vmatprep.subr.mxu0 0.0
    %3495 = vmatpush1.msra.mxu0 0.0
    %3496 = vmatprep.subr.mxu0 0.0
    %3497 = vmatpush1.msra.mxu0 0.0
    %3498 = vmatprep.subr.mxu0 0.0
    %3499 = vmatpush1.msra.mxu0 0.0
    %3500 = vmatprep.subr.mxu0 0.0
    %3501 = vmatpush1.msra.mxu0 0.0
    %3502 = vmatprep.subr.mxu0 0.0
    %3503 = vmatpush1.msra.mxu0 0.0
    %3504 = vmatprep.subr.mxu0 0.0
    %3505 = vmatpush1.msra.mxu0 0.0
    %3506 = vmatprep.subr.mxu0 0.0
    %3507 = vmatpush1.msra.mxu0 0.0
    %3508 = vmatprep.subr.mxu0 0.0
    %3509 = vmatpush1.msra.mxu0 0.0
    %3510 = vmatprep.subr.mxu0 0.0
    %3511 = vmatpush1.msra.mxu0 0.0
    %3512 = vmatprep.subr.mxu0 0.0
    %3513 = vmatpush1.msra.mxu0 0.0
    %3514 = vmatprep.subr.mxu0 0.0
    %3515 = vmatpush1.msra.mxu0 0.0
    %3516 = vmatprep.subr.mxu0 0.0
    %3517 = vmatpush1.msra.mxu0 0.0
    %3518 = vmatprep.subr.mxu0 0.0
    %3519 = vmatpush1.msra.mxu0 0.0
    %3520 = vmatprep.subr.mxu0 0.0
    %3521 = vmatpush1.msra.mxu0 0.0
    %3522 = vmatprep.subr.mxu0 0.0
    %3523 = vmatpush1.msra.mxu0 0.0
    %3524 = vmatprep.subr.mxu0 0.0
    %3525 = vmatpush1.msra.mxu0 0.0
    %3526 = vmatprep.subr.mxu0 0.0
    %3527 = vmatpush1.msra.mxu0 0.0
    %3528 = vmatprep.subr.mxu0 0.0
    %3529 = vmatpush1.msra.mxu0 0.0
    %3530 = vmatprep.subr.mxu0 0.0
    %3531 = vmatpush1.msra.mxu0 0.0
    %3532 = vmatprep.subr.mxu0 0.0
    %3533 = vmatpush1.msra.mxu0 0.0
    %3534 = vmatprep.subr.mxu0 0.0
    %3535 = vmatpush1.msra.mxu0 0.0
    %3536 = vmatprep.subr.mxu0 0.0
    %3537 = vmatpush1.msra.mxu0 0.0
    %3538 = vmatprep.mubr.f32.mxu0 0.0
    %3539 = vmatmul.mubr.f32.gmra.mrb[0].mxu0 %v3454
    %v3540 = vpop.f32.mrb[0].mxu0
    %v3541 = vadd.f32 %v3443, %v3540
    %v3542 = vpop.f32.mrb[0].mxu0
    %v3543 = vadd.f32 %v3443, %v3542
    %3544 = vmatprep.mubr.f32.mxu0 0.0
    %3545 = vmatmul.mubr.f32.gmra.mrb[0].mxu0 %v3457
    %v3546 = vpop.f32.mrb[0].mxu0
    %v3547 = vadd.f32 %v3447, %v3546
    %v3548 = vpop.f32.mrb[0].mxu0
    %v3549 = vadd.f32 %v3447, %v3548
    %3550 = vmatprep.mubr.f32.mxu0 0.0
    %3551 = vmatmul.mubr.f32.gmra.mrb[0].mxu0 %v3460
    %v3552 = vpop.f32.mrb[0].mxu0
    %v3553 = vadd.f32 %v3451, %v3552
    %v3554 = vpop.f32.mrb[0].mxu0
    %v3555 = vadd.f32 %v3451, %v3554
    %3556 = vdwg.mxu0
    %3557 = vmatprep.subr.mxu0 %v3428
    %3558 = vmatpush1.msra.mxu0 %v3427
    %3559 = vmatprep.subr.mxu0 %v3432
    %3560 = vmatpush1.msra.mxu0 %v3431
    %3561 = vmatprep.subr.mxu0 %v3472
    %3562 = vmatpush1.msra.mxu0 %v3469
    %3563 = vmatprep.subr.mxu0 0.0
    %3564 = vmatpush1.msra.mxu0 0.0
    %3565 = vmatprep.subr.mxu0 0.0
    %3566 = vmatpush1.msra.mxu0 0.0
    %3567 = vmatprep.subr.mxu0 0.0
    %3568 = vmatpush1.msra.mxu0 0.0
    %3569 = vmatprep.subr.mxu0 0.0
    %3570 = vmatpush1.msra.mxu0 0.0
    %3571 = vmatprep.subr.mxu0 0.0
    %3572 = vmatpush1.msra.mxu0 0.0
    %3573 = vmatprep.subr.mxu0 0.0
    %3574 = vmatpush1.msra.mxu0 0.0
    %3575 = vmatprep.subr.mxu0 0.0
    %3576 = vmatpush1.msra.mxu0 0.0
    %3577 = vmatprep.subr.mxu0 0.0
    %3578 = vmatpush1.msra.mxu0 0.0
    %3579 = vmatprep.subr.mxu0 0.0
    %3580 = vmatpush1.msra.mxu0 0.0
    %3581 = vmatprep.subr.mxu0 0.0
    %3582 = vmatpush1.msra.mxu0 0.0
    %3583 = vmatprep.subr.mxu0 0.0
    %3584 = vmatpush1.msra.mxu0 0.0
    %3585 = vmatprep.subr.mxu0 0.0
    %3586 = vmatpush1.msra.mxu0 0.0
    %3587 = vmatprep.subr.mxu0 0.0
    %3588 = vmatpush1.msra.mxu0 0.0
    %3589 = vmatprep.subr.mxu0 0.0
    %3590 = vmatpush1.msra.mxu0 0.0
    %3591 = vmatprep.subr.mxu0 0.0
    %3592 = vmatpush1.msra.mxu0 0.0
    %3593 = vmatprep.subr.mxu0 0.0
    %3594 = vmatpush1.msra.mxu0 0.0
    %3595 = vmatprep.subr.mxu0 0.0
    %3596 = vmatpush1.msra.mxu0 0.0
    %3597 = vmatprep.subr.mxu0 0.0
    %3598 = vmatpush1.msra.mxu0 0.0
    %3599 = vmatprep.subr.mxu0 0.0
    %3600 = vmatpush1.msra.mxu0 0.0
    %3601 = vmatprep.subr.mxu0 0.0
    %3602 = vmatpush1.msra.mxu0 0.0
    %3603 = vmatprep.subr.mxu0 0.0
    %3604 = vmatpush1.msra.mxu0 0.0
    %3605 = vmatprep.subr.mxu0 0.0
    %3606 = vmatpush1.msra.mxu0 0.0
    %3607 = vmatprep.subr.mxu0 0.0
    %3608 = vmatpush1.msra.mxu0 0.0
    %3609 = vmatprep.subr.mxu0 0.0
    %3610 = vmatpush1.msra.mxu0 0.0
    %3611 = vmatprep.subr.mxu0 0.0
    %3612 = vmatpush1.msra.mxu0 0.0
    %3613 = vmatprep.subr.mxu0 0.0
    %3614 = vmatpush1.msra.mxu0 0.0
    %3615 = vmatprep.subr.mxu0 0.0
    %3616 = vmatpush1.msra.mxu0 0.0
    %3617 = vmatprep.subr.mxu0 0.0
    %3618 = vmatpush1.msra.mxu0 0.0
    %3619 = vmatprep.subr.mxu0 0.0
    %3620 = vmatpush1.msra.mxu0 0.0
    %3621 = vmatprep.mubr.f32.mxu0 0.0
    %3622 = vmatmul.mubr.f32.gmra.mrb[0].mxu0 %v3454
    %v3623 = vpop.f32.mrb[0].mxu0
    %v3624 = vadd.f32 %v3443, %v3623
    %v3625 = vpop.f32.mrb[0].mxu0
    %v3626 = vadd.f32 %v3443, %v3625
    %3627 = vmatprep.mubr.f32.mxu0 0.0
    %3628 = vmatmul.mubr.f32.gmra.mrb[0].mxu0 %v3457
    %v3629 = vpop.f32.mrb[0].mxu0
    %v3630 = vadd.f32 %v3447, %v3629
    %v3631 = vpop.f32.mrb[0].mxu0
    %v3632 = vadd.f32 %v3447, %v3631
    %3633 = vmatprep.mubr.f32.mxu0 0.0
    %3634 = vmatmul.mubr.f32.gmra.mrb[0].mxu0 %v3460
    %v3635 = vpop.f32.mrb[0].mxu0
    %v3636 = vadd.f32 %v3451, %v3635
    %v3637 = vpop.f32.mrb[0].mxu0
    %v3638 = vadd.f32 %v3451, %v3637
    %3639 = vdwg.mxu0
    %s3640 = scalar_lea.vmem %s3, 48
    %v3641 = vld [vmem:[%s3640] sm:$0xff]
    %v3642 = vld [vmem:[%s3640 + $0x8] sm:$0xff]
    %v3643 = vld [vmem:[%s3640 + $0x10] sm:$0xf]
    %3644 = vrot.lane.b32.xlu0 %v3541, 1
    %v3645 = vpop.permute.xlu0 %3644
    %3646 = vrot.lane.b32.xlu0 %v3547, 1
    %v3647 = vpop.permute.xlu0 %3646
    %3648 = vrot.lane.b32.xlu0 %v3553, 1
    %v3649 = vpop.permute.xlu0 %3648
    %3650 = vrot.lane.b32.xlu0 %v3543, 1
    %v3651 = vpop.permute.xlu0 %3650
    %3652 = vrot.lane.b32.xlu0 %v3549, 1
    %v3653 = vpop.permute.xlu0 %3652
    %3654 = vrot.lane.b32.xlu0 %v3555, 1
    %v3655 = vpop.permute.xlu0 %3654
    %3656 = vrot.lane.b32.xlu0 %v3624, 1
    %v3657 = vpop.permute.xlu0 %3656
    %3658 = vrot.lane.b32.xlu0 %v3630, 1
    %v3659 = vpop.permute.xlu0 %3658
    %3660 = vrot.lane.b32.xlu0 %v3636, 1
    %v3661 = vpop.permute.xlu0 %3660
    %3662 = vrot.lane.b32.xlu0 %v3626, 1
    %v3663 = vpop.permute.xlu0 %3662
    %3664 = vrot.lane.b32.xlu0 %v3632, 1
    %v3665 = vpop.permute.xlu0 %3664
    %3666 = vrot.lane.b32.xlu0 %v3638, 1
    %v3667 = vpop.permute.xlu0 %3666
    %v3668 = vsel %vm997, %v3657, %v3663
    %v3669 = vsel %vm997, %v3659, %v3665
    %v3670 = vsel %vm997, %v3661, %v3667
    %v3671 = vsel %vm997, %v3651, %v3657
    %v3672 = vsel %vm997, %v3653, %v3659
    %v3673 = vsel %vm997, %v3655, %v3661
    %v3674 = vsel %vm997, %v3645, %v3651
    %v3675 = vsel %vm997, %v3647, %v3653
    %v3676 = vsel %vm997, %v3649, %v3655
    %v3677 = vsel %vm997, %v3663, %v3645
    %v3678 = vsel %vm997, %v3665, %v3647
    %v3679 = vsel %vm997, %v3667, %v3649
    %v3680 = vmul.f32 %v3677, %v1013
    %v3681 = vmul.f32 %v3674, %v1017
    %v3682 = vmul.f32 %v3671, %v1021
    %v3683 = vmul.f32 %v3668, %v1025
    %v3684 = vmul.f32 %v3678, %v1013
    %v3685 = vmul.f32 %v3675, %v1017
    %v3686 = vmul.f32 %v3672, %v1021
    %v3687 = vmul.f32 %v3669, %v1025
    %v3688 = vmul.f32 %v3679, %v1013
    %v3689 = vmul.f32 %v3676, %v1017
    %v3690 = vmul.f32 %v3673, %v1021
    %v3691 = vmul.f32 %v3670, %v1025
    %3692 = vrot.lane.b32.xlu0 %v3541, 127
    %v3693 = vpop.permute.xlu0 %3692
    %3694 = vrot.lane.b32.xlu0 %v3547, 127
    %v3695 = vpop.permute.xlu0 %3694
    %3696 = vrot.lane.b32.xlu0 %v3553, 127
    %v3697 = vpop.permute.xlu0 %3696
    %3698 = vrot.lane.b32.xlu0 %v3543, 127
    %v3699 = vpop.permute.xlu0 %3698
    %3700 = vrot.lane.b32.xlu0 %v3549, 127
    %v3701 = vpop.permute.xlu0 %3700
    %3702 = vrot.lane.b32.xlu0 %v3555, 127
    %v3703 = vpop.permute.xlu0 %3702
    %3704 = vrot.lane.b32.xlu0 %v3624, 127
    %v3705 = vpop.permute.xlu0 %3704
    %3706 = vrot.lane.b32.xlu0 %v3630, 127
    %v3707 = vpop.permute.xlu0 %3706
    %3708 = vrot.lane.b32.xlu0 %v3636, 127
    %v3709 = vpop.permute.xlu0 %3708
    %3710 = vrot.lane.b32.xlu0 %v3626, 127
    %v3711 = vpop.permute.xlu0 %3710
    %3712 = vrot.lane.b32.xlu0 %v3632, 127
    %v3713 = vpop.permute.xlu0 %3712
    %3714 = vrot.lane.b32.xlu0 %v3638, 127
    %v3715 = vpop.permute.xlu0 %3714
    %v3716 = vsel %vm1062, %v3705, %v3711
    %v3717 = vsel %vm1062, %v3707, %v3713
    %v3718 = vsel %vm1062, %v3709, %v3715
    %v3719 = vsel %vm1062, %v3699, %v3705
    %v3720 = vsel %vm1062, %v3701, %v3707
    %v3721 = vsel %vm1062, %v3703, %v3709
    %v3722 = vsel %vm1062, %v3693, %v3699
    %v3723 = vsel %vm1062, %v3695, %v3701
    %v3724 = vsel %vm1062, %v3697, %v3703
    %v3725 = vsel %vm1062, %v3711, %v3693
    %v3726 = vsel %vm1062, %v3713, %v3695
    %v3727 = vsel %vm1062, %v3715, %v3697
    %v3728 = vmul.f32 %v3722, %v1078
    %v3729 = vmul.f32 %v3719, %v1082
    %v3730 = vmul.f32 %v3716, %v1086
    %v3731 = vmul.f32 %v3725, %v1090
    %v3732 = vmul.f32 %v3723, %v1078
    %v3733 = vmul.f32 %v3720, %v1082
    %v3734 = vmul.f32 %v3717, %v1086
    %v3735 = vmul.f32 %v3726, %v1090
    %v3736 = vmul.f32 %v3724, %v1078
    %v3737 = vmul.f32 %v3721, %v1082
    %v3738 = vmul.f32 %v3718, %v1086
    %v3739 = vmul.f32 %v3727, %v1090
    %3741 = vset.pattern.permute.xlu0 3
    %3742 = vperm.xlu0 %3741, %v3641
    %v3743 = vpop.permute.xlu0 %3742
    %3746 = vset.pattern.permute.xlu0 3
    %3747 = vperm.xlu0 %3746, %v3642
    %v3748 = vpop.permute.xlu0 %3747
    %3751 = vset.pattern.permute.xlu0 3
    %3752 = vperm.xlu0 %3751, %v3643
    %v3753 = vpop.permute.xlu0 %3752
    %v3755 = vmul.f32 %v3743, %v3680
    %v3756 = vmul.f32 %v3743, %v3681
    %v3757 = vmul.f32 %v3743, %v3682
    %v3758 = vmul.f32 %v3743, %v3683
    %v3759 = vmul.f32 %v3748, %v3684
    %v3760 = vmul.f32 %v3748, %v3685
    %v3761 = vmul.f32 %v3748, %v3686
    %v3762 = vmul.f32 %v3748, %v3687
    %v3763 = vmul.f32 %v3753, %v3688
    %v3764 = vmul.f32 %v3753, %v3689
    %v3765 = vmul.f32 %v3753, %v3690
    %v3766 = vmul.f32 %v3753, %v3691
    %3767 = vset.pattern.permute.xlu0 4
    %3768 = vperm.xlu0 %3767, %v3641
    %v3769 = vpop.permute.xlu0 %3768
    %3771 = vset.pattern.permute.xlu0 4
    %3772 = vperm.xlu0 %3771, %v3642
    %v3773 = vpop.permute.xlu0 %3772
    %3775 = vset.pattern.permute.xlu0 4
    %3776 = vperm.xlu0 %3775, %v3643
    %v3777 = vpop.permute.xlu0 %3776
    %v3779 = vmul.f32 %v3769, %v3541
    %v3780 = vmul.f32 %v3769, %v3543
    %v3781 = vmul.f32 %v3769, %v3624
    %v3782 = vmul.f32 %v3769, %v3626
    %v3783 = vmul.f32 %v3773, %v3547
    %v3784 = vmul.f32 %v3773, %v3549
    %v3785 = vmul.f32 %v3773, %v3630
    %v3786 = vmul.f32 %v3773, %v3632
    %v3787 = vmul.f32 %v3777, %v3553
    %v3788 = vmul.f32 %v3777, %v3555
    %v3789 = vmul.f32 %v3777, %v3636
    %v3790 = vmul.f32 %v3777, %v3638
    %v3791 = vadd.f32 %v3755, %v3779
    %v3792 = vadd.f32 %v3756, %v3780
    %v3793 = vadd.f32 %v3757, %v3781
    %v3794 = vadd.f32 %v3758, %v3782
    %v3795 = vadd.f32 %v3759, %v3783
    %v3796 = vadd.f32 %v3760, %v3784
    %v3797 = vadd.f32 %v3761, %v3785
    %v3798 = vadd.f32 %v3762, %v3786
    %v3799 = vadd.f32 %v3763, %v3787
    %v3800 = vadd.f32 %v3764, %v3788
    %v3801 = vadd.f32 %v3765, %v3789
    %v3802 = vadd.f32 %v3766, %v3790
    %3803 = vset.pattern.permute.xlu0 5
    %3804 = vperm.xlu0 %3803, %v3641
    %v3805 = vpop.permute.xlu0 %3804
    %3807 = vset.pattern.permute.xlu0 5
    %3808 = vperm.xlu0 %3807, %v3642
    %v3809 = vpop.permute.xlu0 %3808
    %3811 = vset.pattern.permute.xlu0 5
    %3812 = vperm.xlu0 %3811, %v3643
    %v3813 = vpop.permute.xlu0 %3812
    %v3815 = vmul.f32 %v3805, %v3728
    %v3816 = vmul.f32 %v3805, %v3729
    %v3817 = vmul.f32 %v3805, %v3730
    %v3818 = vmul.f32 %v3805, %v3731
    %v3819 = vmul.f32 %v3809, %v3732
    %v3820 = vmul.f32 %v3809, %v3733
    %v3821 = vmul.f32 %v3809, %v3734
    %v3822 = vmul.f32 %v3809, %v3735
    %v3823 = vmul.f32 %v3813, %v3736
    %v3824 = vmul.f32 %v3813, %v3737
    %v3825 = vmul.f32 %v3813, %v3738
    %v3826 = vmul.f32 %v3813, %v3739
    %v3827 = vadd.f32 %v3791, %v3815
    %v3828 = vadd.f32 %v3792, %v3816
    %v3829 = vadd.f32 %v3793, %v3817
    %v3830 = vadd.f32 %v3794, %v3818
    %v3831 = vadd.f32 %v3795, %v3819
    %v3832 = vadd.f32 %v3796, %v3820
    %v3833 = vadd.f32 %v3797, %v3821
    %v3834 = vadd.f32 %v3798, %v3822
    %v3835 = vadd.f32 %v3799, %v3823
    %v3836 = vadd.f32 %v3800, %v3824
    %v3837 = vadd.f32 %v3801, %v3825
    %v3838 = vadd.f32 %v3802, %v3826
    %3839 = vset.pattern.permute.xlu0 7
    %3840 = vperm.xlu0 %3839, %v48
    %v3841 = vpop.permute.xlu0 %3840
    %3843 = vset.pattern.permute.xlu0 7
    %3844 = vperm.xlu0 %3843, %v49
    %v3845 = vpop.permute.xlu0 %3844
    %3847 = vset.pattern.permute.xlu0 7
    %3848 = vperm.xlu0 %3847, %v50
    %v3849 = vpop.permute.xlu0 %3848
    %v3851 = vadd.f32 %v3841, %v3827
    %v3852 = vadd.f32 %v3841, %v3828
    %v3853 = vadd.f32 %v3841, %v3829
    %v3854 = vadd.f32 %v3841, %v3830
    %v3855 = vadd.f32 %v3845, %v3831
    %v3856 = vadd.f32 %v3845, %v3832
    %v3857 = vadd.f32 %v3845, %v3833
    %v3858 = vadd.f32 %v3845, %v3834
    %v3859 = vadd.f32 %v3849, %v3835
    %v3860 = vadd.f32 %v3849, %v3836
    %v3861 = vadd.f32 %v3849, %v3837
    %v3862 = vadd.f32 %v3849, %v3838
    %3863 = vset.pattern.permute.xlu0 0
    %3864 = vperm.xlu0 %3863, %v3641
    %v3865 = vpop.permute.xlu0 %3864
    %3867 = vset.pattern.permute.xlu0 0
    %3868 = vperm.xlu0 %3867, %v3642
    %v3869 = vpop.permute.xlu0 %3868
    %3871 = vset.pattern.permute.xlu0 0
    %3872 = vperm.xlu0 %3871, %v3643
    %v3873 = vpop.permute.xlu0 %3872
    %v3875 = vmul.f32 %v3865, %v3680
    %v3876 = vmul.f32 %v3865, %v3681
    %v3877 = vmul.f32 %v3865, %v3682
    %v3878 = vmul.f32 %v3865, %v3683
    %v3879 = vmul.f32 %v3869, %v3684
    %v3880 = vmul.f32 %v3869, %v3685
    %v3881 = vmul.f32 %v3869, %v3686
    %v3882 = vmul.f32 %v3869, %v3687
    %v3883 = vmul.f32 %v3873, %v3688
    %v3884 = vmul.f32 %v3873, %v3689
    %v3885 = vmul.f32 %v3873, %v3690
    %v3886 = vmul.f32 %v3873, %v3691
    %3887 = vset.pattern.permute.xlu0 1
    %3888 = vperm.xlu0 %3887, %v3641
    %v3889 = vpop.permute.xlu0 %3888
    %3891 = vset.pattern.permute.xlu0 1
    %3892 = vperm.xlu0 %3891, %v3642
    %v3893 = vpop.permute.xlu0 %3892
    %3895 = vset.pattern.permute.xlu0 1
    %3896 = vperm.xlu0 %3895, %v3643
    %v3897 = vpop.permute.xlu0 %3896
    %v3899 = vmul.f32 %v3889, %v3541
    %v3900 = vmul.f32 %v3889, %v3543
    %v3901 = vmul.f32 %v3889, %v3624
    %v3902 = vmul.f32 %v3889, %v3626
    %v3903 = vmul.f32 %v3893, %v3547
    %v3904 = vmul.f32 %v3893, %v3549
    %v3905 = vmul.f32 %v3893, %v3630
    %v3906 = vmul.f32 %v3893, %v3632
    %v3907 = vmul.f32 %v3897, %v3553
    %v3908 = vmul.f32 %v3897, %v3555
    %v3909 = vmul.f32 %v3897, %v3636
    %v3910 = vmul.f32 %v3897, %v3638
    %v3911 = vadd.f32 %v3875, %v3899
    %v3912 = vadd.f32 %v3876, %v3900
    %v3913 = vadd.f32 %v3877, %v3901
    %v3914 = vadd.f32 %v3878, %v3902
    %v3915 = vadd.f32 %v3879, %v3903
    %v3916 = vadd.f32 %v3880, %v3904
    %v3917 = vadd.f32 %v3881, %v3905
    %v3918 = vadd.f32 %v3882, %v3906
    %v3919 = vadd.f32 %v3883, %v3907
    %v3920 = vadd.f32 %v3884, %v3908
    %v3921 = vadd.f32 %v3885, %v3909
    %v3922 = vadd.f32 %v3886, %v3910
    %3923 = vset.pattern.permute.xlu0 2
    %3924 = vperm.xlu0 %3923, %v3641
    %v3925 = vpop.permute.xlu0 %3924
    %3927 = vset.pattern.permute.xlu0 2
    %3928 = vperm.xlu0 %3927, %v3642
    %v3929 = vpop.permute.xlu0 %3928
    %3931 = vset.pattern.permute.xlu0 2
    %3932 = vperm.xlu0 %3931, %v3643
    %v3933 = vpop.permute.xlu0 %3932
    %v3935 = vmul.f32 %v3925, %v3728
    %v3936 = vmul.f32 %v3925, %v3729
    %v3937 = vmul.f32 %v3925, %v3730
    %v3938 = vmul.f32 %v3925, %v3731
    %v3939 = vmul.f32 %v3929, %v3732
    %v3940 = vmul.f32 %v3929, %v3733
    %v3941 = vmul.f32 %v3929, %v3734
    %v3942 = vmul.f32 %v3929, %v3735
    %v3943 = vmul.f32 %v3933, %v3736
    %v3944 = vmul.f32 %v3933, %v3737
    %v3945 = vmul.f32 %v3933, %v3738
    %v3946 = vmul.f32 %v3933, %v3739
    %v3947 = vadd.f32 %v3911, %v3935
    %v3948 = vadd.f32 %v3912, %v3936
    %v3949 = vadd.f32 %v3913, %v3937
    %v3950 = vadd.f32 %v3914, %v3938
    %v3951 = vadd.f32 %v3915, %v3939
    %v3952 = vadd.f32 %v3916, %v3940
    %v3953 = vadd.f32 %v3917, %v3941
    %v3954 = vadd.f32 %v3918, %v3942
    %v3955 = vadd.f32 %v3919, %v3943
    %v3956 = vadd.f32 %v3920, %v3944
    %v3957 = vadd.f32 %v3921, %v3945
    %v3958 = vadd.f32 %v3922, %v3946
    %3959 = vrot.lane.b32.xlu0 %v3947, 16
    %v3960 = vpop.permute.xlu0 %3959
    %3961 = vrot.lane.b32.xlu0 %v3951, 16
    %v3962 = vpop.permute.xlu0 %3961
    %3963 = vrot.lane.b32.xlu0 %v3955, 16
    %v3964 = vpop.permute.xlu0 %3963
    %3965 = vrot.lane.b32.xlu0 %v3948, 16
    %v3966 = vpop.permute.xlu0 %3965
    %3967 = vrot.lane.b32.xlu0 %v3952, 16
    %v3968 = vpop.permute.xlu0 %3967
    %3969 = vrot.lane.b32.xlu0 %v3956, 16
    %v3970 = vpop.permute.xlu0 %3969
    %3971 = vrot.lane.b32.xlu0 %v3949, 16
    %v3972 = vpop.permute.xlu0 %3971
    %3973 = vrot.lane.b32.xlu0 %v3953, 16
    %v3974 = vpop.permute.xlu0 %3973
    %3975 = vrot.lane.b32.xlu0 %v3957, 16
    %v3976 = vpop.permute.xlu0 %3975
    %3977 = vrot.lane.b32.xlu0 %v3950, 16
    %v3978 = vpop.permute.xlu0 %3977
    %3979 = vrot.lane.b32.xlu0 %v3954, 16
    %v3980 = vpop.permute.xlu0 %3979
    %3981 = vrot.lane.b32.xlu0 %v3958, 16
    %v3982 = vpop.permute.xlu0 %3981
    %v3983 = vsel %vm1346, %v3972, %v3978
    %v3984 = vsel %vm1346, %v3974, %v3980
    %v3985 = vsel %vm1346, %v3976, %v3982
    %v3986 = vsel %vm1346, %v3966, %v3972
    %v3987 = vsel %vm1346, %v3968, %v3974
    %v3988 = vsel %vm1346, %v3970, %v3976
    %v3989 = vsel %vm1346, %v3960, %v3966
    %v3990 = vsel %vm1346, %v3962, %v3968
    %v3991 = vsel %vm1346, %v3964, %v3970
    %v3992 = vsel %vm1346, %v3978, %v3960
    %v3993 = vsel %vm1346, %v3980, %v3962
    %v3994 = vsel %vm1346, %v3982, %v3964
    %v3995 = vmul.f32 %v3992, %v1362
    %v3996 = vmul.f32 %v3989, %v1366
    %v3997 = vmul.f32 %v3986, %v1370
    %v3998 = vmul.f32 %v3983, %v1374
    %v3999 = vmul.f32 %v3993, %v1362
    %v4000 = vmul.f32 %v3990, %v1366
    %v4001 = vmul.f32 %v3987, %v1370
    %v4002 = vmul.f32 %v3984, %v1374
    %v4003 = vmul.f32 %v3994, %v1362
    %v4004 = vmul.f32 %v3991, %v1366
    %v4005 = vmul.f32 %v3988, %v1370
    %v4006 = vmul.f32 %v3985, %v1374
    %v4007 = vadd.f32 %v3851, %v3995
    %v4008 = vadd.f32 %v3852, %v3996
    %v4009 = vadd.f32 %v3853, %v3997
    %v4010 = vadd.f32 %v3854, %v3998
    %v4011 = vadd.f32 %v3855, %v3999
    %v4012 = vadd.f32 %v3856, %v4000
    %v4013 = vadd.f32 %v3857, %v4001
    %v4014 = vadd.f32 %v3858, %v4002
    %v4015 = vadd.f32 %v3859, %v4003
    %v4016 = vadd.f32 %v3860, %v4004
    %v4017 = vadd.f32 %v3861, %v4005
    %v4018 = vadd.f32 %v3862, %v4006
    %4019 = vset.pattern.permute.xlu0 6
    %4020 = vperm.xlu0 %4019, %v3641
    %v4021 = vpop.permute.xlu0 %4020
    %4023 = vset.pattern.permute.xlu0 6
    %4024 = vperm.xlu0 %4023, %v3642
    %v4025 = vpop.permute.xlu0 %4024
    %4027 = vset.pattern.permute.xlu0 6
    %4028 = vperm.xlu0 %4027, %v3643
    %v4029 = vpop.permute.xlu0 %4028
    %v4031 = vmul.f32 %v4021, %v3680
    %v4032 = vmul.f32 %v4021, %v3681
    %v4033 = vmul.f32 %v4021, %v3682
    %v4034 = vmul.f32 %v4021, %v3683
    %v4035 = vmul.f32 %v4025, %v3684
    %v4036 = vmul.f32 %v4025, %v3685
    %v4037 = vmul.f32 %v4025, %v3686
    %v4038 = vmul.f32 %v4025, %v3687
    %v4039 = vmul.f32 %v4029, %v3688
    %v4040 = vmul.f32 %v4029, %v3689
    %v4041 = vmul.f32 %v4029, %v3690
    %v4042 = vmul.f32 %v4029, %v3691
    %4043 = vset.pattern.permute.xlu0 7
    %4044 = vperm.xlu0 %4043, %v3641
    %v4045 = vpop.permute.xlu0 %4044
    %4047 = vset.pattern.permute.xlu0 7
    %4048 = vperm.xlu0 %4047, %v3642
    %v4049 = vpop.permute.xlu0 %4048
    %4051 = vset.pattern.permute.xlu0 7
    %4052 = vperm.xlu0 %4051, %v3643
    %v4053 = vpop.permute.xlu0 %4052
    %v4055 = vmul.f32 %v4045, %v3541
    %v4056 = vmul.f32 %v4045, %v3543
    %v4057 = vmul.f32 %v4045, %v3624
    %v4058 = vmul.f32 %v4045, %v3626
    %v4059 = vmul.f32 %v4049, %v3547
    %v4060 = vmul.f32 %v4049, %v3549
    %v4061 = vmul.f32 %v4049, %v3630
    %v4062 = vmul.f32 %v4049, %v3632
    %v4063 = vmul.f32 %v4053, %v3553
    %v4064 = vmul.f32 %v4053, %v3555
    %v4065 = vmul.f32 %v4053, %v3636
    %v4066 = vmul.f32 %v4053, %v3638
    %v4067 = vadd.f32 %v4031, %v4055
    %v4068 = vadd.f32 %v4032, %v4056
    %v4069 = vadd.f32 %v4033, %v4057
    %v4070 = vadd.f32 %v4034, %v4058
    %v4071 = vadd.f32 %v4035, %v4059
    %v4072 = vadd.f32 %v4036, %v4060
    %v4073 = vadd.f32 %v4037, %v4061
    %v4074 = vadd.f32 %v4038, %v4062
    %v4075 = vadd.f32 %v4039, %v4063
    %v4076 = vadd.f32 %v4040, %v4064
    %v4077 = vadd.f32 %v4041, %v4065
    %v4078 = vadd.f32 %v4042, %v4066
    %4079 = vset.pattern.permute.xlu0 8
    %4080 = vperm.xlu0 %4079, %v3641
    %v4081 = vpop.permute.xlu0 %4080
    %4083 = vset.pattern.permute.xlu0 8
    %4084 = vperm.xlu0 %4083, %v3642
    %v4085 = vpop.permute.xlu0 %4084
    %4087 = vset.pattern.permute.xlu0 8
    %4088 = vperm.xlu0 %4087, %v3643
    %v4089 = vpop.permute.xlu0 %4088
    %v4091 = vmul.f32 %v4081, %v3728
    %v4092 = vmul.f32 %v4081, %v3729
    %v4093 = vmul.f32 %v4081, %v3730
    %v4094 = vmul.f32 %v4081, %v3731
    %v4095 = vmul.f32 %v4085, %v3732
    %v4096 = vmul.f32 %v4085, %v3733
    %v4097 = vmul.f32 %v4085, %v3734
    %v4098 = vmul.f32 %v4085, %v3735
    %v4099 = vmul.f32 %v4089, %v3736
    %v4100 = vmul.f32 %v4089, %v3737
    %v4101 = vmul.f32 %v4089, %v3738
    %v4102 = vmul.f32 %v4089, %v3739
    %v4103 = vadd.f32 %v4067, %v4091
    %v4104 = vadd.f32 %v4068, %v4092
    %v4105 = vadd.f32 %v4069, %v4093
    %v4106 = vadd.f32 %v4070, %v4094
    %v4107 = vadd.f32 %v4071, %v4095
    %v4108 = vadd.f32 %v4072, %v4096
    %v4109 = vadd.f32 %v4073, %v4097
    %v4110 = vadd.f32 %v4074, %v4098
    %v4111 = vadd.f32 %v4075, %v4099
    %v4112 = vadd.f32 %v4076, %v4100
    %v4113 = vadd.f32 %v4077, %v4101
    %v4114 = vadd.f32 %v4078, %v4102
    %4115 = vrot.lane.b32.xlu0 %v4103, 112
    %v4116 = vpop.permute.xlu0 %4115
    %4117 = vrot.lane.b32.xlu0 %v4107, 112
    %v4118 = vpop.permute.xlu0 %4117
    %4119 = vrot.lane.b32.xlu0 %v4111, 112
    %v4120 = vpop.permute.xlu0 %4119
    %4121 = vrot.lane.b32.xlu0 %v4104, 112
    %v4122 = vpop.permute.xlu0 %4121
    %4123 = vrot.lane.b32.xlu0 %v4108, 112
    %v4124 = vpop.permute.xlu0 %4123
    %4125 = vrot.lane.b32.xlu0 %v4112, 112
    %v4126 = vpop.permute.xlu0 %4125
    %4127 = vrot.lane.b32.xlu0 %v4105, 112
    %v4128 = vpop.permute.xlu0 %4127
    %4129 = vrot.lane.b32.xlu0 %v4109, 112
    %v4130 = vpop.permute.xlu0 %4129
    %4131 = vrot.lane.b32.xlu0 %v4113, 112
    %v4132 = vpop.permute.xlu0 %4131
    %4133 = vrot.lane.b32.xlu0 %v4106, 112
    %v4134 = vpop.permute.xlu0 %4133
    %4135 = vrot.lane.b32.xlu0 %v4110, 112
    %v4136 = vpop.permute.xlu0 %4135
    %4137 = vrot.lane.b32.xlu0 %v4114, 112
    %v4138 = vpop.permute.xlu0 %4137
    %v4139 = vsel %vm1519, %v4128, %v4134
    %v4140 = vsel %vm1519, %v4130, %v4136
    %v4141 = vsel %vm1519, %v4132, %v4138
    %v4142 = vsel %vm1519, %v4122, %v4128
    %v4143 = vsel %vm1519, %v4124, %v4130
    %v4144 = vsel %vm1519, %v4126, %v4132
    %v4145 = vsel %vm1519, %v4116, %v4122
    %v4146 = vsel %vm1519, %v4118, %v4124
    %v4147 = vsel %vm1519, %v4120, %v4126
    %v4148 = vsel %vm1519, %v4134, %v4116
    %v4149 = vsel %vm1519, %v4136, %v4118
    %v4150 = vsel %vm1519, %v4138, %v4120
    %v4151 = vmul.f32 %v4145, %v1535
    %v4152 = vmul.f32 %v4142, %v1539
    %v4153 = vmul.f32 %v4139, %v1543
    %v4154 = vmul.f32 %v4148, %v1547
    %v4155 = vmul.f32 %v4146, %v1535
    %v4156 = vmul.f32 %v4143, %v1539
    %v4157 = vmul.f32 %v4140, %v1543
    %v4158 = vmul.f32 %v4149, %v1547
    %v4159 = vmul.f32 %v4147, %v1535
    %v4160 = vmul.f32 %v4144, %v1539
    %v4161 = vmul.f32 %v4141, %v1543
    %v4162 = vmul.f32 %v4150, %v1547
    %v4163 = vadd.f32 %v4007, %v4151
    %v4164 = vadd.f32 %v4008, %v4152
    %v4165 = vadd.f32 %v4009, %v4153
    %v4166 = vadd.f32 %v4010, %v4154
    %v4167 = vadd.f32 %v4011, %v4155
    %v4168 = vadd.f32 %v4012, %v4156
    %v4169 = vadd.f32 %v4013, %v4157
    %v4170 = vadd.f32 %v4014, %v4158
    %v4171 = vadd.f32 %v4015, %v4159
    %v4172 = vadd.f32 %v4016, %v4160
    %v4173 = vadd.f32 %v4017, %v4161
    %v4174 = vadd.f32 %v4018, %v4162
    %v4175 = vmul.f32 %v4163, %v1599
    %v4176 = vmul.f32 %v4164, %v1603
    %v4177 = vmul.f32 %v4165, %v1607
    %v4178 = vmul.f32 %v4166, %v1611
    %v4179 = vmul.f32 %v4167, %v1599
    %v4180 = vmul.f32 %v4168, %v1603
    %v4181 = vmul.f32 %v4169, %v1607
    %v4182 = vmul.f32 %v4170, %v1611
    %v4183 = vmul.f32 %v4171, %v1599
    %v4184 = vmul.f32 %v4172, %v1603
    %v4185 = vmul.f32 %v4173, %v1607
    %v4186 = vmul.f32 %v4174, %v1611
    %v4187 = vadd.f32 %v4175, %v4176
    %v4188 = vadd.f32 %v4187, %v4177
    %v4189 = vadd.f32 %v4188, %v4178
    %4190 = vadd.xlane.f32.xlu0 %v4189
    %v4191 = vpop.xlane.xlu0 %4190
    %v4192 = vadd.f32 %v4179, %v4180
    %v4193 = vadd.f32 %v4192, %v4181
    %v4194 = vadd.f32 %v4193, %v4182
    %4195 = vadd.xlane.f32.xlu0 %v4194
    %v4196 = vpop.xlane.xlu0 %4195
    %v4197 = vsel %vm83, %v4183, 0.0
    %v4198 = vsel %vm83, %v4184, 0.0
    %v4199 = vadd.f32 %v4197, %v4198
    %v4200 = vsel %vm83, %v4185, 0.0
    %v4201 = vadd.f32 %v4199, %v4200
    %v4202 = vsel %vm83, %v4186, 0.0
    %v4203 = vadd.f32 %v4201, %v4202
    %4204 = vadd.xlane.f32.xlu0 %v4203
    %v4205 = vpop.xlane.xlu0 %4204
    %v4206 = vmul.f32 %v4191, 0.00390625
    %v4207 = vmul.f32 %v4196, 0.00390625
    %v4208 = vmul.f32 %v4205, 0.00390625
    %v4209 = vmul.f32 %v4206, %v1599
    %v4210 = vmul.f32 %v4206, %v1603
    %v4211 = vmul.f32 %v4206, %v1607
    %v4212 = vmul.f32 %v4206, %v1611
    %v4213 = vmul.f32 %v4207, %v1599
    %v4214 = vmul.f32 %v4207, %v1603
    %v4215 = vmul.f32 %v4207, %v1607
    %v4216 = vmul.f32 %v4207, %v1611
    %v4217 = vmul.f32 %v4208, %v1599
    %v4218 = vmul.f32 %v4208, %v1603
    %v4219 = vmul.f32 %v4208, %v1607
    %v4220 = vmul.f32 %v4208, %v1611
    %v4221 = vmul.f32 %v4163, %v1661
    %v4222 = vmul.f32 %v4164, %v1665
    %v4223 = vmul.f32 %v4165, %v1669
    %v4224 = vmul.f32 %v4166, %v1673
    %v4225 = vmul.f32 %v4167, %v1661
    %v4226 = vmul.f32 %v4168, %v1665
    %v4227 = vmul.f32 %v4169, %v1669
    %v4228 = vmul.f32 %v4170, %v1673
    %v4229 = vmul.f32 %v4171, %v1661
    %v4230 = vmul.f32 %v4172, %v1665
    %v4231 = vmul.f32 %v4173, %v1669
    %v4232 = vmul.f32 %v4174, %v1673
    %v4233 = vadd.f32 %v4221, %v4222
    %v4234 = vadd.f32 %v4233, %v4223
    %v4235 = vadd.f32 %v4234, %v4224
    %4236 = vadd.xlane.f32.xlu0 %v4235
    %v4237 = vpop.xlane.xlu0 %4236
    %v4238 = vadd.f32 %v4225, %v4226
    %v4239 = vadd.f32 %v4238, %v4227
    %v4240 = vadd.f32 %v4239, %v4228
    %4241 = vadd.xlane.f32.xlu0 %v4240
    %v4242 = vpop.xlane.xlu0 %4241
    %v4243 = vsel %vm83, %v4229, 0.0
    %v4244 = vsel %vm83, %v4230, 0.0
    %v4245 = vadd.f32 %v4243, %v4244
    %v4246 = vsel %vm83, %v4231, 0.0
    %v4247 = vadd.f32 %v4245, %v4246
    %v4248 = vsel %vm83, %v4232, 0.0
    %v4249 = vadd.f32 %v4247, %v4248
    %4250 = vadd.xlane.f32.xlu0 %v4249
    %v4251 = vpop.xlane.xlu0 %4250
    %v4252 = vmul.f32 %v4237, 0.00390625
    %v4253 = vmul.f32 %v4242, 0.00390625
    %v4254 = vmul.f32 %v4251, 0.00390625
    %v4255 = vmul.f32 %v4252, %v1661
    %v4256 = vmul.f32 %v4252, %v1665
    %v4257 = vmul.f32 %v4252, %v1669
    %v4258 = vmul.f32 %v4252, %v1673
    %v4259 = vmul.f32 %v4253, %v1661
    %v4260 = vmul.f32 %v4253, %v1665
    %v4261 = vmul.f32 %v4253, %v1669
    %v4262 = vmul.f32 %v4253, %v1673
    %v4263 = vmul.f32 %v4254, %v1661
    %v4264 = vmul.f32 %v4254, %v1665
    %v4265 = vmul.f32 %v4254, %v1669
    %v4266 = vmul.f32 %v4254, %v1673
    %v4267 = vadd.f32 %v4209, %v4255
    %v4268 = vadd.f32 %v4210, %v4256
    %v4269 = vadd.f32 %v4211, %v4257
    %v4270 = vadd.f32 %v4212, %v4258
    %v4271 = vadd.f32 %v4213, %v4259
    %v4272 = vadd.f32 %v4214, %v4260
    %v4273 = vadd.f32 %v4215, %v4261
    %v4274 = vadd.f32 %v4216, %v4262
    %v4275 = vadd.f32 %v4217, %v4263
    %v4276 = vadd.f32 %v4218, %v4264
    %v4277 = vadd.f32 %v4219, %v4265
    %v4278 = vadd.f32 %v4220, %v4266
    %v4279 = vsub.f32 %v4163, %v4267
    %v4280 = vsub.f32 %v4164, %v4268
    %v4281 = vsub.f32 %v4165, %v4269
    %v4282 = vsub.f32 %v4166, %v4270
    %v4283 = vsub.f32 %v4167, %v4271
    %v4284 = vsub.f32 %v4168, %v4272
    %v4285 = vsub.f32 %v4169, %v4273
    %v4286 = vsub.f32 %v4170, %v4274
    %v4287 = vsub.f32 %v4171, %v4275
    %v4288 = vsub.f32 %v4172, %v4276
    %v4289 = vsub.f32 %v4173, %v4277
    %v4290 = vsub.f32 %v4174, %v4278
    %v4291 = vmul.f32 %v4279, %v4279
    %v4292 = vmul.f32 %v4280, %v4280
    %v4293 = vmul.f32 %v4281, %v4281
    %v4294 = vmul.f32 %v4282, %v4282
    %v4295 = vmul.f32 %v4283, %v4283
    %v4296 = vmul.f32 %v4284, %v4284
    %v4297 = vmul.f32 %v4285, %v4285
    %v4298 = vmul.f32 %v4286, %v4286
    %v4299 = vmul.f32 %v4287, %v4287
    %v4300 = vmul.f32 %v4288, %v4288
    %v4301 = vmul.f32 %v4289, %v4289
    %v4302 = vmul.f32 %v4290, %v4290
    %v4303 = vmul.f32 %v4291, %v1599
    %v4304 = vmul.f32 %v4292, %v1603
    %v4305 = vmul.f32 %v4293, %v1607
    %v4306 = vmul.f32 %v4294, %v1611
    %v4307 = vmul.f32 %v4295, %v1599
    %v4308 = vmul.f32 %v4296, %v1603
    %v4309 = vmul.f32 %v4297, %v1607
    %v4310 = vmul.f32 %v4298, %v1611
    %v4311 = vmul.f32 %v4299, %v1599
    %v4312 = vmul.f32 %v4300, %v1603
    %v4313 = vmul.f32 %v4301, %v1607
    %v4314 = vmul.f32 %v4302, %v1611
    %v4315 = vadd.f32 %v4303, %v4304
    %v4316 = vadd.f32 %v4315, %v4305
    %v4317 = vadd.f32 %v4316, %v4306
    %4318 = vadd.xlane.f32.xlu0 %v4317
    %v4319 = vpop.xlane.xlu0 %4318
    %v4320 = vadd.f32 %v4307, %v4308
    %v4321 = vadd.f32 %v4320, %v4309
    %v4322 = vadd.f32 %v4321, %v4310
    %4323 = vadd.xlane.f32.xlu0 %v4322
    %v4324 = vpop.xlane.xlu0 %4323
    %v4325 = vsel %vm83, %v4311, 0.0
    %v4326 = vsel %vm83, %v4312, 0.0
    %v4327 = vadd.f32 %v4325, %v4326
    %v4328 = vsel %vm83, %v4313, 0.0
    %v4329 = vadd.f32 %v4327, %v4328
    %v4330 = vsel %vm83, %v4314, 0.0
    %v4331 = vadd.f32 %v4329, %v4330
    %4332 = vadd.xlane.f32.xlu0 %v4331
    %v4333 = vpop.xlane.xlu0 %4332
    %v4334 = vmul.f32 %v4319, 0.00390625
    %v4335 = vmul.f32 %v4324, 0.00390625
    %v4336 = vmul.f32 %v4333, 0.00390625
    %v4337 = vadd.f32 %v4334, 1e-05
    %v4338 = vadd.f32 %v4335, 1e-05
    %v4339 = vadd.f32 %v4336, 1e-05
    %v4340 = vrsqrt.pop %v4337
    %v4341 = vrsqrt.pop %v4338
    %v4342 = vrsqrt.pop %v4339
    %v4343 = vmul.f32 %v4340, %v1599
    %v4344 = vmul.f32 %v4340, %v1603
    %v4345 = vmul.f32 %v4340, %v1607
    %v4346 = vmul.f32 %v4340, %v1611
    %v4347 = vmul.f32 %v4341, %v1599
    %v4348 = vmul.f32 %v4341, %v1603
    %v4349 = vmul.f32 %v4341, %v1607
    %v4350 = vmul.f32 %v4341, %v1611
    %v4351 = vmul.f32 %v4342, %v1599
    %v4352 = vmul.f32 %v4342, %v1603
    %v4353 = vmul.f32 %v4342, %v1607
    %v4354 = vmul.f32 %v4342, %v1611
    %v4355 = vmul.f32 %v4291, %v1661
    %v4356 = vmul.f32 %v4292, %v1665
    %v4357 = vmul.f32 %v4293, %v1669
    %v4358 = vmul.f32 %v4294, %v1673
    %v4359 = vmul.f32 %v4295, %v1661
    %v4360 = vmul.f32 %v4296, %v1665
    %v4361 = vmul.f32 %v4297, %v1669
    %v4362 = vmul.f32 %v4298, %v1673
    %v4363 = vmul.f32 %v4299, %v1661
    %v4364 = vmul.f32 %v4300, %v1665
    %v4365 = vmul.f32 %v4301, %v1669
    %v4366 = vmul.f32 %v4302, %v1673
    %v4367 = vadd.f32 %v4355, %v4356
    %v4368 = vadd.f32 %v4367, %v4357
    %v4369 = vadd.f32 %v4368, %v4358
    %4370 = vadd.xlane.f32.xlu0 %v4369
    %v4371 = vpop.xlane.xlu0 %4370
    %v4372 = vadd.f32 %v4359, %v4360
    %v4373 = vadd.f32 %v4372, %v4361
    %v4374 = vadd.f32 %v4373, %v4362
    %4375 = vadd.xlane.f32.xlu0 %v4374
    %v4376 = vpop.xlane.xlu0 %4375
    %v4377 = vsel %vm83, %v4363, 0.0
    %v4378 = vsel %vm83, %v4364, 0.0
    %v4379 = vadd.f32 %v4377, %v4378
    %v4380 = vsel %vm83, %v4365, 0.0
    %v4381 = vadd.f32 %v4379, %v4380
    %v4382 = vsel %vm83, %v4366, 0.0
    %v4383 = vadd.f32 %v4381, %v4382
    %4384 = vadd.xlane.f32.xlu0 %v4383
    %v4385 = vpop.xlane.xlu0 %4384
    %v4386 = vmul.f32 %v4371, 0.00390625
    %v4387 = vmul.f32 %v4376, 0.00390625
    %v4388 = vmul.f32 %v4385, 0.00390625
    %v4389 = vadd.f32 %v4386, 1e-05
    %v4390 = vadd.f32 %v4387, 1e-05
    %v4391 = vadd.f32 %v4388, 1e-05
    %v4392 = vrsqrt.pop %v4389
    %v4393 = vrsqrt.pop %v4390
    %v4394 = vrsqrt.pop %v4391
    %v4395 = vmul.f32 %v4392, %v1661
    %v4396 = vmul.f32 %v4392, %v1665
    %v4397 = vmul.f32 %v4392, %v1669
    %v4398 = vmul.f32 %v4392, %v1673
    %v4399 = vmul.f32 %v4393, %v1661
    %v4400 = vmul.f32 %v4393, %v1665
    %v4401 = vmul.f32 %v4393, %v1669
    %v4402 = vmul.f32 %v4393, %v1673
    %v4403 = vmul.f32 %v4394, %v1661
    %v4404 = vmul.f32 %v4394, %v1665
    %v4405 = vmul.f32 %v4394, %v1669
    %v4406 = vmul.f32 %v4394, %v1673
    %v4407 = vadd.f32 %v4343, %v4395
    %v4408 = vadd.f32 %v4344, %v4396
    %v4409 = vadd.f32 %v4345, %v4397
    %v4410 = vadd.f32 %v4346, %v4398
    %v4411 = vadd.f32 %v4347, %v4399
    %v4412 = vadd.f32 %v4348, %v4400
    %v4413 = vadd.f32 %v4349, %v4401
    %v4414 = vadd.f32 %v4350, %v4402
    %v4415 = vadd.f32 %v4351, %v4403
    %v4416 = vadd.f32 %v4352, %v4404
    %v4417 = vadd.f32 %v4353, %v4405
    %v4418 = vadd.f32 %v4354, %v4406
    %v4419 = vmul.f32 %v4279, %v4407
    %v4420 = vmul.f32 %v4280, %v4408
    %v4421 = vmul.f32 %v4281, %v4409
    %v4422 = vmul.f32 %v4282, %v4410
    %v4423 = vmul.f32 %v4283, %v4411
    %v4424 = vmul.f32 %v4284, %v4412
    %v4425 = vmul.f32 %v4285, %v4413
    %v4426 = vmul.f32 %v4286, %v4414
    %v4427 = vmul.f32 %v4287, %v4415
    %v4428 = vmul.f32 %v4288, %v4416
    %v4429 = vmul.f32 %v4289, %v4417
    %v4430 = vmul.f32 %v4290, %v4418
    %v4431 = vmul.f32 %v1886, %v4267
    %v4432 = vmul.f32 %v1886, %v4268
    %v4433 = vmul.f32 %v1886, %v4269
    %v4434 = vmul.f32 %v1886, %v4270
    %v4435 = vmul.f32 %v1890, %v4271
    %v4436 = vmul.f32 %v1890, %v4272
    %v4437 = vmul.f32 %v1890, %v4273
    %v4438 = vmul.f32 %v1890, %v4274
    %v4439 = vmul.f32 %v1894, %v4275
    %v4440 = vmul.f32 %v1894, %v4276
    %v4441 = vmul.f32 %v1894, %v4277
    %v4442 = vmul.f32 %v1894, %v4278
    %v4443 = vadd.f32 %v4431, %v1910
    %v4444 = vadd.f32 %v4432, %v1910
    %v4445 = vadd.f32 %v4433, %v1910
    %v4446 = vadd.f32 %v4434, %v1910
    %v4447 = vadd.f32 %v4435, %v1914
    %v4448 = vadd.f32 %v4436, %v1914
    %v4449 = vadd.f32 %v4437, %v1914
    %v4450 = vadd.f32 %v4438, %v1914
    %v4451 = vadd.f32 %v4439, %v1918
    %v4452 = vadd.f32 %v4440, %v1918
    %v4453 = vadd.f32 %v4441, %v1918
    %v4454 = vadd.f32 %v4442, %v1918
    %v4455 = vmul.f32 %v1934, %v4419
    %v4456 = vmul.f32 %v1934, %v4420
    %v4457 = vmul.f32 %v1934, %v4421
    %v4458 = vmul.f32 %v1934, %v4422
    %v4459 = vmul.f32 %v1938, %v4423
    %v4460 = vmul.f32 %v1938, %v4424
    %v4461 = vmul.f32 %v1938, %v4425
    %v4462 = vmul.f32 %v1938, %v4426
    %v4463 = vmul.f32 %v1942, %v4427
    %v4464 = vmul.f32 %v1942, %v4428
    %v4465 = vmul.f32 %v1942, %v4429
    %v4466 = vmul.f32 %v1942, %v4430
    %v4467 = vadd.f32 %v4455, %v1958
    %v4468 = vadd.f32 %v4456, %v1958
    %v4469 = vadd.f32 %v4457, %v1958
    %v4470 = vadd.f32 %v4458, %v1958
    %v4471 = vadd.f32 %v4459, %v1962
    %v4472 = vadd.f32 %v4460, %v1962
    %v4473 = vadd.f32 %v4461, %v1962
    %v4474 = vadd.f32 %v4462, %v1962
    %v4475 = vadd.f32 %v4463, %v1966
    %v4476 = vadd.f32 %v4464, %v1966
    %v4477 = vadd.f32 %v4465, %v1966
    %v4478 = vadd.f32 %v4466, %v1966
    %v4479 = vmul.f32 %v1982, %v4467
    %v4480 = vmul.f32 %v1982, %v4468
    %v4481 = vmul.f32 %v1982, %v4469
    %v4482 = vmul.f32 %v1982, %v4470
    %v4483 = vmul.f32 %v1986, %v4471
    %v4484 = vmul.f32 %v1986, %v4472
    %v4485 = vmul.f32 %v1986, %v4473
    %v4486 = vmul.f32 %v1986, %v4474
    %v4487 = vmul.f32 %v1990, %v4475
    %v4488 = vmul.f32 %v1990, %v4476
    %v4489 = vmul.f32 %v1990, %v4477
    %v4490 = vmul.f32 %v1990, %v4478
    %v4491 = vadd.f32 %v4479, %v2006
    %v4492 = vadd.f32 %v4480, %v2006
    %v4493 = vadd.f32 %v4481, %v2006
    %v4494 = vadd.f32 %v4482, %v2006
    %v4495 = vadd.f32 %v4483, %v2010
    %v4496 = vadd.f32 %v4484, %v2010
    %v4497 = vadd.f32 %v4485, %v2010
    %v4498 = vadd.f32 %v4486, %v2010
    %v4499 = vadd.f32 %v4487, %v2014
    %v4500 = vadd.f32 %v4488, %v2014
    %v4501 = vadd.f32 %v4489, %v2014
    %v4502 = vadd.f32 %v4490, %v2014
    %v4503 = vsub.f32 %v4443, %v4491
    %v4504 = vsub.f32 %v4444, %v4492
    %v4505 = vsub.f32 %v4445, %v4493
    %v4506 = vsub.f32 %v4446, %v4494
    %v4507 = vsub.f32 %v4447, %v4495
    %v4508 = vsub.f32 %v4448, %v4496
    %v4509 = vsub.f32 %v4449, %v4497
    %v4510 = vsub.f32 %v4450, %v4498
    %v4511 = vsub.f32 %v4451, %v4499
    %v4512 = vsub.f32 %v4452, %v4500
    %v4513 = vsub.f32 %v4453, %v4501
    %v4514 = vsub.f32 %v4454, %v4502
    %v4515 = vmul.f32 %v2042, %v4503
    %v4516 = vmul.f32 %v2042, %v4504
    %v4517 = vmul.f32 %v2042, %v4505
    %v4518 = vmul.f32 %v2042, %v4506
    %v4519 = vmul.f32 %v2046, %v4507
    %v4520 = vmul.f32 %v2046, %v4508
    %v4521 = vmul.f32 %v2046, %v4509
    %v4522 = vmul.f32 %v2046, %v4510
    %v4523 = vmul.f32 %v2050, %v4511
    %v4524 = vmul.f32 %v2050, %v4512
    %v4525 = vmul.f32 %v2050, %v4513
    %v4526 = vmul.f32 %v2050, %v4514
    %v4527 = vadd.f32 %v4491, %v4515
    %v4528 = vadd.f32 %v4492, %v4516
    %v4529 = vadd.f32 %v4493, %v4517
    %v4530 = vadd.f32 %v4494, %v4518
    %v4531 = vadd.f32 %v4495, %v4519
    %v4532 = vadd.f32 %v4496, %v4520
    %v4533 = vadd.f32 %v4497, %v4521
    %v4534 = vadd.f32 %v4498, %v4522
    %v4535 = vadd.f32 %v4499, %v4523
    %v4536 = vadd.f32 %v4500, %v4524
    %v4537 = vadd.f32 %v4501, %v4525
    %v4538 = vadd.f32 %v4502, %v4526
    %v4539 = vsub.f32 0.0, %v4527
    %v4540 = vsub.f32 0.0, %v4528
    %v4541 = vsub.f32 0.0, %v4529
    %v4542 = vsub.f32 0.0, %v4530
    %v4543 = vsub.f32 0.0, %v4531
    %v4544 = vsub.f32 0.0, %v4532
    %v4545 = vsub.f32 0.0, %v4533
    %v4546 = vsub.f32 0.0, %v4534
    %v4547 = vsub.f32 0.0, %v4535
    %v4548 = vsub.f32 0.0, %v4536
    %v4549 = vsub.f32 0.0, %v4537
    %v4550 = vsub.f32 0.0, %v4538
    %v4551 = vmul.f32 %v4539, 1.442695
    %v4552 = vpow.pop %v4551
    %v4553 = vmul.f32 %v4540, 1.442695
    %v4554 = vpow.pop %v4553
    %v4555 = vmul.f32 %v4541, 1.442695
    %v4556 = vpow.pop %v4555
    %v4557 = vmul.f32 %v4542, 1.442695
    %v4558 = vpow.pop %v4557
    %v4559 = vmul.f32 %v4543, 1.442695
    %v4560 = vpow.pop %v4559
    %v4561 = vmul.f32 %v4544, 1.442695
    %v4562 = vpow.pop %v4561
    %v4563 = vmul.f32 %v4545, 1.442695
    %v4564 = vpow.pop %v4563
    %v4565 = vmul.f32 %v4546, 1.442695
    %v4566 = vpow.pop %v4565
    %v4567 = vmul.f32 %v4547, 1.442695
    %v4568 = vpow.pop %v4567
    %v4569 = vmul.f32 %v4548, 1.442695
    %v4570 = vpow.pop %v4569
    %v4571 = vmul.f32 %v4549, 1.442695
    %v4572 = vpow.pop %v4571
    %v4573 = vmul.f32 %v4550, 1.442695
    %v4574 = vpow.pop %v4573
    %v4575 = vadd.f32 %v4552, 1.0
    %v4576 = vadd.f32 %v4554, 1.0
    %v4577 = vadd.f32 %v4556, 1.0
    %v4578 = vadd.f32 %v4558, 1.0
    %v4579 = vadd.f32 %v4560, 1.0
    %v4580 = vadd.f32 %v4562, 1.0
    %v4581 = vadd.f32 %v4564, 1.0
    %v4582 = vadd.f32 %v4566, 1.0
    %v4583 = vadd.f32 %v4568, 1.0
    %v4584 = vadd.f32 %v4570, 1.0
    %v4585 = vadd.f32 %v4572, 1.0
    %v4586 = vadd.f32 %v4574, 1.0
    %v4587 = vrcp.pop %v4575
    %v4588 = vrcp.pop %v4576
    %v4589 = vrcp.pop %v4577
    %v4590 = vrcp.pop %v4578
    %v4591 = vrcp.pop %v4579
    %v4592 = vrcp.pop %v4580
    %v4593 = vrcp.pop %v4581
    %v4594 = vrcp.pop %v4582
    %v4595 = vrcp.pop %v4583
    %v4596 = vrcp.pop %v4584
    %v4597 = vrcp.pop %v4585
    %v4598 = vrcp.pop %v4586
    %v4599 = vmul.f32 %v4163, %v4587
    %v4600 = vmul.f32 %v4164, %v4588
    %v4601 = vmul.f32 %v4165, %v4589
    %v4602 = vmul.f32 %v4166, %v4590
    %v4603 = vmul.f32 %v4167, %v4591
    %v4604 = vmul.f32 %v4168, %v4592
    %v4605 = vmul.f32 %v4169, %v4593
    %v4606 = vmul.f32 %v4170, %v4594
    %v4607 = vmul.f32 %v4171, %v4595
    %v4608 = vmul.f32 %v4172, %v4596
    %v4609 = vmul.f32 %v4173, %v4597
    %v4610 = vmul.f32 %v4174, %v4598
    %v4611 = vmul.f32 %v2518, 0.5
    %v4612 = vmul.f32 %v2519, 0.5
    %v4613 = vmul.f32 %v2520, 0.5
    %v4614 = vmul.f32 %v2521, 0.5
    %v4615 = vmul.f32 %v2522, 0.5
    %v4616 = vmul.f32 %v2523, 0.5
    %v4617 = vmul.f32 %v2524, 0.5
    %v4618 = vmul.f32 %v2525, 0.5
    %v4619 = vmul.f32 %v2526, 0.5
    %v4620 = vmul.f32 %v2527, 0.5
    %v4621 = vmul.f32 %v2528, 0.5
    %v4622 = vmul.f32 %v2529, 0.5
    %v4623 = vmul.f32 %v2518, 0.70710677
    %v4624 = vmul.f32 %v2519, 0.70710677
    %v4625 = vmul.f32 %v2520, 0.70710677
    %v4626 = vmul.f32 %v2521, 0.70710677
    %v4627 = vmul.f32 %v2522, 0.70710677
    %v4628 = vmul.f32 %v2523, 0.70710677
    %v4629 = vmul.f32 %v2524, 0.70710677
    %v4630 = vmul.f32 %v2525, 0.70710677
    %v4631 = vmul.f32 %v2526, 0.70710677
    %v4632 = vmul.f32 %v2527, 0.70710677
    %v4633 = vmul.f32 %v2528, 0.70710677
    %v4634 = vmul.f32 %v2529, 0.70710677
    %vm4635 = vcmp.ge.f32.partialorder %v4623, 0.0
    %vm4636 = vcmp.ge.f32.partialorder %v4624, 0.0
    %vm4637 = vcmp.ge.f32.partialorder %v4625, 0.0
    %vm4638 = vcmp.ge.f32.partialorder %v4626, 0.0
    %vm4639 = vcmp.ge.f32.partialorder %v4627, 0.0
    %vm4640 = vcmp.ge.f32.partialorder %v4628, 0.0
    %vm4641 = vcmp.ge.f32.partialorder %v4629, 0.0
    %vm4642 = vcmp.ge.f32.partialorder %v4630, 0.0
    %vm4643 = vcmp.ge.f32.partialorder %v4631, 0.0
    %vm4644 = vcmp.ge.f32.partialorder %v4632, 0.0
    %vm4645 = vcmp.ge.f32.partialorder %v4633, 0.0
    %vm4646 = vcmp.ge.f32.partialorder %v4634, 0.0
    %v4647 = vsel %vm4635, 1.0, -1.0
    %v4648 = vsel %vm4636, 1.0, -1.0
    %v4649 = vsel %vm4637, 1.0, -1.0
    %v4650 = vsel %vm4638, 1.0, -1.0
    %v4651 = vsel %vm4639, 1.0, -1.0
    %v4652 = vsel %vm4640, 1.0, -1.0
    %v4653 = vsel %vm4641, 1.0, -1.0
    %v4654 = vsel %vm4642, 1.0, -1.0
    %v4655 = vsel %vm4643, 1.0, -1.0
    %v4656 = vsel %vm4644, 1.0, -1.0
    %v4657 = vsel %vm4645, 1.0, -1.0
    %v4658 = vsel %vm4646, 1.0, -1.0
    %v4659 = vand.u32 2147483647, %v4623
    %v4660 = vand.u32 2147483647, %v4624
    %v4661 = vand.u32 2147483647, %v4625
    %v4662 = vand.u32 2147483647, %v4626
    %v4663 = vand.u32 2147483647, %v4627
    %v4664 = vand.u32 2147483647, %v4628
    %v4665 = vand.u32 2147483647, %v4629
    %v4666 = vand.u32 2147483647, %v4630
    %v4667 = vand.u32 2147483647, %v4631
    %v4668 = vand.u32 2147483647, %v4632
    %v4669 = vand.u32 2147483647, %v4633
    %v4670 = vand.u32 2147483647, %v4634
    %v4671 = vmul.f32 %v4659, 0.3275911
    %v4672 = vmul.f32 %v4660, 0.3275911
    %v4673 = vmul.f32 %v4661, 0.3275911
    %v4674 = vmul.f32 %v4662, 0.3275911
    %v4675 = vmul.f32 %v4663, 0.3275911
    %v4676 = vmul.f32 %v4664, 0.3275911
    %v4677 = vmul.f32 %v4665, 0.3275911
    %v4678 = vmul.f32 %v4666, 0.3275911
    %v4679 = vmul.f32 %v4667, 0.3275911
    %v4680 = vmul.f32 %v4668, 0.3275911
    %v4681 = vmul.f32 %v4669, 0.3275911
    %v4682 = vmul.f32 %v4670, 0.3275911
    %v4683 = vadd.f32 %v4671, 1.0
    %v4684 = vadd.f32 %v4672, 1.0
    %v4685 = vadd.f32 %v4673, 1.0
    %v4686 = vadd.f32 %v4674, 1.0
    %v4687 = vadd.f32 %v4675, 1.0
    %v4688 = vadd.f32 %v4676, 1.0
    %v4689 = vadd.f32 %v4677, 1.0
    %v4690 = vadd.f32 %v4678, 1.0
    %v4691 = vadd.f32 %v4679, 1.0
    %v4692 = vadd.f32 %v4680, 1.0
    %v4693 = vadd.f32 %v4681, 1.0
    %v4694 = vadd.f32 %v4682, 1.0
    %v4695 = vrcp.pop %v4683
    %v4696 = vrcp.pop %v4684
    %v4697 = vrcp.pop %v4685
    %v4698 = vrcp.pop %v4686
    %v4699 = vrcp.pop %v4687
    %v4700 = vrcp.pop %v4688
    %v4701 = vrcp.pop %v4689
    %v4702 = vrcp.pop %v4690
    %v4703 = vrcp.pop %v4691
    %v4704 = vrcp.pop %v4692
    %v4705 = vrcp.pop %v4693
    %v4706 = vrcp.pop %v4694
    %v4707 = vmul.f32 %v4695, 1.0614054
    %v4708 = vmul.f32 %v4696, 1.0614054
    %v4709 = vmul.f32 %v4697, 1.0614054
    %v4710 = vmul.f32 %v4698, 1.0614054
    %v4711 = vmul.f32 %v4699, 1.0614054
    %v4712 = vmul.f32 %v4700, 1.0614054
    %v4713 = vmul.f32 %v4701, 1.0614054
    %v4714 = vmul.f32 %v4702, 1.0614054
    %v4715 = vmul.f32 %v4703, 1.0614054
    %v4716 = vmul.f32 %v4704, 1.0614054
    %v4717 = vmul.f32 %v4705, 1.0614054
    %v4718 = vmul.f32 %v4706, 1.0614054
    %v4719 = vadd.f32 %v4707, -1.4531521
    %v4720 = vadd.f32 %v4708, -1.4531521
    %v4721 = vadd.f32 %v4709, -1.4531521
    %v4722 = vadd.f32 %v4710, -1.4531521
    %v4723 = vadd.f32 %v4711, -1.4531521
    %v4724 = vadd.f32 %v4712, -1.4531521
    %v4725 = vadd.f32 %v4713, -1.4531521
    %v4726 = vadd.f32 %v4714, -1.4531521
    %v4727 = vadd.f32 %v4715, -1.4531521
    %v4728 = vadd.f32 %v4716, -1.4531521
    %v4729 = vadd.f32 %v4717, -1.4531521
    %v4730 = vadd.f32 %v4718, -1.4531521
    %v4731 = vmul.f32 %v4719, %v4695
    %v4732 = vmul.f32 %v4720, %v4696
    %v4733 = vmul.f32 %v4721, %v4697
    %v4734 = vmul.f32 %v4722, %v4698
    %v4735 = vmul.f32 %v4723, %v4699
    %v4736 = vmul.f32 %v4724, %v4700
    %v4737 = vmul.f32 %v4725, %v4701
    %v4738 = vmul.f32 %v4726, %v4702
    %v4739 = vmul.f32 %v4727, %v4703
    %v4740 = vmul.f32 %v4728, %v4704
    %v4741 = vmul.f32 %v4729, %v4705
    %v4742 = vmul.f32 %v4730, %v4706
    %v4743 = vadd.f32 %v4731, 1.4214138
    %v4744 = vadd.f32 %v4732, 1.4214138
    %v4745 = vadd.f32 %v4733, 1.4214138
    %v4746 = vadd.f32 %v4734, 1.4214138
    %v4747 = vadd.f32 %v4735, 1.4214138
    %v4748 = vadd.f32 %v4736, 1.4214138
    %v4749 = vadd.f32 %v4737, 1.4214138
    %v4750 = vadd.f32 %v4738, 1.4214138
    %v4751 = vadd.f32 %v4739, 1.4214138
    %v4752 = vadd.f32 %v4740, 1.4214138
    %v4753 = vadd.f32 %v4741, 1.4214138
    %v4754 = vadd.f32 %v4742, 1.4214138
    %v4755 = vmul.f32 %v4743, %v4695
    %v4756 = vmul.f32 %v4744, %v4696
    %v4757 = vmul.f32 %v4745, %v4697
    %v4758 = vmul.f32 %v4746, %v4698
    %v4759 = vmul.f32 %v4747, %v4699
    %v4760 = vmul.f32 %v4748, %v4700
    %v4761 = vmul.f32 %v4749, %v4701
    %v4762 = vmul.f32 %v4750, %v4702
    %v4763 = vmul.f32 %v4751, %v4703
    %v4764 = vmul.f32 %v4752, %v4704
    %v4765 = vmul.f32 %v4753, %v4705
    %v4766 = vmul.f32 %v4754, %v4706
    %v4767 = vadd.f32 %v4755, -0.28449672
    %v4768 = vadd.f32 %v4756, -0.28449672
    %v4769 = vadd.f32 %v4757, -0.28449672
    %v4770 = vadd.f32 %v4758, -0.28449672
    %v4771 = vadd.f32 %v4759, -0.28449672
    %v4772 = vadd.f32 %v4760, -0.28449672
    %v4773 = vadd.f32 %v4761, -0.28449672
    %v4774 = vadd.f32 %v4762, -0.28449672
    %v4775 = vadd.f32 %v4763, -0.28449672
    %v4776 = vadd.f32 %v4764, -0.28449672
    %v4777 = vadd.f32 %v4765, -0.28449672
    %v4778 = vadd.f32 %v4766, -0.28449672
    %v4779 = vmul.f32 %v4767, %v4695
    %v4780 = vmul.f32 %v4768, %v4696
    %v4781 = vmul.f32 %v4769, %v4697
    %v4782 = vmul.f32 %v4770, %v4698
    %v4783 = vmul.f32 %v4771, %v4699
    %v4784 = vmul.f32 %v4772, %v4700
    %v4785 = vmul.f32 %v4773, %v4701
    %v4786 = vmul.f32 %v4774, %v4702
    %v4787 = vmul.f32 %v4775, %v4703
    %v4788 = vmul.f32 %v4776, %v4704
    %v4789 = vmul.f32 %v4777, %v4705
    %v4790 = vmul.f32 %v4778, %v4706
    %v4791 = vadd.f32 %v4779, 0.2548296
    %v4792 = vadd.f32 %v4780, 0.2548296
    %v4793 = vadd.f32 %v4781, 0.2548296
    %v4794 = vadd.f32 %v4782, 0.2548296
    %v4795 = vadd.f32 %v4783, 0.2548296
    %v4796 = vadd.f32 %v4784, 0.2548296
    %v4797 = vadd.f32 %v4785, 0.2548296
    %v4798 = vadd.f32 %v4786, 0.2548296
    %v4799 = vadd.f32 %v4787, 0.2548296
    %v4800 = vadd.f32 %v4788, 0.2548296
    %v4801 = vadd.f32 %v4789, 0.2548296
    %v4802 = vadd.f32 %v4790, 0.2548296
    %v4803 = vmul.f32 %v4791, %v4695
    %v4804 = vmul.f32 %v4792, %v4696
    %v4805 = vmul.f32 %v4793, %v4697
    %v4806 = vmul.f32 %v4794, %v4698
    %v4807 = vmul.f32 %v4795, %v4699
    %v4808 = vmul.f32 %v4796, %v4700
    %v4809 = vmul.f32 %v4797, %v4701
    %v4810 = vmul.f32 %v4798, %v4702
    %v4811 = vmul.f32 %v4799, %v4703
    %v4812 = vmul.f32 %v4800, %v4704
    %v4813 = vmul.f32 %v4801, %v4705
    %v4814 = vmul.f32 %v4802, %v4706
    %v4815 = vsub.f32 0.0, %v4659
    %v4816 = vsub.f32 0.0, %v4660
    %v4817 = vsub.f32 0.0, %v4661
    %v4818 = vsub.f32 0.0, %v4662
    %v4819 = vsub.f32 0.0, %v4663
    %v4820 = vsub.f32 0.0, %v4664
    %v4821 = vsub.f32 0.0, %v4665
    %v4822 = vsub.f32 0.0, %v4666
    %v4823 = vsub.f32 0.0, %v4667
    %v4824 = vsub.f32 0.0, %v4668
    %v4825 = vsub.f32 0.0, %v4669
    %v4826 = vsub.f32 0.0, %v4670
    %v4827 = vmul.f32 %v4815, %v4659
    %v4828 = vmul.f32 %v4816, %v4660
    %v4829 = vmul.f32 %v4817, %v4661
    %v4830 = vmul.f32 %v4818, %v4662
    %v4831 = vmul.f32 %v4819, %v4663
    %v4832 = vmul.f32 %v4820, %v4664
    %v4833 = vmul.f32 %v4821, %v4665
    %v4834 = vmul.f32 %v4822, %v4666
    %v4835 = vmul.f32 %v4823, %v4667
    %v4836 = vmul.f32 %v4824, %v4668
    %v4837 = vmul.f32 %v4825, %v4669
    %v4838 = vmul.f32 %v4826, %v4670
    %v4839 = vmul.f32 %v4827, 1.442695
    %v4840 = vpow.pop %v4839
    %v4841 = vmul.f32 %v4828, 1.442695
    %v4842 = vpow.pop %v4841
    %v4843 = vmul.f32 %v4829, 1.442695
    %v4844 = vpow.pop %v4843
    %v4845 = vmul.f32 %v4830, 1.442695
    %v4846 = vpow.pop %v4845
    %v4847 = vmul.f32 %v4831, 1.442695
    %v4848 = vpow.pop %v4847
    %v4849 = vmul.f32 %v4832, 1.442695
    %v4850 = vpow.pop %v4849
    %v4851 = vmul.f32 %v4833, 1.442695
    %v4852 = vpow.pop %v4851
    %v4853 = vmul.f32 %v4834, 1.442695
    %v4854 = vpow.pop %v4853
    %v4855 = vmul.f32 %v4835, 1.442695
    %v4856 = vpow.pop %v4855
    %v4857 = vmul.f32 %v4836, 1.442695
    %v4858 = vpow.pop %v4857
    %v4859 = vmul.f32 %v4837, 1.442695
    %v4860 = vpow.pop %v4859
    %v4861 = vmul.f32 %v4838, 1.442695
    %v4862 = vpow.pop %v4861
    %v4863 = vmul.f32 %v4803, %v4840
    %v4864 = vmul.f32 %v4804, %v4842
    %v4865 = vmul.f32 %v4805, %v4844
    %v4866 = vmul.f32 %v4806, %v4846
    %v4867 = vmul.f32 %v4807, %v4848
    %v4868 = vmul.f32 %v4808, %v4850
    %v4869 = vmul.f32 %v4809, %v4852
    %v4870 = vmul.f32 %v4810, %v4854
    %v4871 = vmul.f32 %v4811, %v4856
    %v4872 = vmul.f32 %v4812, %v4858
    %v4873 = vmul.f32 %v4813, %v4860
    %v4874 = vmul.f32 %v4814, %v4862
    %v4875 = vsub.f32 1.0, %v4863
    %v4876 = vsub.f32 1.0, %v4864
    %v4877 = vsub.f32 1.0, %v4865
    %v4878 = vsub.f32 1.0, %v4866
    %v4879 = vsub.f32 1.0, %v4867
    %v4880 = vsub.f32 1.0, %v4868
    %v4881 = vsub.f32 1.0, %v4869
    %v4882 = vsub.f32 1.0, %v4870
    %v4883 = vsub.f32 1.0, %v4871
    %v4884 = vsub.f32 1.0, %v4872
    %v4885 = vsub.f32 1.0, %v4873
    %v4886 = vsub.f32 1.0, %v4874
    %v4887 = vmul.f32 %v4647, %v4875
    %v4888 = vmul.f32 %v4648, %v4876
    %v4889 = vmul.f32 %v4649, %v4877
    %v4890 = vmul.f32 %v4650, %v4878
    %v4891 = vmul.f32 %v4651, %v4879
    %v4892 = vmul.f32 %v4652, %v4880
    %v4893 = vmul.f32 %v4653, %v4881
    %v4894 = vmul.f32 %v4654, %v4882
    %v4895 = vmul.f32 %v4655, %v4883
    %v4896 = vmul.f32 %v4656, %v4884
    %v4897 = vmul.f32 %v4657, %v4885
    %v4898 = vmul.f32 %v4658, %v4886
    %v4899 = vadd.f32 %v4887, 1.0
    %v4900 = vadd.f32 %v4888, 1.0
    %v4901 = vadd.f32 %v4889, 1.0
    %v4902 = vadd.f32 %v4890, 1.0
    %v4903 = vadd.f32 %v4891, 1.0
    %v4904 = vadd.f32 %v4892, 1.0
    %v4905 = vadd.f32 %v4893, 1.0
    %v4906 = vadd.f32 %v4894, 1.0
    %v4907 = vadd.f32 %v4895, 1.0
    %v4908 = vadd.f32 %v4896, 1.0
    %v4909 = vadd.f32 %v4897, 1.0
    %v4910 = vadd.f32 %v4898, 1.0
    %v4911 = vmul.f32 %v4611, %v4899
    %v4912 = vmul.f32 %v4612, %v4900
    %v4913 = vmul.f32 %v4613, %v4901
    %v4914 = vmul.f32 %v4614, %v4902
    %v4915 = vmul.f32 %v4615, %v4903
    %v4916 = vmul.f32 %v4616, %v4904
    %v4917 = vmul.f32 %v4617, %v4905
    %v4918 = vmul.f32 %v4618, %v4906
    %v4919 = vmul.f32 %v4619, %v4907
    %v4920 = vmul.f32 %v4620, %v4908
    %v4921 = vmul.f32 %v4621, %v4909
    %v4922 = vmul.f32 %v4622, %v4910
    %s4923 = scalar_lea.vmem %s1, 96
    %v4924 = vld [vmem:[%s4923] sm:$0xff]
    %v4925 = vld [vmem:[%s4923 + $0x8] sm:$0xff]
    %v4926 = vld [vmem:[%s4923 + $0x10] sm:$0xf]
    %4927 = vset.pattern.permute.xlu0 9
    %4928 = vperm.xlu0 %4927, %v48
    %v4929 = vpop.permute.xlu0 %4928
    %4931 = vset.pattern.permute.xlu0 9
    %4932 = vperm.xlu0 %4931, %v49
    %v4933 = vpop.permute.xlu0 %4932
    %4935 = vset.pattern.permute.xlu0 9
    %4936 = vperm.xlu0 %4935, %v50
    %v4937 = vpop.permute.xlu0 %4936
    %v4940 = vsel %vm73, %v4924, 0
    %v4943 = vsel %vm73, %v4925, 0
    %v4946 = vsel %vm73, %v4926, 0
    %v4949 = vsel %vm83, %v4919, 0
    %v4952 = vsel %vm83, %v4920, 0
    %v4955 = vsel %vm83, %v4921, 0
    %v4958 = vsel %vm83, %v4922, 0
    %4960 = vmatprep.subr.mxu0 %v4912
    %4961 = vmatpush1.msra.mxu0 %v4911
    %4962 = vmatprep.subr.mxu0 %v4916
    %4963 = vmatpush1.msra.mxu0 %v4915
    %4964 = vmatprep.subr.mxu0 %v4952
    %4965 = vmatpush1.msra.mxu0 %v4949
    %4966 = vmatprep.subr.mxu0 0.0
    %4967 = vmatpush1.msra.mxu0 0.0
    %4968 = vmatprep.subr.mxu0 0.0
    %4969 = vmatpush1.msra.mxu0 0.0
    %4970 = vmatprep.subr.mxu0 0.0
    %4971 = vmatpush1.msra.mxu0 0.0
    %4972 = vmatprep.subr.mxu0 0.0
    %4973 = vmatpush1.msra.mxu0 0.0
    %4974 = vmatprep.subr.mxu0 0.0
    %4975 = vmatpush1.msra.mxu0 0.0
    %4976 = vmatprep.subr.mxu0 0.0
    %4977 = vmatpush1.msra.mxu0 0.0
    %4978 = vmatprep.subr.mxu0 0.0
    %4979 = vmatpush1.msra.mxu0 0.0
    %4980 = vmatprep.subr.mxu0 0.0
    %4981 = vmatpush1.msra.mxu0 0.0
    %4982 = vmatprep.subr.mxu0 0.0
    %4983 = vmatpush1.msra.mxu0 0.0
    %4984 = vmatprep.subr.mxu0 0.0
    %4985 = vmatpush1.msra.mxu0 0.0
    %4986 = vmatprep.subr.mxu0 0.0
    %4987 = vmatpush1.msra.mxu0 0.0
    %4988 = vmatprep.subr.mxu0 0.0
    %4989 = vmatpush1.msra.mxu0 0.0
    %4990 = vmatprep.subr.mxu0 0.0
    %4991 = vmatpush1.msra.mxu0 0.0
    %4992 = vmatprep.subr.mxu0 0.0
    %4993 = vmatpush1.msra.mxu0 0.0
    %4994 = vmatprep.subr.mxu0 0.0
    %4995 = vmatpush1.msra.mxu0 0.0
    %4996 = vmatprep.subr.mxu0 0.0
    %4997 = vmatpush1.msra.mxu0 0.0
    %4998 = vmatprep.subr.mxu0 0.0
    %4999 = vmatpush1.msra.mxu0 0.0
    %5000 = vmatprep.subr.mxu0 0.0
    %5001 = vmatpush1.msra.mxu0 0.0
    %5002 = vmatprep.subr.mxu0 0.0
    %5003 = vmatpush1.msra.mxu0 0.0
    %5004 = vmatprep.subr.mxu0 0.0
    %5005 = vmatpush1.msra.mxu0 0.0
    %5006 = vmatprep.subr.mxu0 0.0
    %5007 = vmatpush1.msra.mxu0 0.0
    %5008 = vmatprep.subr.mxu0 0.0
    %5009 = vmatpush1.msra.mxu0 0.0
    %5010 = vmatprep.subr.mxu0 0.0
    %5011 = vmatpush1.msra.mxu0 0.0
    %5012 = vmatprep.subr.mxu0 0.0
    %5013 = vmatpush1.msra.mxu0 0.0
    %5014 = vmatprep.subr.mxu0 0.0
    %5015 = vmatpush1.msra.mxu0 0.0
    %5016 = vmatprep.subr.mxu0 0.0
    %5017 = vmatpush1.msra.mxu0 0.0
    %5018 = vmatprep.subr.mxu0 0.0
    %5019 = vmatpush1.msra.mxu0 0.0
    %5020 = vmatprep.subr.mxu0 0.0
    %5021 = vmatpush1.msra.mxu0 0.0
    %5022 = vmatprep.subr.mxu0 0.0
    %5023 = vmatpush1.msra.mxu0 0.0
    %5024 = vmatprep.mubr.f32.mxu0 0.0
    %5025 = vmatmul.mubr.f32.gmra.mrb[0].mxu0 %v4940
    %v5026 = vpop.f32.mrb[0].mxu0
    %v5027 = vadd.f32 %v4929, %v5026
    %v5028 = vpop.f32.mrb[0].mxu0
    %v5029 = vadd.f32 %v4929, %v5028
    %5030 = vmatprep.mubr.f32.mxu0 0.0
    %5031 = vmatmul.mubr.f32.gmra.mrb[0].mxu0 %v4943
    %v5032 = vpop.f32.mrb[0].mxu0
    %v5033 = vadd.f32 %v4933, %v5032
    %v5034 = vpop.f32.mrb[0].mxu0
    %v5035 = vadd.f32 %v4933, %v5034
    %5036 = vmatprep.mubr.f32.mxu0 0.0
    %5037 = vmatmul.mubr.f32.gmra.mrb[0].mxu0 %v4946
    %v5038 = vpop.f32.mrb[0].mxu0
    %v5039 = vadd.f32 %v4937, %v5038
    %v5040 = vpop.f32.mrb[0].mxu0
    %v5041 = vadd.f32 %v4937, %v5040
    %5042 = vdwg.mxu0
    %5043 = vmatprep.subr.mxu0 %v4914
    %5044 = vmatpush1.msra.mxu0 %v4913
    %5045 = vmatprep.subr.mxu0 %v4918
    %5046 = vmatpush1.msra.mxu0 %v4917
    %5047 = vmatprep.subr.mxu0 %v4958
    %5048 = vmatpush1.msra.mxu0 %v4955
    %5049 = vmatprep.subr.mxu0 0.0
    %5050 = vmatpush1.msra.mxu0 0.0
    %5051 = vmatprep.subr.mxu0 0.0
    %5052 = vmatpush1.msra.mxu0 0.0
    %5053 = vmatprep.subr.mxu0 0.0
    %5054 = vmatpush1.msra.mxu0 0.0
    %5055 = vmatprep.subr.mxu0 0.0
    %5056 = vmatpush1.msra.mxu0 0.0
    %5057 = vmatprep.subr.mxu0 0.0
    %5058 = vmatpush1.msra.mxu0 0.0
    %5059 = vmatprep.subr.mxu0 0.0
    %5060 = vmatpush1.msra.mxu0 0.0
    %5061 = vmatprep.subr.mxu0 0.0
    %5062 = vmatpush1.msra.mxu0 0.0
    %5063 = vmatprep.subr.mxu0 0.0
    %5064 = vmatpush1.msra.mxu0 0.0
    %5065 = vmatprep.subr.mxu0 0.0
    %5066 = vmatpush1.msra.mxu0 0.0
    %5067 = vmatprep.subr.mxu0 0.0
    %5068 = vmatpush1.msra.mxu0 0.0
    %5069 = vmatprep.subr.mxu0 0.0
    %5070 = vmatpush1.msra.mxu0 0.0
    %5071 = vmatprep.subr.mxu0 0.0
    %5072 = vmatpush1.msra.mxu0 0.0
    %5073 = vmatprep.subr.mxu0 0.0
    %5074 = vmatpush1.msra.mxu0 0.0
    %5075 = vmatprep.subr.mxu0 0.0
    %5076 = vmatpush1.msra.mxu0 0.0
    %5077 = vmatprep.subr.mxu0 0.0
    %5078 = vmatpush1.msra.mxu0 0.0
    %5079 = vmatprep.subr.mxu0 0.0
    %5080 = vmatpush1.msra.mxu0 0.0
    %5081 = vmatprep.subr.mxu0 0.0
    %5082 = vmatpush1.msra.mxu0 0.0
    %5083 = vmatprep.subr.mxu0 0.0
    %5084 = vmatpush1.msra.mxu0 0.0
    %5085 = vmatprep.subr.mxu0 0.0
    %5086 = vmatpush1.msra.mxu0 0.0
    %5087 = vmatprep.subr.mxu0 0.0
    %5088 = vmatpush1.msra.mxu0 0.0
    %5089 = vmatprep.subr.mxu0 0.0
    %5090 = vmatpush1.msra.mxu0 0.0
    %5091 = vmatprep.subr.mxu0 0.0
    %5092 = vmatpush1.msra.mxu0 0.0
    %5093 = vmatprep.subr.mxu0 0.0
    %5094 = vmatpush1.msra.mxu0 0.0
    %5095 = vmatprep.subr.mxu0 0.0
    %5096 = vmatpush1.msra.mxu0 0.0
    %5097 = vmatprep.subr.mxu0 0.0
    %5098 = vmatpush1.msra.mxu0 0.0
    %5099 = vmatprep.subr.mxu0 0.0
    %5100 = vmatpush1.msra.mxu0 0.0
    %5101 = vmatprep.subr.mxu0 0.0
    %5102 = vmatpush1.msra.mxu0 0.0
    %5103 = vmatprep.subr.mxu0 0.0
    %5104 = vmatpush1.msra.mxu0 0.0
    %5105 = vmatprep.subr.mxu0 0.0
    %5106 = vmatpush1.msra.mxu0 0.0
    %5107 = vmatprep.mubr.f32.mxu0 0.0
    %5108 = vmatmul.mubr.f32.gmra.mrb[0].mxu0 %v4940
    %v5109 = vpop.f32.mrb[0].mxu0
    %v5110 = vadd.f32 %v4929, %v5109
    %v5111 = vpop.f32.mrb[0].mxu0
    %v5112 = vadd.f32 %v4929, %v5111
    %5113 = vmatprep.mubr.f32.mxu0 0.0
    %5114 = vmatmul.mubr.f32.gmra.mrb[0].mxu0 %v4943
    %v5115 = vpop.f32.mrb[0].mxu0
    %v5116 = vadd.f32 %v4933, %v5115
    %v5117 = vpop.f32.mrb[0].mxu0
    %v5118 = vadd.f32 %v4933, %v5117
    %5119 = vmatprep.mubr.f32.mxu0 0.0
    %5120 = vmatmul.mubr.f32.gmra.mrb[0].mxu0 %v4946
    %v5121 = vpop.f32.mrb[0].mxu0
    %v5122 = vadd.f32 %v4937, %v5121
    %v5123 = vpop.f32.mrb[0].mxu0
    %v5124 = vadd.f32 %v4937, %v5123
    %5125 = vdwg.mxu0
    %s5126 = scalar_lea.vmem %s3, 72
    %v5127 = vld [vmem:[%s5126] sm:$0xff]
    %v5128 = vld [vmem:[%s5126 + $0x8] sm:$0xff]
    %v5129 = vld [vmem:[%s5126 + $0x10] sm:$0xf]
    %5130 = vrot.lane.b32.xlu0 %v5027, 1
    %v5131 = vpop.permute.xlu0 %5130
    %5132 = vrot.lane.b32.xlu0 %v5033, 1
    %v5133 = vpop.permute.xlu0 %5132
    %5134 = vrot.lane.b32.xlu0 %v5039, 1
    %v5135 = vpop.permute.xlu0 %5134
    %5136 = vrot.lane.b32.xlu0 %v5029, 1
    %v5137 = vpop.permute.xlu0 %5136
    %5138 = vrot.lane.b32.xlu0 %v5035, 1
    %v5139 = vpop.permute.xlu0 %5138
    %5140 = vrot.lane.b32.xlu0 %v5041, 1
    %v5141 = vpop.permute.xlu0 %5140
    %5142 = vrot.lane.b32.xlu0 %v5110, 1
    %v5143 = vpop.permute.xlu0 %5142
    %5144 = vrot.lane.b32.xlu0 %v5116, 1
    %v5145 = vpop.permute.xlu0 %5144
    %5146 = vrot.lane.b32.xlu0 %v5122, 1
    %v5147 = vpop.permute.xlu0 %5146
    %5148 = vrot.lane.b32.xlu0 %v5112, 1
    %v5149 = vpop.permute.xlu0 %5148
    %5150 = vrot.lane.b32.xlu0 %v5118, 1
    %v5151 = vpop.permute.xlu0 %5150
    %5152 = vrot.lane.b32.xlu0 %v5124, 1
    %v5153 = vpop.permute.xlu0 %5152
    %v5154 = vsel %vm997, %v5143, %v5149
    %v5155 = vsel %vm997, %v5145, %v5151
    %v5156 = vsel %vm997, %v5147, %v5153
    %v5157 = vsel %vm997, %v5137, %v5143
    %v5158 = vsel %vm997, %v5139, %v5145
    %v5159 = vsel %vm997, %v5141, %v5147
    %v5160 = vsel %vm997, %v5131, %v5137
    %v5161 = vsel %vm997, %v5133, %v5139
    %v5162 = vsel %vm997, %v5135, %v5141
    %v5163 = vsel %vm997, %v5149, %v5131
    %v5164 = vsel %vm997, %v5151, %v5133
    %v5165 = vsel %vm997, %v5153, %v5135
    %v5166 = vmul.f32 %v5163, %v1013
    %v5167 = vmul.f32 %v5160, %v1017
    %v5168 = vmul.f32 %v5157, %v1021
    %v5169 = vmul.f32 %v5154, %v1025
    %v5170 = vmul.f32 %v5164, %v1013
    %v5171 = vmul.f32 %v5161, %v1017
    %v5172 = vmul.f32 %v5158, %v1021
    %v5173 = vmul.f32 %v5155, %v1025
    %v5174 = vmul.f32 %v5165, %v1013
    %v5175 = vmul.f32 %v5162, %v1017
    %v5176 = vmul.f32 %v5159, %v1021
    %v5177 = vmul.f32 %v5156, %v1025
    %5178 = vrot.lane.b32.xlu0 %v5027, 127
    %v5179 = vpop.permute.xlu0 %5178
    %5180 = vrot.lane.b32.xlu0 %v5033, 127
    %v5181 = vpop.permute.xlu0 %5180
    %5182 = vrot.lane.b32.xlu0 %v5039, 127
    %v5183 = vpop.permute.xlu0 %5182
    %5184 = vrot.lane.b32.xlu0 %v5029, 127
    %v5185 = vpop.permute.xlu0 %5184
    %5186 = vrot.lane.b32.xlu0 %v5035, 127
    %v5187 = vpop.permute.xlu0 %5186
    %5188 = vrot.lane.b32.xlu0 %v5041, 127
    %v5189 = vpop.permute.xlu0 %5188
    %5190 = vrot.lane.b32.xlu0 %v5110, 127
    %v5191 = vpop.permute.xlu0 %5190
    %5192 = vrot.lane.b32.xlu0 %v5116, 127
    %v5193 = vpop.permute.xlu0 %5192
    %5194 = vrot.lane.b32.xlu0 %v5122, 127
    %v5195 = vpop.permute.xlu0 %5194
    %5196 = vrot.lane.b32.xlu0 %v5112, 127
    %v5197 = vpop.permute.xlu0 %5196
    %5198 = vrot.lane.b32.xlu0 %v5118, 127
    %v5199 = vpop.permute.xlu0 %5198
    %5200 = vrot.lane.b32.xlu0 %v5124, 127
    %v5201 = vpop.permute.xlu0 %5200
    %v5202 = vsel %vm1062, %v5191, %v5197
    %v5203 = vsel %vm1062, %v5193, %v5199
    %v5204 = vsel %vm1062, %v5195, %v5201
    %v5205 = vsel %vm1062, %v5185, %v5191
    %v5206 = vsel %vm1062, %v5187, %v5193
    %v5207 = vsel %vm1062, %v5189, %v5195
    %v5208 = vsel %vm1062, %v5179, %v5185
    %v5209 = vsel %vm1062, %v5181, %v5187
    %v5210 = vsel %vm1062, %v5183, %v5189
    %v5211 = vsel %vm1062, %v5197, %v5179
    %v5212 = vsel %vm1062, %v5199, %v5181
    %v5213 = vsel %vm1062, %v5201, %v5183
    %v5214 = vmul.f32 %v5208, %v1078
    %v5215 = vmul.f32 %v5205, %v1082
    %v5216 = vmul.f32 %v5202, %v1086
    %v5217 = vmul.f32 %v5211, %v1090
    %v5218 = vmul.f32 %v5209, %v1078
    %v5219 = vmul.f32 %v5206, %v1082
    %v5220 = vmul.f32 %v5203, %v1086
    %v5221 = vmul.f32 %v5212, %v1090
    %v5222 = vmul.f32 %v5210, %v1078
    %v5223 = vmul.f32 %v5207, %v1082
    %v5224 = vmul.f32 %v5204, %v1086
    %v5225 = vmul.f32 %v5213, %v1090
    %5227 = vset.pattern.permute.xlu0 3
    %5228 = vperm.xlu0 %5227, %v5127
    %v5229 = vpop.permute.xlu0 %5228
    %5232 = vset.pattern.permute.xlu0 3
    %5233 = vperm.xlu0 %5232, %v5128
    %v5234 = vpop.permute.xlu0 %5233
    %5237 = vset.pattern.permute.xlu0 3
    %5238 = vperm.xlu0 %5237, %v5129
    %v5239 = vpop.permute.xlu0 %5238
    %v5241 = vmul.f32 %v5229, %v5166
    %v5242 = vmul.f32 %v5229, %v5167
    %v5243 = vmul.f32 %v5229, %v5168
    %v5244 = vmul.f32 %v5229, %v5169
    %v5245 = vmul.f32 %v5234, %v5170
    %v5246 = vmul.f32 %v5234, %v5171
    %v5247 = vmul.f32 %v5234, %v5172
    %v5248 = vmul.f32 %v5234, %v5173
    %v5249 = vmul.f32 %v5239, %v5174
    %v5250 = vmul.f32 %v5239, %v5175
    %v5251 = vmul.f32 %v5239, %v5176
    %v5252 = vmul.f32 %v5239, %v5177
    %5253 = vset.pattern.permute.xlu0 4
    %5254 = vperm.xlu0 %5253, %v5127
    %v5255 = vpop.permute.xlu0 %5254
    %5257 = vset.pattern.permute.xlu0 4
    %5258 = vperm.xlu0 %5257, %v5128
    %v5259 = vpop.permute.xlu0 %5258
    %5261 = vset.pattern.permute.xlu0 4
    %5262 = vperm.xlu0 %5261, %v5129
    %v5263 = vpop.permute.xlu0 %5262
    %v5265 = vmul.f32 %v5255, %v5027
    %v5266 = vmul.f32 %v5255, %v5029
    %v5267 = vmul.f32 %v5255, %v5110
    %v5268 = vmul.f32 %v5255, %v5112
    %v5269 = vmul.f32 %v5259, %v5033
    %v5270 = vmul.f32 %v5259, %v5035
    %v5271 = vmul.f32 %v5259, %v5116
    %v5272 = vmul.f32 %v5259, %v5118
    %v5273 = vmul.f32 %v5263, %v5039
    %v5274 = vmul.f32 %v5263, %v5041
    %v5275 = vmul.f32 %v5263, %v5122
    %v5276 = vmul.f32 %v5263, %v5124
    %v5277 = vadd.f32 %v5241, %v5265
    %v5278 = vadd.f32 %v5242, %v5266
    %v5279 = vadd.f32 %v5243, %v5267
    %v5280 = vadd.f32 %v5244, %v5268
    %v5281 = vadd.f32 %v5245, %v5269
    %v5282 = vadd.f32 %v5246, %v5270
    %v5283 = vadd.f32 %v5247, %v5271
    %v5284 = vadd.f32 %v5248, %v5272
    %v5285 = vadd.f32 %v5249, %v5273
    %v5286 = vadd.f32 %v5250, %v5274
    %v5287 = vadd.f32 %v5251, %v5275
    %v5288 = vadd.f32 %v5252, %v5276
    %5289 = vset.pattern.permute.xlu0 5
    %5290 = vperm.xlu0 %5289, %v5127
    %v5291 = vpop.permute.xlu0 %5290
    %5293 = vset.pattern.permute.xlu0 5
    %5294 = vperm.xlu0 %5293, %v5128
    %v5295 = vpop.permute.xlu0 %5294
    %5297 = vset.pattern.permute.xlu0 5
    %5298 = vperm.xlu0 %5297, %v5129
    %v5299 = vpop.permute.xlu0 %5298
    %v5301 = vmul.f32 %v5291, %v5214
    %v5302 = vmul.f32 %v5291, %v5215
    %v5303 = vmul.f32 %v5291, %v5216
    %v5304 = vmul.f32 %v5291, %v5217
    %v5305 = vmul.f32 %v5295, %v5218
    %v5306 = vmul.f32 %v5295, %v5219
    %v5307 = vmul.f32 %v5295, %v5220
    %v5308 = vmul.f32 %v5295, %v5221
    %v5309 = vmul.f32 %v5299, %v5222
    %v5310 = vmul.f32 %v5299, %v5223
    %v5311 = vmul.f32 %v5299, %v5224
    %v5312 = vmul.f32 %v5299, %v5225
    %v5313 = vadd.f32 %v5277, %v5301
    %v5314 = vadd.f32 %v5278, %v5302
    %v5315 = vadd.f32 %v5279, %v5303
    %v5316 = vadd.f32 %v5280, %v5304
    %v5317 = vadd.f32 %v5281, %v5305
    %v5318 = vadd.f32 %v5282, %v5306
    %v5319 = vadd.f32 %v5283, %v5307
    %v5320 = vadd.f32 %v5284, %v5308
    %v5321 = vadd.f32 %v5285, %v5309
    %v5322 = vadd.f32 %v5286, %v5310
    %v5323 = vadd.f32 %v5287, %v5311
    %v5324 = vadd.f32 %v5288, %v5312
    %5325 = vset.pattern.permute.xlu0 10
    %5326 = vperm.xlu0 %5325, %v48
    %v5327 = vpop.permute.xlu0 %5326
    %5329 = vset.pattern.permute.xlu0 10
    %5330 = vperm.xlu0 %5329, %v49
    %v5331 = vpop.permute.xlu0 %5330
    %5333 = vset.pattern.permute.xlu0 10
    %5334 = vperm.xlu0 %5333, %v50
    %v5335 = vpop.permute.xlu0 %5334
    %v5337 = vadd.f32 %v5327, %v5313
    %v5338 = vadd.f32 %v5327, %v5314
    %v5339 = vadd.f32 %v5327, %v5315
    %v5340 = vadd.f32 %v5327, %v5316
    %v5341 = vadd.f32 %v5331, %v5317
    %v5342 = vadd.f32 %v5331, %v5318
    %v5343 = vadd.f32 %v5331, %v5319
    %v5344 = vadd.f32 %v5331, %v5320
    %v5345 = vadd.f32 %v5335, %v5321
    %v5346 = vadd.f32 %v5335, %v5322
    %v5347 = vadd.f32 %v5335, %v5323
    %v5348 = vadd.f32 %v5335, %v5324
    %5349 = vset.pattern.permute.xlu0 0
    %5350 = vperm.xlu0 %5349, %v5127
    %v5351 = vpop.permute.xlu0 %5350
    %5353 = vset.pattern.permute.xlu0 0
    %5354 = vperm.xlu0 %5353, %v5128
    %v5355 = vpop.permute.xlu0 %5354
    %5357 = vset.pattern.permute.xlu0 0
    %5358 = vperm.xlu0 %5357, %v5129
    %v5359 = vpop.permute.xlu0 %5358
    %v5361 = vmul.f32 %v5351, %v5166
    %v5362 = vmul.f32 %v5351, %v5167
    %v5363 = vmul.f32 %v5351, %v5168
    %v5364 = vmul.f32 %v5351, %v5169
    %v5365 = vmul.f32 %v5355, %v5170
    %v5366 = vmul.f32 %v5355, %v5171
    %v5367 = vmul.f32 %v5355, %v5172
    %v5368 = vmul.f32 %v5355, %v5173
    %v5369 = vmul.f32 %v5359, %v5174
    %v5370 = vmul.f32 %v5359, %v5175
    %v5371 = vmul.f32 %v5359, %v5176
    %v5372 = vmul.f32 %v5359, %v5177
    %5373 = vset.pattern.permute.xlu0 1
    %5374 = vperm.xlu0 %5373, %v5127
    %v5375 = vpop.permute.xlu0 %5374
    %5377 = vset.pattern.permute.xlu0 1
    %5378 = vperm.xlu0 %5377, %v5128
    %v5379 = vpop.permute.xlu0 %5378
    %5381 = vset.pattern.permute.xlu0 1
    %5382 = vperm.xlu0 %5381, %v5129
    %v5383 = vpop.permute.xlu0 %5382
    %v5385 = vmul.f32 %v5375, %v5027
    %v5386 = vmul.f32 %v5375, %v5029
    %v5387 = vmul.f32 %v5375, %v5110
    %v5388 = vmul.f32 %v5375, %v5112
    %v5389 = vmul.f32 %v5379, %v5033
    %v5390 = vmul.f32 %v5379, %v5035
    %v5391 = vmul.f32 %v5379, %v5116
    %v5392 = vmul.f32 %v5379, %v5118
    %v5393 = vmul.f32 %v5383, %v5039
    %v5394 = vmul.f32 %v5383, %v5041
    %v5395 = vmul.f32 %v5383, %v5122
    %v5396 = vmul.f32 %v5383, %v5124
    %v5397 = vadd.f32 %v5361, %v5385
    %v5398 = vadd.f32 %v5362, %v5386
    %v5399 = vadd.f32 %v5363, %v5387
    %v5400 = vadd.f32 %v5364, %v5388
    %v5401 = vadd.f32 %v5365, %v5389
    %v5402 = vadd.f32 %v5366, %v5390
    %v5403 = vadd.f32 %v5367, %v5391
    %v5404 = vadd.f32 %v5368, %v5392
    %v5405 = vadd.f32 %v5369, %v5393
    %v5406 = vadd.f32 %v5370, %v5394
    %v5407 = vadd.f32 %v5371, %v5395
    %v5408 = vadd.f32 %v5372, %v5396
    %5409 = vset.pattern.permute.xlu0 2
    %5410 = vperm.xlu0 %5409, %v5127
    %v5411 = vpop.permute.xlu0 %5410
    %5413 = vset.pattern.permute.xlu0 2
    %5414 = vperm.xlu0 %5413, %v5128
    %v5415 = vpop.permute.xlu0 %5414
    %5417 = vset.pattern.permute.xlu0 2
    %5418 = vperm.xlu0 %5417, %v5129
    %v5419 = vpop.permute.xlu0 %5418
    %v5421 = vmul.f32 %v5411, %v5214
    %v5422 = vmul.f32 %v5411, %v5215
    %v5423 = vmul.f32 %v5411, %v5216
    %v5424 = vmul.f32 %v5411, %v5217
    %v5425 = vmul.f32 %v5415, %v5218
    %v5426 = vmul.f32 %v5415, %v5219
    %v5427 = vmul.f32 %v5415, %v5220
    %v5428 = vmul.f32 %v5415, %v5221
    %v5429 = vmul.f32 %v5419, %v5222
    %v5430 = vmul.f32 %v5419, %v5223
    %v5431 = vmul.f32 %v5419, %v5224
    %v5432 = vmul.f32 %v5419, %v5225
    %v5433 = vadd.f32 %v5397, %v5421
    %v5434 = vadd.f32 %v5398, %v5422
    %v5435 = vadd.f32 %v5399, %v5423
    %v5436 = vadd.f32 %v5400, %v5424
    %v5437 = vadd.f32 %v5401, %v5425
    %v5438 = vadd.f32 %v5402, %v5426
    %v5439 = vadd.f32 %v5403, %v5427
    %v5440 = vadd.f32 %v5404, %v5428
    %v5441 = vadd.f32 %v5405, %v5429
    %v5442 = vadd.f32 %v5406, %v5430
    %v5443 = vadd.f32 %v5407, %v5431
    %v5444 = vadd.f32 %v5408, %v5432
    %5445 = vrot.lane.b32.xlu0 %v5433, 16
    %v5446 = vpop.permute.xlu0 %5445
    %5447 = vrot.lane.b32.xlu0 %v5437, 16
    %v5448 = vpop.permute.xlu0 %5447
    %5449 = vrot.lane.b32.xlu0 %v5441, 16
    %v5450 = vpop.permute.xlu0 %5449
    %5451 = vrot.lane.b32.xlu0 %v5434, 16
    %v5452 = vpop.permute.xlu0 %5451
    %5453 = vrot.lane.b32.xlu0 %v5438, 16
    %v5454 = vpop.permute.xlu0 %5453
    %5455 = vrot.lane.b32.xlu0 %v5442, 16
    %v5456 = vpop.permute.xlu0 %5455
    %5457 = vrot.lane.b32.xlu0 %v5435, 16
    %v5458 = vpop.permute.xlu0 %5457
    %5459 = vrot.lane.b32.xlu0 %v5439, 16
    %v5460 = vpop.permute.xlu0 %5459
    %5461 = vrot.lane.b32.xlu0 %v5443, 16
    %v5462 = vpop.permute.xlu0 %5461
    %5463 = vrot.lane.b32.xlu0 %v5436, 16
    %v5464 = vpop.permute.xlu0 %5463
    %5465 = vrot.lane.b32.xlu0 %v5440, 16
    %v5466 = vpop.permute.xlu0 %5465
    %5467 = vrot.lane.b32.xlu0 %v5444, 16
    %v5468 = vpop.permute.xlu0 %5467
    %v5469 = vsel %vm1346, %v5458, %v5464
    %v5470 = vsel %vm1346, %v5460, %v5466
    %v5471 = vsel %vm1346, %v5462, %v5468
    %v5472 = vsel %vm1346, %v5452, %v5458
    %v5473 = vsel %vm1346, %v5454, %v5460
    %v5474 = vsel %vm1346, %v5456, %v5462
    %v5475 = vsel %vm1346, %v5446, %v5452
    %v5476 = vsel %vm1346, %v5448, %v5454
    %v5477 = vsel %vm1346, %v5450, %v5456
    %v5478 = vsel %vm1346, %v5464, %v5446
    %v5479 = vsel %vm1346, %v5466, %v5448
    %v5480 = vsel %vm1346, %v5468, %v5450
    %v5481 = vmul.f32 %v5478, %v1362
    %v5482 = vmul.f32 %v5475, %v1366
    %v5483 = vmul.f32 %v5472, %v1370
    %v5484 = vmul.f32 %v5469, %v1374
    %v5485 = vmul.f32 %v5479, %v1362
    %v5486 = vmul.f32 %v5476, %v1366
    %v5487 = vmul.f32 %v5473, %v1370
    %v5488 = vmul.f32 %v5470, %v1374
    %v5489 = vmul.f32 %v5480, %v1362
    %v5490 = vmul.f32 %v5477, %v1366
    %v5491 = vmul.f32 %v5474, %v1370
    %v5492 = vmul.f32 %v5471, %v1374
    %v5493 = vadd.f32 %v5337, %v5481
    %v5494 = vadd.f32 %v5338, %v5482
    %v5495 = vadd.f32 %v5339, %v5483
    %v5496 = vadd.f32 %v5340, %v5484
    %v5497 = vadd.f32 %v5341, %v5485
    %v5498 = vadd.f32 %v5342, %v5486
    %v5499 = vadd.f32 %v5343, %v5487
    %v5500 = vadd.f32 %v5344, %v5488
    %v5501 = vadd.f32 %v5345, %v5489
    %v5502 = vadd.f32 %v5346, %v5490
    %v5503 = vadd.f32 %v5347, %v5491
    %v5504 = vadd.f32 %v5348, %v5492
    %5505 = vset.pattern.permute.xlu0 6
    %5506 = vperm.xlu0 %5505, %v5127
    %v5507 = vpop.permute.xlu0 %5506
    %5509 = vset.pattern.permute.xlu0 6
    %5510 = vperm.xlu0 %5509, %v5128
    %v5511 = vpop.permute.xlu0 %5510
    %5513 = vset.pattern.permute.xlu0 6
    %5514 = vperm.xlu0 %5513, %v5129
    %v5515 = vpop.permute.xlu0 %5514
    %v5517 = vmul.f32 %v5507, %v5166
    %v5518 = vmul.f32 %v5507, %v5167
    %v5519 = vmul.f32 %v5507, %v5168
    %v5520 = vmul.f32 %v5507, %v5169
    %v5521 = vmul.f32 %v5511, %v5170
    %v5522 = vmul.f32 %v5511, %v5171
    %v5523 = vmul.f32 %v5511, %v5172
    %v5524 = vmul.f32 %v5511, %v5173
    %v5525 = vmul.f32 %v5515, %v5174
    %v5526 = vmul.f32 %v5515, %v5175
    %v5527 = vmul.f32 %v5515, %v5176
    %v5528 = vmul.f32 %v5515, %v5177
    %5529 = vset.pattern.permute.xlu0 7
    %5530 = vperm.xlu0 %5529, %v5127
    %v5531 = vpop.permute.xlu0 %5530
    %5533 = vset.pattern.permute.xlu0 7
    %5534 = vperm.xlu0 %5533, %v5128
    %v5535 = vpop.permute.xlu0 %5534
    %5537 = vset.pattern.permute.xlu0 7
    %5538 = vperm.xlu0 %5537, %v5129
    %v5539 = vpop.permute.xlu0 %5538
    %v5541 = vmul.f32 %v5531, %v5027
    %v5542 = vmul.f32 %v5531, %v5029
    %v5543 = vmul.f32 %v5531, %v5110
    %v5544 = vmul.f32 %v5531, %v5112
    %v5545 = vmul.f32 %v5535, %v5033
    %v5546 = vmul.f32 %v5535, %v5035
    %v5547 = vmul.f32 %v5535, %v5116
    %v5548 = vmul.f32 %v5535, %v5118
    %v5549 = vmul.f32 %v5539, %v5039
    %v5550 = vmul.f32 %v5539, %v5041
    %v5551 = vmul.f32 %v5539, %v5122
    %v5552 = vmul.f32 %v5539, %v5124
    %v5553 = vadd.f32 %v5517, %v5541
    %v5554 = vadd.f32 %v5518, %v5542
    %v5555 = vadd.f32 %v5519, %v5543
    %v5556 = vadd.f32 %v5520, %v5544
    %v5557 = vadd.f32 %v5521, %v5545
    %v5558 = vadd.f32 %v5522, %v5546
    %v5559 = vadd.f32 %v5523, %v5547
    %v5560 = vadd.f32 %v5524, %v5548
    %v5561 = vadd.f32 %v5525, %v5549
    %v5562 = vadd.f32 %v5526, %v5550
    %v5563 = vadd.f32 %v5527, %v5551
    %v5564 = vadd.f32 %v5528, %v5552
    %5565 = vset.pattern.permute.xlu0 8
    %5566 = vperm.xlu0 %5565, %v5127
    %v5567 = vpop.permute.xlu0 %5566
    %5569 = vset.pattern.permute.xlu0 8
    %5570 = vperm.xlu0 %5569, %v5128
    %v5571 = vpop.permute.xlu0 %5570
    %5573 = vset.pattern.permute.xlu0 8
    %5574 = vperm.xlu0 %5573, %v5129
    %v5575 = vpop.permute.xlu0 %5574
    %v5577 = vmul.f32 %v5567, %v5214
    %v5578 = vmul.f32 %v5567, %v5215
    %v5579 = vmul.f32 %v5567, %v5216
    %v5580 = vmul.f32 %v5567, %v5217
    %v5581 = vmul.f32 %v5571, %v5218
    %v5582 = vmul.f32 %v5571, %v5219
    %v5583 = vmul.f32 %v5571, %v5220
    %v5584 = vmul.f32 %v5571, %v5221
    %v5585 = vmul.f32 %v5575, %v5222
    %v5586 = vmul.f32 %v5575, %v5223
    %v5587 = vmul.f32 %v5575, %v5224
    %v5588 = vmul.f32 %v5575, %v5225
    %v5589 = vadd.f32 %v5553, %v5577
    %v5590 = vadd.f32 %v5554, %v5578
    %v5591 = vadd.f32 %v5555, %v5579
    %v5592 = vadd.f32 %v5556, %v5580
    %v5593 = vadd.f32 %v5557, %v5581
    %v5594 = vadd.f32 %v5558, %v5582
    %v5595 = vadd.f32 %v5559, %v5583
    %v5596 = vadd.f32 %v5560, %v5584
    %v5597 = vadd.f32 %v5561, %v5585
    %v5598 = vadd.f32 %v5562, %v5586
    %v5599 = vadd.f32 %v5563, %v5587
    %v5600 = vadd.f32 %v5564, %v5588
    %5601 = vrot.lane.b32.xlu0 %v5589, 112
    %v5602 = vpop.permute.xlu0 %5601
    %5603 = vrot.lane.b32.xlu0 %v5593, 112
    %v5604 = vpop.permute.xlu0 %5603
    %5605 = vrot.lane.b32.xlu0 %v5597, 112
    %v5606 = vpop.permute.xlu0 %5605
    %5607 = vrot.lane.b32.xlu0 %v5590, 112
    %v5608 = vpop.permute.xlu0 %5607
    %5609 = vrot.lane.b32.xlu0 %v5594, 112
    %v5610 = vpop.permute.xlu0 %5609
    %5611 = vrot.lane.b32.xlu0 %v5598, 112
    %v5612 = vpop.permute.xlu0 %5611
    %5613 = vrot.lane.b32.xlu0 %v5591, 112
    %v5614 = vpop.permute.xlu0 %5613
    %5615 = vrot.lane.b32.xlu0 %v5595, 112
    %v5616 = vpop.permute.xlu0 %5615
    %5617 = vrot.lane.b32.xlu0 %v5599, 112
    %v5618 = vpop.permute.xlu0 %5617
    %5619 = vrot.lane.b32.xlu0 %v5592, 112
    %v5620 = vpop.permute.xlu0 %5619
    %5621 = vrot.lane.b32.xlu0 %v5596, 112
    %v5622 = vpop.permute.xlu0 %5621
    %5623 = vrot.lane.b32.xlu0 %v5600, 112
    %v5624 = vpop.permute.xlu0 %5623
    %v5625 = vsel %vm1519, %v5614, %v5620
    %v5626 = vsel %vm1519, %v5616, %v5622
    %v5627 = vsel %vm1519, %v5618, %v5624
    %v5628 = vsel %vm1519, %v5608, %v5614
    %v5629 = vsel %vm1519, %v5610, %v5616
    %v5630 = vsel %vm1519, %v5612, %v5618
    %v5631 = vsel %vm1519, %v5602, %v5608
    %v5632 = vsel %vm1519, %v5604, %v5610
    %v5633 = vsel %vm1519, %v5606, %v5612
    %v5634 = vsel %vm1519, %v5620, %v5602
    %v5635 = vsel %vm1519, %v5622, %v5604
    %v5636 = vsel %vm1519, %v5624, %v5606
    %v5637 = vmul.f32 %v5631, %v1535
    %v5638 = vmul.f32 %v5628, %v1539
    %v5639 = vmul.f32 %v5625, %v1543
    %v5640 = vmul.f32 %v5634, %v1547
    %v5641 = vmul.f32 %v5632, %v1535
    %v5642 = vmul.f32 %v5629, %v1539
    %v5643 = vmul.f32 %v5626, %v1543
    %v5644 = vmul.f32 %v5635, %v1547
    %v5645 = vmul.f32 %v5633, %v1535
    %v5646 = vmul.f32 %v5630, %v1539
    %v5647 = vmul.f32 %v5627, %v1543
    %v5648 = vmul.f32 %v5636, %v1547
    %v5649 = vadd.f32 %v5493, %v5637
    %v5650 = vadd.f32 %v5494, %v5638
    %v5651 = vadd.f32 %v5495, %v5639
    %v5652 = vadd.f32 %v5496, %v5640
    %v5653 = vadd.f32 %v5497, %v5641
    %v5654 = vadd.f32 %v5498, %v5642
    %v5655 = vadd.f32 %v5499, %v5643
    %v5656 = vadd.f32 %v5500, %v5644
    %v5657 = vadd.f32 %v5501, %v5645
    %v5658 = vadd.f32 %v5502, %v5646
    %v5659 = vadd.f32 %v5503, %v5647
    %v5660 = vadd.f32 %v5504, %v5648
    %v5661 = vmul.f32 %v4599, 0.5
    %v5662 = vmul.f32 %v4600, 0.5
    %v5663 = vmul.f32 %v4601, 0.5
    %v5664 = vmul.f32 %v4602, 0.5
    %v5665 = vmul.f32 %v4603, 0.5
    %v5666 = vmul.f32 %v4604, 0.5
    %v5667 = vmul.f32 %v4605, 0.5
    %v5668 = vmul.f32 %v4606, 0.5
    %v5669 = vmul.f32 %v4607, 0.5
    %v5670 = vmul.f32 %v4608, 0.5
    %v5671 = vmul.f32 %v4609, 0.5
    %v5672 = vmul.f32 %v4610, 0.5
    %v5673 = vadd.f32 %v5649, %v5661
    %v5674 = vadd.f32 %v5650, %v5662
    %v5675 = vadd.f32 %v5651, %v5663
    %v5676 = vadd.f32 %v5652, %v5664
    %v5677 = vadd.f32 %v5653, %v5665
    %v5678 = vadd.f32 %v5654, %v5666
    %v5679 = vadd.f32 %v5655, %v5667
    %v5680 = vadd.f32 %v5656, %v5668
    %v5681 = vadd.f32 %v5657, %v5669
    %v5682 = vadd.f32 %v5658, %v5670
    %v5683 = vadd.f32 %v5659, %v5671
    %v5684 = vadd.f32 %v5660, %v5672
    %v5685 = vmul.f32 %v5673, %v3113
    %v5686 = vmul.f32 %v5674, %v3114
    %v5687 = vmul.f32 %v5675, %v3115
    %v5688 = vmul.f32 %v5676, %v3116
    %v5689 = vmul.f32 %v5677, %v3117
    %v5690 = vmul.f32 %v5678, %v3118
    %v5691 = vmul.f32 %v5679, %v3119
    %v5692 = vmul.f32 %v5680, %v3120
    %v5693 = vmul.f32 %v5681, %v3121
    %v5694 = vmul.f32 %v5682, %v3122
    %v5695 = vmul.f32 %v5683, %v3123
    %v5696 = vmul.f32 %v5684, %v3124
    %5697 = vst [vmem:[#allocation5] sm:$0xff] %v5685
    %5698 = vst [vmem:[#allocation5 + $0x8] sm:$0xff] %v5686
    %5699 = vst [vmem:[#allocation5 + $0x10] sm:$0xff] %v5687
    %5700 = vst [vmem:[#allocation5 + $0x18] sm:$0xff] %v5688
    %5701 = vst [vmem:[#allocation5 + $0x20] sm:$0xff] %v5689
    %5702 = vst [vmem:[#allocation5 + $0x28] sm:$0xff] %v5690
    %5703 = vst [vmem:[#allocation5 + $0x30] sm:$0xff] %v5691
    %5704 = vst [vmem:[#allocation5 + $0x38] sm:$0xff] %v5692
    %5705 = vst [vmem:[#allocation5 + $0x40] sm:$0xf] %v5693
    %5706 = vst [vmem:[#allocation5 + $0x48] sm:$0xf] %v5694
    %5707 = vst [vmem:[#allocation5 + $0x50] sm:$0xf] %v5695
    %5708 = vst [vmem:[#allocation5 + $0x58] sm:$0xf] %v5696
    // Predicated region
    $region30: #{tpu_custom_call.1} parent=1 // pred_check
      _
    $region31: #{tpu_custom_call.1} parent=1 // pred_check_branch
      %5710 = sbr.rel (0) target = $region33
    $region32: #{tpu_custom_call.1} parent=1 // pred_region
      %s5712 = ssub.s32 1536, 1536
      %5713 = vsyncadd [#allocation4], %s5712
      %s5714 = sshll.u32 [#allocation5], 4
      %s5715 = int_to_ptr.vmem [resolvable:$true] %s5714
      %5720 = dma.vmem_to_hbm [thread:$0]  %s5715, 1536, %s6, [#allocation4], 512, 512, 32
    $region33: #{tpu_custom_call.1} parent=1 // pred_fallthru
      _
    // Predicated region
    $region34: #{tpu_custom_call.1} parent=1 // pred_check
      _
    $region35: #{tpu_custom_call.1} parent=1 // pred_check_branch
      %5722 = sbr.rel (0) target = $region37
    $region36: #{tpu_custom_call.1} parent=1 // pred_region
      %5723 = dma.done [#allocation4], 1536
    $region37: #{tpu_custom_call.1} parent=1 // pred_fallthru
      _
    %5724 = vsyncpa [#allocation3], 1
    %5725 = vsyncpa [#allocation4], 1

</llo_original>
